<compile_context>
chip_gen: v6e
topology: v6e:2x2x1
jax: 0.10.0
libtpu: 0.0.40
codegen_flags: <defaults>
</compile_context>

<pallas_src>
import functools
import math

import jax
import jax.numpy as jnp
from jax.experimental import pallas as pl
from jax.experimental.pallas import tpu as pltpu

_LANE = 128
_VMEM_LIMIT_BYTES = 48 * 1024 * 1024   # within physical VMEM on v5e/v6e/v7x


def _rup(v, m):
    return ((v + m - 1) // m) * m


def _choose_tm(m):
    """Largest lane-dense M tile: whole (16-aligned) M if <=1024, else 512."""
    mp16 = _rup(max(m, 16), 16)
    if mp16 <= 1024:
        return mp16, mp16
    return 512, _rup(m, 512)


# ---------------------------------------------------------------------------
# Pallas kernels
# ---------------------------------------------------------------------------
def _sigmoid(y):
    # exp + approx reciprocal both go to the EUP -> epilogue hides under MXU.
    return pl.reciprocal(1.0 + jnp.exp(-y), approx=True)


def _apply_act(y, act):
    if act == "silu":
        return y * _sigmoid(y)
    if act == "relu":
        return jnp.maximum(y, 0.0)
    if act == "sigmoid":
        return _sigmoid(y)
    return y


def _fused_mm_kernel(*refs, n_x, has_res, act):
    """out = act(sum_i x_i @ w_i + bias) [+ residual]; bf16 in, f32 math."""
    o_ref = refs[-1]
    xs = refs[:n_x]
    ws = refs[n_x:2 * n_x]
    b_ref = refs[2 * n_x]
    acc = jnp.dot(xs[0][...], ws[0][...], preferred_element_type=jnp.float32)
    for x_ref, w_ref in zip(xs[1:], ws[1:]):
        acc = acc + jnp.dot(x_ref[...], w_ref[...],
                            preferred_element_type=jnp.float32)
    y = _apply_act(acc + b_ref[...], act)
    if has_res:
        y = y + refs[2 * n_x + 1][...].astype(jnp.float32)
    o_ref[...] = y.astype(o_ref.dtype)


def _ct_phase_kernel(x_ref, w_ref, b_ref, o_ref, *, act):
    acc = jnp.dot(x_ref[...], w_ref[...], preferred_element_type=jnp.float32)
    o_ref[...] = _apply_act(acc + b_ref[...], act).astype(o_ref.dtype)


# ---------------------------------------------------------------------------
# Kernel wrappers
# ---------------------------------------------------------------------------
def fused_matmul(xs, ws, bias, act, residual=None, out_dtype=jnp.bfloat16):
    """act(concat_K(xs) @ concat_K(ws) + bias) [+ residual].

    xs[i]: [M, Kp_i] bf16 (lane-padded activations); ws[i]: [Kp_i, Np] bf16
    (pre-packed, BN-folded); bias: [1, Np] f32.  K untiled, N tile = full Np.
    """
    m = xs[0].shape[0]
    np_ = ws[0].shape[1]
    tm, mp = _choose_tm(m)

    def pad_m(a):
        if a.shape[0] == mp:
            return a
        return jnp.zeros((mp,) + a.shape[1:], a.dtype).at[:a.shape[0]].set(a)

    args, in_specs = [], []
    for x in xs:
        kp = x.shape[1]
        args.append(pad_m(x))
        in_specs.append(pl.BlockSpec((tm, kp), lambda i: (i, 0)))
    for w in ws:
        kp = w.shape[0]
        args.append(w)
        in_specs.append(pl.BlockSpec((kp, np_), lambda i: (0, 0)))
    args.append(bias)
    in_specs.append(pl.BlockSpec((1, np_), lambda i: (0, 0)))
    has_res = residual is not None
    if has_res:
        args.append(pad_m(residual))
        in_specs.append(pl.BlockSpec((tm, np_), lambda i: (i, 0)))

    out = pl.pallas_call(
        functools.partial(_fused_mm_kernel, n_x=len(xs), has_res=has_res,
                          act=act),
        out_shape=jax.ShapeDtypeStruct((mp, np_), out_dtype),
        grid=(mp // tm,),
        in_specs=in_specs,
        out_specs=pl.BlockSpec((tm, np_), lambda i: (i, 0)),
        compiler_params=pltpu.CompilerParams(
            dimension_semantics=("parallel",),
            vmem_limit_bytes=_VMEM_LIMIT_BYTES),
    )(*args)
    return out if mp == m else out[:m]


# ConvTranspose2d(k=4, s=2, p=1): each output parity (ay, ax) only sees a fixed
# 2x2 subset of the 4x4 taps.  phase parity -> ((kernel_tap, input_offset), ..)
# Weight convention here: w[ky, kx, ci, co] == PyTorch weight[ci, co, ky, kx].
_CT_TAPS = {0: ((1, 0), (3, -1)), 1: ((0, 1), (2, 0))}


def conv_transpose4x4_s2_bn_relu(x, pk):
    """All 4 output phases of ConvT(4,2,1)+BN+ReLU in one pallas_call."""
    b, h, w, cp = x.shape
    m = b * h * w
    kp, np_ = pk["w"].shape[1], pk["w"].shape[2]
    assert kp == 4 * cp, (kp, cp)
    xp = jnp.pad(x, ((0, 0), (1, 1), (1, 1), (0, 0)))
    phases = []
    for ay in (0, 1):
        for ax in (0, 1):
            cols = [xp[:, 1 + dy:1 + dy + h, 1 + dx:1 + dx + w, :]
                    for _ky, dy in _CT_TAPS[ay] for _kx, dx in _CT_TAPS[ax]]
            phases.append(jnp.concatenate(cols, axis=-1).reshape(m, 4 * cp))
    xph = jnp.stack(phases, axis=0)                        # [4, M, 4*Cp]

    tm, mp = _choose_tm(m)
    if mp != m:
        xph = jnp.zeros((4, mp, 4 * cp), xph.dtype).at[:, :m].set(xph)

    out = pl.pallas_call(
        functools.partial(_ct_phase_kernel, act="relu"),
        out_shape=jax.ShapeDtypeStruct((4, mp, np_), jnp.float32),
        grid=(4, mp // tm),
        in_specs=[
            pl.BlockSpec((None, tm, kp), lambda p, i: (p, i, 0)),
            pl.BlockSpec((None, kp, np_), lambda p, i: (p, 0, 0)),
            pl.BlockSpec((1, np_), lambda p, i: (0, 0)),
        ],
        out_specs=pl.BlockSpec((None, tm, np_), lambda p, i: (p, i, 0)),
        compiler_params=pltpu.CompilerParams(
            dimension_semantics=("parallel", "parallel"),
            vmem_limit_bytes=_VMEM_LIMIT_BYTES),
    )(xph, pk["w"], pk["b"])

    out = out[:, :m].reshape(2, 2, b, h, w, np_)           # [ay, ax, B, H, W, C]
    out = out.transpose(2, 3, 0, 4, 1, 5)                  # [B, H, ay, W, ax, C]
    return out.reshape(b, 2 * h, 2 * w, np_)


# ---------------------------------------------------------------------------
# Module forwards
# ---------------------------------------------------------------------------
def _im2col3x3(x):
    b, h, w, c = x.shape
    xp = jnp.pad(x, ((0, 0), (1, 1), (1, 1), (0, 0)))
    cols = [xp[:, ky:ky + h, kx:kx + w, :] for ky in range(3) for kx in range(3)]
    return jnp.concatenate(cols, axis=-1).reshape(b * h * w, 9 * c)


def c3_forward(x, p):
    """yolov5 C3 (n=1, shortcut=True, e=0.5), SiLU activations."""
    b, h, w, cp = x.shape
    m = b * h * w
    x2 = x.reshape(m, cp)
    y1 = fused_matmul([x2], [p["cv1"]["w"]], p["cv1"]["b"], "silu")
    y2 = fused_matmul([x2], [p["cv2"]["w"]], p["cv2"]["b"], "silu")
    hmid = fused_matmul([y1], [p["m_cv1"]["w"]], p["m_cv1"]["b"], "silu")
    patches = _im2col3x3(hmid.reshape(b, h, w, hmid.shape[-1]))
    # Bottleneck shortcut: y1 added after the 3x3 conv's SiLU, fused in-kernel.
    mm = fused_matmul([patches], [p["m_cv2"]["w"]], p["m_cv2"]["b"], "silu",
                      residual=y1)
    # cv3 on concat([m, y2]): fused as a 2-operand matmul (no concat in HBM).
    out = fused_matmul([mm, y2], [p["cv3"]["w1"], p["cv3"]["w2"]],
                       p["cv3"]["b"], "silu")
    return out.reshape(b, h, w, out.shape[-1])


def double_conv_up_c3_forward(params, x, *, out_ch):
    """x: [B, H, W, in_ch + mid_ch] (NHWC) -> [B, 2H, 2W, out_ch]."""
    b, h, w, c = x.shape
    cp = _rup(c, _LANE)
    xb = jnp.zeros((b, h, w, cp), jnp.bfloat16).at[..., :c].set(
        x.astype(jnp.bfloat16))
    y = c3_forward(xb, params["c3"])
    up = conv_transpose4x4_s2_bn_relu(y, params["up"])
    return up[..., :out_ch]


# ---------------------------------------------------------------------------
# Parameter packing (BN fold + pad + bf16 cast, done once outside jit)
# ---------------------------------------------------------------------------
def _fold_bn(gamma, beta, mean, var, eps=1e-5):
    scale = gamma / jnp.sqrt(var + eps)
    return scale, beta - mean * scale


def _pad_bias(shift, np_):
    return jnp.zeros((1, np_), jnp.float32).at[0, :shift.shape[0]].set(shift)


def _pack_1x1(w, scale, shift):
    cin, cout = w.shape
    kp, np_ = _rup(cin, _LANE), _rup(cout, _LANE)
    wf = (w * scale[None, :]).astype(jnp.bfloat16)
    wp = jnp.zeros((kp, np_), jnp.bfloat16).at[:cin, :cout].set(wf)
    return {"w": wp, "b": _pad_bias(shift, np_)}


def _pack_1x1_split(w, scale, shift, split):
    cout = w.shape[1]
    np_ = _rup(cout, _LANE)
    wf = w * scale[None, :]

    def pad_half(wh):
        k = wh.shape[0]
        kp = _rup(k, _LANE)
        return jnp.zeros((kp, np_), jnp.bfloat16).at[:k, :cout].set(
            wh.astype(jnp.bfloat16))

    return {"w1": pad_half(wf[:split]), "w2": pad_half(wf[split:]),
            "b": _pad_bias(shift, np_)}


def _pack_3x3(w, scale, shift):
    # Patches are built from channel-padded activations, so each of the 9 taps
    # occupies a Cp-wide slot along K; padded rows stay zero.
    _, _, cin, cout = w.shape
    cp, np_ = _rup(cin, _LANE), _rup(cout, _LANE)
    wf = w * scale
    wp = jnp.zeros((9 * cp, np_), jnp.float32)
    t = 0
    for ky in range(3):
        for kx in range(3):
            wp = wp.at[t * cp:t * cp + cin, :cout].set(wf[ky, kx])
            t += 1
    return {"w": wp.astype(jnp.bfloat16), "b": _pad_bias(shift, np_)}


def _pack_conv_transpose(w, scale, shift):
    # w: [4, 4, Cin, Cout]; per-phase stacked [4, 4*Cp, Np] weight matrix.
    _, _, cin, cout = w.shape
    cp, np_ = _rup(cin, _LANE), _rup(cout, _LANE)
    wf = w * scale
    wp = jnp.zeros((4, 4 * cp, np_), jnp.float32)
    for p, (ay, ax) in enumerate(((0, 0), (0, 1), (1, 0), (1, 1))):
        t = 0
        for ky, _dy in _CT_TAPS[ay]:
            for kx, _dx in _CT_TAPS[ax]:
                wp = wp.at[p, t * cp:t * cp + cin, :cout].set(wf[ky, kx])
                t += 1
    return {"w": wp.astype(jnp.bfloat16), "b": _pad_bias(shift, np_)}


# ---------------------------------------------------------------------------
# Deterministic synthetic parameters
# ---------------------------------------------------------------------------
def _conv_w(key, kh, kw, cin, cout):
    return jax.random.normal(key, (kh, kw, cin, cout),
                             jnp.float32) / math.sqrt(kh * kw * cin)


def _bn(key, c, eps=1e-5):
    k1, k2, k3, k4 = jax.random.split(key, 4)
    gamma = 1.0 + 0.1 * jax.random.normal(k1, (c,), jnp.float32)
    beta = 0.1 * jax.random.normal(k2, (c,), jnp.float32)
    mean = 0.1 * jax.random.normal(k3, (c,), jnp.float32)
    var = 1.0 + 0.1 * jax.random.uniform(k4, (c,), jnp.float32)
    return _fold_bn(gamma, beta, mean, var, eps)


def make_double_conv_up_c3_params(key, in_ch, mid_ch, out_ch):
    c1, c2 = in_ch + mid_ch, mid_ch
    c_ = c2 // 2
    ks = jax.random.split(key, 12)
    c3 = {
        "cv1": _pack_1x1(_conv_w(ks[0], 1, 1, c1, c_)[0, 0], *_bn(ks[1], c_)),
        "cv2": _pack_1x1(_conv_w(ks[2], 1, 1, c1, c_)[0, 0], *_bn(ks[3], c_)),
        "cv3": _pack_1x1_split(_conv_w(ks[4], 1, 1, 2 * c_, c2)[0, 0],
                               *_bn(ks[5], c2), split=c_),
        "m_cv1": _pack_1x1(_conv_w(ks[6], 1, 1, c_, c_)[0, 0], *_bn(ks[7], c_)),
        "m_cv2": _pack_3x3(_conv_w(ks[8], 3, 3, c_, c_), *_bn(ks[9], c_)),
    }
    up = _pack_conv_transpose(_conv_w(ks[10], 4, 4, c2, out_ch),
                              *_bn(ks[11], out_ch))
    return {"c3": c3, "up": up}


if __name__ == "__main__":
    IN_CH, MID_CH, OUT_CH = 16, 32, 16
    B, H, W = 2, 16, 16

    key = jax.random.PRNGKey(0)
    kparam, kx = jax.random.split(key)
    params = make_double_conv_up_c3_params(kparam, IN_CH, MID_CH, OUT_CH)
    # NHWC input (PyTorch equivalent would be NCHW [2, 48, 16, 16]).
    x = jax.random.normal(kx, (B, H, W, IN_CH + MID_CH), jnp.float32)

    fwd = jax.jit(functools.partial(double_conv_up_c3_forward, out_ch=OUT_CH))
    y = fwd(params, x)
    jax.block_until_ready(y)

    assert y.shape == (B, 2 * H, 2 * W, OUT_CH), y.shape
    assert bool(jnp.all(jnp.isfinite(y)))
    assert bool(jnp.all(y >= 0.0))      # ReLU output
    print("KERNEL_OK")
</pallas_src>

<mosaic_0001>
module attributes {stable_mosaic.version = 11 : i64} {
  func.func @_fused_mm_kernel(%arg0: i32, %arg1: memref<512x128xbf16, #tpu.memory_space<vmem>>, %arg2: memref<128x128xbf16, #tpu.memory_space<vmem>>, %arg3: memref<1x128xf32, #tpu.memory_space<vmem>>, %arg4: memref<512x128xbf16, #tpu.memory_space<vmem>>) attributes {dimension_semantics = [#tpu.dimension_semantics<parallel>], iteration_bounds = array<i64: 1>, scalar_prefetch = 0 : i64, scratch_operands = 0 : i64, tpu.core_type = #tpu.core_type<tc>, window_params = [{transform_indices = @transform_0, window_bounds = array<i64: 512, 128>}, {pipeline_mode = #tpu.pipeline_mode<synchronous>, transform_indices = @transform_1, window_bounds = array<i64: 128, 128>}, {pipeline_mode = #tpu.pipeline_mode<synchronous>, transform_indices = @transform_2, window_bounds = array<i64: 1, 128>}, {transform_indices = @transform_3, window_bounds = array<i64: 512, 128>}]} {
    %c0 = arith.constant 0 : index
    %c0_0 = arith.constant 0 : index
    %0 = vector.load %arg1[%c0, %c0_0] : memref<512x128xbf16, #tpu.memory_space<vmem>>, vector<512x128xbf16>
    %c0_1 = arith.constant 0 : index
    %c0_2 = arith.constant 0 : index
    %1 = vector.load %arg2[%c0_1, %c0_2] : memref<128x128xbf16, #tpu.memory_space<vmem>>, vector<128x128xbf16>
    %cst = arith.constant dense<0.000000e+00> : vector<512x128xf32>
    %2 = tpu.matmul %0, %1, %cst {dimension_numbers = #tpu.dot_dimension_numbers<[1], [0], [0], [1], [0, 0, 1, 1], [], []>} : vector<512x128xbf16>, vector<128x128xbf16>, vector<512x128xf32> -> vector<512x128xf32>
    %c0_3 = arith.constant 0 : index
    %c0_4 = arith.constant 0 : index
    %3 = vector.load %arg3[%c0_3, %c0_4] : memref<1x128xf32, #tpu.memory_space<vmem>>, vector<1x128xf32>
    %4 = vector.broadcast %3 : vector<1x128xf32> to vector<512x128xf32>
    %5 = arith.addf %2, %4 : vector<512x128xf32>
    %cst_5 = arith.constant 0.000000e+00 : f32
    %6 = vector.broadcast %cst_5 : f32 to vector<512x128xf32>
    %7 = arith.subf %6, %5 : vector<512x128xf32>
    %8 = math.exp %7 : vector<512x128xf32>
    %cst_6 = arith.constant 1.000000e+00 : f32
    %9 = vector.broadcast %cst_6 : f32 to vector<512x128xf32>
    %10 = arith.addf %9, %8 : vector<512x128xf32>
    %11 = tpu.reciprocal %10 {approx = true} : vector<512x128xf32> -> vector<512x128xf32>
    %12 = arith.mulf %5, %11 : vector<512x128xf32>
    %13 = arith.truncf %12 : vector<512x128xf32> to vector<512x128xbf16>
    %c0_7 = arith.constant 0 : index
    %c0_8 = arith.constant 0 : index
    %14 = vector.load %arg4[%c0_7, %c0_8] : memref<512x128xbf16, #tpu.memory_space<vmem>>, vector<512x128xbf16>
    tpu.vector_store %arg4[%c0_7, %c0_8], %13 {strides = array<i32>} : memref<512x128xbf16, #tpu.memory_space<vmem>>, vector<512x128xbf16>,
    return
  }
  func.func @transform_0(%arg0: i32) -> (i32, i32) {
    %c0_i32 = arith.constant 0 : i32
    %c0_i32_0 = arith.constant 0 : i32
    return %arg0, %c0_i32 : i32, i32
  }
  func.func @transform_1(%arg0: i32) -> (i32, i32) {
    %c0_i32 = arith.constant 0 : i32
    %c0_i32_0 = arith.constant 0 : i32
    %c0_i32_1 = arith.constant 0 : i32
    return %c0_i32, %c0_i32_0 : i32, i32
  }
  func.func @transform_2(%arg0: i32) -> (i32, i32) {
    %c0_i32 = arith.constant 0 : i32
    %c0_i32_0 = arith.constant 0 : i32
    %c0_i32_1 = arith.constant 0 : i32
    return %c0_i32, %c0_i32_0 : i32, i32
  }
  func.func @transform_3(%arg0: i32) -> (i32, i32) {
    %c0_i32 = arith.constant 0 : i32
    %c0_i32_0 = arith.constant 0 : i32
    return %arg0, %c0_i32 : i32, i32
  }
}

module attributes {stable_mosaic.version = 11 : i64} {
  func.func @_fused_mm_kernel(%arg0: i32, %arg1: memref<512x1152xbf16, #tpu.memory_space<vmem>>, %arg2: memref<1152x128xbf16, #tpu.memory_space<vmem>>, %arg3: memref<1x128xf32, #tpu.memory_space<vmem>>, %arg4: memref<512x128xbf16, #tpu.memory_space<vmem>>, %arg5: memref<512x128xbf16, #tpu.memory_space<vmem>>) attributes {dimension_semantics = [#tpu.dimension_semantics<parallel>], iteration_bounds = array<i64: 1>, scalar_prefetch = 0 : i64, scratch_operands = 0 : i64, tpu.core_type = #tpu.core_type<tc>, window_params = [{transform_indices = @transform_0, window_bounds = array<i64: 512, 1152>}, {pipeline_mode = #tpu.pipeline_mode<synchronous>, transform_indices = @transform_1, window_bounds = array<i64: 1152, 128>}, {pipeline_mode = #tpu.pipeline_mode<synchronous>, transform_indices = @transform_2, window_bounds = array<i64: 1, 128>}, {transform_indices = @transform_3, window_bounds = array<i64: 512, 128>}, {transform_indices = @transform_4, window_bounds = array<i64: 512, 128>}]} {
    %c0 = arith.constant 0 : index
    %c0_0 = arith.constant 0 : index
    %0 = vector.load %arg1[%c0, %c0_0] : memref<512x1152xbf16, #tpu.memory_space<vmem>>, vector<512x1152xbf16>
    %c0_1 = arith.constant 0 : index
    %c0_2 = arith.constant 0 : index
    %1 = vector.load %arg2[%c0_1, %c0_2] : memref<1152x128xbf16, #tpu.memory_space<vmem>>, vector<1152x128xbf16>
    %cst = arith.constant dense<0.000000e+00> : vector<512x128xf32>
    %2 = tpu.matmul %0, %1, %cst {dimension_numbers = #tpu.dot_dimension_numbers<[1], [0], [0], [1], [0, 0, 1, 1], [], []>} : vector<512x1152xbf16>, vector<1152x128xbf16>, vector<512x128xf32> -> vector<512x128xf32>
    %c0_3 = arith.constant 0 : index
    %c0_4 = arith.constant 0 : index
    %3 = vector.load %arg3[%c0_3, %c0_4] : memref<1x128xf32, #tpu.memory_space<vmem>>, vector<1x128xf32>
    %4 = vector.broadcast %3 : vector<1x128xf32> to vector<512x128xf32>
    %5 = arith.addf %2, %4 : vector<512x128xf32>
    %cst_5 = arith.constant 0.000000e+00 : f32
    %6 = vector.broadcast %cst_5 : f32 to vector<512x128xf32>
    %7 = arith.subf %6, %5 : vector<512x128xf32>
    %8 = math.exp %7 : vector<512x128xf32>
    %cst_6 = arith.constant 1.000000e+00 : f32
    %9 = vector.broadcast %cst_6 : f32 to vector<512x128xf32>
    %10 = arith.addf %9, %8 : vector<512x128xf32>
    %11 = tpu.reciprocal %10 {approx = true} : vector<512x128xf32> -> vector<512x128xf32>
    %12 = arith.mulf %5, %11 : vector<512x128xf32>
    %c0_7 = arith.constant 0 : index
    %c0_8 = arith.constant 0 : index
    %13 = vector.load %arg4[%c0_7, %c0_8] : memref<512x128xbf16, #tpu.memory_space<vmem>>, vector<512x128xbf16>
    %14 = arith.extf %13 : vector<512x128xbf16> to vector<512x128xf32>
    %15 = arith.addf %12, %14 : vector<512x128xf32>
    %16 = arith.truncf %15 : vector<512x128xf32> to vector<512x128xbf16>
    %c0_9 = arith.constant 0 : index
    %c0_10 = arith.constant 0 : index
    %17 = vector.load %arg5[%c0_9, %c0_10] : memref<512x128xbf16, #tpu.memory_space<vmem>>, vector<512x128xbf16>
    tpu.vector_store %arg5[%c0_9, %c0_10], %16 {strides = array<i32>} : memref<512x128xbf16, #tpu.memory_space<vmem>>, vector<512x128xbf16>,
    return
  }
  func.func @transform_0(%arg0: i32) -> (i32, i32) {
    %c0_i32 = arith.constant 0 : i32
    %c0_i32_0 = arith.constant 0 : i32
    return %arg0, %c0_i32 : i32, i32
  }
  func.func @transform_1(%arg0: i32) -> (i32, i32) {
    %c0_i32 = arith.constant 0 : i32
    %c0_i32_0 = arith.constant 0 : i32
    %c0_i32_1 = arith.constant 0 : i32
    return %c0_i32, %c0_i32_0 : i32, i32
  }
  func.func @transform_2(%arg0: i32) -> (i32, i32) {
    %c0_i32 = arith.constant 0 : i32
    %c0_i32_0 = arith.constant 0 : i32
    %c0_i32_1 = arith.constant 0 : i32
    return %c0_i32, %c0_i32_0 : i32, i32
  }
  func.func @transform_3(%arg0: i32) -> (i32, i32) {
    %c0_i32 = arith.constant 0 : i32
    %c0_i32_0 = arith.constant 0 : i32
    return %arg0, %c0_i32 : i32, i32
  }
  func.func @transform_4(%arg0: i32) -> (i32, i32) {
    %c0_i32 = arith.constant 0 : i32
    %c0_i32_0 = arith.constant 0 : i32
    return %arg0, %c0_i32 : i32, i32
  }
}

module attributes {stable_mosaic.version = 11 : i64} {
  func.func @_fused_mm_kernel(%arg0: i32, %arg1: memref<512x128xbf16, #tpu.memory_space<vmem>>, %arg2: memref<512x128xbf16, #tpu.memory_space<vmem>>, %arg3: memref<128x128xbf16, #tpu.memory_space<vmem>>, %arg4: memref<128x128xbf16, #tpu.memory_space<vmem>>, %arg5: memref<1x128xf32, #tpu.memory_space<vmem>>, %arg6: memref<512x128xbf16, #tpu.memory_space<vmem>>) attributes {dimension_semantics = [#tpu.dimension_semantics<parallel>], iteration_bounds = array<i64: 1>, scalar_prefetch = 0 : i64, scratch_operands = 0 : i64, tpu.core_type = #tpu.core_type<tc>, window_params = [{transform_indices = @transform_0, window_bounds = array<i64: 512, 128>}, {transform_indices = @transform_1, window_bounds = array<i64: 512, 128>}, {pipeline_mode = #tpu.pipeline_mode<synchronous>, transform_indices = @transform_2, window_bounds = array<i64: 128, 128>}, {pipeline_mode = #tpu.pipeline_mode<synchronous>, transform_indices = @transform_3, window_bounds = array<i64: 128, 128>}, {pipeline_mode = #tpu.pipeline_mode<synchronous>, transform_indices = @transform_4, window_bounds = array<i64: 1, 128>}, {transform_indices = @transform_5, window_bounds = array<i64: 512, 128>}]} {
    %c0 = arith.constant 0 : index
    %c0_0 = arith.constant 0 : index
    %0 = vector.load %arg1[%c0, %c0_0] : memref<512x128xbf16, #tpu.memory_space<vmem>>, vector<512x128xbf16>
    %c0_1 = arith.constant 0 : index
    %c0_2 = arith.constant 0 : index
    %1 = vector.load %arg3[%c0_1, %c0_2] : memref<128x128xbf16, #tpu.memory_space<vmem>>, vector<128x128xbf16>
    %cst = arith.constant dense<0.000000e+00> : vector<512x128xf32>
    %2 = tpu.matmul %0, %1, %cst {dimension_numbers = #tpu.dot_dimension_numbers<[1], [0], [0], [1], [0, 0, 1, 1], [], []>} : vector<512x128xbf16>, vector<128x128xbf16>, vector<512x128xf32> -> vector<512x128xf32>
    %c0_3 = arith.constant 0 : index
    %c0_4 = arith.constant 0 : index
    %3 = vector.load %arg2[%c0_3, %c0_4] : memref<512x128xbf16, #tpu.memory_space<vmem>>, vector<512x128xbf16>
    %c0_5 = arith.constant 0 : index
    %c0_6 = arith.constant 0 : index
    %4 = vector.load %arg4[%c0_5, %c0_6] : memref<128x128xbf16, #tpu.memory_space<vmem>>, vector<128x128xbf16>
    %cst_7 = arith.constant dense<0.000000e+00> : vector<512x128xf32>
    %5 = tpu.matmul %3, %4, %cst_7 {dimension_numbers = #tpu.dot_dimension_numbers<[1], [0], [0], [1], [0, 0, 1, 1], [], []>} : vector<512x128xbf16>, vector<128x128xbf16>, vector<512x128xf32> -> vector<512x128xf32>
    %6 = arith.addf %2, %5 : vector<512x128xf32>
    %c0_8 = arith.constant 0 : index
    %c0_9 = arith.constant 0 : index
    %7 = vector.load %arg5[%c0_8, %c0_9] : memref<1x128xf32, #tpu.memory_space<vmem>>, vector<1x128xf32>
    %8 = vector.broadcast %7 : vector<1x128xf32> to vector<512x128xf32>
    %9 = arith.addf %6, %8 : vector<512x128xf32>
    %cst_10 = arith.constant 0.000000e+00 : f32
    %10 = vector.broadcast %cst_10 : f32 to vector<512x128xf32>
    %11 = arith.subf %10, %9 : vector<512x128xf32>
    %12 = math.exp %11 : vector<512x128xf32>
    %cst_11 = arith.constant 1.000000e+00 : f32
    %13 = vector.broadcast %cst_11 : f32 to vector<512x128xf32>
    %14 = arith.addf %13, %12 : vector<512x128xf32>
    %15 = tpu.reciprocal %14 {approx = true} : vector<512x128xf32> -> vector<512x128xf32>
    %16 = arith.mulf %9, %15 : vector<512x128xf32>
    %17 = arith.truncf %16 : vector<512x128xf32> to vector<512x128xbf16>
    %c0_12 = arith.constant 0 : index
    %c0_13 = arith.constant 0 : index
    %18 = vector.load %arg6[%c0_12, %c0_13] : memref<512x128xbf16, #tpu.memory_space<vmem>>, vector<512x128xbf16>
    tpu.vector_store %arg6[%c0_12, %c0_13], %17 {strides = array<i32>} : memref<512x128xbf16, #tpu.memory_space<vmem>>, vector<512x128xbf16>,
    return
  }
  func.func @transform_0(%arg0: i32) -> (i32, i32) {
    %c0_i32 = arith.constant 0 : i32
    %c0_i32_0 = arith.constant 0 : i32
    return %arg0, %c0_i32 : i32, i32
  }
  func.func @transform_1(%arg0: i32) -> (i32, i32) {
    %c0_i32 = arith.constant 0 : i32
    %c0_i32_0 = arith.constant 0 : i32
    return %arg0, %c0_i32 : i32, i32
  }
  func.func @transform_2(%arg0: i32) -> (i32, i32) {
    %c0_i32 = arith.constant 0 : i32
    %c0_i32_0 = arith.constant 0 : i32
    %c0_i32_1 = arith.constant 0 : i32
    return %c0_i32, %c0_i32_0 : i32, i32
  }
  func.func @transform_3(%arg0: i32) -> (i32, i32) {
    %c0_i32 = arith.constant 0 : i32
    %c0_i32_0 = arith.constant 0 : i32
    %c0_i32_1 = arith.constant 0 : i32
    return %c0_i32, %c0_i32_0 : i32, i32
  }
  func.func @transform_4(%arg0: i32) -> (i32, i32) {
    %c0_i32 = arith.constant 0 : i32
    %c0_i32_0 = arith.constant 0 : i32
    %c0_i32_1 = arith.constant 0 : i32
    return %c0_i32, %c0_i32_0 : i32, i32
  }
  func.func @transform_5(%arg0: i32) -> (i32, i32) {
    %c0_i32 = arith.constant 0 : i32
    %c0_i32_0 = arith.constant 0 : i32
    return %arg0, %c0_i32 : i32, i32
  }
}

module attributes {stable_mosaic.version = 11 : i64} {
  func.func @_ct_phase_kernel(%arg0: i32, %arg1: i32, %arg2: memref<1x512x512xbf16, #tpu.memory_space<vmem>>, %arg3: memref<1x512x128xbf16, #tpu.memory_space<vmem>>, %arg4: memref<1x128xf32, #tpu.memory_space<vmem>>, %arg5: memref<1x512x128xf32, #tpu.memory_space<vmem>>) attributes {dimension_semantics = [#tpu.dimension_semantics<parallel>, #tpu.dimension_semantics<parallel>], iteration_bounds = array<i64: 4, 1>, scalar_prefetch = 0 : i64, scratch_operands = 0 : i64, tpu.core_type = #tpu.core_type<tc>, window_params = [{transform_indices = @transform_0, window_bounds = array<i64: 1, 512, 512>}, {transform_indices = @transform_1, window_bounds = array<i64: 1, 512, 128>}, {pipeline_mode = #tpu.pipeline_mode<synchronous>, transform_indices = @transform_2, window_bounds = array<i64: 1, 128>}, {transform_indices = @transform_3, window_bounds = array<i64: 1, 512, 128>}]} {
    %c0 = arith.constant 0 : index
    %c0_0 = arith.constant 0 : index
    %c0_1 = arith.constant 0 : index
    %0 = vector.load %arg2[%c0, %c0_0, %c0_1] : memref<1x512x512xbf16, #tpu.memory_space<vmem>>, vector<1x512x512xbf16>
    %1 = vector.shape_cast %0 : vector<1x512x512xbf16> to vector<512x512xbf16>
    %c0_2 = arith.constant 0 : index
    %c0_3 = arith.constant 0 : index
    %c0_4 = arith.constant 0 : index
    %2 = vector.load %arg3[%c0_2, %c0_3, %c0_4] : memref<1x512x128xbf16, #tpu.memory_space<vmem>>, vector<1x512x128xbf16>
    %3 = vector.shape_cast %2 : vector<1x512x128xbf16> to vector<512x128xbf16>
    %cst = arith.constant dense<0.000000e+00> : vector<512x128xf32>
    %4 = tpu.matmul %1, %3, %cst {dimension_numbers = #tpu.dot_dimension_numbers<[1], [0], [0], [1], [0, 0, 1, 1], [], []>} : vector<512x512xbf16>, vector<512x128xbf16>, vector<512x128xf32> -> vector<512x128xf32>
    %c0_5 = arith.constant 0 : index
    %c0_6 = arith.constant 0 : index
    %5 = vector.load %arg4[%c0_5, %c0_6] : memref<1x128xf32, #tpu.memory_space<vmem>>, vector<1x128xf32>
    %6 = vector.broadcast %5 : vector<1x128xf32> to vector<512x128xf32>
    %7 = arith.addf %4, %6 : vector<512x128xf32>
    %cst_7 = arith.constant 0.000000e+00 : f32
    %8 = vector.broadcast %cst_7 : f32 to vector<512x128xf32>
    %9 = arith.maximumf %7, %8 : vector<512x128xf32>
    %c0_8 = arith.constant 0 : index
    %c0_9 = arith.constant 0 : index
    %c0_10 = arith.constant 0 : index
    %10 = vector.load %arg5[%c0_8, %c0_9, %c0_10] : memref<1x512x128xf32, #tpu.memory_space<vmem>>, vector<1x512x128xf32>
    %11 = vector.shape_cast %10 : vector<1x512x128xf32> to vector<512x128xf32>
    %12 = vector.shape_cast %9 : vector<512x128xf32> to vector<1x512x128xf32>
    tpu.vector_store %arg5[%c0_8, %c0_9, %c0_10], %12 {strides = array<i32>} : memref<1x512x128xf32, #tpu.memory_space<vmem>>, vector<1x512x128xf32>,
    return
  }
  func.func @transform_0(%arg0: i32, %arg1: i32) -> (i32, i32, i32) {
    %c0_i32 = arith.constant 0 : i32
    %c0_i32_0 = arith.constant 0 : i32
    return %arg0, %arg1, %c0_i32 : i32, i32, i32
  }
  func.func @transform_1(%arg0: i32, %arg1: i32) -> (i32, i32, i32) {
    %c0_i32 = arith.constant 0 : i32
    %c0_i32_0 = arith.constant 0 : i32
    %c0_i32_1 = arith.constant 0 : i32
    return %arg0, %c0_i32, %c0_i32_0 : i32, i32, i32
  }
  func.func @transform_2(%arg0: i32, %arg1: i32) -> (i32, i32) {
    %c0_i32 = arith.constant 0 : i32
    %c0_i32_0 = arith.constant 0 : i32
    %c0_i32_1 = arith.constant 0 : i32
    return %c0_i32, %c0_i32_0 : i32, i32
  }
  func.func @transform_3(%arg0: i32, %arg1: i32) -> (i32, i32, i32) {
    %c0_i32 = arith.constant 0 : i32
    %c0_i32_0 = arith.constant 0 : i32
    return %arg0, %arg1, %c0_i32 : i32, i32, i32
  }
}

</mosaic_0001>

<llo_original>
// kernel: double_conv_up_c3_forward.6
$region0: #{double_conv_up_c3_forward.6}
  #allocation0 [shape = 'u32[]', space=smem, size = 0x4, offset = 0x4, fixed_abs, tag = 'smem constant byte address 0x4 - core index']
  #allocation1 [shape = 'u32[144,128]{1,0:T(1,128)}', space=vmem, size = 0x12000, scoped, tag = 'internal scratch']
  %s0 = inlined_call_operand.vmem [shape: bf16[512,128], index: 0, kind: input, shape index: {}]
  %s1 = inlined_call_operand.hbm [shape: bf16[128,128], index: 1, kind: input, shape index: {}]
  %s2 = inlined_call_operand.hbm [shape: f32[1,128], index: 2, kind: input, shape index: {}]
  %s3 = inlined_call_operand.vmem [shape: bf16[512,128], index: 3, kind: output, shape index: {}]
  %s4 = sld [smem:[#allocation0]]
  $region30: #{double_conv_up_c3_forward.6} parent=0
    _
  %s6 = ssub.s32 1, %s4
  %s7 = scalar_select 0, %s6, %s4
  $region1: #{double_conv_up_c3_forward.6} parent=0
    #allocation2 [shape = 'u8[32768]{0}', space=vmem, size = 0x8000, scoped, tag = 'input window, operand 1, single buffered']
    #allocation3 [shape = 's32[1]{0}', space=sflag, size = 0x4, scoped, tag = 'scoped memory for double_conv_up_c3_forward.6']
    #allocation4 [shape = 'u8[512]{0}', space=vmem, size = 0x400, scoped, tag = 'input window, operand 2, single buffered']
    #allocation5 [shape = 's32[1]{0}', space=sflag, size = 0x4, scoped, tag = 'scoped memory for double_conv_up_c3_forward.6']
    %8 = vsyncpa [#allocation3], 0
    %9 = vsyncpa [#allocation5], 0
    // Predicated region
    $region2: #{double_conv_up_c3_forward.6} parent=1 // pred_check
      _
    $region3: #{double_conv_up_c3_forward.6} parent=1 // pred_check_branch
      %11 = sbr.rel (0) target = $region5
    $region4: #{double_conv_up_c3_forward.6} parent=1 // pred_region
      _
    $region5: #{double_conv_up_c3_forward.6} parent=1 // pred_fallthru
      _
    // Predicated region
    $region6: #{double_conv_up_c3_forward.6} parent=1 // pred_check
      _
    $region7: #{double_conv_up_c3_forward.6} parent=1 // pred_check_branch
      %13 = sbr.rel (0) target = $region9
    $region8: #{double_conv_up_c3_forward.6} parent=1 // pred_region
      %s15 = ssub.s32 1024, 1024
      %16 = vsyncadd [#allocation3], %s15
      %s17 = sshll.u32 [#allocation2], 4
      %s18 = int_to_ptr.vmem [resolvable:$true] %s17
      %23 = dma.hbm_to_vmem [thread:$0]  %s1, 1024, %s18, [#allocation3], 64, 64, 4
    $region9: #{double_conv_up_c3_forward.6} parent=1 // pred_fallthru
      _
    // Predicated region
    $region10: #{double_conv_up_c3_forward.6} parent=1 // pred_check
      _
    $region11: #{double_conv_up_c3_forward.6} parent=1 // pred_check_branch
      %25 = sbr.rel (0) target = $region13
    $region12: #{double_conv_up_c3_forward.6} parent=1 // pred_region
      %s27 = ssub.s32 16, 16
      %28 = vsyncadd [#allocation5], %s27
      %s30 = sshll.u32 [#allocation4], 4
      %s31 = int_to_ptr.vmem [resolvable:$true] %s30
      %33 = dma.hbm_to_vmem [thread:$0]  %s2, 16, %s31, [#allocation5]
    $region13: #{double_conv_up_c3_forward.6} parent=1 // pred_fallthru
      _
    // Predicated region
    $region14: #{double_conv_up_c3_forward.6} parent=1 // pred_check
      _
    $region15: #{double_conv_up_c3_forward.6} parent=1 // pred_check_branch
      %35 = sbr.rel (0) target = $region17
    $region16: #{double_conv_up_c3_forward.6} parent=1 // pred_region
      %36 = dma.done [#allocation3], 1024
    $region17: #{double_conv_up_c3_forward.6} parent=1 // pred_fallthru
      _
    // Predicated region
    $region18: #{double_conv_up_c3_forward.6} parent=1 // pred_check
      _
    $region19: #{double_conv_up_c3_forward.6} parent=1 // pred_check_branch
      %38 = sbr.rel (0) target = $region21
    $region20: #{double_conv_up_c3_forward.6} parent=1 // pred_region
      %39 = dma.done [#allocation5], 16
    $region21: #{double_conv_up_c3_forward.6} parent=1 // pred_fallthru
      _
    %v41 = vld [vmem:[%s0] sm:$0xf]
    %v42 = vld [vmem:[%s0 + $0x4] sm:$0xf]
    %v43 = vld [vmem:[%s0 + $0x8] sm:$0xf]
    %v44 = vld [vmem:[%s0 + $0xc] sm:$0xf]
    %v45 = vld [vmem:[%s0 + $0x10] sm:$0xf]
    %v46 = vld [vmem:[%s0 + $0x14] sm:$0xf]
    %v47 = vld [vmem:[%s0 + $0x18] sm:$0xf]
    %v48 = vld [vmem:[%s0 + $0x1c] sm:$0xf]
    %v49 = vld [vmem:[%s0 + $0x20] sm:$0xf]
    %v50 = vld [vmem:[%s0 + $0x24] sm:$0xf]
    %v51 = vld [vmem:[%s0 + $0x28] sm:$0xf]
    %v52 = vld [vmem:[%s0 + $0x2c] sm:$0xf]
    %v53 = vld [vmem:[%s0 + $0x30] sm:$0xf]
    %v54 = vld [vmem:[%s0 + $0x34] sm:$0xf]
    %v55 = vld [vmem:[%s0 + $0x38] sm:$0xf]
    %v56 = vld [vmem:[%s0 + $0x3c] sm:$0xf]
    %v57 = vld [vmem:[%s0 + $0x40] sm:$0xf]
    %v58 = vld [vmem:[%s0 + $0x44] sm:$0xf]
    %v59 = vld [vmem:[%s0 + $0x48] sm:$0xf]
    %v60 = vld [vmem:[%s0 + $0x4c] sm:$0xf]
    %v61 = vld [vmem:[%s0 + $0x50] sm:$0xf]
    %v62 = vld [vmem:[%s0 + $0x54] sm:$0xf]
    %v63 = vld [vmem:[%s0 + $0x58] sm:$0xf]
    %v64 = vld [vmem:[%s0 + $0x5c] sm:$0xf]
    %v65 = vld [vmem:[%s0 + $0x60] sm:$0xf]
    %v66 = vld [vmem:[%s0 + $0x64] sm:$0xf]
    %v67 = vld [vmem:[%s0 + $0x68] sm:$0xf]
    %v68 = vld [vmem:[%s0 + $0x6c] sm:$0xf]
    %v69 = vld [vmem:[%s0 + $0x70] sm:$0xf]
    %v70 = vld [vmem:[%s0 + $0x74] sm:$0xf]
    %v71 = vld [vmem:[%s0 + $0x78] sm:$0xf]
    %v72 = vld [vmem:[%s0 + $0x7c] sm:$0xf]
    %v73 = vld [vmem:[%s0 + $0x80] sm:$0xf]
    %v74 = vld [vmem:[%s0 + $0x84] sm:$0xf]
    %v75 = vld [vmem:[%s0 + $0x88] sm:$0xf]
    %v76 = vld [vmem:[%s0 + $0x8c] sm:$0xf]
    %v77 = vld [vmem:[%s0 + $0x90] sm:$0xf]
    %v78 = vld [vmem:[%s0 + $0x94] sm:$0xf]
    %v79 = vld [vmem:[%s0 + $0x98] sm:$0xf]
    %v80 = vld [vmem:[%s0 + $0x9c] sm:$0xf]
    %v81 = vld [vmem:[%s0 + $0xa0] sm:$0xf]
    %v82 = vld [vmem:[%s0 + $0xa4] sm:$0xf]
    %v83 = vld [vmem:[%s0 + $0xa8] sm:$0xf]
    %v84 = vld [vmem:[%s0 + $0xac] sm:$0xf]
    %v85 = vld [vmem:[%s0 + $0xb0] sm:$0xf]
    %v86 = vld [vmem:[%s0 + $0xb4] sm:$0xf]
    %v87 = vld [vmem:[%s0 + $0xb8] sm:$0xf]
    %v88 = vld [vmem:[%s0 + $0xbc] sm:$0xf]
    %v89 = vld [vmem:[%s0 + $0xc0] sm:$0xf]
    %v90 = vld [vmem:[%s0 + $0xc4] sm:$0xf]
    %v91 = vld [vmem:[%s0 + $0xc8] sm:$0xf]
    %v92 = vld [vmem:[%s0 + $0xcc] sm:$0xf]
    %v93 = vld [vmem:[%s0 + $0xd0] sm:$0xf]
    %v94 = vld [vmem:[%s0 + $0xd4] sm:$0xf]
    %v95 = vld [vmem:[%s0 + $0xd8] sm:$0xf]
    %v96 = vld [vmem:[%s0 + $0xdc] sm:$0xf]
    %v97 = vld [vmem:[%s0 + $0xe0] sm:$0xf]
    %v98 = vld [vmem:[%s0 + $0xe4] sm:$0xf]
    %v99 = vld [vmem:[%s0 + $0xe8] sm:$0xf]
    %v100 = vld [vmem:[%s0 + $0xec] sm:$0xf]
    %v101 = vld [vmem:[%s0 + $0xf0] sm:$0xf]
    %v102 = vld [vmem:[%s0 + $0xf4] sm:$0xf]
    %v103 = vld [vmem:[%s0 + $0xf8] sm:$0xf]
    %v104 = vld [vmem:[%s0 + $0xfc] sm:$0xf]
    %v105 = vld [vmem:[#allocation2] sm:$0xf]
    %v106 = vld [vmem:[#allocation2 + $0x4] sm:$0xf]
    %v107 = vld [vmem:[#allocation2 + $0x8] sm:$0xf]
    %v108 = vld [vmem:[#allocation2 + $0xc] sm:$0xf]
    %v109 = vld [vmem:[#allocation2 + $0x10] sm:$0xf]
    %v110 = vld [vmem:[#allocation2 + $0x14] sm:$0xf]
    %v111 = vld [vmem:[#allocation2 + $0x18] sm:$0xf]
    %v112 = vld [vmem:[#allocation2 + $0x1c] sm:$0xf]
    %v113 = vld [vmem:[#allocation2 + $0x20] sm:$0xf]
    %v114 = vld [vmem:[#allocation2 + $0x24] sm:$0xf]
    %v115 = vld [vmem:[#allocation2 + $0x28] sm:$0xf]
    %v116 = vld [vmem:[#allocation2 + $0x2c] sm:$0xf]
    %v117 = vld [vmem:[#allocation2 + $0x30] sm:$0xf]
    %v118 = vld [vmem:[#allocation2 + $0x34] sm:$0xf]
    %v119 = vld [vmem:[#allocation2 + $0x38] sm:$0xf]
    %v120 = vld [vmem:[#allocation2 + $0x3c] sm:$0xf]
    %v121 = vld [vmem:[#allocation4] sm:$0x1]
    %v123 = vlaneseq
    %v124 = vshrl.u32 %v123, 7
    %v125 = vsub.s32 0, %v124
    %v126 = vrot.slane %v121, %v125
    %v192 = vunpack.c.l.b16 %v41
    %v193 = vunpack.c.l.b16 %v42
    %v194 = vunpack.c.l.b16 %v43
    %v195 = vunpack.c.l.b16 %v44
    %v196 = vunpack.c.l.b16 %v45
    %v197 = vunpack.c.l.b16 %v46
    %v198 = vunpack.c.l.b16 %v47
    %v199 = vunpack.c.l.b16 %v48
    %v200 = vunpack.c.l.b16 %v49
    %v201 = vunpack.c.l.b16 %v50
    %v202 = vunpack.c.l.b16 %v51
    %v203 = vunpack.c.l.b16 %v52
    %v204 = vunpack.c.l.b16 %v53
    %v205 = vunpack.c.l.b16 %v54
    %v206 = vunpack.c.l.b16 %v55
    %v207 = vunpack.c.l.b16 %v56
    %v208 = vunpack.c.l.b16 %v57
    %v209 = vunpack.c.l.b16 %v58
    %v210 = vunpack.c.l.b16 %v59
    %v211 = vunpack.c.l.b16 %v60
    %v212 = vunpack.c.l.b16 %v61
    %v213 = vunpack.c.l.b16 %v62
    %v214 = vunpack.c.l.b16 %v63
    %v215 = vunpack.c.l.b16 %v64
    %v216 = vunpack.c.l.b16 %v65
    %v217 = vunpack.c.l.b16 %v66
    %v218 = vunpack.c.l.b16 %v67
    %v219 = vunpack.c.l.b16 %v68
    %v220 = vunpack.c.l.b16 %v69
    %v221 = vunpack.c.l.b16 %v70
    %v222 = vunpack.c.l.b16 %v71
    %v223 = vunpack.c.l.b16 %v72
    %v224 = vunpack.c.l.b16 %v73
    %v225 = vunpack.c.l.b16 %v74
    %v226 = vunpack.c.l.b16 %v75
    %v227 = vunpack.c.l.b16 %v76
    %v228 = vunpack.c.l.b16 %v77
    %v229 = vunpack.c.l.b16 %v78
    %v230 = vunpack.c.l.b16 %v79
    %v231 = vunpack.c.l.b16 %v80
    %v232 = vunpack.c.l.b16 %v81
    %v233 = vunpack.c.l.b16 %v82
    %v234 = vunpack.c.l.b16 %v83
    %v235 = vunpack.c.l.b16 %v84
    %v236 = vunpack.c.l.b16 %v85
    %v237 = vunpack.c.l.b16 %v86
    %v238 = vunpack.c.l.b16 %v87
    %v239 = vunpack.c.l.b16 %v88
    %v240 = vunpack.c.l.b16 %v89
    %v241 = vunpack.c.l.b16 %v90
    %v242 = vunpack.c.l.b16 %v91
    %v243 = vunpack.c.l.b16 %v92
    %v244 = vunpack.c.l.b16 %v93
    %v245 = vunpack.c.l.b16 %v94
    %v246 = vunpack.c.l.b16 %v95
    %v247 = vunpack.c.l.b16 %v96
    %v248 = vunpack.c.l.b16 %v97
    %v249 = vunpack.c.l.b16 %v98
    %v250 = vunpack.c.l.b16 %v99
    %v251 = vunpack.c.l.b16 %v100
    %v252 = vunpack.c.l.b16 %v101
    %v253 = vunpack.c.l.b16 %v102
    %v254 = vunpack.c.l.b16 %v103
    %v255 = vunpack.c.l.b16 %v104
    %v256 = vpack.c.b16 %v193, %v192
    %v257 = vpack.c.b16 %v195, %v194
    %v258 = vpack.c.b16 %v197, %v196
    %v259 = vpack.c.b16 %v199, %v198
    %v260 = vpack.c.b16 %v201, %v200
    %v261 = vpack.c.b16 %v203, %v202
    %v262 = vpack.c.b16 %v205, %v204
    %v263 = vpack.c.b16 %v207, %v206
    %v264 = vpack.c.b16 %v209, %v208
    %v265 = vpack.c.b16 %v211, %v210
    %v266 = vpack.c.b16 %v213, %v212
    %v267 = vpack.c.b16 %v215, %v214
    %v268 = vpack.c.b16 %v217, %v216
    %v269 = vpack.c.b16 %v219, %v218
    %v270 = vpack.c.b16 %v221, %v220
    %v271 = vpack.c.b16 %v223, %v222
    %v272 = vpack.c.b16 %v225, %v224
    %v273 = vpack.c.b16 %v227, %v226
    %v274 = vpack.c.b16 %v229, %v228
    %v275 = vpack.c.b16 %v231, %v230
    %v276 = vpack.c.b16 %v233, %v232
    %v277 = vpack.c.b16 %v235, %v234
    %v278 = vpack.c.b16 %v237, %v236
    %v279 = vpack.c.b16 %v239, %v238
    %v280 = vpack.c.b16 %v241, %v240
    %v281 = vpack.c.b16 %v243, %v242
    %v282 = vpack.c.b16 %v245, %v244
    %v283 = vpack.c.b16 %v247, %v246
    %v284 = vpack.c.b16 %v249, %v248
    %v285 = vpack.c.b16 %v251, %v250
    %v286 = vpack.c.b16 %v253, %v252
    %v287 = vpack.c.b16 %v255, %v254
    %v336 = vunpack.c.l.b16 %v105
    %v337 = vunpack.c.l.b16 %v106
    %v338 = vunpack.c.l.b16 %v107
    %v339 = vunpack.c.l.b16 %v108
    %v340 = vunpack.c.l.b16 %v109
    %v341 = vunpack.c.l.b16 %v110
    %v342 = vunpack.c.l.b16 %v111
    %v343 = vunpack.c.l.b16 %v112
    %v344 = vunpack.c.l.b16 %v113
    %v345 = vunpack.c.l.b16 %v114
    %v346 = vunpack.c.l.b16 %v115
    %v347 = vunpack.c.l.b16 %v116
    %v348 = vunpack.c.l.b16 %v117
    %v349 = vunpack.c.l.b16 %v118
    %v350 = vunpack.c.l.b16 %v119
    %v351 = vunpack.c.l.b16 %v120
    %v352 = vpack.c.b16 %v337, %v336
    %v353 = vpack.c.b16 %v339, %v338
    %v354 = vpack.c.b16 %v341, %v340
    %v355 = vpack.c.b16 %v343, %v342
    %v356 = vpack.c.b16 %v345, %v344
    %v357 = vpack.c.b16 %v347, %v346
    %v358 = vpack.c.b16 %v349, %v348
    %v359 = vpack.c.b16 %v351, %v350
    %368 = vmatprep.subr.bf16.mxu0 0
    %369 = vmatpush1.bf16.msra.mxu0 %v359
    %370 = vmatprep.subr.bf16.mxu0 0
    %371 = vmatpush1.bf16.msra.mxu0 %v358
    %372 = vmatprep.subr.bf16.mxu0 0
    %373 = vmatpush1.bf16.msra.mxu0 %v357
    %374 = vmatprep.subr.bf16.mxu0 0
    %375 = vmatpush1.bf16.msra.mxu0 %v356
    %376 = vmatprep.subr.bf16.mxu0 0
    %377 = vmatpush1.bf16.msra.mxu0 %v355
    %378 = vmatprep.subr.bf16.mxu0 0
    %379 = vmatpush1.bf16.msra.mxu0 %v354
    %380 = vmatprep.subr.bf16.mxu0 0
    %381 = vmatpush1.bf16.msra.mxu0 %v353
    %382 = vmatprep.subr.bf16.mxu0 0
    %383 = vmatpush1.bf16.msra.mxu0 %v352
    %384 = vmatprep.subr.bf16.mxu0 0
    %385 = vmatpush2.bf16.msra.mxu0 0
    %386 = vmatprep.subr.bf16.mxu0 0
    %387 = vmatpush2.bf16.msra.mxu0 0
    %388 = vmatprep.subr.bf16.mxu0 0
    %389 = vmatpush2.bf16.msra.mxu0 0
    %390 = vmatprep.subr.bf16.mxu0 0
    %391 = vmatpush2.bf16.msra.mxu0 0
    %392 = vmatprep.subr.bf16.mxu0 0
    %393 = vmatpush2.bf16.msra.mxu0 0
    %394 = vmatprep.subr.bf16.mxu0 0
    %395 = vmatpush2.bf16.msra.mxu0 0
    %396 = vmatprep.subr.bf16.mxu0 0
    %397 = vmatpush2.bf16.msra.mxu0 0
    %398 = vmatprep.subr.bf16.mxu0 0
    %399 = vmatpush2.bf16.msra.mxu0 0
    %400 = vmatprep.mubr.bf16.mxu0 0
    %401 = vmatmul.mubr.bf16.gmra.mxu0 %v256
    %v402 = vpop.f32.mrf.mxu0
    %v403 = vadd.f32 %v126, %v402
    %v404 = vpop.f32.mrf.mxu0
    %v405 = vpop.f32.mrf.mxu0
    %v406 = vadd.f32 %v126, %v405
    %v407 = vpop.f32.mrf.mxu0
    %408 = vmatprep.mubr.bf16.mxu0 0
    %409 = vmatmul.mubr.bf16.gmra.mxu0 %v257
    %v410 = vpop.f32.mrf.mxu0
    %v411 = vadd.f32 %v126, %v410
    %v412 = vpop.f32.mrf.mxu0
    %v413 = vpop.f32.mrf.mxu0
    %v414 = vadd.f32 %v126, %v413
    %v415 = vpop.f32.mrf.mxu0
    %416 = vmatprep.mubr.bf16.mxu0 0
    %417 = vmatmul.mubr.bf16.gmra.mxu0 %v258
    %v418 = vpop.f32.mrf.mxu0
    %v419 = vadd.f32 %v126, %v418
    %v420 = vpop.f32.mrf.mxu0
    %v421 = vpop.f32.mrf.mxu0
    %v422 = vadd.f32 %v126, %v421
    %v423 = vpop.f32.mrf.mxu0
    %424 = vmatprep.mubr.bf16.mxu0 0
    %425 = vmatmul.mubr.bf16.gmra.mxu0 %v259
    %v426 = vpop.f32.mrf.mxu0
    %v427 = vadd.f32 %v126, %v426
    %v428 = vpop.f32.mrf.mxu0
    %v429 = vpop.f32.mrf.mxu0
    %v430 = vadd.f32 %v126, %v429
    %v431 = vpop.f32.mrf.mxu0
    %432 = vmatprep.mubr.bf16.mxu0 0
    %433 = vmatmul.mubr.bf16.gmra.mxu0 %v260
    %v434 = vpop.f32.mrf.mxu0
    %v435 = vadd.f32 %v126, %v434
    %v436 = vpop.f32.mrf.mxu0
    %v437 = vpop.f32.mrf.mxu0
    %v438 = vadd.f32 %v126, %v437
    %v439 = vpop.f32.mrf.mxu0
    %440 = vmatprep.mubr.bf16.mxu0 0
    %441 = vmatmul.mubr.bf16.gmra.mxu0 %v261
    %v442 = vpop.f32.mrf.mxu0
    %v443 = vadd.f32 %v126, %v442
    %v444 = vpop.f32.mrf.mxu0
    %v445 = vpop.f32.mrf.mxu0
    %v446 = vadd.f32 %v126, %v445
    %v447 = vpop.f32.mrf.mxu0
    %448 = vmatprep.mubr.bf16.mxu0 0
    %449 = vmatmul.mubr.bf16.gmra.mxu0 %v262
    %v450 = vpop.f32.mrf.mxu0
    %v451 = vadd.f32 %v126, %v450
    %v452 = vpop.f32.mrf.mxu0
    %v453 = vpop.f32.mrf.mxu0
    %v454 = vadd.f32 %v126, %v453
    %v455 = vpop.f32.mrf.mxu0
    %456 = vmatprep.mubr.bf16.mxu0 0
    %457 = vmatmul.mubr.bf16.gmra.mxu0 %v263
    %v458 = vpop.f32.mrf.mxu0
    %v459 = vadd.f32 %v126, %v458
    %v460 = vpop.f32.mrf.mxu0
    %v461 = vpop.f32.mrf.mxu0
    %v462 = vadd.f32 %v126, %v461
    %v463 = vpop.f32.mrf.mxu0
    %464 = vmatprep.mubr.bf16.mxu0 0
    %465 = vmatmul.mubr.bf16.gmra.mxu0 %v264
    %v466 = vpop.f32.mrf.mxu0
    %v467 = vadd.f32 %v126, %v466
    %v468 = vpop.f32.mrf.mxu0
    %v469 = vpop.f32.mrf.mxu0
    %v470 = vadd.f32 %v126, %v469
    %v471 = vpop.f32.mrf.mxu0
    %472 = vmatprep.mubr.bf16.mxu0 0
    %473 = vmatmul.mubr.bf16.gmra.mxu0 %v265
    %v474 = vpop.f32.mrf.mxu0
    %v475 = vadd.f32 %v126, %v474
    %v476 = vpop.f32.mrf.mxu0
    %v477 = vpop.f32.mrf.mxu0
    %v478 = vadd.f32 %v126, %v477
    %v479 = vpop.f32.mrf.mxu0
    %480 = vmatprep.mubr.bf16.mxu0 0
    %481 = vmatmul.mubr.bf16.gmra.mxu0 %v266
    %v482 = vpop.f32.mrf.mxu0
    %v483 = vadd.f32 %v126, %v482
    %v484 = vpop.f32.mrf.mxu0
    %v485 = vpop.f32.mrf.mxu0
    %v486 = vadd.f32 %v126, %v485
    %v487 = vpop.f32.mrf.mxu0
    %488 = vmatprep.mubr.bf16.mxu0 0
    %489 = vmatmul.mubr.bf16.gmra.mxu0 %v267
    %v490 = vpop.f32.mrf.mxu0
    %v491 = vadd.f32 %v126, %v490
    %v492 = vpop.f32.mrf.mxu0
    %v493 = vpop.f32.mrf.mxu0
    %v494 = vadd.f32 %v126, %v493
    %v495 = vpop.f32.mrf.mxu0
    %496 = vmatprep.mubr.bf16.mxu0 0
    %497 = vmatmul.mubr.bf16.gmra.mxu0 %v268
    %v498 = vpop.f32.mrf.mxu0
    %v499 = vadd.f32 %v126, %v498
    %v500 = vpop.f32.mrf.mxu0
    %v501 = vpop.f32.mrf.mxu0
    %v502 = vadd.f32 %v126, %v501
    %v503 = vpop.f32.mrf.mxu0
    %504 = vmatprep.mubr.bf16.mxu0 0
    %505 = vmatmul.mubr.bf16.gmra.mxu0 %v269
    %v506 = vpop.f32.mrf.mxu0
    %v507 = vadd.f32 %v126, %v506
    %v508 = vpop.f32.mrf.mxu0
    %v509 = vpop.f32.mrf.mxu0
    %v510 = vadd.f32 %v126, %v509
    %v511 = vpop.f32.mrf.mxu0
    %512 = vmatprep.mubr.bf16.mxu0 0
    %513 = vmatmul.mubr.bf16.gmra.mxu0 %v270
    %v514 = vpop.f32.mrf.mxu0
    %v515 = vadd.f32 %v126, %v514
    %v516 = vpop.f32.mrf.mxu0
    %v517 = vpop.f32.mrf.mxu0
    %v518 = vadd.f32 %v126, %v517
    %v519 = vpop.f32.mrf.mxu0
    %520 = vmatprep.mubr.bf16.mxu0 0
    %521 = vmatmul.mubr.bf16.gmra.mxu0 %v271
    %v522 = vpop.f32.mrf.mxu0
    %v523 = vadd.f32 %v126, %v522
    %v524 = vpop.f32.mrf.mxu0
    %v525 = vpop.f32.mrf.mxu0
    %v526 = vadd.f32 %v126, %v525
    %v527 = vpop.f32.mrf.mxu0
    %528 = vmatprep.mubr.bf16.mxu0 0
    %529 = vmatmul.mubr.bf16.gmra.mxu0 %v272
    %v530 = vpop.f32.mrf.mxu0
    %v531 = vadd.f32 %v126, %v530
    %v532 = vpop.f32.mrf.mxu0
    %v533 = vpop.f32.mrf.mxu0
    %v534 = vadd.f32 %v126, %v533
    %v535 = vpop.f32.mrf.mxu0
    %536 = vmatprep.mubr.bf16.mxu0 0
    %537 = vmatmul.mubr.bf16.gmra.mxu0 %v273
    %v538 = vpop.f32.mrf.mxu0
    %v539 = vadd.f32 %v126, %v538
    %v540 = vpop.f32.mrf.mxu0
    %v541 = vpop.f32.mrf.mxu0
    %v542 = vadd.f32 %v126, %v541
    %v543 = vpop.f32.mrf.mxu0
    %544 = vmatprep.mubr.bf16.mxu0 0
    %545 = vmatmul.mubr.bf16.gmra.mxu0 %v274
    %v546 = vpop.f32.mrf.mxu0
    %v547 = vadd.f32 %v126, %v546
    %v548 = vpop.f32.mrf.mxu0
    %v549 = vpop.f32.mrf.mxu0
    %v550 = vadd.f32 %v126, %v549
    %v551 = vpop.f32.mrf.mxu0
    %552 = vmatprep.mubr.bf16.mxu0 0
    %553 = vmatmul.mubr.bf16.gmra.mxu0 %v275
    %v554 = vpop.f32.mrf.mxu0
    %v555 = vadd.f32 %v126, %v554
    %v556 = vpop.f32.mrf.mxu0
    %v557 = vpop.f32.mrf.mxu0
    %v558 = vadd.f32 %v126, %v557
    %v559 = vpop.f32.mrf.mxu0
    %560 = vmatprep.mubr.bf16.mxu0 0
    %561 = vmatmul.mubr.bf16.gmra.mxu0 %v276
    %v562 = vpop.f32.mrf.mxu0
    %v563 = vadd.f32 %v126, %v562
    %v564 = vpop.f32.mrf.mxu0
    %v565 = vpop.f32.mrf.mxu0
    %v566 = vadd.f32 %v126, %v565
    %v567 = vpop.f32.mrf.mxu0
    %568 = vmatprep.mubr.bf16.mxu0 0
    %569 = vmatmul.mubr.bf16.gmra.mxu0 %v277
    %v570 = vpop.f32.mrf.mxu0
    %v571 = vadd.f32 %v126, %v570
    %v572 = vpop.f32.mrf.mxu0
    %v573 = vpop.f32.mrf.mxu0
    %v574 = vadd.f32 %v126, %v573
    %v575 = vpop.f32.mrf.mxu0
    %576 = vmatprep.mubr.bf16.mxu0 0
    %577 = vmatmul.mubr.bf16.gmra.mxu0 %v278
    %v578 = vpop.f32.mrf.mxu0
    %v579 = vadd.f32 %v126, %v578
    %v580 = vpop.f32.mrf.mxu0
    %v581 = vpop.f32.mrf.mxu0
    %v582 = vadd.f32 %v126, %v581
    %v583 = vpop.f32.mrf.mxu0
    %584 = vmatprep.mubr.bf16.mxu0 0
    %585 = vmatmul.mubr.bf16.gmra.mxu0 %v279
    %v586 = vpop.f32.mrf.mxu0
    %v587 = vadd.f32 %v126, %v586
    %v588 = vpop.f32.mrf.mxu0
    %v589 = vpop.f32.mrf.mxu0
    %v590 = vadd.f32 %v126, %v589
    %v591 = vpop.f32.mrf.mxu0
    %592 = vmatprep.mubr.bf16.mxu0 0
    %593 = vmatmul.mubr.bf16.gmra.mxu0 %v280
    %v594 = vpop.f32.mrf.mxu0
    %v595 = vadd.f32 %v126, %v594
    %v596 = vpop.f32.mrf.mxu0
    %v597 = vpop.f32.mrf.mxu0
    %v598 = vadd.f32 %v126, %v597
    %v599 = vpop.f32.mrf.mxu0
    %600 = vmatprep.mubr.bf16.mxu0 0
    %601 = vmatmul.mubr.bf16.gmra.mxu0 %v281
    %v602 = vpop.f32.mrf.mxu0
    %v603 = vadd.f32 %v126, %v602
    %v604 = vpop.f32.mrf.mxu0
    %v605 = vpop.f32.mrf.mxu0
    %v606 = vadd.f32 %v126, %v605
    %v607 = vpop.f32.mrf.mxu0
    %608 = vmatprep.mubr.bf16.mxu0 0
    %609 = vmatmul.mubr.bf16.gmra.mxu0 %v282
    %v610 = vpop.f32.mrf.mxu0
    %v611 = vadd.f32 %v126, %v610
    %v612 = vpop.f32.mrf.mxu0
    %v613 = vpop.f32.mrf.mxu0
    %v614 = vadd.f32 %v126, %v613
    %v615 = vpop.f32.mrf.mxu0
    %616 = vmatprep.mubr.bf16.mxu0 0
    %617 = vmatmul.mubr.bf16.gmra.mxu0 %v283
    %v618 = vpop.f32.mrf.mxu0
    %v619 = vadd.f32 %v126, %v618
    %v620 = vpop.f32.mrf.mxu0
    %v621 = vpop.f32.mrf.mxu0
    %v622 = vadd.f32 %v126, %v621
    %v623 = vpop.f32.mrf.mxu0
    %624 = vmatprep.mubr.bf16.mxu0 0
    %625 = vmatmul.mubr.bf16.gmra.mxu0 %v284
    %v626 = vpop.f32.mrf.mxu0
    %v627 = vadd.f32 %v126, %v626
    %v628 = vpop.f32.mrf.mxu0
    %v629 = vpop.f32.mrf.mxu0
    %v630 = vadd.f32 %v126, %v629
    %v631 = vpop.f32.mrf.mxu0
    %632 = vmatprep.mubr.bf16.mxu0 0
    %633 = vmatmul.mubr.bf16.gmra.mxu0 %v285
    %v634 = vpop.f32.mrf.mxu0
    %v635 = vadd.f32 %v126, %v634
    %v636 = vpop.f32.mrf.mxu0
    %v637 = vpop.f32.mrf.mxu0
    %v638 = vadd.f32 %v126, %v637
    %v639 = vpop.f32.mrf.mxu0
    %640 = vmatprep.mubr.bf16.mxu0 0
    %641 = vmatmul.mubr.bf16.gmra.mxu0 %v286
    %v642 = vpop.f32.mrf.mxu0
    %v643 = vadd.f32 %v126, %v642
    %v644 = vpop.f32.mrf.mxu0
    %v645 = vpop.f32.mrf.mxu0
    %v646 = vadd.f32 %v126, %v645
    %v647 = vpop.f32.mrf.mxu0
    %648 = vmatprep.mubr.bf16.mxu0 0
    %649 = vmatmul.mubr.bf16.gmra.mxu0 %v287
    %v650 = vpop.f32.mrf.mxu0
    %v651 = vadd.f32 %v126, %v650
    %v652 = vpop.f32.mrf.mxu0
    %v653 = vpop.f32.mrf.mxu0
    %v654 = vadd.f32 %v126, %v653
    %v655 = vpop.f32.mrf.mxu0
    %656 = vdwg.mxu0
    %v657 = vsub.f32 0.0, %v403
    %v658 = vsub.f32 0.0, %v406
    %v659 = vsub.f32 0.0, %v411
    %v660 = vsub.f32 0.0, %v414
    %v661 = vsub.f32 0.0, %v419
    %v662 = vsub.f32 0.0, %v422
    %v663 = vsub.f32 0.0, %v427
    %v664 = vsub.f32 0.0, %v430
    %v665 = vsub.f32 0.0, %v435
    %v666 = vsub.f32 0.0, %v438
    %v667 = vsub.f32 0.0, %v443
    %v668 = vsub.f32 0.0, %v446
    %v669 = vsub.f32 0.0, %v451
    %v670 = vsub.f32 0.0, %v454
    %v671 = vsub.f32 0.0, %v459
    %v672 = vsub.f32 0.0, %v462
    %v673 = vsub.f32 0.0, %v467
    %v674 = vsub.f32 0.0, %v470
    %v675 = vsub.f32 0.0, %v475
    %v676 = vsub.f32 0.0, %v478
    %v677 = vsub.f32 0.0, %v483
    %v678 = vsub.f32 0.0, %v486
    %v679 = vsub.f32 0.0, %v491
    %v680 = vsub.f32 0.0, %v494
    %v681 = vsub.f32 0.0, %v499
    %v682 = vsub.f32 0.0, %v502
    %v683 = vsub.f32 0.0, %v507
    %v684 = vsub.f32 0.0, %v510
    %v685 = vsub.f32 0.0, %v515
    %v686 = vsub.f32 0.0, %v518
    %v687 = vsub.f32 0.0, %v523
    %v688 = vsub.f32 0.0, %v526
    %v689 = vsub.f32 0.0, %v531
    %v690 = vsub.f32 0.0, %v534
    %v691 = vsub.f32 0.0, %v539
    %v692 = vsub.f32 0.0, %v542
    %v693 = vsub.f32 0.0, %v547
    %v694 = vsub.f32 0.0, %v550
    %v695 = vsub.f32 0.0, %v555
    %v696 = vsub.f32 0.0, %v558
    %v697 = vsub.f32 0.0, %v563
    %v698 = vsub.f32 0.0, %v566
    %v699 = vsub.f32 0.0, %v571
    %v700 = vsub.f32 0.0, %v574
    %v701 = vsub.f32 0.0, %v579
    %v702 = vsub.f32 0.0, %v582
    %v703 = vsub.f32 0.0, %v587
    %v704 = vsub.f32 0.0, %v590
    %v705 = vsub.f32 0.0, %v595
    %v706 = vsub.f32 0.0, %v598
    %v707 = vsub.f32 0.0, %v603
    %v708 = vsub.f32 0.0, %v606
    %v709 = vsub.f32 0.0, %v611
    %v710 = vsub.f32 0.0, %v614
    %v711 = vsub.f32 0.0, %v619
    %v712 = vsub.f32 0.0, %v622
    %v713 = vsub.f32 0.0, %v627
    %v714 = vsub.f32 0.0, %v630
    %v715 = vsub.f32 0.0, %v635
    %v716 = vsub.f32 0.0, %v638
    %v717 = vsub.f32 0.0, %v643
    %v718 = vsub.f32 0.0, %v646
    %v719 = vsub.f32 0.0, %v651
    %v720 = vsub.f32 0.0, %v654
    %v721 = vmul.f32 %v657, 1.442695
    %v722 = vpow.pop %v721
    %v723 = vmul.f32 %v658, 1.442695
    %v724 = vpow.pop %v723
    %v725 = vmul.f32 %v659, 1.442695
    %v726 = vpow.pop %v725
    %v727 = vmul.f32 %v660, 1.442695
    %v728 = vpow.pop %v727
    %v729 = vmul.f32 %v661, 1.442695
    %v730 = vpow.pop %v729
    %v731 = vmul.f32 %v662, 1.442695
    %v732 = vpow.pop %v731
    %v733 = vmul.f32 %v663, 1.442695
    %v734 = vpow.pop %v733
    %v735 = vmul.f32 %v664, 1.442695
    %v736 = vpow.pop %v735
    %v737 = vmul.f32 %v665, 1.442695
    %v738 = vpow.pop %v737
    %v739 = vmul.f32 %v666, 1.442695
    %v740 = vpow.pop %v739
    %v741 = vmul.f32 %v667, 1.442695
    %v742 = vpow.pop %v741
    %v743 = vmul.f32 %v668, 1.442695
    %v744 = vpow.pop %v743
    %v745 = vmul.f32 %v669, 1.442695
    %v746 = vpow.pop %v745
    %v747 = vmul.f32 %v670, 1.442695
    %v748 = vpow.pop %v747
    %v749 = vmul.f32 %v671, 1.442695
    %v750 = vpow.pop %v749
    %v751 = vmul.f32 %v672, 1.442695
    %v752 = vpow.pop %v751
    %v753 = vmul.f32 %v673, 1.442695
    %v754 = vpow.pop %v753
    %v755 = vmul.f32 %v674, 1.442695
    %v756 = vpow.pop %v755
    %v757 = vmul.f32 %v675, 1.442695
    %v758 = vpow.pop %v757
    %v759 = vmul.f32 %v676, 1.442695
    %v760 = vpow.pop %v759
    %v761 = vmul.f32 %v677, 1.442695
    %v762 = vpow.pop %v761
    %v763 = vmul.f32 %v678, 1.442695
    %v764 = vpow.pop %v763
    %v765 = vmul.f32 %v679, 1.442695
    %v766 = vpow.pop %v765
    %v767 = vmul.f32 %v680, 1.442695
    %v768 = vpow.pop %v767
    %v769 = vmul.f32 %v681, 1.442695
    %v770 = vpow.pop %v769
    %v771 = vmul.f32 %v682, 1.442695
    %v772 = vpow.pop %v771
    %v773 = vmul.f32 %v683, 1.442695
    %v774 = vpow.pop %v773
    %v775 = vmul.f32 %v684, 1.442695
    %v776 = vpow.pop %v775
    %v777 = vmul.f32 %v685, 1.442695
    %v778 = vpow.pop %v777
    %v779 = vmul.f32 %v686, 1.442695
    %v780 = vpow.pop %v779
    %v781 = vmul.f32 %v687, 1.442695
    %v782 = vpow.pop %v781
    %v783 = vmul.f32 %v688, 1.442695
    %v784 = vpow.pop %v783
    %v785 = vmul.f32 %v689, 1.442695
    %v786 = vpow.pop %v785
    %v787 = vmul.f32 %v690, 1.442695
    %v788 = vpow.pop %v787
    %v789 = vmul.f32 %v691, 1.442695
    %v790 = vpow.pop %v789
    %v791 = vmul.f32 %v692, 1.442695
    %v792 = vpow.pop %v791
    %v793 = vmul.f32 %v693, 1.442695
    %v794 = vpow.pop %v793
    %v795 = vmul.f32 %v694, 1.442695
    %v796 = vpow.pop %v795
    %v797 = vmul.f32 %v695, 1.442695
    %v798 = vpow.pop %v797
    %v799 = vmul.f32 %v696, 1.442695
    %v800 = vpow.pop %v799
    %v801 = vmul.f32 %v697, 1.442695
    %v802 = vpow.pop %v801
    %v803 = vmul.f32 %v698, 1.442695
    %v804 = vpow.pop %v803
    %v805 = vmul.f32 %v699, 1.442695
    %v806 = vpow.pop %v805
    %v807 = vmul.f32 %v700, 1.442695
    %v808 = vpow.pop %v807
    %v809 = vmul.f32 %v701, 1.442695
    %v810 = vpow.pop %v809
    %v811 = vmul.f32 %v702, 1.442695
    %v812 = vpow.pop %v811
    %v813 = vmul.f32 %v703, 1.442695
    %v814 = vpow.pop %v813
    %v815 = vmul.f32 %v704, 1.442695
    %v816 = vpow.pop %v815
    %v817 = vmul.f32 %v705, 1.442695
    %v818 = vpow.pop %v817
    %v819 = vmul.f32 %v706, 1.442695
    %v820 = vpow.pop %v819
    %v821 = vmul.f32 %v707, 1.442695
    %v822 = vpow.pop %v821
    %v823 = vmul.f32 %v708, 1.442695
    %v824 = vpow.pop %v823
    %v825 = vmul.f32 %v709, 1.442695
    %v826 = vpow.pop %v825
    %v827 = vmul.f32 %v710, 1.442695
    %v828 = vpow.pop %v827
    %v829 = vmul.f32 %v711, 1.442695
    %v830 = vpow.pop %v829
    %v831 = vmul.f32 %v712, 1.442695
    %v832 = vpow.pop %v831
    %v833 = vmul.f32 %v713, 1.442695
    %v834 = vpow.pop %v833
    %v835 = vmul.f32 %v714, 1.442695
    %v836 = vpow.pop %v835
    %v837 = vmul.f32 %v715, 1.442695
    %v838 = vpow.pop %v837
    %v839 = vmul.f32 %v716, 1.442695
    %v840 = vpow.pop %v839
    %v841 = vmul.f32 %v717, 1.442695
    %v842 = vpow.pop %v841
    %v843 = vmul.f32 %v718, 1.442695
    %v844 = vpow.pop %v843
    %v845 = vmul.f32 %v719, 1.442695
    %v846 = vpow.pop %v845
    %v847 = vmul.f32 %v720, 1.442695
    %v848 = vpow.pop %v847
    %v849 = vadd.f32 %v722, 1.0
    %v850 = vadd.f32 %v724, 1.0
    %v851 = vadd.f32 %v726, 1.0
    %v852 = vadd.f32 %v728, 1.0
    %v853 = vadd.f32 %v730, 1.0
    %v854 = vadd.f32 %v732, 1.0
    %v855 = vadd.f32 %v734, 1.0
    %v856 = vadd.f32 %v736, 1.0
    %v857 = vadd.f32 %v738, 1.0
    %v858 = vadd.f32 %v740, 1.0
    %v859 = vadd.f32 %v742, 1.0
    %v860 = vadd.f32 %v744, 1.0
    %v861 = vadd.f32 %v746, 1.0
    %v862 = vadd.f32 %v748, 1.0
    %v863 = vadd.f32 %v750, 1.0
    %v864 = vadd.f32 %v752, 1.0
    %v865 = vadd.f32 %v754, 1.0
    %v866 = vadd.f32 %v756, 1.0
    %v867 = vadd.f32 %v758, 1.0
    %v868 = vadd.f32 %v760, 1.0
    %v869 = vadd.f32 %v762, 1.0
    %v870 = vadd.f32 %v764, 1.0
    %v871 = vadd.f32 %v766, 1.0
    %v872 = vadd.f32 %v768, 1.0
    %v873 = vadd.f32 %v770, 1.0
    %v874 = vadd.f32 %v772, 1.0
    %v875 = vadd.f32 %v774, 1.0
    %v876 = vadd.f32 %v776, 1.0
    %v877 = vadd.f32 %v778, 1.0
    %v878 = vadd.f32 %v780, 1.0
    %v879 = vadd.f32 %v782, 1.0
    %v880 = vadd.f32 %v784, 1.0
    %v881 = vadd.f32 %v786, 1.0
    %v882 = vadd.f32 %v788, 1.0
    %v883 = vadd.f32 %v790, 1.0
    %v884 = vadd.f32 %v792, 1.0
    %v885 = vadd.f32 %v794, 1.0
    %v886 = vadd.f32 %v796, 1.0
    %v887 = vadd.f32 %v798, 1.0
    %v888 = vadd.f32 %v800, 1.0
    %v889 = vadd.f32 %v802, 1.0
    %v890 = vadd.f32 %v804, 1.0
    %v891 = vadd.f32 %v806, 1.0
    %v892 = vadd.f32 %v808, 1.0
    %v893 = vadd.f32 %v810, 1.0
    %v894 = vadd.f32 %v812, 1.0
    %v895 = vadd.f32 %v814, 1.0
    %v896 = vadd.f32 %v816, 1.0
    %v897 = vadd.f32 %v818, 1.0
    %v898 = vadd.f32 %v820, 1.0
    %v899 = vadd.f32 %v822, 1.0
    %v900 = vadd.f32 %v824, 1.0
    %v901 = vadd.f32 %v826, 1.0
    %v902 = vadd.f32 %v828, 1.0
    %v903 = vadd.f32 %v830, 1.0
    %v904 = vadd.f32 %v832, 1.0
    %v905 = vadd.f32 %v834, 1.0
    %v906 = vadd.f32 %v836, 1.0
    %v907 = vadd.f32 %v838, 1.0
    %v908 = vadd.f32 %v840, 1.0
    %v909 = vadd.f32 %v842, 1.0
    %v910 = vadd.f32 %v844, 1.0
    %v911 = vadd.f32 %v846, 1.0
    %v912 = vadd.f32 %v848, 1.0
    %v913 = vrcp.pop %v849
    %v914 = vrcp.pop %v850
    %v915 = vrcp.pop %v851
    %v916 = vrcp.pop %v852
    %v917 = vrcp.pop %v853
    %v918 = vrcp.pop %v854
    %v919 = vrcp.pop %v855
    %v920 = vrcp.pop %v856
    %v921 = vrcp.pop %v857
    %v922 = vrcp.pop %v858
    %v923 = vrcp.pop %v859
    %v924 = vrcp.pop %v860
    %v925 = vrcp.pop %v861
    %v926 = vrcp.pop %v862
    %v927 = vrcp.pop %v863
    %v928 = vrcp.pop %v864
    %v929 = vrcp.pop %v865
    %v930 = vrcp.pop %v866
    %v931 = vrcp.pop %v867
    %v932 = vrcp.pop %v868
    %v933 = vrcp.pop %v869
    %v934 = vrcp.pop %v870
    %v935 = vrcp.pop %v871
    %v936 = vrcp.pop %v872
    %v937 = vrcp.pop %v873
    %v938 = vrcp.pop %v874
    %v939 = vrcp.pop %v875
    %v940 = vrcp.pop %v876
    %v941 = vrcp.pop %v877
    %v942 = vrcp.pop %v878
    %v943 = vrcp.pop %v879
    %v944 = vrcp.pop %v880
    %v945 = vrcp.pop %v881
    %v946 = vrcp.pop %v882
    %v947 = vrcp.pop %v883
    %v948 = vrcp.pop %v884
    %v949 = vrcp.pop %v885
    %v950 = vrcp.pop %v886
    %v951 = vrcp.pop %v887
    %v952 = vrcp.pop %v888
    %v953 = vrcp.pop %v889
    %v954 = vrcp.pop %v890
    %v955 = vrcp.pop %v891
    %v956 = vrcp.pop %v892
    %v957 = vrcp.pop %v893
    %v958 = vrcp.pop %v894
    %v959 = vrcp.pop %v895
    %v960 = vrcp.pop %v896
    %v961 = vrcp.pop %v897
    %v962 = vrcp.pop %v898
    %v963 = vrcp.pop %v899
    %v964 = vrcp.pop %v900
    %v965 = vrcp.pop %v901
    %v966 = vrcp.pop %v902
    %v967 = vrcp.pop %v903
    %v968 = vrcp.pop %v904
    %v969 = vrcp.pop %v905
    %v970 = vrcp.pop %v906
    %v971 = vrcp.pop %v907
    %v972 = vrcp.pop %v908
    %v973 = vrcp.pop %v909
    %v974 = vrcp.pop %v910
    %v975 = vrcp.pop %v911
    %v976 = vrcp.pop %v912
    %v977 = vmul.f32 %v403, %v913
    %v978 = vmul.f32 %v406, %v914
    %v979 = vmul.f32 %v411, %v915
    %v980 = vmul.f32 %v414, %v916
    %v981 = vmul.f32 %v419, %v917
    %v982 = vmul.f32 %v422, %v918
    %v983 = vmul.f32 %v427, %v919
    %v984 = vmul.f32 %v430, %v920
    %v985 = vmul.f32 %v435, %v921
    %v986 = vmul.f32 %v438, %v922
    %v987 = vmul.f32 %v443, %v923
    %v988 = vmul.f32 %v446, %v924
    %v989 = vmul.f32 %v451, %v925
    %v990 = vmul.f32 %v454, %v926
    %v991 = vmul.f32 %v459, %v927
    %v992 = vmul.f32 %v462, %v928
    %v993 = vmul.f32 %v467, %v929
    %v994 = vmul.f32 %v470, %v930
    %v995 = vmul.f32 %v475, %v931
    %v996 = vmul.f32 %v478, %v932
    %v997 = vmul.f32 %v483, %v933
    %v998 = vmul.f32 %v486, %v934
    %v999 = vmul.f32 %v491, %v935
    %v1000 = vmul.f32 %v494, %v936
    %v1001 = vmul.f32 %v499, %v937
    %v1002 = vmul.f32 %v502, %v938
    %v1003 = vmul.f32 %v507, %v939
    %v1004 = vmul.f32 %v510, %v940
    %v1005 = vmul.f32 %v515, %v941
    %v1006 = vmul.f32 %v518, %v942
    %v1007 = vmul.f32 %v523, %v943
    %v1008 = vmul.f32 %v526, %v944
    %v1009 = vmul.f32 %v531, %v945
    %v1010 = vmul.f32 %v534, %v946
    %v1011 = vmul.f32 %v539, %v947
    %v1012 = vmul.f32 %v542, %v948
    %v1013 = vmul.f32 %v547, %v949
    %v1014 = vmul.f32 %v550, %v950
    %v1015 = vmul.f32 %v555, %v951
    %v1016 = vmul.f32 %v558, %v952
    %v1017 = vmul.f32 %v563, %v953
    %v1018 = vmul.f32 %v566, %v954
    %v1019 = vmul.f32 %v571, %v955
    %v1020 = vmul.f32 %v574, %v956
    %v1021 = vmul.f32 %v579, %v957
    %v1022 = vmul.f32 %v582, %v958
    %v1023 = vmul.f32 %v587, %v959
    %v1024 = vmul.f32 %v590, %v960
    %v1025 = vmul.f32 %v595, %v961
    %v1026 = vmul.f32 %v598, %v962
    %v1027 = vmul.f32 %v603, %v963
    %v1028 = vmul.f32 %v606, %v964
    %v1029 = vmul.f32 %v611, %v965
    %v1030 = vmul.f32 %v614, %v966
    %v1031 = vmul.f32 %v619, %v967
    %v1032 = vmul.f32 %v622, %v968
    %v1033 = vmul.f32 %v627, %v969
    %v1034 = vmul.f32 %v630, %v970
    %v1035 = vmul.f32 %v635, %v971
    %v1036 = vmul.f32 %v638, %v972
    %v1037 = vmul.f32 %v643, %v973
    %v1038 = vmul.f32 %v646, %v974
    %v1039 = vmul.f32 %v651, %v975
    %v1040 = vmul.f32 %v654, %v976
    %v1041 = vpack.c.bf16 %v978, %v977
    %v1042 = vpack.c.bf16 %v980, %v979
    %v1043 = vpack.c.bf16 %v982, %v981
    %v1044 = vpack.c.bf16 %v984, %v983
    %v1045 = vpack.c.bf16 %v986, %v985
    %v1046 = vpack.c.bf16 %v988, %v987
    %v1047 = vpack.c.bf16 %v990, %v989
    %v1048 = vpack.c.bf16 %v992, %v991
    %v1049 = vpack.c.bf16 %v994, %v993
    %v1050 = vpack.c.bf16 %v996, %v995
    %v1051 = vpack.c.bf16 %v998, %v997
    %v1052 = vpack.c.bf16 %v1000, %v999
    %v1053 = vpack.c.bf16 %v1002, %v1001
    %v1054 = vpack.c.bf16 %v1004, %v1003
    %v1055 = vpack.c.bf16 %v1006, %v1005
    %v1056 = vpack.c.bf16 %v1008, %v1007
    %v1057 = vpack.c.bf16 %v1010, %v1009
    %v1058 = vpack.c.bf16 %v1012, %v1011
    %v1059 = vpack.c.bf16 %v1014, %v1013
    %v1060 = vpack.c.bf16 %v1016, %v1015
    %v1061 = vpack.c.bf16 %v1018, %v1017
    %v1062 = vpack.c.bf16 %v1020, %v1019
    %v1063 = vpack.c.bf16 %v1022, %v1021
    %v1064 = vpack.c.bf16 %v1024, %v1023
    %v1065 = vpack.c.bf16 %v1026, %v1025
    %v1066 = vpack.c.bf16 %v1028, %v1027
    %v1067 = vpack.c.bf16 %v1030, %v1029
    %v1068 = vpack.c.bf16 %v1032, %v1031
    %v1069 = vpack.c.bf16 %v1034, %v1033
    %v1070 = vpack.c.bf16 %v1036, %v1035
    %v1071 = vpack.c.bf16 %v1038, %v1037
    %v1072 = vpack.c.bf16 %v1040, %v1039
    %v1105 = vunpack.c.l.b16 %v1041
    %v1106 = vunpack.c.h.b16 %v1041
    %v1107 = vunpack.c.l.b16 %v1042
    %v1108 = vunpack.c.h.b16 %v1042
    %v1109 = vunpack.c.l.b16 %v1043
    %v1110 = vunpack.c.h.b16 %v1043
    %v1111 = vunpack.c.l.b16 %v1044
    %v1112 = vunpack.c.h.b16 %v1044
    %v1113 = vunpack.c.l.b16 %v1045
    %v1114 = vunpack.c.h.b16 %v1045
    %v1115 = vunpack.c.l.b16 %v1046
    %v1116 = vunpack.c.h.b16 %v1046
    %v1117 = vunpack.c.l.b16 %v1047
    %v1118 = vunpack.c.h.b16 %v1047
    %v1119 = vunpack.c.l.b16 %v1048
    %v1120 = vunpack.c.h.b16 %v1048
    %v1121 = vunpack.c.l.b16 %v1049
    %v1122 = vunpack.c.h.b16 %v1049
    %v1123 = vunpack.c.l.b16 %v1050
    %v1124 = vunpack.c.h.b16 %v1050
    %v1125 = vunpack.c.l.b16 %v1051
    %v1126 = vunpack.c.h.b16 %v1051
    %v1127 = vunpack.c.l.b16 %v1052
    %v1128 = vunpack.c.h.b16 %v1052
    %v1129 = vunpack.c.l.b16 %v1053
    %v1130 = vunpack.c.h.b16 %v1053
    %v1131 = vunpack.c.l.b16 %v1054
    %v1132 = vunpack.c.h.b16 %v1054
    %v1133 = vunpack.c.l.b16 %v1055
    %v1134 = vunpack.c.h.b16 %v1055
    %v1135 = vunpack.c.l.b16 %v1056
    %v1136 = vunpack.c.h.b16 %v1056
    %v1137 = vunpack.c.l.b16 %v1057
    %v1138 = vunpack.c.h.b16 %v1057
    %v1139 = vunpack.c.l.b16 %v1058
    %v1140 = vunpack.c.h.b16 %v1058
    %v1141 = vunpack.c.l.b16 %v1059
    %v1142 = vunpack.c.h.b16 %v1059
    %v1143 = vunpack.c.l.b16 %v1060
    %v1144 = vunpack.c.h.b16 %v1060
    %v1145 = vunpack.c.l.b16 %v1061
    %v1146 = vunpack.c.h.b16 %v1061
    %v1147 = vunpack.c.l.b16 %v1062
    %v1148 = vunpack.c.h.b16 %v1062
    %v1149 = vunpack.c.l.b16 %v1063
    %v1150 = vunpack.c.h.b16 %v1063
    %v1151 = vunpack.c.l.b16 %v1064
    %v1152 = vunpack.c.h.b16 %v1064
    %v1153 = vunpack.c.l.b16 %v1065
    %v1154 = vunpack.c.h.b16 %v1065
    %v1155 = vunpack.c.l.b16 %v1066
    %v1156 = vunpack.c.h.b16 %v1066
    %v1157 = vunpack.c.l.b16 %v1067
    %v1158 = vunpack.c.h.b16 %v1067
    %v1159 = vunpack.c.l.b16 %v1068
    %v1160 = vunpack.c.h.b16 %v1068
    %v1161 = vunpack.c.l.b16 %v1069
    %v1162 = vunpack.c.h.b16 %v1069
    %v1163 = vunpack.c.l.b16 %v1070
    %v1164 = vunpack.c.h.b16 %v1070
    %v1165 = vunpack.c.l.b16 %v1071
    %v1166 = vunpack.c.h.b16 %v1071
    %v1167 = vunpack.c.l.b16 %v1072
    %v1168 = vunpack.c.h.b16 %v1072
    %v1169 = vpack.c.b16 %v1105, %v1105
    %v1170 = vpack.c.b16 %v1106, %v1106
    %v1171 = vpack.c.b16 %v1107, %v1107
    %v1172 = vpack.c.b16 %v1108, %v1108
    %v1173 = vpack.c.b16 %v1109, %v1109
    %v1174 = vpack.c.b16 %v1110, %v1110
    %v1175 = vpack.c.b16 %v1111, %v1111
    %v1176 = vpack.c.b16 %v1112, %v1112
    %v1177 = vpack.c.b16 %v1113, %v1113
    %v1178 = vpack.c.b16 %v1114, %v1114
    %v1179 = vpack.c.b16 %v1115, %v1115
    %v1180 = vpack.c.b16 %v1116, %v1116
    %v1181 = vpack.c.b16 %v1117, %v1117
    %v1182 = vpack.c.b16 %v1118, %v1118
    %v1183 = vpack.c.b16 %v1119, %v1119
    %v1184 = vpack.c.b16 %v1120, %v1120
    %v1185 = vpack.c.b16 %v1121, %v1121
    %v1186 = vpack.c.b16 %v1122, %v1122
    %v1187 = vpack.c.b16 %v1123, %v1123
    %v1188 = vpack.c.b16 %v1124, %v1124
    %v1189 = vpack.c.b16 %v1125, %v1125
    %v1190 = vpack.c.b16 %v1126, %v1126
    %v1191 = vpack.c.b16 %v1127, %v1127
    %v1192 = vpack.c.b16 %v1128, %v1128
    %v1193 = vpack.c.b16 %v1129, %v1129
    %v1194 = vpack.c.b16 %v1130, %v1130
    %v1195 = vpack.c.b16 %v1131, %v1131
    %v1196 = vpack.c.b16 %v1132, %v1132
    %v1197 = vpack.c.b16 %v1133, %v1133
    %v1198 = vpack.c.b16 %v1134, %v1134
    %v1199 = vpack.c.b16 %v1135, %v1135
    %v1200 = vpack.c.b16 %v1136, %v1136
    %v1201 = vpack.c.b16 %v1137, %v1137
    %v1202 = vpack.c.b16 %v1138, %v1138
    %v1203 = vpack.c.b16 %v1139, %v1139
    %v1204 = vpack.c.b16 %v1140, %v1140
    %v1205 = vpack.c.b16 %v1141, %v1141
    %v1206 = vpack.c.b16 %v1142, %v1142
    %v1207 = vpack.c.b16 %v1143, %v1143
    %v1208 = vpack.c.b16 %v1144, %v1144
    %v1209 = vpack.c.b16 %v1145, %v1145
    %v1210 = vpack.c.b16 %v1146, %v1146
    %v1211 = vpack.c.b16 %v1147, %v1147
    %v1212 = vpack.c.b16 %v1148, %v1148
    %v1213 = vpack.c.b16 %v1149, %v1149
    %v1214 = vpack.c.b16 %v1150, %v1150
    %v1215 = vpack.c.b16 %v1151, %v1151
    %v1216 = vpack.c.b16 %v1152, %v1152
    %v1217 = vpack.c.b16 %v1153, %v1153
    %v1218 = vpack.c.b16 %v1154, %v1154
    %v1219 = vpack.c.b16 %v1155, %v1155
    %v1220 = vpack.c.b16 %v1156, %v1156
    %v1221 = vpack.c.b16 %v1157, %v1157
    %v1222 = vpack.c.b16 %v1158, %v1158
    %v1223 = vpack.c.b16 %v1159, %v1159
    %v1224 = vpack.c.b16 %v1160, %v1160
    %v1225 = vpack.c.b16 %v1161, %v1161
    %v1226 = vpack.c.b16 %v1162, %v1162
    %v1227 = vpack.c.b16 %v1163, %v1163
    %v1228 = vpack.c.b16 %v1164, %v1164
    %v1229 = vpack.c.b16 %v1165, %v1165
    %v1230 = vpack.c.b16 %v1166, %v1166
    %v1231 = vpack.c.b16 %v1167, %v1167
    %v1232 = vpack.c.b16 %v1168, %v1168
    %1297 = vst [vmem:[%s3] sm:$0xf] %v1169
    %1298 = vst [vmem:[%s3 + $0x4] sm:$0xf] %v1170
    %1299 = vst [vmem:[%s3 + $0x8] sm:$0xf] %v1171
    %1300 = vst [vmem:[%s3 + $0xc] sm:$0xf] %v1172
    %1301 = vst [vmem:[%s3 + $0x10] sm:$0xf] %v1173
    %1302 = vst [vmem:[%s3 + $0x14] sm:$0xf] %v1174
    %1303 = vst [vmem:[%s3 + $0x18] sm:$0xf] %v1175
    %1304 = vst [vmem:[%s3 + $0x1c] sm:$0xf] %v1176
    %1305 = vst [vmem:[%s3 + $0x20] sm:$0xf] %v1177
    %1306 = vst [vmem:[%s3 + $0x24] sm:$0xf] %v1178
    %1307 = vst [vmem:[%s3 + $0x28] sm:$0xf] %v1179
    %1308 = vst [vmem:[%s3 + $0x2c] sm:$0xf] %v1180
    %1309 = vst [vmem:[%s3 + $0x30] sm:$0xf] %v1181
    %1310 = vst [vmem:[%s3 + $0x34] sm:$0xf] %v1182
    %1311 = vst [vmem:[%s3 + $0x38] sm:$0xf] %v1183
    %1312 = vst [vmem:[%s3 + $0x3c] sm:$0xf] %v1184
    %1313 = vst [vmem:[%s3 + $0x40] sm:$0xf] %v1185
    %1314 = vst [vmem:[%s3 + $0x44] sm:$0xf] %v1186
    %1315 = vst [vmem:[%s3 + $0x48] sm:$0xf] %v1187
    %1316 = vst [vmem:[%s3 + $0x4c] sm:$0xf] %v1188
    %1317 = vst [vmem:[%s3 + $0x50] sm:$0xf] %v1189
    %1318 = vst [vmem:[%s3 + $0x54] sm:$0xf] %v1190
    %1319 = vst [vmem:[%s3 + $0x58] sm:$0xf] %v1191
    %1320 = vst [vmem:[%s3 + $0x5c] sm:$0xf] %v1192
    %1321 = vst [vmem:[%s3 + $0x60] sm:$0xf] %v1193
    %1322 = vst [vmem:[%s3 + $0x64] sm:$0xf] %v1194
    %1323 = vst [vmem:[%s3 + $0x68] sm:$0xf] %v1195
    %1324 = vst [vmem:[%s3 + $0x6c] sm:$0xf] %v1196
    %1325 = vst [vmem:[%s3 + $0x70] sm:$0xf] %v1197
    %1326 = vst [vmem:[%s3 + $0x74] sm:$0xf] %v1198
    %1327 = vst [vmem:[%s3 + $0x78] sm:$0xf] %v1199
    %1328 = vst [vmem:[%s3 + $0x7c] sm:$0xf] %v1200
    %1329 = vst [vmem:[%s3 + $0x80] sm:$0xf] %v1201
    %1330 = vst [vmem:[%s3 + $0x84] sm:$0xf] %v1202
    %1331 = vst [vmem:[%s3 + $0x88] sm:$0xf] %v1203
    %1332 = vst [vmem:[%s3 + $0x8c] sm:$0xf] %v1204
    %1333 = vst [vmem:[%s3 + $0x90] sm:$0xf] %v1205
    %1334 = vst [vmem:[%s3 + $0x94] sm:$0xf] %v1206
    %1335 = vst [vmem:[%s3 + $0x98] sm:$0xf] %v1207
    %1336 = vst [vmem:[%s3 + $0x9c] sm:$0xf] %v1208
    %1337 = vst [vmem:[%s3 + $0xa0] sm:$0xf] %v1209
    %1338 = vst [vmem:[%s3 + $0xa4] sm:$0xf] %v1210
    %1339 = vst [vmem:[%s3 + $0xa8] sm:$0xf] %v1211
    %1340 = vst [vmem:[%s3 + $0xac] sm:$0xf] %v1212
    %1341 = vst [vmem:[%s3 + $0xb0] sm:$0xf] %v1213
    %1342 = vst [vmem:[%s3 + $0xb4] sm:$0xf] %v1214
    %1343 = vst [vmem:[%s3 + $0xb8] sm:$0xf] %v1215
    %1344 = vst [vmem:[%s3 + $0xbc] sm:$0xf] %v1216
    %1345 = vst [vmem:[%s3 + $0xc0] sm:$0xf] %v1217
    %1346 = vst [vmem:[%s3 + $0xc4] sm:$0xf] %v1218
    %1347 = vst [vmem:[%s3 + $0xc8] sm:$0xf] %v1219
    %1348 = vst [vmem:[%s3 + $0xcc] sm:$0xf] %v1220
    %1349 = vst [vmem:[%s3 + $0xd0] sm:$0xf] %v1221
    %1350 = vst [vmem:[%s3 + $0xd4] sm:$0xf] %v1222
    %1351 = vst [vmem:[%s3 + $0xd8] sm:$0xf] %v1223
    %1352 = vst [vmem:[%s3 + $0xdc] sm:$0xf] %v1224
    %1353 = vst [vmem:[%s3 + $0xe0] sm:$0xf] %v1225
    %1354 = vst [vmem:[%s3 + $0xe4] sm:$0xf] %v1226
    %1355 = vst [vmem:[%s3 + $0xe8] sm:$0xf] %v1227
    %1356 = vst [vmem:[%s3 + $0xec] sm:$0xf] %v1228
    %1357 = vst [vmem:[%s3 + $0xf0] sm:$0xf] %v1229
    %1358 = vst [vmem:[%s3 + $0xf4] sm:$0xf] %v1230
    %1359 = vst [vmem:[%s3 + $0xf8] sm:$0xf] %v1231
    %1360 = vst [vmem:[%s3 + $0xfc] sm:$0xf] %v1232
    // Predicated region
    $region22: #{double_conv_up_c3_forward.6} parent=1 // pred_check
      _
    $region23: #{double_conv_up_c3_forward.6} parent=1 // pred_check_branch
      %1362 = sbr.rel (0) target = $region25
    $region24: #{double_conv_up_c3_forward.6} parent=1 // pred_region
      _
    $region25: #{double_conv_up_c3_forward.6} parent=1 // pred_fallthru
      _
    // Predicated region
    $region26: #{double_conv_up_c3_forward.6} parent=1 // pred_check
      _
    $region27: #{double_conv_up_c3_forward.6} parent=1 // pred_check_branch
      %1364 = sbr.rel (0) target = $region29
    $region28: #{double_conv_up_c3_forward.6} parent=1 // pred_region
      _
    $region29: #{double_conv_up_c3_forward.6} parent=1 // pred_fallthru
      _
    %1365 = vsyncpa [#allocation3], 1
    %1366 = vsyncpa [#allocation5], 1

// kernel: double_conv_up_c3_forward.10
$region0: #{double_conv_up_c3_forward.10}
  #allocation0 [shape = 'u32[]', space=smem, size = 0x4, offset = 0x4, fixed_abs, tag = 'smem constant byte address 0x4 - core index']
  #allocation1 [shape = 'u32[144,128]{1,0:T(1,128)}', space=vmem, size = 0x12000, scoped, tag = 'internal scratch']
  %s0 = inlined_call_operand.vmem [shape: bf16[512,128], index: 0, kind: input, shape index: {}]
  %s1 = inlined_call_operand.vmem [shape: bf16[512,128], index: 1, kind: input, shape index: {}]
  %s2 = inlined_call_operand.vmem [shape: bf16[128,128], index: 2, kind: input, shape index: {}]
  %s3 = inlined_call_operand.vmem [shape: bf16[128,128], index: 3, kind: input, shape index: {}]
  %s4 = inlined_call_operand.vmem [shape: f32[1,128], index: 4, kind: input, shape index: {}]
  %s5 = inlined_call_operand.vmem [shape: bf16[512,128], index: 5, kind: output, shape index: {}]
  %s6 = sld [smem:[#allocation0]]
  $region30: #{double_conv_up_c3_forward.10} parent=0
    _
  %s8 = ssub.s32 1, %s6
  %s9 = scalar_select 0, %s8, %s6
  // Predicated region
  $region2: #{double_conv_up_c3_forward.10} parent=0 // pred_check
    _
  $region3: #{double_conv_up_c3_forward.10} parent=0 // pred_check_branch
    %11 = sbr.rel (0) target = $region5
  $region4: #{double_conv_up_c3_forward.10} parent=0 // pred_region
    _
  $region5: #{double_conv_up_c3_forward.10} parent=0 // pred_fallthru
    _
  // Predicated region
  $region6: #{double_conv_up_c3_forward.10} parent=0 // pred_check
    _
  $region7: #{double_conv_up_c3_forward.10} parent=0 // pred_check_branch
    %13 = sbr.rel (0) target = $region9
  $region8: #{double_conv_up_c3_forward.10} parent=0 // pred_region
    _
  $region9: #{double_conv_up_c3_forward.10} parent=0 // pred_fallthru
    _
  // Predicated region
  $region10: #{double_conv_up_c3_forward.10} parent=0 // pred_check
    _
  $region11: #{double_conv_up_c3_forward.10} parent=0 // pred_check_branch
    %15 = sbr.rel (0) target = $region13
  $region12: #{double_conv_up_c3_forward.10} parent=0 // pred_region
    _
  $region13: #{double_conv_up_c3_forward.10} parent=0 // pred_fallthru
    _
  // Predicated region
  $region14: #{double_conv_up_c3_forward.10} parent=0 // pred_check
    _
  $region15: #{double_conv_up_c3_forward.10} parent=0 // pred_check_branch
    %17 = sbr.rel (0) target = $region17
  $region16: #{double_conv_up_c3_forward.10} parent=0 // pred_region
    _
  $region17: #{double_conv_up_c3_forward.10} parent=0 // pred_fallthru
    _
  // Predicated region
  $region18: #{double_conv_up_c3_forward.10} parent=0 // pred_check
    _
  $region19: #{double_conv_up_c3_forward.10} parent=0 // pred_check_branch
    %19 = sbr.rel (0) target = $region21
  $region20: #{double_conv_up_c3_forward.10} parent=0 // pred_region
    _
  $region21: #{double_conv_up_c3_forward.10} parent=0 // pred_fallthru
    _
  %v21 = vld [vmem:[%s0] sm:$0xf]
  %v22 = vld [vmem:[%s0 + $0x4] sm:$0xf]
  %v23 = vld [vmem:[%s0 + $0x8] sm:$0xf]
  %v24 = vld [vmem:[%s0 + $0xc] sm:$0xf]
  %v25 = vld [vmem:[%s0 + $0x10] sm:$0xf]
  %v26 = vld [vmem:[%s0 + $0x14] sm:$0xf]
  %v27 = vld [vmem:[%s0 + $0x18] sm:$0xf]
  %v28 = vld [vmem:[%s0 + $0x1c] sm:$0xf]
  %v29 = vld [vmem:[%s0 + $0x20] sm:$0xf]
  %v30 = vld [vmem:[%s0 + $0x24] sm:$0xf]
  %v31 = vld [vmem:[%s0 + $0x28] sm:$0xf]
  %v32 = vld [vmem:[%s0 + $0x2c] sm:$0xf]
  %v33 = vld [vmem:[%s0 + $0x30] sm:$0xf]
  %v34 = vld [vmem:[%s0 + $0x34] sm:$0xf]
  %v35 = vld [vmem:[%s0 + $0x38] sm:$0xf]
  %v36 = vld [vmem:[%s0 + $0x3c] sm:$0xf]
  %v37 = vld [vmem:[%s0 + $0x40] sm:$0xf]
  %v38 = vld [vmem:[%s0 + $0x44] sm:$0xf]
  %v39 = vld [vmem:[%s0 + $0x48] sm:$0xf]
  %v40 = vld [vmem:[%s0 + $0x4c] sm:$0xf]
  %v41 = vld [vmem:[%s0 + $0x50] sm:$0xf]
  %v42 = vld [vmem:[%s0 + $0x54] sm:$0xf]
  %v43 = vld [vmem:[%s0 + $0x58] sm:$0xf]
  %v44 = vld [vmem:[%s0 + $0x5c] sm:$0xf]
  %v45 = vld [vmem:[%s0 + $0x60] sm:$0xf]
  %v46 = vld [vmem:[%s0 + $0x64] sm:$0xf]
  %v47 = vld [vmem:[%s0 + $0x68] sm:$0xf]
  %v48 = vld [vmem:[%s0 + $0x6c] sm:$0xf]
  %v49 = vld [vmem:[%s0 + $0x70] sm:$0xf]
  %v50 = vld [vmem:[%s0 + $0x74] sm:$0xf]
  %v51 = vld [vmem:[%s0 + $0x78] sm:$0xf]
  %v52 = vld [vmem:[%s0 + $0x7c] sm:$0xf]
  %v53 = vld [vmem:[%s0 + $0x80] sm:$0xf]
  %v54 = vld [vmem:[%s0 + $0x84] sm:$0xf]
  %v55 = vld [vmem:[%s0 + $0x88] sm:$0xf]
  %v56 = vld [vmem:[%s0 + $0x8c] sm:$0xf]
  %v57 = vld [vmem:[%s0 + $0x90] sm:$0xf]
  %v58 = vld [vmem:[%s0 + $0x94] sm:$0xf]
  %v59 = vld [vmem:[%s0 + $0x98] sm:$0xf]
  %v60 = vld [vmem:[%s0 + $0x9c] sm:$0xf]
  %v61 = vld [vmem:[%s0 + $0xa0] sm:$0xf]
  %v62 = vld [vmem:[%s0 + $0xa4] sm:$0xf]
  %v63 = vld [vmem:[%s0 + $0xa8] sm:$0xf]
  %v64 = vld [vmem:[%s0 + $0xac] sm:$0xf]
  %v65 = vld [vmem:[%s0 + $0xb0] sm:$0xf]
  %v66 = vld [vmem:[%s0 + $0xb4] sm:$0xf]
  %v67 = vld [vmem:[%s0 + $0xb8] sm:$0xf]
  %v68 = vld [vmem:[%s0 + $0xbc] sm:$0xf]
  %v69 = vld [vmem:[%s0 + $0xc0] sm:$0xf]
  %v70 = vld [vmem:[%s0 + $0xc4] sm:$0xf]
  %v71 = vld [vmem:[%s0 + $0xc8] sm:$0xf]
  %v72 = vld [vmem:[%s0 + $0xcc] sm:$0xf]
  %v73 = vld [vmem:[%s0 + $0xd0] sm:$0xf]
  %v74 = vld [vmem:[%s0 + $0xd4] sm:$0xf]
  %v75 = vld [vmem:[%s0 + $0xd8] sm:$0xf]
  %v76 = vld [vmem:[%s0 + $0xdc] sm:$0xf]
  %v77 = vld [vmem:[%s0 + $0xe0] sm:$0xf]
  %v78 = vld [vmem:[%s0 + $0xe4] sm:$0xf]
  %v79 = vld [vmem:[%s0 + $0xe8] sm:$0xf]
  %v80 = vld [vmem:[%s0 + $0xec] sm:$0xf]
  %v81 = vld [vmem:[%s0 + $0xf0] sm:$0xf]
  %v82 = vld [vmem:[%s0 + $0xf4] sm:$0xf]
  %v83 = vld [vmem:[%s0 + $0xf8] sm:$0xf]
  %v84 = vld [vmem:[%s0 + $0xfc] sm:$0xf]
  %v85 = vld [vmem:[%s2] sm:$0xf]
  %v86 = vld [vmem:[%s2 + $0x4] sm:$0xf]
  %v87 = vld [vmem:[%s2 + $0x8] sm:$0xf]
  %v88 = vld [vmem:[%s2 + $0xc] sm:$0xf]
  %v89 = vld [vmem:[%s2 + $0x10] sm:$0xf]
  %v90 = vld [vmem:[%s2 + $0x14] sm:$0xf]
  %v91 = vld [vmem:[%s2 + $0x18] sm:$0xf]
  %v92 = vld [vmem:[%s2 + $0x1c] sm:$0xf]
  %v93 = vld [vmem:[%s2 + $0x20] sm:$0xf]
  %v94 = vld [vmem:[%s2 + $0x24] sm:$0xf]
  %v95 = vld [vmem:[%s2 + $0x28] sm:$0xf]
  %v96 = vld [vmem:[%s2 + $0x2c] sm:$0xf]
  %v97 = vld [vmem:[%s2 + $0x30] sm:$0xf]
  %v98 = vld [vmem:[%s2 + $0x34] sm:$0xf]
  %v99 = vld [vmem:[%s2 + $0x38] sm:$0xf]
  %v100 = vld [vmem:[%s2 + $0x3c] sm:$0xf]
  %v101 = vld [vmem:[%s1] sm:$0xf]
  %v102 = vld [vmem:[%s1 + $0x4] sm:$0xf]
  %v103 = vld [vmem:[%s1 + $0x8] sm:$0xf]
  %v104 = vld [vmem:[%s1 + $0xc] sm:$0xf]
  %v105 = vld [vmem:[%s1 + $0x10] sm:$0xf]
  %v106 = vld [vmem:[%s1 + $0x14] sm:$0xf]
  %v107 = vld [vmem:[%s1 + $0x18] sm:$0xf]
  %v108 = vld [vmem:[%s1 + $0x1c] sm:$0xf]
  %v109 = vld [vmem:[%s1 + $0x20] sm:$0xf]
  %v110 = vld [vmem:[%s1 + $0x24] sm:$0xf]
  %v111 = vld [vmem:[%s1 + $0x28] sm:$0xf]
  %v112 = vld [vmem:[%s1 + $0x2c] sm:$0xf]
  %v113 = vld [vmem:[%s1 + $0x30] sm:$0xf]
  %v114 = vld [vmem:[%s1 + $0x34] sm:$0xf]
  %v115 = vld [vmem:[%s1 + $0x38] sm:$0xf]
  %v116 = vld [vmem:[%s1 + $0x3c] sm:$0xf]
  %v117 = vld [vmem:[%s1 + $0x40] sm:$0xf]
  %v118 = vld [vmem:[%s1 + $0x44] sm:$0xf]
  %v119 = vld [vmem:[%s1 + $0x48] sm:$0xf]
  %v120 = vld [vmem:[%s1 + $0x4c] sm:$0xf]
  %v121 = vld [vmem:[%s1 + $0x50] sm:$0xf]
  %v122 = vld [vmem:[%s1 + $0x54] sm:$0xf]
  %v123 = vld [vmem:[%s1 + $0x58] sm:$0xf]
  %v124 = vld [vmem:[%s1 + $0x5c] sm:$0xf]
  %v125 = vld [vmem:[%s1 + $0x60] sm:$0xf]
  %v126 = vld [vmem:[%s1 + $0x64] sm:$0xf]
  %v127 = vld [vmem:[%s1 + $0x68] sm:$0xf]
  %v128 = vld [vmem:[%s1 + $0x6c] sm:$0xf]
  %v129 = vld [vmem:[%s1 + $0x70] sm:$0xf]
  %v130 = vld [vmem:[%s1 + $0x74] sm:$0xf]
  %v131 = vld [vmem:[%s1 + $0x78] sm:$0xf]
  %v132 = vld [vmem:[%s1 + $0x7c] sm:$0xf]
  %v133 = vld [vmem:[%s1 + $0x80] sm:$0xf]
  %v134 = vld [vmem:[%s1 + $0x84] sm:$0xf]
  %v135 = vld [vmem:[%s1 + $0x88] sm:$0xf]
  %v136 = vld [vmem:[%s1 + $0x8c] sm:$0xf]
  %v137 = vld [vmem:[%s1 + $0x90] sm:$0xf]
  %v138 = vld [vmem:[%s1 + $0x94] sm:$0xf]
  %v139 = vld [vmem:[%s1 + $0x98] sm:$0xf]
  %v140 = vld [vmem:[%s1 + $0x9c] sm:$0xf]
  %v141 = vld [vmem:[%s1 + $0xa0] sm:$0xf]
  %v142 = vld [vmem:[%s1 + $0xa4] sm:$0xf]
  %v143 = vld [vmem:[%s1 + $0xa8] sm:$0xf]
  %v144 = vld [vmem:[%s1 + $0xac] sm:$0xf]
  %v145 = vld [vmem:[%s1 + $0xb0] sm:$0xf]
  %v146 = vld [vmem:[%s1 + $0xb4] sm:$0xf]
  %v147 = vld [vmem:[%s1 + $0xb8] sm:$0xf]
  %v148 = vld [vmem:[%s1 + $0xbc] sm:$0xf]
  %v149 = vld [vmem:[%s1 + $0xc0] sm:$0xf]
  %v150 = vld [vmem:[%s1 + $0xc4] sm:$0xf]
  %v151 = vld [vmem:[%s1 + $0xc8] sm:$0xf]
  %v152 = vld [vmem:[%s1 + $0xcc] sm:$0xf]
  %v153 = vld [vmem:[%s1 + $0xd0] sm:$0xf]
  %v154 = vld [vmem:[%s1 + $0xd4] sm:$0xf]
  %v155 = vld [vmem:[%s1 + $0xd8] sm:$0xf]
  %v156 = vld [vmem:[%s1 + $0xdc] sm:$0xf]
  %v157 = vld [vmem:[%s1 + $0xe0] sm:$0xf]
  %v158 = vld [vmem:[%s1 + $0xe4] sm:$0xf]
  %v159 = vld [vmem:[%s1 + $0xe8] sm:$0xf]
  %v160 = vld [vmem:[%s1 + $0xec] sm:$0xf]
  %v161 = vld [vmem:[%s1 + $0xf0] sm:$0xf]
  %v162 = vld [vmem:[%s1 + $0xf4] sm:$0xf]
  %v163 = vld [vmem:[%s1 + $0xf8] sm:$0xf]
  %v164 = vld [vmem:[%s1 + $0xfc] sm:$0xf]
  %v165 = vld [vmem:[%s3] sm:$0xf]
  %v166 = vld [vmem:[%s3 + $0x4] sm:$0xf]
  %v167 = vld [vmem:[%s3 + $0x8] sm:$0xf]
  %v168 = vld [vmem:[%s3 + $0xc] sm:$0xf]
  %v169 = vld [vmem:[%s3 + $0x10] sm:$0xf]
  %v170 = vld [vmem:[%s3 + $0x14] sm:$0xf]
  %v171 = vld [vmem:[%s3 + $0x18] sm:$0xf]
  %v172 = vld [vmem:[%s3 + $0x1c] sm:$0xf]
  %v173 = vld [vmem:[%s3 + $0x20] sm:$0xf]
  %v174 = vld [vmem:[%s3 + $0x24] sm:$0xf]
  %v175 = vld [vmem:[%s3 + $0x28] sm:$0xf]
  %v176 = vld [vmem:[%s3 + $0x2c] sm:$0xf]
  %v177 = vld [vmem:[%s3 + $0x30] sm:$0xf]
  %v178 = vld [vmem:[%s3 + $0x34] sm:$0xf]
  %v179 = vld [vmem:[%s3 + $0x38] sm:$0xf]
  %v180 = vld [vmem:[%s3 + $0x3c] sm:$0xf]
  %v245 = vunpack.c.l.b16 %v101
  %v246 = vunpack.c.l.b16 %v102
  %v247 = vunpack.c.l.b16 %v103
  %v248 = vunpack.c.l.b16 %v104
  %v249 = vunpack.c.l.b16 %v105
  %v250 = vunpack.c.l.b16 %v106
  %v251 = vunpack.c.l.b16 %v107
  %v252 = vunpack.c.l.b16 %v108
  %v253 = vunpack.c.l.b16 %v109
  %v254 = vunpack.c.l.b16 %v110
  %v255 = vunpack.c.l.b16 %v111
  %v256 = vunpack.c.l.b16 %v112
  %v257 = vunpack.c.l.b16 %v113
  %v258 = vunpack.c.l.b16 %v114
  %v259 = vunpack.c.l.b16 %v115
  %v260 = vunpack.c.l.b16 %v116
  %v261 = vunpack.c.l.b16 %v117
  %v262 = vunpack.c.l.b16 %v118
  %v263 = vunpack.c.l.b16 %v119
  %v264 = vunpack.c.l.b16 %v120
  %v265 = vunpack.c.l.b16 %v121
  %v266 = vunpack.c.l.b16 %v122
  %v267 = vunpack.c.l.b16 %v123
  %v268 = vunpack.c.l.b16 %v124
  %v269 = vunpack.c.l.b16 %v125
  %v270 = vunpack.c.l.b16 %v126
  %v271 = vunpack.c.l.b16 %v127
  %v272 = vunpack.c.l.b16 %v128
  %v273 = vunpack.c.l.b16 %v129
  %v274 = vunpack.c.l.b16 %v130
  %v275 = vunpack.c.l.b16 %v131
  %v276 = vunpack.c.l.b16 %v132
  %v277 = vunpack.c.l.b16 %v133
  %v278 = vunpack.c.l.b16 %v134
  %v279 = vunpack.c.l.b16 %v135
  %v280 = vunpack.c.l.b16 %v136
  %v281 = vunpack.c.l.b16 %v137
  %v282 = vunpack.c.l.b16 %v138
  %v283 = vunpack.c.l.b16 %v139
  %v284 = vunpack.c.l.b16 %v140
  %v285 = vunpack.c.l.b16 %v141
  %v286 = vunpack.c.l.b16 %v142
  %v287 = vunpack.c.l.b16 %v143
  %v288 = vunpack.c.l.b16 %v144
  %v289 = vunpack.c.l.b16 %v145
  %v290 = vunpack.c.l.b16 %v146
  %v291 = vunpack.c.l.b16 %v147
  %v292 = vunpack.c.l.b16 %v148
  %v293 = vunpack.c.l.b16 %v149
  %v294 = vunpack.c.l.b16 %v150
  %v295 = vunpack.c.l.b16 %v151
  %v296 = vunpack.c.l.b16 %v152
  %v297 = vunpack.c.l.b16 %v153
  %v298 = vunpack.c.l.b16 %v154
  %v299 = vunpack.c.l.b16 %v155
  %v300 = vunpack.c.l.b16 %v156
  %v301 = vunpack.c.l.b16 %v157
  %v302 = vunpack.c.l.b16 %v158
  %v303 = vunpack.c.l.b16 %v159
  %v304 = vunpack.c.l.b16 %v160
  %v305 = vunpack.c.l.b16 %v161
  %v306 = vunpack.c.l.b16 %v162
  %v307 = vunpack.c.l.b16 %v163
  %v308 = vunpack.c.l.b16 %v164
  %v309 = vpack.c.b16 %v246, %v245
  %v310 = vpack.c.b16 %v248, %v247
  %v311 = vpack.c.b16 %v250, %v249
  %v312 = vpack.c.b16 %v252, %v251
  %v313 = vpack.c.b16 %v254, %v253
  %v314 = vpack.c.b16 %v256, %v255
  %v315 = vpack.c.b16 %v258, %v257
  %v316 = vpack.c.b16 %v260, %v259
  %v317 = vpack.c.b16 %v262, %v261
  %v318 = vpack.c.b16 %v264, %v263
  %v319 = vpack.c.b16 %v266, %v265
  %v320 = vpack.c.b16 %v268, %v267
  %v321 = vpack.c.b16 %v270, %v269
  %v322 = vpack.c.b16 %v272, %v271
  %v323 = vpack.c.b16 %v274, %v273
  %v324 = vpack.c.b16 %v276, %v275
  %v325 = vpack.c.b16 %v278, %v277
  %v326 = vpack.c.b16 %v280, %v279
  %v327 = vpack.c.b16 %v282, %v281
  %v328 = vpack.c.b16 %v284, %v283
  %v329 = vpack.c.b16 %v286, %v285
  %v330 = vpack.c.b16 %v288, %v287
  %v331 = vpack.c.b16 %v290, %v289
  %v332 = vpack.c.b16 %v292, %v291
  %v333 = vpack.c.b16 %v294, %v293
  %v334 = vpack.c.b16 %v296, %v295
  %v335 = vpack.c.b16 %v298, %v297
  %v336 = vpack.c.b16 %v300, %v299
  %v337 = vpack.c.b16 %v302, %v301
  %v338 = vpack.c.b16 %v304, %v303
  %v339 = vpack.c.b16 %v306, %v305
  %v340 = vpack.c.b16 %v308, %v307
  %v389 = vunpack.c.l.b16 %v165
  %v390 = vunpack.c.l.b16 %v166
  %v391 = vunpack.c.l.b16 %v167
  %v392 = vunpack.c.l.b16 %v168
  %v393 = vunpack.c.l.b16 %v169
  %v394 = vunpack.c.l.b16 %v170
  %v395 = vunpack.c.l.b16 %v171
  %v396 = vunpack.c.l.b16 %v172
  %v397 = vunpack.c.l.b16 %v173
  %v398 = vunpack.c.l.b16 %v174
  %v399 = vunpack.c.l.b16 %v175
  %v400 = vunpack.c.l.b16 %v176
  %v401 = vunpack.c.l.b16 %v177
  %v402 = vunpack.c.l.b16 %v178
  %v403 = vunpack.c.l.b16 %v179
  %v404 = vunpack.c.l.b16 %v180
  %v405 = vpack.c.b16 %v390, %v389
  %v406 = vpack.c.b16 %v392, %v391
  %v407 = vpack.c.b16 %v394, %v393
  %v408 = vpack.c.b16 %v396, %v395
  %v409 = vpack.c.b16 %v398, %v397
  %v410 = vpack.c.b16 %v400, %v399
  %v411 = vpack.c.b16 %v402, %v401
  %v412 = vpack.c.b16 %v404, %v403
  %421 = vmatprep.subr.bf16.mxu0 0
  %422 = vmatpush1.bf16.msra.mxu0 %v412
  %423 = vmatprep.subr.bf16.mxu0 0
  %424 = vmatpush1.bf16.msra.mxu0 %v411
  %425 = vmatprep.subr.bf16.mxu0 0
  %426 = vmatpush1.bf16.msra.mxu0 %v410
  %427 = vmatprep.subr.bf16.mxu0 0
  %428 = vmatpush1.bf16.msra.mxu0 %v409
  %429 = vmatprep.subr.bf16.mxu0 0
  %430 = vmatpush1.bf16.msra.mxu0 %v408
  %431 = vmatprep.subr.bf16.mxu0 0
  %432 = vmatpush1.bf16.msra.mxu0 %v407
  %433 = vmatprep.subr.bf16.mxu0 0
  %434 = vmatpush1.bf16.msra.mxu0 %v406
  %435 = vmatprep.subr.bf16.mxu0 0
  %436 = vmatpush1.bf16.msra.mxu0 %v405
  %437 = vmatprep.subr.bf16.mxu0 0
  %438 = vmatpush2.bf16.msra.mxu0 0
  %439 = vmatprep.subr.bf16.mxu0 0
  %440 = vmatpush2.bf16.msra.mxu0 0
  %441 = vmatprep.subr.bf16.mxu0 0
  %442 = vmatpush2.bf16.msra.mxu0 0
  %443 = vmatprep.subr.bf16.mxu0 0
  %444 = vmatpush2.bf16.msra.mxu0 0
  %445 = vmatprep.subr.bf16.mxu0 0
  %446 = vmatpush2.bf16.msra.mxu0 0
  %447 = vmatprep.subr.bf16.mxu0 0
  %448 = vmatpush2.bf16.msra.mxu0 0
  %449 = vmatprep.subr.bf16.mxu0 0
  %450 = vmatpush2.bf16.msra.mxu0 0
  %451 = vmatprep.subr.bf16.mxu0 0
  %452 = vmatpush2.bf16.msra.mxu0 0
  %453 = vmatprep.mubr.bf16.mxu0 0
  %454 = vmatmul.mubr.bf16.gmra.mxu0 %v309
  %v455 = vpop.f32.mrf.mxu0
  %v456 = vadd.f32 0.0, %v455
  %v457 = vpop.f32.mrf.mxu0
  %v458 = vpop.f32.mrf.mxu0
  %v459 = vadd.f32 0.0, %v458
  %v460 = vpop.f32.mrf.mxu0
  %461 = vmatprep.mubr.bf16.mxu0 0
  %462 = vmatmul.mubr.bf16.gmra.mxu0 %v310
  %v463 = vpop.f32.mrf.mxu0
  %v464 = vadd.f32 0.0, %v463
  %v465 = vpop.f32.mrf.mxu0
  %v466 = vpop.f32.mrf.mxu0
  %v467 = vadd.f32 0.0, %v466
  %v468 = vpop.f32.mrf.mxu0
  %469 = vmatprep.mubr.bf16.mxu0 0
  %470 = vmatmul.mubr.bf16.gmra.mxu0 %v311
  %v471 = vpop.f32.mrf.mxu0
  %v472 = vadd.f32 0.0, %v471
  %v473 = vpop.f32.mrf.mxu0
  %v474 = vpop.f32.mrf.mxu0
  %v475 = vadd.f32 0.0, %v474
  %v476 = vpop.f32.mrf.mxu0
  %477 = vmatprep.mubr.bf16.mxu0 0
  %478 = vmatmul.mubr.bf16.gmra.mxu0 %v312
  %v479 = vpop.f32.mrf.mxu0
  %v480 = vadd.f32 0.0, %v479
  %v481 = vpop.f32.mrf.mxu0
  %v482 = vpop.f32.mrf.mxu0
  %v483 = vadd.f32 0.0, %v482
  %v484 = vpop.f32.mrf.mxu0
  %485 = vmatprep.mubr.bf16.mxu0 0
  %486 = vmatmul.mubr.bf16.gmra.mxu0 %v313
  %v487 = vpop.f32.mrf.mxu0
  %v488 = vadd.f32 0.0, %v487
  %v489 = vpop.f32.mrf.mxu0
  %v490 = vpop.f32.mrf.mxu0
  %v491 = vadd.f32 0.0, %v490
  %v492 = vpop.f32.mrf.mxu0
  %493 = vmatprep.mubr.bf16.mxu0 0
  %494 = vmatmul.mubr.bf16.gmra.mxu0 %v314
  %v495 = vpop.f32.mrf.mxu0
  %v496 = vadd.f32 0.0, %v495
  %v497 = vpop.f32.mrf.mxu0
  %v498 = vpop.f32.mrf.mxu0
  %v499 = vadd.f32 0.0, %v498
  %v500 = vpop.f32.mrf.mxu0
  %501 = vmatprep.mubr.bf16.mxu0 0
  %502 = vmatmul.mubr.bf16.gmra.mxu0 %v315
  %v503 = vpop.f32.mrf.mxu0
  %v504 = vadd.f32 0.0, %v503
  %v505 = vpop.f32.mrf.mxu0
  %v506 = vpop.f32.mrf.mxu0
  %v507 = vadd.f32 0.0, %v506
  %v508 = vpop.f32.mrf.mxu0
  %509 = vmatprep.mubr.bf16.mxu0 0
  %510 = vmatmul.mubr.bf16.gmra.mxu0 %v316
  %v511 = vpop.f32.mrf.mxu0
  %v512 = vadd.f32 0.0, %v511
  %v513 = vpop.f32.mrf.mxu0
  %v514 = vpop.f32.mrf.mxu0
  %v515 = vadd.f32 0.0, %v514
  %v516 = vpop.f32.mrf.mxu0
  %517 = vmatprep.mubr.bf16.mxu0 0
  %518 = vmatmul.mubr.bf16.gmra.mxu0 %v317
  %v519 = vpop.f32.mrf.mxu0
  %v520 = vadd.f32 0.0, %v519
  %v521 = vpop.f32.mrf.mxu0
  %v522 = vpop.f32.mrf.mxu0
  %v523 = vadd.f32 0.0, %v522
  %v524 = vpop.f32.mrf.mxu0
  %525 = vmatprep.mubr.bf16.mxu0 0
  %526 = vmatmul.mubr.bf16.gmra.mxu0 %v318
  %v527 = vpop.f32.mrf.mxu0
  %v528 = vadd.f32 0.0, %v527
  %v529 = vpop.f32.mrf.mxu0
  %v530 = vpop.f32.mrf.mxu0
  %v531 = vadd.f32 0.0, %v530
  %v532 = vpop.f32.mrf.mxu0
  %533 = vmatprep.mubr.bf16.mxu0 0
  %534 = vmatmul.mubr.bf16.gmra.mxu0 %v319
  %v535 = vpop.f32.mrf.mxu0
  %v536 = vadd.f32 0.0, %v535
  %v537 = vpop.f32.mrf.mxu0
  %v538 = vpop.f32.mrf.mxu0
  %v539 = vadd.f32 0.0, %v538
  %v540 = vpop.f32.mrf.mxu0
  %541 = vmatprep.mubr.bf16.mxu0 0
  %542 = vmatmul.mubr.bf16.gmra.mxu0 %v320
  %v543 = vpop.f32.mrf.mxu0
  %v544 = vadd.f32 0.0, %v543
  %v545 = vpop.f32.mrf.mxu0
  %v546 = vpop.f32.mrf.mxu0
  %v547 = vadd.f32 0.0, %v546
  %v548 = vpop.f32.mrf.mxu0
  %549 = vmatprep.mubr.bf16.mxu0 0
  %550 = vmatmul.mubr.bf16.gmra.mxu0 %v321
  %v551 = vpop.f32.mrf.mxu0
  %v552 = vadd.f32 0.0, %v551
  %v553 = vpop.f32.mrf.mxu0
  %v554 = vpop.f32.mrf.mxu0
  %v555 = vadd.f32 0.0, %v554
  %v556 = vpop.f32.mrf.mxu0
  %557 = vmatprep.mubr.bf16.mxu0 0
  %558 = vmatmul.mubr.bf16.gmra.mxu0 %v322
  %v559 = vpop.f32.mrf.mxu0
  %v560 = vadd.f32 0.0, %v559
  %v561 = vpop.f32.mrf.mxu0
  %v562 = vpop.f32.mrf.mxu0
  %v563 = vadd.f32 0.0, %v562
  %v564 = vpop.f32.mrf.mxu0
  %565 = vmatprep.mubr.bf16.mxu0 0
  %566 = vmatmul.mubr.bf16.gmra.mxu0 %v323
  %v567 = vpop.f32.mrf.mxu0
  %v568 = vadd.f32 0.0, %v567
  %v569 = vpop.f32.mrf.mxu0
  %v570 = vpop.f32.mrf.mxu0
  %v571 = vadd.f32 0.0, %v570
  %v572 = vpop.f32.mrf.mxu0
  %573 = vmatprep.mubr.bf16.mxu0 0
  %574 = vmatmul.mubr.bf16.gmra.mxu0 %v324
  %v575 = vpop.f32.mrf.mxu0
  %v576 = vadd.f32 0.0, %v575
  %v577 = vpop.f32.mrf.mxu0
  %v578 = vpop.f32.mrf.mxu0
  %v579 = vadd.f32 0.0, %v578
  %v580 = vpop.f32.mrf.mxu0
  %581 = vmatprep.mubr.bf16.mxu0 0
  %582 = vmatmul.mubr.bf16.gmra.mxu0 %v325
  %v583 = vpop.f32.mrf.mxu0
  %v584 = vadd.f32 0.0, %v583
  %v585 = vpop.f32.mrf.mxu0
  %v586 = vpop.f32.mrf.mxu0
  %v587 = vadd.f32 0.0, %v586
  %v588 = vpop.f32.mrf.mxu0
  %589 = vmatprep.mubr.bf16.mxu0 0
  %590 = vmatmul.mubr.bf16.gmra.mxu0 %v326
  %v591 = vpop.f32.mrf.mxu0
  %v592 = vadd.f32 0.0, %v591
  %v593 = vpop.f32.mrf.mxu0
  %v594 = vpop.f32.mrf.mxu0
  %v595 = vadd.f32 0.0, %v594
  %v596 = vpop.f32.mrf.mxu0
  %597 = vmatprep.mubr.bf16.mxu0 0
  %598 = vmatmul.mubr.bf16.gmra.mxu0 %v327
  %v599 = vpop.f32.mrf.mxu0
  %v600 = vadd.f32 0.0, %v599
  %v601 = vpop.f32.mrf.mxu0
  %v602 = vpop.f32.mrf.mxu0
  %v603 = vadd.f32 0.0, %v602
  %v604 = vpop.f32.mrf.mxu0
  %605 = vmatprep.mubr.bf16.mxu0 0
  %606 = vmatmul.mubr.bf16.gmra.mxu0 %v328
  %v607 = vpop.f32.mrf.mxu0
  %v608 = vadd.f32 0.0, %v607
  %v609 = vpop.f32.mrf.mxu0
  %v610 = vpop.f32.mrf.mxu0
  %v611 = vadd.f32 0.0, %v610
  %v612 = vpop.f32.mrf.mxu0
  %613 = vmatprep.mubr.bf16.mxu0 0
  %614 = vmatmul.mubr.bf16.gmra.mxu0 %v329
  %v615 = vpop.f32.mrf.mxu0
  %v616 = vadd.f32 0.0, %v615
  %v617 = vpop.f32.mrf.mxu0
  %v618 = vpop.f32.mrf.mxu0
  %v619 = vadd.f32 0.0, %v618
  %v620 = vpop.f32.mrf.mxu0
  %621 = vmatprep.mubr.bf16.mxu0 0
  %622 = vmatmul.mubr.bf16.gmra.mxu0 %v330
  %v623 = vpop.f32.mrf.mxu0
  %v624 = vadd.f32 0.0, %v623
  %v625 = vpop.f32.mrf.mxu0
  %v626 = vpop.f32.mrf.mxu0
  %v627 = vadd.f32 0.0, %v626
  %v628 = vpop.f32.mrf.mxu0
  %629 = vmatprep.mubr.bf16.mxu0 0
  %630 = vmatmul.mubr.bf16.gmra.mxu0 %v331
  %v631 = vpop.f32.mrf.mxu0
  %v632 = vadd.f32 0.0, %v631
  %v633 = vpop.f32.mrf.mxu0
  %v634 = vpop.f32.mrf.mxu0
  %v635 = vadd.f32 0.0, %v634
  %v636 = vpop.f32.mrf.mxu0
  %637 = vmatprep.mubr.bf16.mxu0 0
  %638 = vmatmul.mubr.bf16.gmra.mxu0 %v332
  %v639 = vpop.f32.mrf.mxu0
  %v640 = vadd.f32 0.0, %v639
  %v641 = vpop.f32.mrf.mxu0
  %v642 = vpop.f32.mrf.mxu0
  %v643 = vadd.f32 0.0, %v642
  %v644 = vpop.f32.mrf.mxu0
  %645 = vmatprep.mubr.bf16.mxu0 0
  %646 = vmatmul.mubr.bf16.gmra.mxu0 %v333
  %v647 = vpop.f32.mrf.mxu0
  %v648 = vadd.f32 0.0, %v647
  %v649 = vpop.f32.mrf.mxu0
  %v650 = vpop.f32.mrf.mxu0
  %v651 = vadd.f32 0.0, %v650
  %v652 = vpop.f32.mrf.mxu0
  %653 = vmatprep.mubr.bf16.mxu0 0
  %654 = vmatmul.mubr.bf16.gmra.mxu0 %v334
  %v655 = vpop.f32.mrf.mxu0
  %v656 = vadd.f32 0.0, %v655
  %v657 = vpop.f32.mrf.mxu0
  %v658 = vpop.f32.mrf.mxu0
  %v659 = vadd.f32 0.0, %v658
  %v660 = vpop.f32.mrf.mxu0
  %661 = vmatprep.mubr.bf16.mxu0 0
  %662 = vmatmul.mubr.bf16.gmra.mxu0 %v335
  %v663 = vpop.f32.mrf.mxu0
  %v664 = vadd.f32 0.0, %v663
  %v665 = vpop.f32.mrf.mxu0
  %v666 = vpop.f32.mrf.mxu0
  %v667 = vadd.f32 0.0, %v666
  %v668 = vpop.f32.mrf.mxu0
  %669 = vmatprep.mubr.bf16.mxu0 0
  %670 = vmatmul.mubr.bf16.gmra.mxu0 %v336
  %v671 = vpop.f32.mrf.mxu0
  %v672 = vadd.f32 0.0, %v671
  %v673 = vpop.f32.mrf.mxu0
  %v674 = vpop.f32.mrf.mxu0
  %v675 = vadd.f32 0.0, %v674
  %v676 = vpop.f32.mrf.mxu0
  %677 = vmatprep.mubr.bf16.mxu0 0
  %678 = vmatmul.mubr.bf16.gmra.mxu0 %v337
  %v679 = vpop.f32.mrf.mxu0
  %v680 = vadd.f32 0.0, %v679
  %v681 = vpop.f32.mrf.mxu0
  %v682 = vpop.f32.mrf.mxu0
  %v683 = vadd.f32 0.0, %v682
  %v684 = vpop.f32.mrf.mxu0
  %685 = vmatprep.mubr.bf16.mxu0 0
  %686 = vmatmul.mubr.bf16.gmra.mxu0 %v338
  %v687 = vpop.f32.mrf.mxu0
  %v688 = vadd.f32 0.0, %v687
  %v689 = vpop.f32.mrf.mxu0
  %v690 = vpop.f32.mrf.mxu0
  %v691 = vadd.f32 0.0, %v690
  %v692 = vpop.f32.mrf.mxu0
  %693 = vmatprep.mubr.bf16.mxu0 0
  %694 = vmatmul.mubr.bf16.gmra.mxu0 %v339
  %v695 = vpop.f32.mrf.mxu0
  %v696 = vadd.f32 0.0, %v695
  %v697 = vpop.f32.mrf.mxu0
  %v698 = vpop.f32.mrf.mxu0
  %v699 = vadd.f32 0.0, %v698
  %v700 = vpop.f32.mrf.mxu0
  %701 = vmatprep.mubr.bf16.mxu0 0
  %702 = vmatmul.mubr.bf16.gmra.mxu0 %v340
  %v703 = vpop.f32.mrf.mxu0
  %v704 = vadd.f32 0.0, %v703
  %v705 = vpop.f32.mrf.mxu0
  %v706 = vpop.f32.mrf.mxu0
  %v707 = vadd.f32 0.0, %v706
  %v708 = vpop.f32.mrf.mxu0
  %709 = vdwg.mxu0
  %v774 = vunpack.c.l.b16 %v21
  %v775 = vunpack.c.l.b16 %v22
  %v776 = vunpack.c.l.b16 %v23
  %v777 = vunpack.c.l.b16 %v24
  %v778 = vunpack.c.l.b16 %v25
  %v779 = vunpack.c.l.b16 %v26
  %v780 = vunpack.c.l.b16 %v27
  %v781 = vunpack.c.l.b16 %v28
  %v782 = vunpack.c.l.b16 %v29
  %v783 = vunpack.c.l.b16 %v30
  %v784 = vunpack.c.l.b16 %v31
  %v785 = vunpack.c.l.b16 %v32
  %v786 = vunpack.c.l.b16 %v33
  %v787 = vunpack.c.l.b16 %v34
  %v788 = vunpack.c.l.b16 %v35
  %v789 = vunpack.c.l.b16 %v36
  %v790 = vunpack.c.l.b16 %v37
  %v791 = vunpack.c.l.b16 %v38
  %v792 = vunpack.c.l.b16 %v39
  %v793 = vunpack.c.l.b16 %v40
  %v794 = vunpack.c.l.b16 %v41
  %v795 = vunpack.c.l.b16 %v42
  %v796 = vunpack.c.l.b16 %v43
  %v797 = vunpack.c.l.b16 %v44
  %v798 = vunpack.c.l.b16 %v45
  %v799 = vunpack.c.l.b16 %v46
  %v800 = vunpack.c.l.b16 %v47
  %v801 = vunpack.c.l.b16 %v48
  %v802 = vunpack.c.l.b16 %v49
  %v803 = vunpack.c.l.b16 %v50
  %v804 = vunpack.c.l.b16 %v51
  %v805 = vunpack.c.l.b16 %v52
  %v806 = vunpack.c.l.b16 %v53
  %v807 = vunpack.c.l.b16 %v54
  %v808 = vunpack.c.l.b16 %v55
  %v809 = vunpack.c.l.b16 %v56
  %v810 = vunpack.c.l.b16 %v57
  %v811 = vunpack.c.l.b16 %v58
  %v812 = vunpack.c.l.b16 %v59
  %v813 = vunpack.c.l.b16 %v60
  %v814 = vunpack.c.l.b16 %v61
  %v815 = vunpack.c.l.b16 %v62
  %v816 = vunpack.c.l.b16 %v63
  %v817 = vunpack.c.l.b16 %v64
  %v818 = vunpack.c.l.b16 %v65
  %v819 = vunpack.c.l.b16 %v66
  %v820 = vunpack.c.l.b16 %v67
  %v821 = vunpack.c.l.b16 %v68
  %v822 = vunpack.c.l.b16 %v69
  %v823 = vunpack.c.l.b16 %v70
  %v824 = vunpack.c.l.b16 %v71
  %v825 = vunpack.c.l.b16 %v72
  %v826 = vunpack.c.l.b16 %v73
  %v827 = vunpack.c.l.b16 %v74
  %v828 = vunpack.c.l.b16 %v75
  %v829 = vunpack.c.l.b16 %v76
  %v830 = vunpack.c.l.b16 %v77
  %v831 = vunpack.c.l.b16 %v78
  %v832 = vunpack.c.l.b16 %v79
  %v833 = vunpack.c.l.b16 %v80
  %v834 = vunpack.c.l.b16 %v81
  %v835 = vunpack.c.l.b16 %v82
  %v836 = vunpack.c.l.b16 %v83
  %v837 = vunpack.c.l.b16 %v84
  %v838 = vpack.c.b16 %v775, %v774
  %v839 = vpack.c.b16 %v777, %v776
  %v840 = vpack.c.b16 %v779, %v778
  %v841 = vpack.c.b16 %v781, %v780
  %v842 = vpack.c.b16 %v783, %v782
  %v843 = vpack.c.b16 %v785, %v784
  %v844 = vpack.c.b16 %v787, %v786
  %v845 = vpack.c.b16 %v789, %v788
  %v846 = vpack.c.b16 %v791, %v790
  %v847 = vpack.c.b16 %v793, %v792
  %v848 = vpack.c.b16 %v795, %v794
  %v849 = vpack.c.b16 %v797, %v796
  %v850 = vpack.c.b16 %v799, %v798
  %v851 = vpack.c.b16 %v801, %v800
  %v852 = vpack.c.b16 %v803, %v802
  %v853 = vpack.c.b16 %v805, %v804
  %v854 = vpack.c.b16 %v807, %v806
  %v855 = vpack.c.b16 %v809, %v808
  %v856 = vpack.c.b16 %v811, %v810
  %v857 = vpack.c.b16 %v813, %v812
  %v858 = vpack.c.b16 %v815, %v814
  %v859 = vpack.c.b16 %v817, %v816
  %v860 = vpack.c.b16 %v819, %v818
  %v861 = vpack.c.b16 %v821, %v820
  %v862 = vpack.c.b16 %v823, %v822
  %v863 = vpack.c.b16 %v825, %v824
  %v864 = vpack.c.b16 %v827, %v826
  %v865 = vpack.c.b16 %v829, %v828
  %v866 = vpack.c.b16 %v831, %v830
  %v867 = vpack.c.b16 %v833, %v832
  %v868 = vpack.c.b16 %v835, %v834
  %v869 = vpack.c.b16 %v837, %v836
  %v918 = vunpack.c.l.b16 %v85
  %v919 = vunpack.c.l.b16 %v86
  %v920 = vunpack.c.l.b16 %v87
  %v921 = vunpack.c.l.b16 %v88
  %v922 = vunpack.c.l.b16 %v89
  %v923 = vunpack.c.l.b16 %v90
  %v924 = vunpack.c.l.b16 %v91
  %v925 = vunpack.c.l.b16 %v92
  %v926 = vunpack.c.l.b16 %v93
  %v927 = vunpack.c.l.b16 %v94
  %v928 = vunpack.c.l.b16 %v95
  %v929 = vunpack.c.l.b16 %v96
  %v930 = vunpack.c.l.b16 %v97
  %v931 = vunpack.c.l.b16 %v98
  %v932 = vunpack.c.l.b16 %v99
  %v933 = vunpack.c.l.b16 %v100
  %v934 = vpack.c.b16 %v919, %v918
  %v935 = vpack.c.b16 %v921, %v920
  %v936 = vpack.c.b16 %v923, %v922
  %v937 = vpack.c.b16 %v925, %v924
  %v938 = vpack.c.b16 %v927, %v926
  %v939 = vpack.c.b16 %v929, %v928
  %v940 = vpack.c.b16 %v931, %v930
  %v941 = vpack.c.b16 %v933, %v932
  %950 = vmatprep.subr.bf16.mxu0 0
  %951 = vmatpush1.bf16.msra.mxu0 %v941
  %952 = vmatprep.subr.bf16.mxu0 0
  %953 = vmatpush1.bf16.msra.mxu0 %v940
  %954 = vmatprep.subr.bf16.mxu0 0
  %955 = vmatpush1.bf16.msra.mxu0 %v939
  %956 = vmatprep.subr.bf16.mxu0 0
  %957 = vmatpush1.bf16.msra.mxu0 %v938
  %958 = vmatprep.subr.bf16.mxu0 0
  %959 = vmatpush1.bf16.msra.mxu0 %v937
  %960 = vmatprep.subr.bf16.mxu0 0
  %961 = vmatpush1.bf16.msra.mxu0 %v936
  %962 = vmatprep.subr.bf16.mxu0 0
  %963 = vmatpush1.bf16.msra.mxu0 %v935
  %964 = vmatprep.subr.bf16.mxu0 0
  %965 = vmatpush1.bf16.msra.mxu0 %v934
  %966 = vmatprep.subr.bf16.mxu0 0
  %967 = vmatpush2.bf16.msra.mxu0 0
  %968 = vmatprep.subr.bf16.mxu0 0
  %969 = vmatpush2.bf16.msra.mxu0 0
  %970 = vmatprep.subr.bf16.mxu0 0
  %971 = vmatpush2.bf16.msra.mxu0 0
  %972 = vmatprep.subr.bf16.mxu0 0
  %973 = vmatpush2.bf16.msra.mxu0 0
  %974 = vmatprep.subr.bf16.mxu0 0
  %975 = vmatpush2.bf16.msra.mxu0 0
  %976 = vmatprep.subr.bf16.mxu0 0
  %977 = vmatpush2.bf16.msra.mxu0 0
  %978 = vmatprep.subr.bf16.mxu0 0
  %979 = vmatpush2.bf16.msra.mxu0 0
  %980 = vmatprep.subr.bf16.mxu0 0
  %981 = vmatpush2.bf16.msra.mxu0 0
  %982 = vmatprep.mubr.bf16.mxu0 0
  %983 = vmatmul.mubr.bf16.gmra.mxu0 %v838
  %v984 = vpop.f32.mrf.mxu0
  %v985 = vadd.f32 %v456, %v984
  %v986 = vpop.f32.mrf.mxu0
  %v987 = vpop.f32.mrf.mxu0
  %v988 = vadd.f32 %v459, %v987
  %v989 = vpop.f32.mrf.mxu0
  %990 = vmatprep.mubr.bf16.mxu0 0
  %991 = vmatmul.mubr.bf16.gmra.mxu0 %v839
  %v992 = vpop.f32.mrf.mxu0
  %v993 = vadd.f32 %v464, %v992
  %v994 = vpop.f32.mrf.mxu0
  %v995 = vpop.f32.mrf.mxu0
  %v996 = vadd.f32 %v467, %v995
  %v997 = vpop.f32.mrf.mxu0
  %998 = vmatprep.mubr.bf16.mxu0 0
  %999 = vmatmul.mubr.bf16.gmra.mxu0 %v840
  %v1000 = vpop.f32.mrf.mxu0
  %v1001 = vadd.f32 %v472, %v1000
  %v1002 = vpop.f32.mrf.mxu0
  %v1003 = vpop.f32.mrf.mxu0
  %v1004 = vadd.f32 %v475, %v1003
  %v1005 = vpop.f32.mrf.mxu0
  %1006 = vmatprep.mubr.bf16.mxu0 0
  %1007 = vmatmul.mubr.bf16.gmra.mxu0 %v841
  %v1008 = vpop.f32.mrf.mxu0
  %v1009 = vadd.f32 %v480, %v1008
  %v1010 = vpop.f32.mrf.mxu0
  %v1011 = vpop.f32.mrf.mxu0
  %v1012 = vadd.f32 %v483, %v1011
  %v1013 = vpop.f32.mrf.mxu0
  %1014 = vmatprep.mubr.bf16.mxu0 0
  %1015 = vmatmul.mubr.bf16.gmra.mxu0 %v842
  %v1016 = vpop.f32.mrf.mxu0
  %v1017 = vadd.f32 %v488, %v1016
  %v1018 = vpop.f32.mrf.mxu0
  %v1019 = vpop.f32.mrf.mxu0
  %v1020 = vadd.f32 %v491, %v1019
  %v1021 = vpop.f32.mrf.mxu0
  %1022 = vmatprep.mubr.bf16.mxu0 0
  %1023 = vmatmul.mubr.bf16.gmra.mxu0 %v843
  %v1024 = vpop.f32.mrf.mxu0
  %v1025 = vadd.f32 %v496, %v1024
  %v1026 = vpop.f32.mrf.mxu0
  %v1027 = vpop.f32.mrf.mxu0
  %v1028 = vadd.f32 %v499, %v1027
  %v1029 = vpop.f32.mrf.mxu0
  %1030 = vmatprep.mubr.bf16.mxu0 0
  %1031 = vmatmul.mubr.bf16.gmra.mxu0 %v844
  %v1032 = vpop.f32.mrf.mxu0
  %v1033 = vadd.f32 %v504, %v1032
  %v1034 = vpop.f32.mrf.mxu0
  %v1035 = vpop.f32.mrf.mxu0
  %v1036 = vadd.f32 %v507, %v1035
  %v1037 = vpop.f32.mrf.mxu0
  %1038 = vmatprep.mubr.bf16.mxu0 0
  %1039 = vmatmul.mubr.bf16.gmra.mxu0 %v845
  %v1040 = vpop.f32.mrf.mxu0
  %v1041 = vadd.f32 %v512, %v1040
  %v1042 = vpop.f32.mrf.mxu0
  %v1043 = vpop.f32.mrf.mxu0
  %v1044 = vadd.f32 %v515, %v1043
  %v1045 = vpop.f32.mrf.mxu0
  %1046 = vmatprep.mubr.bf16.mxu0 0
  %1047 = vmatmul.mubr.bf16.gmra.mxu0 %v846
  %v1048 = vpop.f32.mrf.mxu0
  %v1049 = vadd.f32 %v520, %v1048
  %v1050 = vpop.f32.mrf.mxu0
  %v1051 = vpop.f32.mrf.mxu0
  %v1052 = vadd.f32 %v523, %v1051
  %v1053 = vpop.f32.mrf.mxu0
  %1054 = vmatprep.mubr.bf16.mxu0 0
  %1055 = vmatmul.mubr.bf16.gmra.mxu0 %v847
  %v1056 = vpop.f32.mrf.mxu0
  %v1057 = vadd.f32 %v528, %v1056
  %v1058 = vpop.f32.mrf.mxu0
  %v1059 = vpop.f32.mrf.mxu0
  %v1060 = vadd.f32 %v531, %v1059
  %v1061 = vpop.f32.mrf.mxu0
  %1062 = vmatprep.mubr.bf16.mxu0 0
  %1063 = vmatmul.mubr.bf16.gmra.mxu0 %v848
  %v1064 = vpop.f32.mrf.mxu0
  %v1065 = vadd.f32 %v536, %v1064
  %v1066 = vpop.f32.mrf.mxu0
  %v1067 = vpop.f32.mrf.mxu0
  %v1068 = vadd.f32 %v539, %v1067
  %v1069 = vpop.f32.mrf.mxu0
  %1070 = vmatprep.mubr.bf16.mxu0 0
  %1071 = vmatmul.mubr.bf16.gmra.mxu0 %v849
  %v1072 = vpop.f32.mrf.mxu0
  %v1073 = vadd.f32 %v544, %v1072
  %v1074 = vpop.f32.mrf.mxu0
  %v1075 = vpop.f32.mrf.mxu0
  %v1076 = vadd.f32 %v547, %v1075
  %v1077 = vpop.f32.mrf.mxu0
  %1078 = vmatprep.mubr.bf16.mxu0 0
  %1079 = vmatmul.mubr.bf16.gmra.mxu0 %v850
  %v1080 = vpop.f32.mrf.mxu0
  %v1081 = vadd.f32 %v552, %v1080
  %v1082 = vpop.f32.mrf.mxu0
  %v1083 = vpop.f32.mrf.mxu0
  %v1084 = vadd.f32 %v555, %v1083
  %v1085 = vpop.f32.mrf.mxu0
  %1086 = vmatprep.mubr.bf16.mxu0 0
  %1087 = vmatmul.mubr.bf16.gmra.mxu0 %v851
  %v1088 = vpop.f32.mrf.mxu0
  %v1089 = vadd.f32 %v560, %v1088
  %v1090 = vpop.f32.mrf.mxu0
  %v1091 = vpop.f32.mrf.mxu0
  %v1092 = vadd.f32 %v563, %v1091
  %v1093 = vpop.f32.mrf.mxu0
  %1094 = vmatprep.mubr.bf16.mxu0 0
  %1095 = vmatmul.mubr.bf16.gmra.mxu0 %v852
  %v1096 = vpop.f32.mrf.mxu0
  %v1097 = vadd.f32 %v568, %v1096
  %v1098 = vpop.f32.mrf.mxu0
  %v1099 = vpop.f32.mrf.mxu0
  %v1100 = vadd.f32 %v571, %v1099
  %v1101 = vpop.f32.mrf.mxu0
  %1102 = vmatprep.mubr.bf16.mxu0 0
  %1103 = vmatmul.mubr.bf16.gmra.mxu0 %v853
  %v1104 = vpop.f32.mrf.mxu0
  %v1105 = vadd.f32 %v576, %v1104
  %v1106 = vpop.f32.mrf.mxu0
  %v1107 = vpop.f32.mrf.mxu0
  %v1108 = vadd.f32 %v579, %v1107
  %v1109 = vpop.f32.mrf.mxu0
  %1110 = vmatprep.mubr.bf16.mxu0 0
  %1111 = vmatmul.mubr.bf16.gmra.mxu0 %v854
  %v1112 = vpop.f32.mrf.mxu0
  %v1113 = vadd.f32 %v584, %v1112
  %v1114 = vpop.f32.mrf.mxu0
  %v1115 = vpop.f32.mrf.mxu0
  %v1116 = vadd.f32 %v587, %v1115
  %v1117 = vpop.f32.mrf.mxu0
  %1118 = vmatprep.mubr.bf16.mxu0 0
  %1119 = vmatmul.mubr.bf16.gmra.mxu0 %v855
  %v1120 = vpop.f32.mrf.mxu0
  %v1121 = vadd.f32 %v592, %v1120
  %v1122 = vpop.f32.mrf.mxu0
  %v1123 = vpop.f32.mrf.mxu0
  %v1124 = vadd.f32 %v595, %v1123
  %v1125 = vpop.f32.mrf.mxu0
  %1126 = vmatprep.mubr.bf16.mxu0 0
  %1127 = vmatmul.mubr.bf16.gmra.mxu0 %v856
  %v1128 = vpop.f32.mrf.mxu0
  %v1129 = vadd.f32 %v600, %v1128
  %v1130 = vpop.f32.mrf.mxu0
  %v1131 = vpop.f32.mrf.mxu0
  %v1132 = vadd.f32 %v603, %v1131
  %v1133 = vpop.f32.mrf.mxu0
  %1134 = vmatprep.mubr.bf16.mxu0 0
  %1135 = vmatmul.mubr.bf16.gmra.mxu0 %v857
  %v1136 = vpop.f32.mrf.mxu0
  %v1137 = vadd.f32 %v608, %v1136
  %v1138 = vpop.f32.mrf.mxu0
  %v1139 = vpop.f32.mrf.mxu0
  %v1140 = vadd.f32 %v611, %v1139
  %v1141 = vpop.f32.mrf.mxu0
  %1142 = vmatprep.mubr.bf16.mxu0 0
  %1143 = vmatmul.mubr.bf16.gmra.mxu0 %v858
  %v1144 = vpop.f32.mrf.mxu0
  %v1145 = vadd.f32 %v616, %v1144
  %v1146 = vpop.f32.mrf.mxu0
  %v1147 = vpop.f32.mrf.mxu0
  %v1148 = vadd.f32 %v619, %v1147
  %v1149 = vpop.f32.mrf.mxu0
  %1150 = vmatprep.mubr.bf16.mxu0 0
  %1151 = vmatmul.mubr.bf16.gmra.mxu0 %v859
  %v1152 = vpop.f32.mrf.mxu0
  %v1153 = vadd.f32 %v624, %v1152
  %v1154 = vpop.f32.mrf.mxu0
  %v1155 = vpop.f32.mrf.mxu0
  %v1156 = vadd.f32 %v627, %v1155
  %v1157 = vpop.f32.mrf.mxu0
  %1158 = vmatprep.mubr.bf16.mxu0 0
  %1159 = vmatmul.mubr.bf16.gmra.mxu0 %v860
  %v1160 = vpop.f32.mrf.mxu0
  %v1161 = vadd.f32 %v632, %v1160
  %v1162 = vpop.f32.mrf.mxu0
  %v1163 = vpop.f32.mrf.mxu0
  %v1164 = vadd.f32 %v635, %v1163
  %v1165 = vpop.f32.mrf.mxu0
  %1166 = vmatprep.mubr.bf16.mxu0 0
  %1167 = vmatmul.mubr.bf16.gmra.mxu0 %v861
  %v1168 = vpop.f32.mrf.mxu0
  %v1169 = vadd.f32 %v640, %v1168
  %v1170 = vpop.f32.mrf.mxu0
  %v1171 = vpop.f32.mrf.mxu0
  %v1172 = vadd.f32 %v643, %v1171
  %v1173 = vpop.f32.mrf.mxu0
  %1174 = vmatprep.mubr.bf16.mxu0 0
  %1175 = vmatmul.mubr.bf16.gmra.mxu0 %v862
  %v1176 = vpop.f32.mrf.mxu0
  %v1177 = vadd.f32 %v648, %v1176
  %v1178 = vpop.f32.mrf.mxu0
  %v1179 = vpop.f32.mrf.mxu0
  %v1180 = vadd.f32 %v651, %v1179
  %v1181 = vpop.f32.mrf.mxu0
  %1182 = vmatprep.mubr.bf16.mxu0 0
  %1183 = vmatmul.mubr.bf16.gmra.mxu0 %v863
  %v1184 = vpop.f32.mrf.mxu0
  %v1185 = vadd.f32 %v656, %v1184
  %v1186 = vpop.f32.mrf.mxu0
  %v1187 = vpop.f32.mrf.mxu0
  %v1188 = vadd.f32 %v659, %v1187
  %v1189 = vpop.f32.mrf.mxu0
  %1190 = vmatprep.mubr.bf16.mxu0 0
  %1191 = vmatmul.mubr.bf16.gmra.mxu0 %v864
  %v1192 = vpop.f32.mrf.mxu0
  %v1193 = vadd.f32 %v664, %v1192
  %v1194 = vpop.f32.mrf.mxu0
  %v1195 = vpop.f32.mrf.mxu0
  %v1196 = vadd.f32 %v667, %v1195
  %v1197 = vpop.f32.mrf.mxu0
  %1198 = vmatprep.mubr.bf16.mxu0 0
  %1199 = vmatmul.mubr.bf16.gmra.mxu0 %v865
  %v1200 = vpop.f32.mrf.mxu0
  %v1201 = vadd.f32 %v672, %v1200
  %v1202 = vpop.f32.mrf.mxu0
  %v1203 = vpop.f32.mrf.mxu0
  %v1204 = vadd.f32 %v675, %v1203
  %v1205 = vpop.f32.mrf.mxu0
  %1206 = vmatprep.mubr.bf16.mxu0 0
  %1207 = vmatmul.mubr.bf16.gmra.mxu0 %v866
  %v1208 = vpop.f32.mrf.mxu0
  %v1209 = vadd.f32 %v680, %v1208
  %v1210 = vpop.f32.mrf.mxu0
  %v1211 = vpop.f32.mrf.mxu0
  %v1212 = vadd.f32 %v683, %v1211
  %v1213 = vpop.f32.mrf.mxu0
  %1214 = vmatprep.mubr.bf16.mxu0 0
  %1215 = vmatmul.mubr.bf16.gmra.mxu0 %v867
  %v1216 = vpop.f32.mrf.mxu0
  %v1217 = vadd.f32 %v688, %v1216
  %v1218 = vpop.f32.mrf.mxu0
  %v1219 = vpop.f32.mrf.mxu0
  %v1220 = vadd.f32 %v691, %v1219
  %v1221 = vpop.f32.mrf.mxu0
  %1222 = vmatprep.mubr.bf16.mxu0 0
  %1223 = vmatmul.mubr.bf16.gmra.mxu0 %v868
  %v1224 = vpop.f32.mrf.mxu0
  %v1225 = vadd.f32 %v696, %v1224
  %v1226 = vpop.f32.mrf.mxu0
  %v1227 = vpop.f32.mrf.mxu0
  %v1228 = vadd.f32 %v699, %v1227
  %v1229 = vpop.f32.mrf.mxu0
  %1230 = vmatprep.mubr.bf16.mxu0 0
  %1231 = vmatmul.mubr.bf16.gmra.mxu0 %v869
  %v1232 = vpop.f32.mrf.mxu0
  %v1233 = vadd.f32 %v704, %v1232
  %v1234 = vpop.f32.mrf.mxu0
  %v1235 = vpop.f32.mrf.mxu0
  %v1236 = vadd.f32 %v707, %v1235
  %v1237 = vpop.f32.mrf.mxu0
  %1238 = vdwg.mxu0
  %v1239 = vld [vmem:[%s4] sm:$0x1]
  %v1241 = vlaneseq
  %v1242 = vshrl.u32 %v1241, 7
  %v1243 = vsub.s32 0, %v1242
  %v1244 = vrot.slane %v1239, %v1243
  %v1246 = vadd.f32 %v985, %v1244
  %v1247 = vadd.f32 %v988, %v1244
  %v1248 = vadd.f32 %v993, %v1244
  %v1249 = vadd.f32 %v996, %v1244
  %v1250 = vadd.f32 %v1001, %v1244
  %v1251 = vadd.f32 %v1004, %v1244
  %v1252 = vadd.f32 %v1009, %v1244
  %v1253 = vadd.f32 %v1012, %v1244
  %v1254 = vadd.f32 %v1017, %v1244
  %v1255 = vadd.f32 %v1020, %v1244
  %v1256 = vadd.f32 %v1025, %v1244
  %v1257 = vadd.f32 %v1028, %v1244
  %v1258 = vadd.f32 %v1033, %v1244
  %v1259 = vadd.f32 %v1036, %v1244
  %v1260 = vadd.f32 %v1041, %v1244
  %v1261 = vadd.f32 %v1044, %v1244
  %v1262 = vadd.f32 %v1049, %v1244
  %v1263 = vadd.f32 %v1052, %v1244
  %v1264 = vadd.f32 %v1057, %v1244
  %v1265 = vadd.f32 %v1060, %v1244
  %v1266 = vadd.f32 %v1065, %v1244
  %v1267 = vadd.f32 %v1068, %v1244
  %v1268 = vadd.f32 %v1073, %v1244
  %v1269 = vadd.f32 %v1076, %v1244
  %v1270 = vadd.f32 %v1081, %v1244
  %v1271 = vadd.f32 %v1084, %v1244
  %v1272 = vadd.f32 %v1089, %v1244
  %v1273 = vadd.f32 %v1092, %v1244
  %v1274 = vadd.f32 %v1097, %v1244
  %v1275 = vadd.f32 %v1100, %v1244
  %v1276 = vadd.f32 %v1105, %v1244
  %v1277 = vadd.f32 %v1108, %v1244
  %v1278 = vadd.f32 %v1113, %v1244
  %v1279 = vadd.f32 %v1116, %v1244
  %v1280 = vadd.f32 %v1121, %v1244
  %v1281 = vadd.f32 %v1124, %v1244
  %v1282 = vadd.f32 %v1129, %v1244
  %v1283 = vadd.f32 %v1132, %v1244
  %v1284 = vadd.f32 %v1137, %v1244
  %v1285 = vadd.f32 %v1140, %v1244
  %v1286 = vadd.f32 %v1145, %v1244
  %v1287 = vadd.f32 %v1148, %v1244
  %v1288 = vadd.f32 %v1153, %v1244
  %v1289 = vadd.f32 %v1156, %v1244
  %v1290 = vadd.f32 %v1161, %v1244
  %v1291 = vadd.f32 %v1164, %v1244
  %v1292 = vadd.f32 %v1169, %v1244
  %v1293 = vadd.f32 %v1172, %v1244
  %v1294 = vadd.f32 %v1177, %v1244
  %v1295 = vadd.f32 %v1180, %v1244
  %v1296 = vadd.f32 %v1185, %v1244
  %v1297 = vadd.f32 %v1188, %v1244
  %v1298 = vadd.f32 %v1193, %v1244
  %v1299 = vadd.f32 %v1196, %v1244
  %v1300 = vadd.f32 %v1201, %v1244
  %v1301 = vadd.f32 %v1204, %v1244
  %v1302 = vadd.f32 %v1209, %v1244
  %v1303 = vadd.f32 %v1212, %v1244
  %v1304 = vadd.f32 %v1217, %v1244
  %v1305 = vadd.f32 %v1220, %v1244
  %v1306 = vadd.f32 %v1225, %v1244
  %v1307 = vadd.f32 %v1228, %v1244
  %v1308 = vadd.f32 %v1233, %v1244
  %v1309 = vadd.f32 %v1236, %v1244
  %v1310 = vsub.f32 0.0, %v1246
  %v1311 = vsub.f32 0.0, %v1247
  %v1312 = vsub.f32 0.0, %v1248
  %v1313 = vsub.f32 0.0, %v1249
  %v1314 = vsub.f32 0.0, %v1250
  %v1315 = vsub.f32 0.0, %v1251
  %v1316 = vsub.f32 0.0, %v1252
  %v1317 = vsub.f32 0.0, %v1253
  %v1318 = vsub.f32 0.0, %v1254
  %v1319 = vsub.f32 0.0, %v1255
  %v1320 = vsub.f32 0.0, %v1256
  %v1321 = vsub.f32 0.0, %v1257
  %v1322 = vsub.f32 0.0, %v1258
  %v1323 = vsub.f32 0.0, %v1259
  %v1324 = vsub.f32 0.0, %v1260
  %v1325 = vsub.f32 0.0, %v1261
  %v1326 = vsub.f32 0.0, %v1262
  %v1327 = vsub.f32 0.0, %v1263
  %v1328 = vsub.f32 0.0, %v1264
  %v1329 = vsub.f32 0.0, %v1265
  %v1330 = vsub.f32 0.0, %v1266
  %v1331 = vsub.f32 0.0, %v1267
  %v1332 = vsub.f32 0.0, %v1268
  %v1333 = vsub.f32 0.0, %v1269
  %v1334 = vsub.f32 0.0, %v1270
  %v1335 = vsub.f32 0.0, %v1271
  %v1336 = vsub.f32 0.0, %v1272
  %v1337 = vsub.f32 0.0, %v1273
  %v1338 = vsub.f32 0.0, %v1274
  %v1339 = vsub.f32 0.0, %v1275
  %v1340 = vsub.f32 0.0, %v1276
  %v1341 = vsub.f32 0.0, %v1277
  %v1342 = vsub.f32 0.0, %v1278
  %v1343 = vsub.f32 0.0, %v1279
  %v1344 = vsub.f32 0.0, %v1280
  %v1345 = vsub.f32 0.0, %v1281
  %v1346 = vsub.f32 0.0, %v1282
  %v1347 = vsub.f32 0.0, %v1283
  %v1348 = vsub.f32 0.0, %v1284
  %v1349 = vsub.f32 0.0, %v1285
  %v1350 = vsub.f32 0.0, %v1286
  %v1351 = vsub.f32 0.0, %v1287
  %v1352 = vsub.f32 0.0, %v1288
  %v1353 = vsub.f32 0.0, %v1289
  %v1354 = vsub.f32 0.0, %v1290
  %v1355 = vsub.f32 0.0, %v1291
  %v1356 = vsub.f32 0.0, %v1292
  %v1357 = vsub.f32 0.0, %v1293
  %v1358 = vsub.f32 0.0, %v1294
  %v1359 = vsub.f32 0.0, %v1295
  %v1360 = vsub.f32 0.0, %v1296
  %v1361 = vsub.f32 0.0, %v1297
  %v1362 = vsub.f32 0.0, %v1298
  %v1363 = vsub.f32 0.0, %v1299
  %v1364 = vsub.f32 0.0, %v1300
  %v1365 = vsub.f32 0.0, %v1301
  %v1366 = vsub.f32 0.0, %v1302
  %v1367 = vsub.f32 0.0, %v1303
  %v1368 = vsub.f32 0.0, %v1304
  %v1369 = vsub.f32 0.0, %v1305
  %v1370 = vsub.f32 0.0, %v1306
  %v1371 = vsub.f32 0.0, %v1307
  %v1372 = vsub.f32 0.0, %v1308
  %v1373 = vsub.f32 0.0, %v1309
  %v1374 = vmul.f32 %v1310, 1.442695
  %v1375 = vpow.pop %v1374
  %v1376 = vmul.f32 %v1311, 1.442695
  %v1377 = vpow.pop %v1376
  %v1378 = vmul.f32 %v1312, 1.442695
  %v1379 = vpow.pop %v1378
  %v1380 = vmul.f32 %v1313, 1.442695
  %v1381 = vpow.pop %v1380
  %v1382 = vmul.f32 %v1314, 1.442695
  %v1383 = vpow.pop %v1382
  %v1384 = vmul.f32 %v1315, 1.442695
  %v1385 = vpow.pop %v1384
  %v1386 = vmul.f32 %v1316, 1.442695
  %v1387 = vpow.pop %v1386
  %v1388 = vmul.f32 %v1317, 1.442695
  %v1389 = vpow.pop %v1388
  %v1390 = vmul.f32 %v1318, 1.442695
  %v1391 = vpow.pop %v1390
  %v1392 = vmul.f32 %v1319, 1.442695
  %v1393 = vpow.pop %v1392
  %v1394 = vmul.f32 %v1320, 1.442695
  %v1395 = vpow.pop %v1394
  %v1396 = vmul.f32 %v1321, 1.442695
  %v1397 = vpow.pop %v1396
  %v1398 = vmul.f32 %v1322, 1.442695
  %v1399 = vpow.pop %v1398
  %v1400 = vmul.f32 %v1323, 1.442695
  %v1401 = vpow.pop %v1400
  %v1402 = vmul.f32 %v1324, 1.442695
  %v1403 = vpow.pop %v1402
  %v1404 = vmul.f32 %v1325, 1.442695
  %v1405 = vpow.pop %v1404
  %v1406 = vmul.f32 %v1326, 1.442695
  %v1407 = vpow.pop %v1406
  %v1408 = vmul.f32 %v1327, 1.442695
  %v1409 = vpow.pop %v1408
  %v1410 = vmul.f32 %v1328, 1.442695
  %v1411 = vpow.pop %v1410
  %v1412 = vmul.f32 %v1329, 1.442695
  %v1413 = vpow.pop %v1412
  %v1414 = vmul.f32 %v1330, 1.442695
  %v1415 = vpow.pop %v1414
  %v1416 = vmul.f32 %v1331, 1.442695
  %v1417 = vpow.pop %v1416
  %v1418 = vmul.f32 %v1332, 1.442695
  %v1419 = vpow.pop %v1418
  %v1420 = vmul.f32 %v1333, 1.442695
  %v1421 = vpow.pop %v1420
  %v1422 = vmul.f32 %v1334, 1.442695
  %v1423 = vpow.pop %v1422
  %v1424 = vmul.f32 %v1335, 1.442695
  %v1425 = vpow.pop %v1424
  %v1426 = vmul.f32 %v1336, 1.442695
  %v1427 = vpow.pop %v1426
  %v1428 = vmul.f32 %v1337, 1.442695
  %v1429 = vpow.pop %v1428
  %v1430 = vmul.f32 %v1338, 1.442695
  %v1431 = vpow.pop %v1430
  %v1432 = vmul.f32 %v1339, 1.442695
  %v1433 = vpow.pop %v1432
  %v1434 = vmul.f32 %v1340, 1.442695
  %v1435 = vpow.pop %v1434
  %v1436 = vmul.f32 %v1341, 1.442695
  %v1437 = vpow.pop %v1436
  %v1438 = vmul.f32 %v1342, 1.442695
  %v1439 = vpow.pop %v1438
  %v1440 = vmul.f32 %v1343, 1.442695
  %v1441 = vpow.pop %v1440
  %v1442 = vmul.f32 %v1344, 1.442695
  %v1443 = vpow.pop %v1442
  %v1444 = vmul.f32 %v1345, 1.442695
  %v1445 = vpow.pop %v1444
  %v1446 = vmul.f32 %v1346, 1.442695
  %v1447 = vpow.pop %v1446
  %v1448 = vmul.f32 %v1347, 1.442695
  %v1449 = vpow.pop %v1448
  %v1450 = vmul.f32 %v1348, 1.442695
  %v1451 = vpow.pop %v1450
  %v1452 = vmul.f32 %v1349, 1.442695
  %v1453 = vpow.pop %v1452
  %v1454 = vmul.f32 %v1350, 1.442695
  %v1455 = vpow.pop %v1454
  %v1456 = vmul.f32 %v1351, 1.442695
  %v1457 = vpow.pop %v1456
  %v1458 = vmul.f32 %v1352, 1.442695
  %v1459 = vpow.pop %v1458
  %v1460 = vmul.f32 %v1353, 1.442695
  %v1461 = vpow.pop %v1460
  %v1462 = vmul.f32 %v1354, 1.442695
  %v1463 = vpow.pop %v1462
  %v1464 = vmul.f32 %v1355, 1.442695
  %v1465 = vpow.pop %v1464
  %v1466 = vmul.f32 %v1356, 1.442695
  %v1467 = vpow.pop %v1466
  %v1468 = vmul.f32 %v1357, 1.442695
  %v1469 = vpow.pop %v1468
  %v1470 = vmul.f32 %v1358, 1.442695
  %v1471 = vpow.pop %v1470
  %v1472 = vmul.f32 %v1359, 1.442695
  %v1473 = vpow.pop %v1472
  %v1474 = vmul.f32 %v1360, 1.442695
  %v1475 = vpow.pop %v1474
  %v1476 = vmul.f32 %v1361, 1.442695
  %v1477 = vpow.pop %v1476
  %v1478 = vmul.f32 %v1362, 1.442695
  %v1479 = vpow.pop %v1478
  %v1480 = vmul.f32 %v1363, 1.442695
  %v1481 = vpow.pop %v1480
  %v1482 = vmul.f32 %v1364, 1.442695
  %v1483 = vpow.pop %v1482
  %v1484 = vmul.f32 %v1365, 1.442695
  %v1485 = vpow.pop %v1484
  %v1486 = vmul.f32 %v1366, 1.442695
  %v1487 = vpow.pop %v1486
  %v1488 = vmul.f32 %v1367, 1.442695
  %v1489 = vpow.pop %v1488
  %v1490 = vmul.f32 %v1368, 1.442695
  %v1491 = vpow.pop %v1490
  %v1492 = vmul.f32 %v1369, 1.442695
  %v1493 = vpow.pop %v1492
  %v1494 = vmul.f32 %v1370, 1.442695
  %v1495 = vpow.pop %v1494
  %v1496 = vmul.f32 %v1371, 1.442695
  %v1497 = vpow.pop %v1496
  %v1498 = vmul.f32 %v1372, 1.442695
  %v1499 = vpow.pop %v1498
  %v1500 = vmul.f32 %v1373, 1.442695
  %v1501 = vpow.pop %v1500
  %v1502 = vadd.f32 %v1375, 1.0
  %v1503 = vadd.f32 %v1377, 1.0
  %v1504 = vadd.f32 %v1379, 1.0
  %v1505 = vadd.f32 %v1381, 1.0
  %v1506 = vadd.f32 %v1383, 1.0
  %v1507 = vadd.f32 %v1385, 1.0
  %v1508 = vadd.f32 %v1387, 1.0
  %v1509 = vadd.f32 %v1389, 1.0
  %v1510 = vadd.f32 %v1391, 1.0
  %v1511 = vadd.f32 %v1393, 1.0
  %v1512 = vadd.f32 %v1395, 1.0
  %v1513 = vadd.f32 %v1397, 1.0
  %v1514 = vadd.f32 %v1399, 1.0
  %v1515 = vadd.f32 %v1401, 1.0
  %v1516 = vadd.f32 %v1403, 1.0
  %v1517 = vadd.f32 %v1405, 1.0
  %v1518 = vadd.f32 %v1407, 1.0
  %v1519 = vadd.f32 %v1409, 1.0
  %v1520 = vadd.f32 %v1411, 1.0
  %v1521 = vadd.f32 %v1413, 1.0
  %v1522 = vadd.f32 %v1415, 1.0
  %v1523 = vadd.f32 %v1417, 1.0
  %v1524 = vadd.f32 %v1419, 1.0
  %v1525 = vadd.f32 %v1421, 1.0
  %v1526 = vadd.f32 %v1423, 1.0
  %v1527 = vadd.f32 %v1425, 1.0
  %v1528 = vadd.f32 %v1427, 1.0
  %v1529 = vadd.f32 %v1429, 1.0
  %v1530 = vadd.f32 %v1431, 1.0
  %v1531 = vadd.f32 %v1433, 1.0
  %v1532 = vadd.f32 %v1435, 1.0
  %v1533 = vadd.f32 %v1437, 1.0
  %v1534 = vadd.f32 %v1439, 1.0
  %v1535 = vadd.f32 %v1441, 1.0
  %v1536 = vadd.f32 %v1443, 1.0
  %v1537 = vadd.f32 %v1445, 1.0
  %v1538 = vadd.f32 %v1447, 1.0
  %v1539 = vadd.f32 %v1449, 1.0
  %v1540 = vadd.f32 %v1451, 1.0
  %v1541 = vadd.f32 %v1453, 1.0
  %v1542 = vadd.f32 %v1455, 1.0
  %v1543 = vadd.f32 %v1457, 1.0
  %v1544 = vadd.f32 %v1459, 1.0
  %v1545 = vadd.f32 %v1461, 1.0
  %v1546 = vadd.f32 %v1463, 1.0
  %v1547 = vadd.f32 %v1465, 1.0
  %v1548 = vadd.f32 %v1467, 1.0
  %v1549 = vadd.f32 %v1469, 1.0
  %v1550 = vadd.f32 %v1471, 1.0
  %v1551 = vadd.f32 %v1473, 1.0
  %v1552 = vadd.f32 %v1475, 1.0
  %v1553 = vadd.f32 %v1477, 1.0
  %v1554 = vadd.f32 %v1479, 1.0
  %v1555 = vadd.f32 %v1481, 1.0
  %v1556 = vadd.f32 %v1483, 1.0
  %v1557 = vadd.f32 %v1485, 1.0
  %v1558 = vadd.f32 %v1487, 1.0
  %v1559 = vadd.f32 %v1489, 1.0
  %v1560 = vadd.f32 %v1491, 1.0
  %v1561 = vadd.f32 %v1493, 1.0
  %v1562 = vadd.f32 %v1495, 1.0
  %v1563 = vadd.f32 %v1497, 1.0
  %v1564 = vadd.f32 %v1499, 1.0
  %v1565 = vadd.f32 %v1501, 1.0
  %v1566 = vrcp.pop %v1502
  %v1567 = vrcp.pop %v1503
  %v1568 = vrcp.pop %v1504
  %v1569 = vrcp.pop %v1505
  %v1570 = vrcp.pop %v1506
  %v1571 = vrcp.pop %v1507
  %v1572 = vrcp.pop %v1508
  %v1573 = vrcp.pop %v1509
  %v1574 = vrcp.pop %v1510
  %v1575 = vrcp.pop %v1511
  %v1576 = vrcp.pop %v1512
  %v1577 = vrcp.pop %v1513
  %v1578 = vrcp.pop %v1514
  %v1579 = vrcp.pop %v1515
  %v1580 = vrcp.pop %v1516
  %v1581 = vrcp.pop %v1517
  %v1582 = vrcp.pop %v1518
  %v1583 = vrcp.pop %v1519
  %v1584 = vrcp.pop %v1520
  %v1585 = vrcp.pop %v1521
  %v1586 = vrcp.pop %v1522
  %v1587 = vrcp.pop %v1523
  %v1588 = vrcp.pop %v1524
  %v1589 = vrcp.pop %v1525
  %v1590 = vrcp.pop %v1526
  %v1591 = vrcp.pop %v1527
  %v1592 = vrcp.pop %v1528
  %v1593 = vrcp.pop %v1529
  %v1594 = vrcp.pop %v1530
  %v1595 = vrcp.pop %v1531
  %v1596 = vrcp.pop %v1532
  %v1597 = vrcp.pop %v1533
  %v1598 = vrcp.pop %v1534
  %v1599 = vrcp.pop %v1535
  %v1600 = vrcp.pop %v1536
  %v1601 = vrcp.pop %v1537
  %v1602 = vrcp.pop %v1538
  %v1603 = vrcp.pop %v1539
  %v1604 = vrcp.pop %v1540
  %v1605 = vrcp.pop %v1541
  %v1606 = vrcp.pop %v1542
  %v1607 = vrcp.pop %v1543
  %v1608 = vrcp.pop %v1544
  %v1609 = vrcp.pop %v1545
  %v1610 = vrcp.pop %v1546
  %v1611 = vrcp.pop %v1547
  %v1612 = vrcp.pop %v1548
  %v1613 = vrcp.pop %v1549
  %v1614 = vrcp.pop %v1550
  %v1615 = vrcp.pop %v1551
  %v1616 = vrcp.pop %v1552
  %v1617 = vrcp.pop %v1553
  %v1618 = vrcp.pop %v1554
  %v1619 = vrcp.pop %v1555
  %v1620 = vrcp.pop %v1556
  %v1621 = vrcp.pop %v1557
  %v1622 = vrcp.pop %v1558
  %v1623 = vrcp.pop %v1559
  %v1624 = vrcp.pop %v1560
  %v1625 = vrcp.pop %v1561
  %v1626 = vrcp.pop %v1562
  %v1627 = vrcp.pop %v1563
  %v1628 = vrcp.pop %v1564
  %v1629 = vrcp.pop %v1565
  %v1630 = vmul.f32 %v1246, %v1566
  %v1631 = vmul.f32 %v1247, %v1567
  %v1632 = vmul.f32 %v1248, %v1568
  %v1633 = vmul.f32 %v1249, %v1569
  %v1634 = vmul.f32 %v1250, %v1570
  %v1635 = vmul.f32 %v1251, %v1571
  %v1636 = vmul.f32 %v1252, %v1572
  %v1637 = vmul.f32 %v1253, %v1573
  %v1638 = vmul.f32 %v1254, %v1574
  %v1639 = vmul.f32 %v1255, %v1575
  %v1640 = vmul.f32 %v1256, %v1576
  %v1641 = vmul.f32 %v1257, %v1577
  %v1642 = vmul.f32 %v1258, %v1578
  %v1643 = vmul.f32 %v1259, %v1579
  %v1644 = vmul.f32 %v1260, %v1580
  %v1645 = vmul.f32 %v1261, %v1581
  %v1646 = vmul.f32 %v1262, %v1582
  %v1647 = vmul.f32 %v1263, %v1583
  %v1648 = vmul.f32 %v1264, %v1584
  %v1649 = vmul.f32 %v1265, %v1585
  %v1650 = vmul.f32 %v1266, %v1586
  %v1651 = vmul.f32 %v1267, %v1587
  %v1652 = vmul.f32 %v1268, %v1588
  %v1653 = vmul.f32 %v1269, %v1589
  %v1654 = vmul.f32 %v1270, %v1590
  %v1655 = vmul.f32 %v1271, %v1591
  %v1656 = vmul.f32 %v1272, %v1592
  %v1657 = vmul.f32 %v1273, %v1593
  %v1658 = vmul.f32 %v1274, %v1594
  %v1659 = vmul.f32 %v1275, %v1595
  %v1660 = vmul.f32 %v1276, %v1596
  %v1661 = vmul.f32 %v1277, %v1597
  %v1662 = vmul.f32 %v1278, %v1598
  %v1663 = vmul.f32 %v1279, %v1599
  %v1664 = vmul.f32 %v1280, %v1600
  %v1665 = vmul.f32 %v1281, %v1601
  %v1666 = vmul.f32 %v1282, %v1602
  %v1667 = vmul.f32 %v1283, %v1603
  %v1668 = vmul.f32 %v1284, %v1604
  %v1669 = vmul.f32 %v1285, %v1605
  %v1670 = vmul.f32 %v1286, %v1606
  %v1671 = vmul.f32 %v1287, %v1607
  %v1672 = vmul.f32 %v1288, %v1608
  %v1673 = vmul.f32 %v1289, %v1609
  %v1674 = vmul.f32 %v1290, %v1610
  %v1675 = vmul.f32 %v1291, %v1611
  %v1676 = vmul.f32 %v1292, %v1612
  %v1677 = vmul.f32 %v1293, %v1613
  %v1678 = vmul.f32 %v1294, %v1614
  %v1679 = vmul.f32 %v1295, %v1615
  %v1680 = vmul.f32 %v1296, %v1616
  %v1681 = vmul.f32 %v1297, %v1617
  %v1682 = vmul.f32 %v1298, %v1618
  %v1683 = vmul.f32 %v1299, %v1619
  %v1684 = vmul.f32 %v1300, %v1620
  %v1685 = vmul.f32 %v1301, %v1621
  %v1686 = vmul.f32 %v1302, %v1622
  %v1687 = vmul.f32 %v1303, %v1623
  %v1688 = vmul.f32 %v1304, %v1624
  %v1689 = vmul.f32 %v1305, %v1625
  %v1690 = vmul.f32 %v1306, %v1626
  %v1691 = vmul.f32 %v1307, %v1627
  %v1692 = vmul.f32 %v1308, %v1628
  %v1693 = vmul.f32 %v1309, %v1629
  %v1694 = vpack.c.bf16 %v1631, %v1630
  %v1695 = vpack.c.bf16 %v1633, %v1632
  %v1696 = vpack.c.bf16 %v1635, %v1634
  %v1697 = vpack.c.bf16 %v1637, %v1636
  %v1698 = vpack.c.bf16 %v1639, %v1638
  %v1699 = vpack.c.bf16 %v1641, %v1640
  %v1700 = vpack.c.bf16 %v1643, %v1642
  %v1701 = vpack.c.bf16 %v1645, %v1644
  %v1702 = vpack.c.bf16 %v1647, %v1646
  %v1703 = vpack.c.bf16 %v1649, %v1648
  %v1704 = vpack.c.bf16 %v1651, %v1650
  %v1705 = vpack.c.bf16 %v1653, %v1652
  %v1706 = vpack.c.bf16 %v1655, %v1654
  %v1707 = vpack.c.bf16 %v1657, %v1656
  %v1708 = vpack.c.bf16 %v1659, %v1658
  %v1709 = vpack.c.bf16 %v1661, %v1660
  %v1710 = vpack.c.bf16 %v1663, %v1662
  %v1711 = vpack.c.bf16 %v1665, %v1664
  %v1712 = vpack.c.bf16 %v1667, %v1666
  %v1713 = vpack.c.bf16 %v1669, %v1668
  %v1714 = vpack.c.bf16 %v1671, %v1670
  %v1715 = vpack.c.bf16 %v1673, %v1672
  %v1716 = vpack.c.bf16 %v1675, %v1674
  %v1717 = vpack.c.bf16 %v1677, %v1676
  %v1718 = vpack.c.bf16 %v1679, %v1678
  %v1719 = vpack.c.bf16 %v1681, %v1680
  %v1720 = vpack.c.bf16 %v1683, %v1682
  %v1721 = vpack.c.bf16 %v1685, %v1684
  %v1722 = vpack.c.bf16 %v1687, %v1686
  %v1723 = vpack.c.bf16 %v1689, %v1688
  %v1724 = vpack.c.bf16 %v1691, %v1690
  %v1725 = vpack.c.bf16 %v1693, %v1692
  %v1758 = vunpack.c.l.b16 %v1694
  %v1759 = vunpack.c.h.b16 %v1694
  %v1760 = vunpack.c.l.b16 %v1695
  %v1761 = vunpack.c.h.b16 %v1695
  %v1762 = vunpack.c.l.b16 %v1696
  %v1763 = vunpack.c.h.b16 %v1696
  %v1764 = vunpack.c.l.b16 %v1697
  %v1765 = vunpack.c.h.b16 %v1697
  %v1766 = vunpack.c.l.b16 %v1698
  %v1767 = vunpack.c.h.b16 %v1698
  %v1768 = vunpack.c.l.b16 %v1699
  %v1769 = vunpack.c.h.b16 %v1699
  %v1770 = vunpack.c.l.b16 %v1700
  %v1771 = vunpack.c.h.b16 %v1700
  %v1772 = vunpack.c.l.b16 %v1701
  %v1773 = vunpack.c.h.b16 %v1701
  %v1774 = vunpack.c.l.b16 %v1702
  %v1775 = vunpack.c.h.b16 %v1702
  %v1776 = vunpack.c.l.b16 %v1703
  %v1777 = vunpack.c.h.b16 %v1703
  %v1778 = vunpack.c.l.b16 %v1704
  %v1779 = vunpack.c.h.b16 %v1704
  %v1780 = vunpack.c.l.b16 %v1705
  %v1781 = vunpack.c.h.b16 %v1705
  %v1782 = vunpack.c.l.b16 %v1706
  %v1783 = vunpack.c.h.b16 %v1706
  %v1784 = vunpack.c.l.b16 %v1707
  %v1785 = vunpack.c.h.b16 %v1707
  %v1786 = vunpack.c.l.b16 %v1708
  %v1787 = vunpack.c.h.b16 %v1708
  %v1788 = vunpack.c.l.b16 %v1709
  %v1789 = vunpack.c.h.b16 %v1709
  %v1790 = vunpack.c.l.b16 %v1710
  %v1791 = vunpack.c.h.b16 %v1710
  %v1792 = vunpack.c.l.b16 %v1711
  %v1793 = vunpack.c.h.b16 %v1711
  %v1794 = vunpack.c.l.b16 %v1712
  %v1795 = vunpack.c.h.b16 %v1712
  %v1796 = vunpack.c.l.b16 %v1713
  %v1797 = vunpack.c.h.b16 %v1713
  %v1798 = vunpack.c.l.b16 %v1714
  %v1799 = vunpack.c.h.b16 %v1714
  %v1800 = vunpack.c.l.b16 %v1715
  %v1801 = vunpack.c.h.b16 %v1715
  %v1802 = vunpack.c.l.b16 %v1716
  %v1803 = vunpack.c.h.b16 %v1716
  %v1804 = vunpack.c.l.b16 %v1717
  %v1805 = vunpack.c.h.b16 %v1717
  %v1806 = vunpack.c.l.b16 %v1718
  %v1807 = vunpack.c.h.b16 %v1718
  %v1808 = vunpack.c.l.b16 %v1719
  %v1809 = vunpack.c.h.b16 %v1719
  %v1810 = vunpack.c.l.b16 %v1720
  %v1811 = vunpack.c.h.b16 %v1720
  %v1812 = vunpack.c.l.b16 %v1721
  %v1813 = vunpack.c.h.b16 %v1721
  %v1814 = vunpack.c.l.b16 %v1722
  %v1815 = vunpack.c.h.b16 %v1722
  %v1816 = vunpack.c.l.b16 %v1723
  %v1817 = vunpack.c.h.b16 %v1723
  %v1818 = vunpack.c.l.b16 %v1724
  %v1819 = vunpack.c.h.b16 %v1724
  %v1820 = vunpack.c.l.b16 %v1725
  %v1821 = vunpack.c.h.b16 %v1725
  %v1822 = vpack.c.b16 %v1758, %v1758
  %v1823 = vpack.c.b16 %v1759, %v1759
  %v1824 = vpack.c.b16 %v1760, %v1760
  %v1825 = vpack.c.b16 %v1761, %v1761
  %v1826 = vpack.c.b16 %v1762, %v1762
  %v1827 = vpack.c.b16 %v1763, %v1763
  %v1828 = vpack.c.b16 %v1764, %v1764
  %v1829 = vpack.c.b16 %v1765, %v1765
  %v1830 = vpack.c.b16 %v1766, %v1766
  %v1831 = vpack.c.b16 %v1767, %v1767
  %v1832 = vpack.c.b16 %v1768, %v1768
  %v1833 = vpack.c.b16 %v1769, %v1769
  %v1834 = vpack.c.b16 %v1770, %v1770
  %v1835 = vpack.c.b16 %v1771, %v1771
  %v1836 = vpack.c.b16 %v1772, %v1772
  %v1837 = vpack.c.b16 %v1773, %v1773
  %v1838 = vpack.c.b16 %v1774, %v1774
  %v1839 = vpack.c.b16 %v1775, %v1775
  %v1840 = vpack.c.b16 %v1776, %v1776
  %v1841 = vpack.c.b16 %v1777, %v1777
  %v1842 = vpack.c.b16 %v1778, %v1778
  %v1843 = vpack.c.b16 %v1779, %v1779
  %v1844 = vpack.c.b16 %v1780, %v1780
  %v1845 = vpack.c.b16 %v1781, %v1781
  %v1846 = vpack.c.b16 %v1782, %v1782
  %v1847 = vpack.c.b16 %v1783, %v1783
  %v1848 = vpack.c.b16 %v1784, %v1784
  %v1849 = vpack.c.b16 %v1785, %v1785
  %v1850 = vpack.c.b16 %v1786, %v1786
  %v1851 = vpack.c.b16 %v1787, %v1787
  %v1852 = vpack.c.b16 %v1788, %v1788
  %v1853 = vpack.c.b16 %v1789, %v1789
  %v1854 = vpack.c.b16 %v1790, %v1790
  %v1855 = vpack.c.b16 %v1791, %v1791
  %v1856 = vpack.c.b16 %v1792, %v1792
  %v1857 = vpack.c.b16 %v1793, %v1793
  %v1858 = vpack.c.b16 %v1794, %v1794
  %v1859 = vpack.c.b16 %v1795, %v1795
  %v1860 = vpack.c.b16 %v1796, %v1796
  %v1861 = vpack.c.b16 %v1797, %v1797
  %v1862 = vpack.c.b16 %v1798, %v1798
  %v1863 = vpack.c.b16 %v1799, %v1799
  %v1864 = vpack.c.b16 %v1800, %v1800
  %v1865 = vpack.c.b16 %v1801, %v1801
  %v1866 = vpack.c.b16 %v1802, %v1802
  %v1867 = vpack.c.b16 %v1803, %v1803
  %v1868 = vpack.c.b16 %v1804, %v1804
  %v1869 = vpack.c.b16 %v1805, %v1805
  %v1870 = vpack.c.b16 %v1806, %v1806
  %v1871 = vpack.c.b16 %v1807, %v1807
  %v1872 = vpack.c.b16 %v1808, %v1808
  %v1873 = vpack.c.b16 %v1809, %v1809
  %v1874 = vpack.c.b16 %v1810, %v1810
  %v1875 = vpack.c.b16 %v1811, %v1811
  %v1876 = vpack.c.b16 %v1812, %v1812
  %v1877 = vpack.c.b16 %v1813, %v1813
  %v1878 = vpack.c.b16 %v1814, %v1814
  %v1879 = vpack.c.b16 %v1815, %v1815
  %v1880 = vpack.c.b16 %v1816, %v1816
  %v1881 = vpack.c.b16 %v1817, %v1817
  %v1882 = vpack.c.b16 %v1818, %v1818
  %v1883 = vpack.c.b16 %v1819, %v1819
  %v1884 = vpack.c.b16 %v1820, %v1820
  %v1885 = vpack.c.b16 %v1821, %v1821
  %1950 = vst [vmem:[%s5] sm:$0xf] %v1822
  %1951 = vst [vmem:[%s5 + $0x4] sm:$0xf] %v1823
  %1952 = vst [vmem:[%s5 + $0x8] sm:$0xf] %v1824
  %1953 = vst [vmem:[%s5 + $0xc] sm:$0xf] %v1825
  %1954 = vst [vmem:[%s5 + $0x10] sm:$0xf] %v1826
  %1955 = vst [vmem:[%s5 + $0x14] sm:$0xf] %v1827
  %1956 = vst [vmem:[%s5 + $0x18] sm:$0xf] %v1828
  %1957 = vst [vmem:[%s5 + $0x1c] sm:$0xf] %v1829
  %1958 = vst [vmem:[%s5 + $0x20] sm:$0xf] %v1830
  %1959 = vst [vmem:[%s5 + $0x24] sm:$0xf] %v1831
  %1960 = vst [vmem:[%s5 + $0x28] sm:$0xf] %v1832
  %1961 = vst [vmem:[%s5 + $0x2c] sm:$0xf] %v1833
  %1962 = vst [vmem:[%s5 + $0x30] sm:$0xf] %v1834
  %1963 = vst [vmem:[%s5 + $0x34] sm:$0xf] %v1835
  %1964 = vst [vmem:[%s5 + $0x38] sm:$0xf] %v1836
  %1965 = vst [vmem:[%s5 + $0x3c] sm:$0xf] %v1837
  %1966 = vst [vmem:[%s5 + $0x40] sm:$0xf] %v1838
  %1967 = vst [vmem:[%s5 + $0x44] sm:$0xf] %v1839
  %1968 = vst [vmem:[%s5 + $0x48] sm:$0xf] %v1840
  %1969 = vst [vmem:[%s5 + $0x4c] sm:$0xf] %v1841
  %1970 = vst [vmem:[%s5 + $0x50] sm:$0xf] %v1842
  %1971 = vst [vmem:[%s5 + $0x54] sm:$0xf] %v1843
  %1972 = vst [vmem:[%s5 + $0x58] sm:$0xf] %v1844
  %1973 = vst [vmem:[%s5 + $0x5c] sm:$0xf] %v1845
  %1974 = vst [vmem:[%s5 + $0x60] sm:$0xf] %v1846
  %1975 = vst [vmem:[%s5 + $0x64] sm:$0xf] %v1847
  %1976 = vst [vmem:[%s5 + $0x68] sm:$0xf] %v1848
  %1977 = vst [vmem:[%s5 + $0x6c] sm:$0xf] %v1849
  %1978 = vst [vmem:[%s5 + $0x70] sm:$0xf] %v1850
  %1979 = vst [vmem:[%s5 + $0x74] sm:$0xf] %v1851
  %1980 = vst [vmem:[%s5 + $0x78] sm:$0xf] %v1852
  %1981 = vst [vmem:[%s5 + $0x7c] sm:$0xf] %v1853
  %1982 = vst [vmem:[%s5 + $0x80] sm:$0xf] %v1854
  %1983 = vst [vmem:[%s5 + $0x84] sm:$0xf] %v1855
  %1984 = vst [vmem:[%s5 + $0x88] sm:$0xf] %v1856
  %1985 = vst [vmem:[%s5 + $0x8c] sm:$0xf] %v1857
  %1986 = vst [vmem:[%s5 + $0x90] sm:$0xf] %v1858
  %1987 = vst [vmem:[%s5 + $0x94] sm:$0xf] %v1859
  %1988 = vst [vmem:[%s5 + $0x98] sm:$0xf] %v1860
  %1989 = vst [vmem:[%s5 + $0x9c] sm:$0xf] %v1861
  %1990 = vst [vmem:[%s5 + $0xa0] sm:$0xf] %v1862
  %1991 = vst [vmem:[%s5 + $0xa4] sm:$0xf] %v1863
  %1992 = vst [vmem:[%s5 + $0xa8] sm:$0xf] %v1864
  %1993 = vst [vmem:[%s5 + $0xac] sm:$0xf] %v1865
  %1994 = vst [vmem:[%s5 + $0xb0] sm:$0xf] %v1866
  %1995 = vst [vmem:[%s5 + $0xb4] sm:$0xf] %v1867
  %1996 = vst [vmem:[%s5 + $0xb8] sm:$0xf] %v1868
  %1997 = vst [vmem:[%s5 + $0xbc] sm:$0xf] %v1869
  %1998 = vst [vmem:[%s5 + $0xc0] sm:$0xf] %v1870
  %1999 = vst [vmem:[%s5 + $0xc4] sm:$0xf] %v1871
  %2000 = vst [vmem:[%s5 + $0xc8] sm:$0xf] %v1872
  %2001 = vst [vmem:[%s5 + $0xcc] sm:$0xf] %v1873
  %2002 = vst [vmem:[%s5 + $0xd0] sm:$0xf] %v1874
  %2003 = vst [vmem:[%s5 + $0xd4] sm:$0xf] %v1875
  %2004 = vst [vmem:[%s5 + $0xd8] sm:$0xf] %v1876
  %2005 = vst [vmem:[%s5 + $0xdc] sm:$0xf] %v1877
  %2006 = vst [vmem:[%s5 + $0xe0] sm:$0xf] %v1878
  %2007 = vst [vmem:[%s5 + $0xe4] sm:$0xf] %v1879
  %2008 = vst [vmem:[%s5 + $0xe8] sm:$0xf] %v1880
  %2009 = vst [vmem:[%s5 + $0xec] sm:$0xf] %v1881
  %2010 = vst [vmem:[%s5 + $0xf0] sm:$0xf] %v1882
  %2011 = vst [vmem:[%s5 + $0xf4] sm:$0xf] %v1883
  %2012 = vst [vmem:[%s5 + $0xf8] sm:$0xf] %v1884
  %2013 = vst [vmem:[%s5 + $0xfc] sm:$0xf] %v1885
  // Predicated region
  $region22: #{double_conv_up_c3_forward.10} parent=0 // pred_check
    _
  $region23: #{double_conv_up_c3_forward.10} parent=0 // pred_check_branch
    %2015 = sbr.rel (0) target = $region25
  $region24: #{double_conv_up_c3_forward.10} parent=0 // pred_region
    _
  $region25: #{double_conv_up_c3_forward.10} parent=0 // pred_fallthru
    _
  // Predicated region
  $region26: #{double_conv_up_c3_forward.10} parent=0 // pred_check
    _
  $region27: #{double_conv_up_c3_forward.10} parent=0 // pred_check_branch
    %2017 = sbr.rel (0) target = $region29
  $region28: #{double_conv_up_c3_forward.10} parent=0 // pred_region
    _
  $region29: #{double_conv_up_c3_forward.10} parent=0 // pred_fallthru
    _

// kernel: double_conv_up_c3_forward.9
$region0: #{double_conv_up_c3_forward.9}
  #allocation0 [shape = 'u32[]', space=smem, size = 0x4, offset = 0x4, fixed_abs, tag = 'smem constant byte address 0x4 - core index']
  #allocation1 [shape = 'u32[144,128]{1,0:T(1,128)}', space=vmem, size = 0x12000, scoped, tag = 'internal scratch']
  %s0 = inlined_call_operand.vmem [shape: bf16[512,1152], index: 0, kind: input, shape index: {}]
  %s1 = inlined_call_operand.vmem [shape: bf16[1152,128], index: 1, kind: input, shape index: {}]
  %s2 = inlined_call_operand.vmem [shape: f32[1,128], index: 2, kind: input, shape index: {}]
  %s3 = inlined_call_operand.vmem [shape: bf16[512,128], index: 3, kind: input, shape index: {}]
  %s4 = inlined_call_operand.vmem [shape: bf16[512,128], index: 4, kind: output, shape index: {}]
  %s5 = sld [smem:[#allocation0]]
  $region26: #{double_conv_up_c3_forward.9} parent=0
    _
  %s7 = ssub.s32 1, %s5
  %s8 = scalar_select 0, %s7, %s5
  // Predicated region
  $region2: #{double_conv_up_c3_forward.9} parent=0 // pred_check
    _
  $region3: #{double_conv_up_c3_forward.9} parent=0 // pred_check_branch
    %10 = sbr.rel (0) target = $region5
  $region4: #{double_conv_up_c3_forward.9} parent=0 // pred_region
    _
  $region5: #{double_conv_up_c3_forward.9} parent=0 // pred_fallthru
    _
  // Predicated region
  $region6: #{double_conv_up_c3_forward.9} parent=0 // pred_check
    _
  $region7: #{double_conv_up_c3_forward.9} parent=0 // pred_check_branch
    %12 = sbr.rel (0) target = $region9
  $region8: #{double_conv_up_c3_forward.9} parent=0 // pred_region
    _
  $region9: #{double_conv_up_c3_forward.9} parent=0 // pred_fallthru
    _
  // Predicated region
  $region10: #{double_conv_up_c3_forward.9} parent=0 // pred_check
    _
  $region11: #{double_conv_up_c3_forward.9} parent=0 // pred_check_branch
    %14 = sbr.rel (0) target = $region13
  $region12: #{double_conv_up_c3_forward.9} parent=0 // pred_region
    _
  $region13: #{double_conv_up_c3_forward.9} parent=0 // pred_fallthru
    _
  // Predicated region
  $region14: #{double_conv_up_c3_forward.9} parent=0 // pred_check
    _
  $region15: #{double_conv_up_c3_forward.9} parent=0 // pred_check_branch
    %16 = sbr.rel (0) target = $region17
  $region16: #{double_conv_up_c3_forward.9} parent=0 // pred_region
    _
  $region17: #{double_conv_up_c3_forward.9} parent=0 // pred_fallthru
    _
  %v18 = vld [vmem:[%s0] sm:$0xff]
  %v19 = vld [vmem:[%s0 + $0x8] sm:$0xff]
  %v20 = vld [vmem:[%s0 + $0x10] sm:$0xff]
  %v21 = vld [vmem:[%s0 + $0x18] sm:$0xff]
  %v22 = vld [vmem:[%s0 + $0x20] sm:$0xf]
  %v23 = vld [vmem:[%s0 + $0x24] sm:$0xff]
  %v24 = vld [vmem:[%s0 + $0x2c] sm:$0xff]
  %v25 = vld [vmem:[%s0 + $0x34] sm:$0xff]
  %v26 = vld [vmem:[%s0 + $0x3c] sm:$0xff]
  %v27 = vld [vmem:[%s0 + $0x44] sm:$0xf]
  %v28 = vld [vmem:[%s0 + $0x48] sm:$0xff]
  %v29 = vld [vmem:[%s0 + $0x50] sm:$0xff]
  %v30 = vld [vmem:[%s0 + $0x58] sm:$0xff]
  %v31 = vld [vmem:[%s0 + $0x60] sm:$0xff]
  %v32 = vld [vmem:[%s0 + $0x68] sm:$0xf]
  %v33 = vld [vmem:[%s0 + $0x6c] sm:$0xff]
  %v34 = vld [vmem:[%s0 + $0x74] sm:$0xff]
  %v35 = vld [vmem:[%s0 + $0x7c] sm:$0xff]
  %v36 = vld [vmem:[%s0 + $0x84] sm:$0xff]
  %v37 = vld [vmem:[%s0 + $0x8c] sm:$0xf]
  %v38 = vld [vmem:[%s0 + $0x90] sm:$0xff]
  %v39 = vld [vmem:[%s0 + $0x98] sm:$0xff]
  %v40 = vld [vmem:[%s0 + $0xa0] sm:$0xff]
  %v41 = vld [vmem:[%s0 + $0xa8] sm:$0xff]
  %v42 = vld [vmem:[%s0 + $0xb0] sm:$0xf]
  %v43 = vld [vmem:[%s0 + $0xb4] sm:$0xff]
  %v44 = vld [vmem:[%s0 + $0xbc] sm:$0xff]
  %v45 = vld [vmem:[%s0 + $0xc4] sm:$0xff]
  %v46 = vld [vmem:[%s0 + $0xcc] sm:$0xff]
  %v47 = vld [vmem:[%s0 + $0xd4] sm:$0xf]
  %v48 = vld [vmem:[%s0 + $0xd8] sm:$0xff]
  %v49 = vld [vmem:[%s0 + $0xe0] sm:$0xff]
  %v50 = vld [vmem:[%s0 + $0xe8] sm:$0xff]
  %v51 = vld [vmem:[%s0 + $0xf0] sm:$0xff]
  %v52 = vld [vmem:[%s0 + $0xf8] sm:$0xf]
  %v53 = vld [vmem:[%s0 + $0xfc] sm:$0xff]
  %v54 = vld [vmem:[%s0 + $0x104] sm:$0xff]
  %v55 = vld [vmem:[%s0 + $0x10c] sm:$0xff]
  %v56 = vld [vmem:[%s0 + $0x114] sm:$0xff]
  %v57 = vld [vmem:[%s0 + $0x11c] sm:$0xf]
  %v58 = vld [vmem:[%s0 + $0x120] sm:$0xff]
  %v59 = vld [vmem:[%s0 + $0x128] sm:$0xff]
  %v60 = vld [vmem:[%s0 + $0x130] sm:$0xff]
  %v61 = vld [vmem:[%s0 + $0x138] sm:$0xff]
  %v62 = vld [vmem:[%s0 + $0x140] sm:$0xf]
  %v63 = vld [vmem:[%s0 + $0x144] sm:$0xff]
  %v64 = vld [vmem:[%s0 + $0x14c] sm:$0xff]
  %v65 = vld [vmem:[%s0 + $0x154] sm:$0xff]
  %v66 = vld [vmem:[%s0 + $0x15c] sm:$0xff]
  %v67 = vld [vmem:[%s0 + $0x164] sm:$0xf]
  %v68 = vld [vmem:[%s0 + $0x168] sm:$0xff]
  %v69 = vld [vmem:[%s0 + $0x170] sm:$0xff]
  %v70 = vld [vmem:[%s0 + $0x178] sm:$0xff]
  %v71 = vld [vmem:[%s0 + $0x180] sm:$0xff]
  %v72 = vld [vmem:[%s0 + $0x188] sm:$0xf]
  %v73 = vld [vmem:[%s0 + $0x18c] sm:$0xff]
  %v74 = vld [vmem:[%s0 + $0x194] sm:$0xff]
  %v75 = vld [vmem:[%s0 + $0x19c] sm:$0xff]
  %v76 = vld [vmem:[%s0 + $0x1a4] sm:$0xff]
  %v77 = vld [vmem:[%s0 + $0x1ac] sm:$0xf]
  %v78 = vld [vmem:[%s0 + $0x1b0] sm:$0xff]
  %v79 = vld [vmem:[%s0 + $0x1b8] sm:$0xff]
  %v80 = vld [vmem:[%s0 + $0x1c0] sm:$0xff]
  %v81 = vld [vmem:[%s0 + $0x1c8] sm:$0xff]
  %v82 = vld [vmem:[%s0 + $0x1d0] sm:$0xf]
  %v83 = vld [vmem:[%s0 + $0x1d4] sm:$0xff]
  %v84 = vld [vmem:[%s0 + $0x1dc] sm:$0xff]
  %v85 = vld [vmem:[%s0 + $0x1e4] sm:$0xff]
  %v86 = vld [vmem:[%s0 + $0x1ec] sm:$0xff]
  %v87 = vld [vmem:[%s0 + $0x1f4] sm:$0xf]
  %v88 = vld [vmem:[%s0 + $0x1f8] sm:$0xff]
  %v89 = vld [vmem:[%s0 + $0x200] sm:$0xff]
  %v90 = vld [vmem:[%s0 + $0x208] sm:$0xff]
  %v91 = vld [vmem:[%s0 + $0x210] sm:$0xff]
  %v92 = vld [vmem:[%s0 + $0x218] sm:$0xf]
  %v93 = vld [vmem:[%s0 + $0x21c] sm:$0xff]
  %v94 = vld [vmem:[%s0 + $0x224] sm:$0xff]
  %v95 = vld [vmem:[%s0 + $0x22c] sm:$0xff]
  %v96 = vld [vmem:[%s0 + $0x234] sm:$0xff]
  %v97 = vld [vmem:[%s0 + $0x23c] sm:$0xf]
  %v98 = vld [vmem:[%s0 + $0x240] sm:$0xff]
  %v99 = vld [vmem:[%s0 + $0x248] sm:$0xff]
  %v100 = vld [vmem:[%s0 + $0x250] sm:$0xff]
  %v101 = vld [vmem:[%s0 + $0x258] sm:$0xff]
  %v102 = vld [vmem:[%s0 + $0x260] sm:$0xf]
  %v103 = vld [vmem:[%s0 + $0x264] sm:$0xff]
  %v104 = vld [vmem:[%s0 + $0x26c] sm:$0xff]
  %v105 = vld [vmem:[%s0 + $0x274] sm:$0xff]
  %v106 = vld [vmem:[%s0 + $0x27c] sm:$0xff]
  %v107 = vld [vmem:[%s0 + $0x284] sm:$0xf]
  %v108 = vld [vmem:[%s0 + $0x288] sm:$0xff]
  %v109 = vld [vmem:[%s0 + $0x290] sm:$0xff]
  %v110 = vld [vmem:[%s0 + $0x298] sm:$0xff]
  %v111 = vld [vmem:[%s0 + $0x2a0] sm:$0xff]
  %v112 = vld [vmem:[%s0 + $0x2a8] sm:$0xf]
  %v113 = vld [vmem:[%s0 + $0x2ac] sm:$0xff]
  %v114 = vld [vmem:[%s0 + $0x2b4] sm:$0xff]
  %v115 = vld [vmem:[%s0 + $0x2bc] sm:$0xff]
  %v116 = vld [vmem:[%s0 + $0x2c4] sm:$0xff]
  %v117 = vld [vmem:[%s0 + $0x2cc] sm:$0xf]
  %v118 = vld [vmem:[%s0 + $0x2d0] sm:$0xff]
  %v119 = vld [vmem:[%s0 + $0x2d8] sm:$0xff]
  %v120 = vld [vmem:[%s0 + $0x2e0] sm:$0xff]
  %v121 = vld [vmem:[%s0 + $0x2e8] sm:$0xff]
  %v122 = vld [vmem:[%s0 + $0x2f0] sm:$0xf]
  %v123 = vld [vmem:[%s0 + $0x2f4] sm:$0xff]
  %v124 = vld [vmem:[%s0 + $0x2fc] sm:$0xff]
  %v125 = vld [vmem:[%s0 + $0x304] sm:$0xff]
  %v126 = vld [vmem:[%s0 + $0x30c] sm:$0xff]
  %v127 = vld [vmem:[%s0 + $0x314] sm:$0xf]
  %v128 = vld [vmem:[%s0 + $0x318] sm:$0xff]
  %v129 = vld [vmem:[%s0 + $0x320] sm:$0xff]
  %v130 = vld [vmem:[%s0 + $0x328] sm:$0xff]
  %v131 = vld [vmem:[%s0 + $0x330] sm:$0xff]
  %v132 = vld [vmem:[%s0 + $0x338] sm:$0xf]
  %v133 = vld [vmem:[%s0 + $0x33c] sm:$0xff]
  %v134 = vld [vmem:[%s0 + $0x344] sm:$0xff]
  %v135 = vld [vmem:[%s0 + $0x34c] sm:$0xff]
  %v136 = vld [vmem:[%s0 + $0x354] sm:$0xff]
  %v137 = vld [vmem:[%s0 + $0x35c] sm:$0xf]
  %v138 = vld [vmem:[%s0 + $0x360] sm:$0xff]
  %v139 = vld [vmem:[%s0 + $0x368] sm:$0xff]
  %v140 = vld [vmem:[%s0 + $0x370] sm:$0xff]
  %v141 = vld [vmem:[%s0 + $0x378] sm:$0xff]
  %v142 = vld [vmem:[%s0 + $0x380] sm:$0xf]
  %v143 = vld [vmem:[%s0 + $0x384] sm:$0xff]
  %v144 = vld [vmem:[%s0 + $0x38c] sm:$0xff]
  %v145 = vld [vmem:[%s0 + $0x394] sm:$0xff]
  %v146 = vld [vmem:[%s0 + $0x39c] sm:$0xff]
  %v147 = vld [vmem:[%s0 + $0x3a4] sm:$0xf]
  %v148 = vld [vmem:[%s0 + $0x3a8] sm:$0xff]
  %v149 = vld [vmem:[%s0 + $0x3b0] sm:$0xff]
  %v150 = vld [vmem:[%s0 + $0x3b8] sm:$0xff]
  %v151 = vld [vmem:[%s0 + $0x3c0] sm:$0xff]
  %v152 = vld [vmem:[%s0 + $0x3c8] sm:$0xf]
  %v153 = vld [vmem:[%s0 + $0x3cc] sm:$0xff]
  %v154 = vld [vmem:[%s0 + $0x3d4] sm:$0xff]
  %v155 = vld [vmem:[%s0 + $0x3dc] sm:$0xff]
  %v156 = vld [vmem:[%s0 + $0x3e4] sm:$0xff]
  %v157 = vld [vmem:[%s0 + $0x3ec] sm:$0xf]
  %v158 = vld [vmem:[%s0 + $0x3f0] sm:$0xff]
  %v159 = vld [vmem:[%s0 + $0x3f8] sm:$0xff]
  %v160 = vld [vmem:[%s0 + $0x400] sm:$0xff]
  %v161 = vld [vmem:[%s0 + $0x408] sm:$0xff]
  %v162 = vld [vmem:[%s0 + $0x410] sm:$0xf]
  %v163 = vld [vmem:[%s0 + $0x414] sm:$0xff]
  %v164 = vld [vmem:[%s0 + $0x41c] sm:$0xff]
  %v165 = vld [vmem:[%s0 + $0x424] sm:$0xff]
  %v166 = vld [vmem:[%s0 + $0x42c] sm:$0xff]
  %v167 = vld [vmem:[%s0 + $0x434] sm:$0xf]
  %v168 = vld [vmem:[%s0 + $0x438] sm:$0xff]
  %v169 = vld [vmem:[%s0 + $0x440] sm:$0xff]
  %v170 = vld [vmem:[%s0 + $0x448] sm:$0xff]
  %v171 = vld [vmem:[%s0 + $0x450] sm:$0xff]
  %v172 = vld [vmem:[%s0 + $0x458] sm:$0xf]
  %v173 = vld [vmem:[%s0 + $0x45c] sm:$0xff]
  %v174 = vld [vmem:[%s0 + $0x464] sm:$0xff]
  %v175 = vld [vmem:[%s0 + $0x46c] sm:$0xff]
  %v176 = vld [vmem:[%s0 + $0x474] sm:$0xff]
  %v177 = vld [vmem:[%s0 + $0x47c] sm:$0xf]
  %v178 = vld [vmem:[%s0 + $0x480] sm:$0xff]
  %v179 = vld [vmem:[%s0 + $0x488] sm:$0xff]
  %v180 = vld [vmem:[%s0 + $0x490] sm:$0xff]
  %v181 = vld [vmem:[%s0 + $0x498] sm:$0xff]
  %v182 = vld [vmem:[%s0 + $0x4a0] sm:$0xf]
  %v183 = vld [vmem:[%s0 + $0x4a4] sm:$0xff]
  %v184 = vld [vmem:[%s0 + $0x4ac] sm:$0xff]
  %v185 = vld [vmem:[%s0 + $0x4b4] sm:$0xff]
  %v186 = vld [vmem:[%s0 + $0x4bc] sm:$0xff]
  %v187 = vld [vmem:[%s0 + $0x4c4] sm:$0xf]
  %v188 = vld [vmem:[%s0 + $0x4c8] sm:$0xff]
  %v189 = vld [vmem:[%s0 + $0x4d0] sm:$0xff]
  %v190 = vld [vmem:[%s0 + $0x4d8] sm:$0xff]
  %v191 = vld [vmem:[%s0 + $0x4e0] sm:$0xff]
  %v192 = vld [vmem:[%s0 + $0x4e8] sm:$0xf]
  %v193 = vld [vmem:[%s0 + $0x4ec] sm:$0xff]
  %v194 = vld [vmem:[%s0 + $0x4f4] sm:$0xff]
  %v195 = vld [vmem:[%s0 + $0x4fc] sm:$0xff]
  %v196 = vld [vmem:[%s0 + $0x504] sm:$0xff]
  %v197 = vld [vmem:[%s0 + $0x50c] sm:$0xf]
  %v198 = vld [vmem:[%s0 + $0x510] sm:$0xff]
  %v199 = vld [vmem:[%s0 + $0x518] sm:$0xff]
  %v200 = vld [vmem:[%s0 + $0x520] sm:$0xff]
  %v201 = vld [vmem:[%s0 + $0x528] sm:$0xff]
  %v202 = vld [vmem:[%s0 + $0x530] sm:$0xf]
  %v203 = vld [vmem:[%s0 + $0x534] sm:$0xff]
  %v204 = vld [vmem:[%s0 + $0x53c] sm:$0xff]
  %v205 = vld [vmem:[%s0 + $0x544] sm:$0xff]
  %v206 = vld [vmem:[%s0 + $0x54c] sm:$0xff]
  %v207 = vld [vmem:[%s0 + $0x554] sm:$0xf]
  %v208 = vld [vmem:[%s0 + $0x558] sm:$0xff]
  %v209 = vld [vmem:[%s0 + $0x560] sm:$0xff]
  %v210 = vld [vmem:[%s0 + $0x568] sm:$0xff]
  %v211 = vld [vmem:[%s0 + $0x570] sm:$0xff]
  %v212 = vld [vmem:[%s0 + $0x578] sm:$0xf]
  %v213 = vld [vmem:[%s0 + $0x57c] sm:$0xff]
  %v214 = vld [vmem:[%s0 + $0x584] sm:$0xff]
  %v215 = vld [vmem:[%s0 + $0x58c] sm:$0xff]
  %v216 = vld [vmem:[%s0 + $0x594] sm:$0xff]
  %v217 = vld [vmem:[%s0 + $0x59c] sm:$0xf]
  %v218 = vld [vmem:[%s0 + $0x5a0] sm:$0xff]
  %v219 = vld [vmem:[%s0 + $0x5a8] sm:$0xff]
  %v220 = vld [vmem:[%s0 + $0x5b0] sm:$0xff]
  %v221 = vld [vmem:[%s0 + $0x5b8] sm:$0xff]
  %v222 = vld [vmem:[%s0 + $0x5c0] sm:$0xf]
  %v223 = vld [vmem:[%s0 + $0x5c4] sm:$0xff]
  %v224 = vld [vmem:[%s0 + $0x5cc] sm:$0xff]
  %v225 = vld [vmem:[%s0 + $0x5d4] sm:$0xff]
  %v226 = vld [vmem:[%s0 + $0x5dc] sm:$0xff]
  %v227 = vld [vmem:[%s0 + $0x5e4] sm:$0xf]
  %v228 = vld [vmem:[%s0 + $0x5e8] sm:$0xff]
  %v229 = vld [vmem:[%s0 + $0x5f0] sm:$0xff]
  %v230 = vld [vmem:[%s0 + $0x5f8] sm:$0xff]
  %v231 = vld [vmem:[%s0 + $0x600] sm:$0xff]
  %v232 = vld [vmem:[%s0 + $0x608] sm:$0xf]
  %v233 = vld [vmem:[%s0 + $0x60c] sm:$0xff]
  %v234 = vld [vmem:[%s0 + $0x614] sm:$0xff]
  %v235 = vld [vmem:[%s0 + $0x61c] sm:$0xff]
  %v236 = vld [vmem:[%s0 + $0x624] sm:$0xff]
  %v237 = vld [vmem:[%s0 + $0x62c] sm:$0xf]
  %v238 = vld [vmem:[%s0 + $0x630] sm:$0xff]
  %v239 = vld [vmem:[%s0 + $0x638] sm:$0xff]
  %v240 = vld [vmem:[%s0 + $0x640] sm:$0xff]
  %v241 = vld [vmem:[%s0 + $0x648] sm:$0xff]
  %v242 = vld [vmem:[%s0 + $0x650] sm:$0xf]
  %v243 = vld [vmem:[%s0 + $0x654] sm:$0xff]
  %v244 = vld [vmem:[%s0 + $0x65c] sm:$0xff]
  %v245 = vld [vmem:[%s0 + $0x664] sm:$0xff]
  %v246 = vld [vmem:[%s0 + $0x66c] sm:$0xff]
  %v247 = vld [vmem:[%s0 + $0x674] sm:$0xf]
  %v248 = vld [vmem:[%s0 + $0x678] sm:$0xff]
  %v249 = vld [vmem:[%s0 + $0x680] sm:$0xff]
  %v250 = vld [vmem:[%s0 + $0x688] sm:$0xff]
  %v251 = vld [vmem:[%s0 + $0x690] sm:$0xff]
  %v252 = vld [vmem:[%s0 + $0x698] sm:$0xf]
  %v253 = vld [vmem:[%s0 + $0x69c] sm:$0xff]
  %v254 = vld [vmem:[%s0 + $0x6a4] sm:$0xff]
  %v255 = vld [vmem:[%s0 + $0x6ac] sm:$0xff]
  %v256 = vld [vmem:[%s0 + $0x6b4] sm:$0xff]
  %v257 = vld [vmem:[%s0 + $0x6bc] sm:$0xf]
  %v258 = vld [vmem:[%s0 + $0x6c0] sm:$0xff]
  %v259 = vld [vmem:[%s0 + $0x6c8] sm:$0xff]
  %v260 = vld [vmem:[%s0 + $0x6d0] sm:$0xff]
  %v261 = vld [vmem:[%s0 + $0x6d8] sm:$0xff]
  %v262 = vld [vmem:[%s0 + $0x6e0] sm:$0xf]
  %v263 = vld [vmem:[%s0 + $0x6e4] sm:$0xff]
  %v264 = vld [vmem:[%s0 + $0x6ec] sm:$0xff]
  %v265 = vld [vmem:[%s0 + $0x6f4] sm:$0xff]
  %v266 = vld [vmem:[%s0 + $0x6fc] sm:$0xff]
  %v267 = vld [vmem:[%s0 + $0x704] sm:$0xf]
  %v268 = vld [vmem:[%s0 + $0x708] sm:$0xff]
  %v269 = vld [vmem:[%s0 + $0x710] sm:$0xff]
  %v270 = vld [vmem:[%s0 + $0x718] sm:$0xff]
  %v271 = vld [vmem:[%s0 + $0x720] sm:$0xff]
  %v272 = vld [vmem:[%s0 + $0x728] sm:$0xf]
  %v273 = vld [vmem:[%s0 + $0x72c] sm:$0xff]
  %v274 = vld [vmem:[%s0 + $0x734] sm:$0xff]
  %v275 = vld [vmem:[%s0 + $0x73c] sm:$0xff]
  %v276 = vld [vmem:[%s0 + $0x744] sm:$0xff]
  %v277 = vld [vmem:[%s0 + $0x74c] sm:$0xf]
  %v278 = vld [vmem:[%s0 + $0x750] sm:$0xff]
  %v279 = vld [vmem:[%s0 + $0x758] sm:$0xff]
  %v280 = vld [vmem:[%s0 + $0x760] sm:$0xff]
  %v281 = vld [vmem:[%s0 + $0x768] sm:$0xff]
  %v282 = vld [vmem:[%s0 + $0x770] sm:$0xf]
  %v283 = vld [vmem:[%s0 + $0x774] sm:$0xff]
  %v284 = vld [vmem:[%s0 + $0x77c] sm:$0xff]
  %v285 = vld [vmem:[%s0 + $0x784] sm:$0xff]
  %v286 = vld [vmem:[%s0 + $0x78c] sm:$0xff]
  %v287 = vld [vmem:[%s0 + $0x794] sm:$0xf]
  %v288 = vld [vmem:[%s0 + $0x798] sm:$0xff]
  %v289 = vld [vmem:[%s0 + $0x7a0] sm:$0xff]
  %v290 = vld [vmem:[%s0 + $0x7a8] sm:$0xff]
  %v291 = vld [vmem:[%s0 + $0x7b0] sm:$0xff]
  %v292 = vld [vmem:[%s0 + $0x7b8] sm:$0xf]
  %v293 = vld [vmem:[%s0 + $0x7bc] sm:$0xff]
  %v294 = vld [vmem:[%s0 + $0x7c4] sm:$0xff]
  %v295 = vld [vmem:[%s0 + $0x7cc] sm:$0xff]
  %v296 = vld [vmem:[%s0 + $0x7d4] sm:$0xff]
  %v297 = vld [vmem:[%s0 + $0x7dc] sm:$0xf]
  %v298 = vld [vmem:[%s0 + $0x7e0] sm:$0xff]
  %v299 = vld [vmem:[%s0 + $0x7e8] sm:$0xff]
  %v300 = vld [vmem:[%s0 + $0x7f0] sm:$0xff]
  %v301 = vld [vmem:[%s0 + $0x7f8] sm:$0xff]
  %v302 = vld [vmem:[%s0 + $0x800] sm:$0xf]
  %v303 = vld [vmem:[%s0 + $0x804] sm:$0xff]
  %v304 = vld [vmem:[%s0 + $0x80c] sm:$0xff]
  %v305 = vld [vmem:[%s0 + $0x814] sm:$0xff]
  %v306 = vld [vmem:[%s0 + $0x81c] sm:$0xff]
  %v307 = vld [vmem:[%s0 + $0x824] sm:$0xf]
  %v308 = vld [vmem:[%s0 + $0x828] sm:$0xff]
  %v309 = vld [vmem:[%s0 + $0x830] sm:$0xff]
  %v310 = vld [vmem:[%s0 + $0x838] sm:$0xff]
  %v311 = vld [vmem:[%s0 + $0x840] sm:$0xff]
  %v312 = vld [vmem:[%s0 + $0x848] sm:$0xf]
  %v313 = vld [vmem:[%s0 + $0x84c] sm:$0xff]
  %v314 = vld [vmem:[%s0 + $0x854] sm:$0xff]
  %v315 = vld [vmem:[%s0 + $0x85c] sm:$0xff]
  %v316 = vld [vmem:[%s0 + $0x864] sm:$0xff]
  %v317 = vld [vmem:[%s0 + $0x86c] sm:$0xf]
  %v318 = vld [vmem:[%s0 + $0x870] sm:$0xff]
  %v319 = vld [vmem:[%s0 + $0x878] sm:$0xff]
  %v320 = vld [vmem:[%s0 + $0x880] sm:$0xff]
  %v321 = vld [vmem:[%s0 + $0x888] sm:$0xff]
  %v322 = vld [vmem:[%s0 + $0x890] sm:$0xf]
  %v323 = vld [vmem:[%s0 + $0x894] sm:$0xff]
  %v324 = vld [vmem:[%s0 + $0x89c] sm:$0xff]
  %v325 = vld [vmem:[%s0 + $0x8a4] sm:$0xff]
  %v326 = vld [vmem:[%s0 + $0x8ac] sm:$0xff]
  %v327 = vld [vmem:[%s0 + $0x8b4] sm:$0xf]
  %v328 = vld [vmem:[%s0 + $0x8b8] sm:$0xff]
  %v329 = vld [vmem:[%s0 + $0x8c0] sm:$0xff]
  %v330 = vld [vmem:[%s0 + $0x8c8] sm:$0xff]
  %v331 = vld [vmem:[%s0 + $0x8d0] sm:$0xff]
  %v332 = vld [vmem:[%s0 + $0x8d8] sm:$0xf]
  %v333 = vld [vmem:[%s0 + $0x8dc] sm:$0xff]
  %v334 = vld [vmem:[%s0 + $0x8e4] sm:$0xff]
  %v335 = vld [vmem:[%s0 + $0x8ec] sm:$0xff]
  %v336 = vld [vmem:[%s0 + $0x8f4] sm:$0xff]
  %v337 = vld [vmem:[%s0 + $0x8fc] sm:$0xf]
  %v338 = vld [vmem:[%s1] sm:$0xf]
  %v339 = vld [vmem:[%s1 + $0x4] sm:$0xf]
  %v340 = vld [vmem:[%s1 + $0x8] sm:$0xf]
  %v341 = vld [vmem:[%s1 + $0xc] sm:$0xf]
  %v342 = vld [vmem:[%s1 + $0x10] sm:$0xf]
  %v343 = vld [vmem:[%s1 + $0x14] sm:$0xf]
  %v344 = vld [vmem:[%s1 + $0x18] sm:$0xf]
  %v345 = vld [vmem:[%s1 + $0x1c] sm:$0xf]
  %v346 = vld [vmem:[%s1 + $0x20] sm:$0xf]
  %v347 = vld [vmem:[%s1 + $0x24] sm:$0xf]
  %v348 = vld [vmem:[%s1 + $0x28] sm:$0xf]
  %v349 = vld [vmem:[%s1 + $0x2c] sm:$0xf]
  %v350 = vld [vmem:[%s1 + $0x30] sm:$0xf]
  %v351 = vld [vmem:[%s1 + $0x34] sm:$0xf]
  %v352 = vld [vmem:[%s1 + $0x38] sm:$0xf]
  %v353 = vld [vmem:[%s1 + $0x3c] sm:$0xf]
  %v354 = vld [vmem:[%s1 + $0x40] sm:$0xf]
  %v355 = vld [vmem:[%s1 + $0x44] sm:$0xf]
  %v356 = vld [vmem:[%s1 + $0x48] sm:$0xf]
  %v357 = vld [vmem:[%s1 + $0x4c] sm:$0xf]
  %v358 = vld [vmem:[%s1 + $0x50] sm:$0xf]
  %v359 = vld [vmem:[%s1 + $0x54] sm:$0xf]
  %v360 = vld [vmem:[%s1 + $0x58] sm:$0xf]
  %v361 = vld [vmem:[%s1 + $0x5c] sm:$0xf]
  %v362 = vld [vmem:[%s1 + $0x60] sm:$0xf]
  %v363 = vld [vmem:[%s1 + $0x64] sm:$0xf]
  %v364 = vld [vmem:[%s1 + $0x68] sm:$0xf]
  %v365 = vld [vmem:[%s1 + $0x6c] sm:$0xf]
  %v366 = vld [vmem:[%s1 + $0x70] sm:$0xf]
  %v367 = vld [vmem:[%s1 + $0x74] sm:$0xf]
  %v368 = vld [vmem:[%s1 + $0x78] sm:$0xf]
  %v369 = vld [vmem:[%s1 + $0x7c] sm:$0xf]
  %v370 = vld [vmem:[%s1 + $0x80] sm:$0xf]
  %v371 = vld [vmem:[%s1 + $0x84] sm:$0xf]
  %v372 = vld [vmem:[%s1 + $0x88] sm:$0xf]
  %v373 = vld [vmem:[%s1 + $0x8c] sm:$0xf]
  %v374 = vld [vmem:[%s1 + $0x90] sm:$0xf]
  %v375 = vld [vmem:[%s1 + $0x94] sm:$0xf]
  %v376 = vld [vmem:[%s1 + $0x98] sm:$0xf]
  %v377 = vld [vmem:[%s1 + $0x9c] sm:$0xf]
  %v378 = vld [vmem:[%s1 + $0xa0] sm:$0xf]
  %v379 = vld [vmem:[%s1 + $0xa4] sm:$0xf]
  %v380 = vld [vmem:[%s1 + $0xa8] sm:$0xf]
  %v381 = vld [vmem:[%s1 + $0xac] sm:$0xf]
  %v382 = vld [vmem:[%s1 + $0xb0] sm:$0xf]
  %v383 = vld [vmem:[%s1 + $0xb4] sm:$0xf]
  %v384 = vld [vmem:[%s1 + $0xb8] sm:$0xf]
  %v385 = vld [vmem:[%s1 + $0xbc] sm:$0xf]
  %v386 = vld [vmem:[%s1 + $0xc0] sm:$0xf]
  %v387 = vld [vmem:[%s1 + $0xc4] sm:$0xf]
  %v388 = vld [vmem:[%s1 + $0xc8] sm:$0xf]
  %v389 = vld [vmem:[%s1 + $0xcc] sm:$0xf]
  %v390 = vld [vmem:[%s1 + $0xd0] sm:$0xf]
  %v391 = vld [vmem:[%s1 + $0xd4] sm:$0xf]
  %v392 = vld [vmem:[%s1 + $0xd8] sm:$0xf]
  %v393 = vld [vmem:[%s1 + $0xdc] sm:$0xf]
  %v394 = vld [vmem:[%s1 + $0xe0] sm:$0xf]
  %v395 = vld [vmem:[%s1 + $0xe4] sm:$0xf]
  %v396 = vld [vmem:[%s1 + $0xe8] sm:$0xf]
  %v397 = vld [vmem:[%s1 + $0xec] sm:$0xf]
  %v398 = vld [vmem:[%s1 + $0xf0] sm:$0xf]
  %v399 = vld [vmem:[%s1 + $0xf4] sm:$0xf]
  %v400 = vld [vmem:[%s1 + $0xf8] sm:$0xf]
  %v401 = vld [vmem:[%s1 + $0xfc] sm:$0xf]
  %v402 = vld [vmem:[%s1 + $0x100] sm:$0xf]
  %v403 = vld [vmem:[%s1 + $0x104] sm:$0xf]
  %v404 = vld [vmem:[%s1 + $0x108] sm:$0xf]
  %v405 = vld [vmem:[%s1 + $0x10c] sm:$0xf]
  %v406 = vld [vmem:[%s1 + $0x110] sm:$0xf]
  %v407 = vld [vmem:[%s1 + $0x114] sm:$0xf]
  %v408 = vld [vmem:[%s1 + $0x118] sm:$0xf]
  %v409 = vld [vmem:[%s1 + $0x11c] sm:$0xf]
  %v410 = vld [vmem:[%s1 + $0x120] sm:$0xf]
  %v411 = vld [vmem:[%s1 + $0x124] sm:$0xf]
  %v412 = vld [vmem:[%s1 + $0x128] sm:$0xf]
  %v413 = vld [vmem:[%s1 + $0x12c] sm:$0xf]
  %v414 = vld [vmem:[%s1 + $0x130] sm:$0xf]
  %v415 = vld [vmem:[%s1 + $0x134] sm:$0xf]
  %v416 = vld [vmem:[%s1 + $0x138] sm:$0xf]
  %v417 = vld [vmem:[%s1 + $0x13c] sm:$0xf]
  %v418 = vld [vmem:[%s1 + $0x140] sm:$0xf]
  %v419 = vld [vmem:[%s1 + $0x144] sm:$0xf]
  %v420 = vld [vmem:[%s1 + $0x148] sm:$0xf]
  %v421 = vld [vmem:[%s1 + $0x14c] sm:$0xf]
  %v422 = vld [vmem:[%s1 + $0x150] sm:$0xf]
  %v423 = vld [vmem:[%s1 + $0x154] sm:$0xf]
  %v424 = vld [vmem:[%s1 + $0x158] sm:$0xf]
  %v425 = vld [vmem:[%s1 + $0x15c] sm:$0xf]
  %v426 = vld [vmem:[%s1 + $0x160] sm:$0xf]
  %v427 = vld [vmem:[%s1 + $0x164] sm:$0xf]
  %v428 = vld [vmem:[%s1 + $0x168] sm:$0xf]
  %v429 = vld [vmem:[%s1 + $0x16c] sm:$0xf]
  %v430 = vld [vmem:[%s1 + $0x170] sm:$0xf]
  %v431 = vld [vmem:[%s1 + $0x174] sm:$0xf]
  %v432 = vld [vmem:[%s1 + $0x178] sm:$0xf]
  %v433 = vld [vmem:[%s1 + $0x17c] sm:$0xf]
  %v434 = vld [vmem:[%s1 + $0x180] sm:$0xf]
  %v435 = vld [vmem:[%s1 + $0x184] sm:$0xf]
  %v436 = vld [vmem:[%s1 + $0x188] sm:$0xf]
  %v437 = vld [vmem:[%s1 + $0x18c] sm:$0xf]
  %v438 = vld [vmem:[%s1 + $0x190] sm:$0xf]
  %v439 = vld [vmem:[%s1 + $0x194] sm:$0xf]
  %v440 = vld [vmem:[%s1 + $0x198] sm:$0xf]
  %v441 = vld [vmem:[%s1 + $0x19c] sm:$0xf]
  %v442 = vld [vmem:[%s1 + $0x1a0] sm:$0xf]
  %v443 = vld [vmem:[%s1 + $0x1a4] sm:$0xf]
  %v444 = vld [vmem:[%s1 + $0x1a8] sm:$0xf]
  %v445 = vld [vmem:[%s1 + $0x1ac] sm:$0xf]
  %v446 = vld [vmem:[%s1 + $0x1b0] sm:$0xf]
  %v447 = vld [vmem:[%s1 + $0x1b4] sm:$0xf]
  %v448 = vld [vmem:[%s1 + $0x1b8] sm:$0xf]
  %v449 = vld [vmem:[%s1 + $0x1bc] sm:$0xf]
  %v450 = vld [vmem:[%s1 + $0x1c0] sm:$0xf]
  %v451 = vld [vmem:[%s1 + $0x1c4] sm:$0xf]
  %v452 = vld [vmem:[%s1 + $0x1c8] sm:$0xf]
  %v453 = vld [vmem:[%s1 + $0x1cc] sm:$0xf]
  %v454 = vld [vmem:[%s1 + $0x1d0] sm:$0xf]
  %v455 = vld [vmem:[%s1 + $0x1d4] sm:$0xf]
  %v456 = vld [vmem:[%s1 + $0x1d8] sm:$0xf]
  %v457 = vld [vmem:[%s1 + $0x1dc] sm:$0xf]
  %v458 = vld [vmem:[%s1 + $0x1e0] sm:$0xf]
  %v459 = vld [vmem:[%s1 + $0x1e4] sm:$0xf]
  %v460 = vld [vmem:[%s1 + $0x1e8] sm:$0xf]
  %v461 = vld [vmem:[%s1 + $0x1ec] sm:$0xf]
  %v462 = vld [vmem:[%s1 + $0x1f0] sm:$0xf]
  %v463 = vld [vmem:[%s1 + $0x1f4] sm:$0xf]
  %v464 = vld [vmem:[%s1 + $0x1f8] sm:$0xf]
  %v465 = vld [vmem:[%s1 + $0x1fc] sm:$0xf]
  %v466 = vld [vmem:[%s1 + $0x200] sm:$0xf]
  %v467 = vld [vmem:[%s1 + $0x204] sm:$0xf]
  %v468 = vld [vmem:[%s1 + $0x208] sm:$0xf]
  %v469 = vld [vmem:[%s1 + $0x20c] sm:$0xf]
  %v470 = vld [vmem:[%s1 + $0x210] sm:$0xf]
  %v471 = vld [vmem:[%s1 + $0x214] sm:$0xf]
  %v472 = vld [vmem:[%s1 + $0x218] sm:$0xf]
  %v473 = vld [vmem:[%s1 + $0x21c] sm:$0xf]
  %v474 = vld [vmem:[%s1 + $0x220] sm:$0xf]
  %v475 = vld [vmem:[%s1 + $0x224] sm:$0xf]
  %v476 = vld [vmem:[%s1 + $0x228] sm:$0xf]
  %v477 = vld [vmem:[%s1 + $0x22c] sm:$0xf]
  %v478 = vld [vmem:[%s1 + $0x230] sm:$0xf]
  %v479 = vld [vmem:[%s1 + $0x234] sm:$0xf]
  %v480 = vld [vmem:[%s1 + $0x238] sm:$0xf]
  %v481 = vld [vmem:[%s1 + $0x23c] sm:$0xf]
  %v482 = vld [vmem:[%s2] sm:$0x1]
  %v484 = vlaneseq
  %v485 = vshrl.u32 %v484, 7
  %v486 = vsub.s32 0, %v485
  %v487 = vrot.slane %v482, %v486
  %v809 = vunpack.c.l.b16 %v18
  %v810 = vunpack.c.h.b16 %v18
  %v811 = vunpack.c.l.b16 %v19
  %v812 = vunpack.c.h.b16 %v19
  %v813 = vunpack.c.l.b16 %v20
  %v814 = vunpack.c.h.b16 %v20
  %v815 = vunpack.c.l.b16 %v21
  %v816 = vunpack.c.h.b16 %v21
  %v817 = vunpack.c.l.b16 %v22
  %v818 = vunpack.c.l.b16 %v23
  %v819 = vunpack.c.h.b16 %v23
  %v820 = vunpack.c.l.b16 %v24
  %v821 = vunpack.c.h.b16 %v24
  %v822 = vunpack.c.l.b16 %v25
  %v823 = vunpack.c.h.b16 %v25
  %v824 = vunpack.c.l.b16 %v26
  %v825 = vunpack.c.h.b16 %v26
  %v826 = vunpack.c.l.b16 %v27
  %v827 = vunpack.c.l.b16 %v28
  %v828 = vunpack.c.h.b16 %v28
  %v829 = vunpack.c.l.b16 %v29
  %v830 = vunpack.c.h.b16 %v29
  %v831 = vunpack.c.l.b16 %v30
  %v832 = vunpack.c.h.b16 %v30
  %v833 = vunpack.c.l.b16 %v31
  %v834 = vunpack.c.h.b16 %v31
  %v835 = vunpack.c.l.b16 %v32
  %v836 = vunpack.c.l.b16 %v33
  %v837 = vunpack.c.h.b16 %v33
  %v838 = vunpack.c.l.b16 %v34
  %v839 = vunpack.c.h.b16 %v34
  %v840 = vunpack.c.l.b16 %v35
  %v841 = vunpack.c.h.b16 %v35
  %v842 = vunpack.c.l.b16 %v36
  %v843 = vunpack.c.h.b16 %v36
  %v844 = vunpack.c.l.b16 %v37
  %v845 = vunpack.c.l.b16 %v38
  %v846 = vunpack.c.h.b16 %v38
  %v847 = vunpack.c.l.b16 %v39
  %v848 = vunpack.c.h.b16 %v39
  %v849 = vunpack.c.l.b16 %v40
  %v850 = vunpack.c.h.b16 %v40
  %v851 = vunpack.c.l.b16 %v41
  %v852 = vunpack.c.h.b16 %v41
  %v853 = vunpack.c.l.b16 %v42
  %v854 = vunpack.c.l.b16 %v43
  %v855 = vunpack.c.h.b16 %v43
  %v856 = vunpack.c.l.b16 %v44
  %v857 = vunpack.c.h.b16 %v44
  %v858 = vunpack.c.l.b16 %v45
  %v859 = vunpack.c.h.b16 %v45
  %v860 = vunpack.c.l.b16 %v46
  %v861 = vunpack.c.h.b16 %v46
  %v862 = vunpack.c.l.b16 %v47
  %v863 = vunpack.c.l.b16 %v48
  %v864 = vunpack.c.h.b16 %v48
  %v865 = vunpack.c.l.b16 %v49
  %v866 = vunpack.c.h.b16 %v49
  %v867 = vunpack.c.l.b16 %v50
  %v868 = vunpack.c.h.b16 %v50
  %v869 = vunpack.c.l.b16 %v51
  %v870 = vunpack.c.h.b16 %v51
  %v871 = vunpack.c.l.b16 %v52
  %v872 = vunpack.c.l.b16 %v53
  %v873 = vunpack.c.h.b16 %v53
  %v874 = vunpack.c.l.b16 %v54
  %v875 = vunpack.c.h.b16 %v54
  %v876 = vunpack.c.l.b16 %v55
  %v877 = vunpack.c.h.b16 %v55
  %v878 = vunpack.c.l.b16 %v56
  %v879 = vunpack.c.h.b16 %v56
  %v880 = vunpack.c.l.b16 %v57
  %v881 = vunpack.c.l.b16 %v58
  %v882 = vunpack.c.h.b16 %v58
  %v883 = vunpack.c.l.b16 %v59
  %v884 = vunpack.c.h.b16 %v59
  %v885 = vunpack.c.l.b16 %v60
  %v886 = vunpack.c.h.b16 %v60
  %v887 = vunpack.c.l.b16 %v61
  %v888 = vunpack.c.h.b16 %v61
  %v889 = vunpack.c.l.b16 %v62
  %v890 = vunpack.c.l.b16 %v63
  %v891 = vunpack.c.h.b16 %v63
  %v892 = vunpack.c.l.b16 %v64
  %v893 = vunpack.c.h.b16 %v64
  %v894 = vunpack.c.l.b16 %v65
  %v895 = vunpack.c.h.b16 %v65
  %v896 = vunpack.c.l.b16 %v66
  %v897 = vunpack.c.h.b16 %v66
  %v898 = vunpack.c.l.b16 %v67
  %v899 = vunpack.c.l.b16 %v68
  %v900 = vunpack.c.h.b16 %v68
  %v901 = vunpack.c.l.b16 %v69
  %v902 = vunpack.c.h.b16 %v69
  %v903 = vunpack.c.l.b16 %v70
  %v904 = vunpack.c.h.b16 %v70
  %v905 = vunpack.c.l.b16 %v71
  %v906 = vunpack.c.h.b16 %v71
  %v907 = vunpack.c.l.b16 %v72
  %v908 = vunpack.c.l.b16 %v73
  %v909 = vunpack.c.h.b16 %v73
  %v910 = vunpack.c.l.b16 %v74
  %v911 = vunpack.c.h.b16 %v74
  %v912 = vunpack.c.l.b16 %v75
  %v913 = vunpack.c.h.b16 %v75
  %v914 = vunpack.c.l.b16 %v76
  %v915 = vunpack.c.h.b16 %v76
  %v916 = vunpack.c.l.b16 %v77
  %v917 = vunpack.c.l.b16 %v78
  %v918 = vunpack.c.h.b16 %v78
  %v919 = vunpack.c.l.b16 %v79
  %v920 = vunpack.c.h.b16 %v79
  %v921 = vunpack.c.l.b16 %v80
  %v922 = vunpack.c.h.b16 %v80
  %v923 = vunpack.c.l.b16 %v81
  %v924 = vunpack.c.h.b16 %v81
  %v925 = vunpack.c.l.b16 %v82
  %v926 = vunpack.c.l.b16 %v83
  %v927 = vunpack.c.h.b16 %v83
  %v928 = vunpack.c.l.b16 %v84
  %v929 = vunpack.c.h.b16 %v84
  %v930 = vunpack.c.l.b16 %v85
  %v931 = vunpack.c.h.b16 %v85
  %v932 = vunpack.c.l.b16 %v86
  %v933 = vunpack.c.h.b16 %v86
  %v934 = vunpack.c.l.b16 %v87
  %v935 = vunpack.c.l.b16 %v88
  %v936 = vunpack.c.h.b16 %v88
  %v937 = vunpack.c.l.b16 %v89
  %v938 = vunpack.c.h.b16 %v89
  %v939 = vunpack.c.l.b16 %v90
  %v940 = vunpack.c.h.b16 %v90
  %v941 = vunpack.c.l.b16 %v91
  %v942 = vunpack.c.h.b16 %v91
  %v943 = vunpack.c.l.b16 %v92
  %v944 = vunpack.c.l.b16 %v93
  %v945 = vunpack.c.h.b16 %v93
  %v946 = vunpack.c.l.b16 %v94
  %v947 = vunpack.c.h.b16 %v94
  %v948 = vunpack.c.l.b16 %v95
  %v949 = vunpack.c.h.b16 %v95
  %v950 = vunpack.c.l.b16 %v96
  %v951 = vunpack.c.h.b16 %v96
  %v952 = vunpack.c.l.b16 %v97
  %v953 = vunpack.c.l.b16 %v98
  %v954 = vunpack.c.h.b16 %v98
  %v955 = vunpack.c.l.b16 %v99
  %v956 = vunpack.c.h.b16 %v99
  %v957 = vunpack.c.l.b16 %v100
  %v958 = vunpack.c.h.b16 %v100
  %v959 = vunpack.c.l.b16 %v101
  %v960 = vunpack.c.h.b16 %v101
  %v961 = vunpack.c.l.b16 %v102
  %v962 = vunpack.c.l.b16 %v103
  %v963 = vunpack.c.h.b16 %v103
  %v964 = vunpack.c.l.b16 %v104
  %v965 = vunpack.c.h.b16 %v104
  %v966 = vunpack.c.l.b16 %v105
  %v967 = vunpack.c.h.b16 %v105
  %v968 = vunpack.c.l.b16 %v106
  %v969 = vunpack.c.h.b16 %v106
  %v970 = vunpack.c.l.b16 %v107
  %v971 = vunpack.c.l.b16 %v108
  %v972 = vunpack.c.h.b16 %v108
  %v973 = vunpack.c.l.b16 %v109
  %v974 = vunpack.c.h.b16 %v109
  %v975 = vunpack.c.l.b16 %v110
  %v976 = vunpack.c.h.b16 %v110
  %v977 = vunpack.c.l.b16 %v111
  %v978 = vunpack.c.h.b16 %v111
  %v979 = vunpack.c.l.b16 %v112
  %v980 = vunpack.c.l.b16 %v113
  %v981 = vunpack.c.h.b16 %v113
  %v982 = vunpack.c.l.b16 %v114
  %v983 = vunpack.c.h.b16 %v114
  %v984 = vunpack.c.l.b16 %v115
  %v985 = vunpack.c.h.b16 %v115
  %v986 = vunpack.c.l.b16 %v116
  %v987 = vunpack.c.h.b16 %v116
  %v988 = vunpack.c.l.b16 %v117
  %v989 = vunpack.c.l.b16 %v118
  %v990 = vunpack.c.h.b16 %v118
  %v991 = vunpack.c.l.b16 %v119
  %v992 = vunpack.c.h.b16 %v119
  %v993 = vunpack.c.l.b16 %v120
  %v994 = vunpack.c.h.b16 %v120
  %v995 = vunpack.c.l.b16 %v121
  %v996 = vunpack.c.h.b16 %v121
  %v997 = vunpack.c.l.b16 %v122
  %v998 = vunpack.c.l.b16 %v123
  %v999 = vunpack.c.h.b16 %v123
  %v1000 = vunpack.c.l.b16 %v124
  %v1001 = vunpack.c.h.b16 %v124
  %v1002 = vunpack.c.l.b16 %v125
  %v1003 = vunpack.c.h.b16 %v125
  %v1004 = vunpack.c.l.b16 %v126
  %v1005 = vunpack.c.h.b16 %v126
  %v1006 = vunpack.c.l.b16 %v127
  %v1007 = vunpack.c.l.b16 %v128
  %v1008 = vunpack.c.h.b16 %v128
  %v1009 = vunpack.c.l.b16 %v129
  %v1010 = vunpack.c.h.b16 %v129
  %v1011 = vunpack.c.l.b16 %v130
  %v1012 = vunpack.c.h.b16 %v130
  %v1013 = vunpack.c.l.b16 %v131
  %v1014 = vunpack.c.h.b16 %v131
  %v1015 = vunpack.c.l.b16 %v132
  %v1016 = vunpack.c.l.b16 %v133
  %v1017 = vunpack.c.h.b16 %v133
  %v1018 = vunpack.c.l.b16 %v134
  %v1019 = vunpack.c.h.b16 %v134
  %v1020 = vunpack.c.l.b16 %v135
  %v1021 = vunpack.c.h.b16 %v135
  %v1022 = vunpack.c.l.b16 %v136
  %v1023 = vunpack.c.h.b16 %v136
  %v1024 = vunpack.c.l.b16 %v137
  %v1025 = vunpack.c.l.b16 %v138
  %v1026 = vunpack.c.h.b16 %v138
  %v1027 = vunpack.c.l.b16 %v139
  %v1028 = vunpack.c.h.b16 %v139
  %v1029 = vunpack.c.l.b16 %v140
  %v1030 = vunpack.c.h.b16 %v140
  %v1031 = vunpack.c.l.b16 %v141
  %v1032 = vunpack.c.h.b16 %v141
  %v1033 = vunpack.c.l.b16 %v142
  %v1034 = vunpack.c.l.b16 %v143
  %v1035 = vunpack.c.h.b16 %v143
  %v1036 = vunpack.c.l.b16 %v144
  %v1037 = vunpack.c.h.b16 %v144
  %v1038 = vunpack.c.l.b16 %v145
  %v1039 = vunpack.c.h.b16 %v145
  %v1040 = vunpack.c.l.b16 %v146
  %v1041 = vunpack.c.h.b16 %v146
  %v1042 = vunpack.c.l.b16 %v147
  %v1043 = vunpack.c.l.b16 %v148
  %v1044 = vunpack.c.h.b16 %v148
  %v1045 = vunpack.c.l.b16 %v149
  %v1046 = vunpack.c.h.b16 %v149
  %v1047 = vunpack.c.l.b16 %v150
  %v1048 = vunpack.c.h.b16 %v150
  %v1049 = vunpack.c.l.b16 %v151
  %v1050 = vunpack.c.h.b16 %v151
  %v1051 = vunpack.c.l.b16 %v152
  %v1052 = vunpack.c.l.b16 %v153
  %v1053 = vunpack.c.h.b16 %v153
  %v1054 = vunpack.c.l.b16 %v154
  %v1055 = vunpack.c.h.b16 %v154
  %v1056 = vunpack.c.l.b16 %v155
  %v1057 = vunpack.c.h.b16 %v155
  %v1058 = vunpack.c.l.b16 %v156
  %v1059 = vunpack.c.h.b16 %v156
  %v1060 = vunpack.c.l.b16 %v157
  %v1061 = vunpack.c.l.b16 %v158
  %v1062 = vunpack.c.h.b16 %v158
  %v1063 = vunpack.c.l.b16 %v159
  %v1064 = vunpack.c.h.b16 %v159
  %v1065 = vunpack.c.l.b16 %v160
  %v1066 = vunpack.c.h.b16 %v160
  %v1067 = vunpack.c.l.b16 %v161
  %v1068 = vunpack.c.h.b16 %v161
  %v1069 = vunpack.c.l.b16 %v162
  %v1070 = vunpack.c.l.b16 %v163
  %v1071 = vunpack.c.h.b16 %v163
  %v1072 = vunpack.c.l.b16 %v164
  %v1073 = vunpack.c.h.b16 %v164
  %v1074 = vunpack.c.l.b16 %v165
  %v1075 = vunpack.c.h.b16 %v165
  %v1076 = vunpack.c.l.b16 %v166
  %v1077 = vunpack.c.h.b16 %v166
  %v1078 = vunpack.c.l.b16 %v167
  %v1079 = vunpack.c.l.b16 %v168
  %v1080 = vunpack.c.h.b16 %v168
  %v1081 = vunpack.c.l.b16 %v169
  %v1082 = vunpack.c.h.b16 %v169
  %v1083 = vunpack.c.l.b16 %v170
  %v1084 = vunpack.c.h.b16 %v170
  %v1085 = vunpack.c.l.b16 %v171
  %v1086 = vunpack.c.h.b16 %v171
  %v1087 = vunpack.c.l.b16 %v172
  %v1088 = vunpack.c.l.b16 %v173
  %v1089 = vunpack.c.h.b16 %v173
  %v1090 = vunpack.c.l.b16 %v174
  %v1091 = vunpack.c.h.b16 %v174
  %v1092 = vunpack.c.l.b16 %v175
  %v1093 = vunpack.c.h.b16 %v175
  %v1094 = vunpack.c.l.b16 %v176
  %v1095 = vunpack.c.h.b16 %v176
  %v1096 = vunpack.c.l.b16 %v177
  %v1097 = vunpack.c.l.b16 %v178
  %v1098 = vunpack.c.h.b16 %v178
  %v1099 = vunpack.c.l.b16 %v179
  %v1100 = vunpack.c.h.b16 %v179
  %v1101 = vunpack.c.l.b16 %v180
  %v1102 = vunpack.c.h.b16 %v180
  %v1103 = vunpack.c.l.b16 %v181
  %v1104 = vunpack.c.h.b16 %v181
  %v1105 = vunpack.c.l.b16 %v182
  %v1106 = vunpack.c.l.b16 %v183
  %v1107 = vunpack.c.h.b16 %v183
  %v1108 = vunpack.c.l.b16 %v184
  %v1109 = vunpack.c.h.b16 %v184
  %v1110 = vunpack.c.l.b16 %v185
  %v1111 = vunpack.c.h.b16 %v185
  %v1112 = vunpack.c.l.b16 %v186
  %v1113 = vunpack.c.h.b16 %v186
  %v1114 = vunpack.c.l.b16 %v187
  %v1115 = vunpack.c.l.b16 %v188
  %v1116 = vunpack.c.h.b16 %v188
  %v1117 = vunpack.c.l.b16 %v189
  %v1118 = vunpack.c.h.b16 %v189
  %v1119 = vunpack.c.l.b16 %v190
  %v1120 = vunpack.c.h.b16 %v190
  %v1121 = vunpack.c.l.b16 %v191
  %v1122 = vunpack.c.h.b16 %v191
  %v1123 = vunpack.c.l.b16 %v192
  %v1124 = vunpack.c.l.b16 %v193
  %v1125 = vunpack.c.h.b16 %v193
  %v1126 = vunpack.c.l.b16 %v194
  %v1127 = vunpack.c.h.b16 %v194
  %v1128 = vunpack.c.l.b16 %v195
  %v1129 = vunpack.c.h.b16 %v195
  %v1130 = vunpack.c.l.b16 %v196
  %v1131 = vunpack.c.h.b16 %v196
  %v1132 = vunpack.c.l.b16 %v197
  %v1133 = vunpack.c.l.b16 %v198
  %v1134 = vunpack.c.h.b16 %v198
  %v1135 = vunpack.c.l.b16 %v199
  %v1136 = vunpack.c.h.b16 %v199
  %v1137 = vunpack.c.l.b16 %v200
  %v1138 = vunpack.c.h.b16 %v200
  %v1139 = vunpack.c.l.b16 %v201
  %v1140 = vunpack.c.h.b16 %v201
  %v1141 = vunpack.c.l.b16 %v202
  %v1142 = vunpack.c.l.b16 %v203
  %v1143 = vunpack.c.h.b16 %v203
  %v1144 = vunpack.c.l.b16 %v204
  %v1145 = vunpack.c.h.b16 %v204
  %v1146 = vunpack.c.l.b16 %v205
  %v1147 = vunpack.c.h.b16 %v205
  %v1148 = vunpack.c.l.b16 %v206
  %v1149 = vunpack.c.h.b16 %v206
  %v1150 = vunpack.c.l.b16 %v207
  %v1151 = vunpack.c.l.b16 %v208
  %v1152 = vunpack.c.h.b16 %v208
  %v1153 = vunpack.c.l.b16 %v209
  %v1154 = vunpack.c.h.b16 %v209
  %v1155 = vunpack.c.l.b16 %v210
  %v1156 = vunpack.c.h.b16 %v210
  %v1157 = vunpack.c.l.b16 %v211
  %v1158 = vunpack.c.h.b16 %v211
  %v1159 = vunpack.c.l.b16 %v212
  %v1160 = vunpack.c.l.b16 %v213
  %v1161 = vunpack.c.h.b16 %v213
  %v1162 = vunpack.c.l.b16 %v214
  %v1163 = vunpack.c.h.b16 %v214
  %v1164 = vunpack.c.l.b16 %v215
  %v1165 = vunpack.c.h.b16 %v215
  %v1166 = vunpack.c.l.b16 %v216
  %v1167 = vunpack.c.h.b16 %v216
  %v1168 = vunpack.c.l.b16 %v217
  %v1169 = vunpack.c.l.b16 %v218
  %v1170 = vunpack.c.h.b16 %v218
  %v1171 = vunpack.c.l.b16 %v219
  %v1172 = vunpack.c.h.b16 %v219
  %v1173 = vunpack.c.l.b16 %v220
  %v1174 = vunpack.c.h.b16 %v220
  %v1175 = vunpack.c.l.b16 %v221
  %v1176 = vunpack.c.h.b16 %v221
  %v1177 = vunpack.c.l.b16 %v222
  %v1178 = vunpack.c.l.b16 %v223
  %v1179 = vunpack.c.h.b16 %v223
  %v1180 = vunpack.c.l.b16 %v224
  %v1181 = vunpack.c.h.b16 %v224
  %v1182 = vunpack.c.l.b16 %v225
  %v1183 = vunpack.c.h.b16 %v225
  %v1184 = vunpack.c.l.b16 %v226
  %v1185 = vunpack.c.h.b16 %v226
  %v1186 = vunpack.c.l.b16 %v227
  %v1187 = vunpack.c.l.b16 %v228
  %v1188 = vunpack.c.h.b16 %v228
  %v1189 = vunpack.c.l.b16 %v229
  %v1190 = vunpack.c.h.b16 %v229
  %v1191 = vunpack.c.l.b16 %v230
  %v1192 = vunpack.c.h.b16 %v230
  %v1193 = vunpack.c.l.b16 %v231
  %v1194 = vunpack.c.h.b16 %v231
  %v1195 = vunpack.c.l.b16 %v232
  %v1196 = vunpack.c.l.b16 %v233
  %v1197 = vunpack.c.h.b16 %v233
  %v1198 = vunpack.c.l.b16 %v234
  %v1199 = vunpack.c.h.b16 %v234
  %v1200 = vunpack.c.l.b16 %v235
  %v1201 = vunpack.c.h.b16 %v235
  %v1202 = vunpack.c.l.b16 %v236
  %v1203 = vunpack.c.h.b16 %v236
  %v1204 = vunpack.c.l.b16 %v237
  %v1205 = vunpack.c.l.b16 %v238
  %v1206 = vunpack.c.h.b16 %v238
  %v1207 = vunpack.c.l.b16 %v239
  %v1208 = vunpack.c.h.b16 %v239
  %v1209 = vunpack.c.l.b16 %v240
  %v1210 = vunpack.c.h.b16 %v240
  %v1211 = vunpack.c.l.b16 %v241
  %v1212 = vunpack.c.h.b16 %v241
  %v1213 = vunpack.c.l.b16 %v242
  %v1214 = vunpack.c.l.b16 %v243
  %v1215 = vunpack.c.h.b16 %v243
  %v1216 = vunpack.c.l.b16 %v244
  %v1217 = vunpack.c.h.b16 %v244
  %v1218 = vunpack.c.l.b16 %v245
  %v1219 = vunpack.c.h.b16 %v245
  %v1220 = vunpack.c.l.b16 %v246
  %v1221 = vunpack.c.h.b16 %v246
  %v1222 = vunpack.c.l.b16 %v247
  %v1223 = vunpack.c.l.b16 %v248
  %v1224 = vunpack.c.h.b16 %v248
  %v1225 = vunpack.c.l.b16 %v249
  %v1226 = vunpack.c.h.b16 %v249
  %v1227 = vunpack.c.l.b16 %v250
  %v1228 = vunpack.c.h.b16 %v250
  %v1229 = vunpack.c.l.b16 %v251
  %v1230 = vunpack.c.h.b16 %v251
  %v1231 = vunpack.c.l.b16 %v252
  %v1232 = vunpack.c.l.b16 %v253
  %v1233 = vunpack.c.h.b16 %v253
  %v1234 = vunpack.c.l.b16 %v254
  %v1235 = vunpack.c.h.b16 %v254
  %v1236 = vunpack.c.l.b16 %v255
  %v1237 = vunpack.c.h.b16 %v255
  %v1238 = vunpack.c.l.b16 %v256
  %v1239 = vunpack.c.h.b16 %v256
  %v1240 = vunpack.c.l.b16 %v257
  %v1241 = vunpack.c.l.b16 %v258
  %v1242 = vunpack.c.h.b16 %v258
  %v1243 = vunpack.c.l.b16 %v259
  %v1244 = vunpack.c.h.b16 %v259
  %v1245 = vunpack.c.l.b16 %v260
  %v1246 = vunpack.c.h.b16 %v260
  %v1247 = vunpack.c.l.b16 %v261
  %v1248 = vunpack.c.h.b16 %v261
  %v1249 = vunpack.c.l.b16 %v262
  %v1250 = vunpack.c.l.b16 %v263
  %v1251 = vunpack.c.h.b16 %v263
  %v1252 = vunpack.c.l.b16 %v264
  %v1253 = vunpack.c.h.b16 %v264
  %v1254 = vunpack.c.l.b16 %v265
  %v1255 = vunpack.c.h.b16 %v265
  %v1256 = vunpack.c.l.b16 %v266
  %v1257 = vunpack.c.h.b16 %v266
  %v1258 = vunpack.c.l.b16 %v267
  %v1259 = vunpack.c.l.b16 %v268
  %v1260 = vunpack.c.h.b16 %v268
  %v1261 = vunpack.c.l.b16 %v269
  %v1262 = vunpack.c.h.b16 %v269
  %v1263 = vunpack.c.l.b16 %v270
  %v1264 = vunpack.c.h.b16 %v270
  %v1265 = vunpack.c.l.b16 %v271
  %v1266 = vunpack.c.h.b16 %v271
  %v1267 = vunpack.c.l.b16 %v272
  %v1268 = vunpack.c.l.b16 %v273
  %v1269 = vunpack.c.h.b16 %v273
  %v1270 = vunpack.c.l.b16 %v274
  %v1271 = vunpack.c.h.b16 %v274
  %v1272 = vunpack.c.l.b16 %v275
  %v1273 = vunpack.c.h.b16 %v275
  %v1274 = vunpack.c.l.b16 %v276
  %v1275 = vunpack.c.h.b16 %v276
  %v1276 = vunpack.c.l.b16 %v277
  %v1277 = vunpack.c.l.b16 %v278
  %v1278 = vunpack.c.h.b16 %v278
  %v1279 = vunpack.c.l.b16 %v279
  %v1280 = vunpack.c.h.b16 %v279
  %v1281 = vunpack.c.l.b16 %v280
  %v1282 = vunpack.c.h.b16 %v280
  %v1283 = vunpack.c.l.b16 %v281
  %v1284 = vunpack.c.h.b16 %v281
  %v1285 = vunpack.c.l.b16 %v282
  %v1286 = vunpack.c.l.b16 %v283
  %v1287 = vunpack.c.h.b16 %v283
  %v1288 = vunpack.c.l.b16 %v284
  %v1289 = vunpack.c.h.b16 %v284
  %v1290 = vunpack.c.l.b16 %v285
  %v1291 = vunpack.c.h.b16 %v285
  %v1292 = vunpack.c.l.b16 %v286
  %v1293 = vunpack.c.h.b16 %v286
  %v1294 = vunpack.c.l.b16 %v287
  %v1295 = vunpack.c.l.b16 %v288
  %v1296 = vunpack.c.h.b16 %v288
  %v1297 = vunpack.c.l.b16 %v289
  %v1298 = vunpack.c.h.b16 %v289
  %v1299 = vunpack.c.l.b16 %v290
  %v1300 = vunpack.c.h.b16 %v290
  %v1301 = vunpack.c.l.b16 %v291
  %v1302 = vunpack.c.h.b16 %v291
  %v1303 = vunpack.c.l.b16 %v292
  %v1304 = vunpack.c.l.b16 %v293
  %v1305 = vunpack.c.h.b16 %v293
  %v1306 = vunpack.c.l.b16 %v294
  %v1307 = vunpack.c.h.b16 %v294
  %v1308 = vunpack.c.l.b16 %v295
  %v1309 = vunpack.c.h.b16 %v295
  %v1310 = vunpack.c.l.b16 %v296
  %v1311 = vunpack.c.h.b16 %v296
  %v1312 = vunpack.c.l.b16 %v297
  %v1313 = vunpack.c.l.b16 %v298
  %v1314 = vunpack.c.h.b16 %v298
  %v1315 = vunpack.c.l.b16 %v299
  %v1316 = vunpack.c.h.b16 %v299
  %v1317 = vunpack.c.l.b16 %v300
  %v1318 = vunpack.c.h.b16 %v300
  %v1319 = vunpack.c.l.b16 %v301
  %v1320 = vunpack.c.h.b16 %v301
  %v1321 = vunpack.c.l.b16 %v302
  %v1322 = vunpack.c.l.b16 %v303
  %v1323 = vunpack.c.h.b16 %v303
  %v1324 = vunpack.c.l.b16 %v304
  %v1325 = vunpack.c.h.b16 %v304
  %v1326 = vunpack.c.l.b16 %v305
  %v1327 = vunpack.c.h.b16 %v305
  %v1328 = vunpack.c.l.b16 %v306
  %v1329 = vunpack.c.h.b16 %v306
  %v1330 = vunpack.c.l.b16 %v307
  %v1331 = vunpack.c.l.b16 %v308
  %v1332 = vunpack.c.h.b16 %v308
  %v1333 = vunpack.c.l.b16 %v309
  %v1334 = vunpack.c.h.b16 %v309
  %v1335 = vunpack.c.l.b16 %v310
  %v1336 = vunpack.c.h.b16 %v310
  %v1337 = vunpack.c.l.b16 %v311
  %v1338 = vunpack.c.h.b16 %v311
  %v1339 = vunpack.c.l.b16 %v312
  %v1340 = vunpack.c.l.b16 %v313
  %v1341 = vunpack.c.h.b16 %v313
  %v1342 = vunpack.c.l.b16 %v314
  %v1343 = vunpack.c.h.b16 %v314
  %v1344 = vunpack.c.l.b16 %v315
  %v1345 = vunpack.c.h.b16 %v315
  %v1346 = vunpack.c.l.b16 %v316
  %v1347 = vunpack.c.h.b16 %v316
  %v1348 = vunpack.c.l.b16 %v317
  %v1349 = vunpack.c.l.b16 %v318
  %v1350 = vunpack.c.h.b16 %v318
  %v1351 = vunpack.c.l.b16 %v319
  %v1352 = vunpack.c.h.b16 %v319
  %v1353 = vunpack.c.l.b16 %v320
  %v1354 = vunpack.c.h.b16 %v320
  %v1355 = vunpack.c.l.b16 %v321
  %v1356 = vunpack.c.h.b16 %v321
  %v1357 = vunpack.c.l.b16 %v322
  %v1358 = vunpack.c.l.b16 %v323
  %v1359 = vunpack.c.h.b16 %v323
  %v1360 = vunpack.c.l.b16 %v324
  %v1361 = vunpack.c.h.b16 %v324
  %v1362 = vunpack.c.l.b16 %v325
  %v1363 = vunpack.c.h.b16 %v325
  %v1364 = vunpack.c.l.b16 %v326
  %v1365 = vunpack.c.h.b16 %v326
  %v1366 = vunpack.c.l.b16 %v327
  %v1367 = vunpack.c.l.b16 %v328
  %v1368 = vunpack.c.h.b16 %v328
  %v1369 = vunpack.c.l.b16 %v329
  %v1370 = vunpack.c.h.b16 %v329
  %v1371 = vunpack.c.l.b16 %v330
  %v1372 = vunpack.c.h.b16 %v330
  %v1373 = vunpack.c.l.b16 %v331
  %v1374 = vunpack.c.h.b16 %v331
  %v1375 = vunpack.c.l.b16 %v332
  %v1376 = vunpack.c.l.b16 %v333
  %v1377 = vunpack.c.h.b16 %v333
  %v1378 = vunpack.c.l.b16 %v334
  %v1379 = vunpack.c.h.b16 %v334
  %v1380 = vunpack.c.l.b16 %v335
  %v1381 = vunpack.c.h.b16 %v335
  %v1382 = vunpack.c.l.b16 %v336
  %v1383 = vunpack.c.h.b16 %v336
  %v1384 = vunpack.c.l.b16 %v337
  %v1385 = vpack.c.b16 %v818, %v809
  %v1386 = vpack.c.b16 %v819, %v810
  %v1387 = vpack.c.b16 %v820, %v811
  %v1388 = vpack.c.b16 %v821, %v812
  %v1389 = vpack.c.b16 %v822, %v813
  %v1390 = vpack.c.b16 %v823, %v814
  %v1391 = vpack.c.b16 %v824, %v815
  %v1392 = vpack.c.b16 %v825, %v816
  %v1393 = vpack.c.b16 %v826, %v817
  %v1394 = vpack.c.b16 %v836, %v827
  %v1395 = vpack.c.b16 %v837, %v828
  %v1396 = vpack.c.b16 %v838, %v829
  %v1397 = vpack.c.b16 %v839, %v830
  %v1398 = vpack.c.b16 %v840, %v831
  %v1399 = vpack.c.b16 %v841, %v832
  %v1400 = vpack.c.b16 %v842, %v833
  %v1401 = vpack.c.b16 %v843, %v834
  %v1402 = vpack.c.b16 %v844, %v835
  %v1403 = vpack.c.b16 %v854, %v845
  %v1404 = vpack.c.b16 %v855, %v846
  %v1405 = vpack.c.b16 %v856, %v847
  %v1406 = vpack.c.b16 %v857, %v848
  %v1407 = vpack.c.b16 %v858, %v849
  %v1408 = vpack.c.b16 %v859, %v850
  %v1409 = vpack.c.b16 %v860, %v851
  %v1410 = vpack.c.b16 %v861, %v852
  %v1411 = vpack.c.b16 %v862, %v853
  %v1412 = vpack.c.b16 %v872, %v863
  %v1413 = vpack.c.b16 %v873, %v864
  %v1414 = vpack.c.b16 %v874, %v865
  %v1415 = vpack.c.b16 %v875, %v866
  %v1416 = vpack.c.b16 %v876, %v867
  %v1417 = vpack.c.b16 %v877, %v868
  %v1418 = vpack.c.b16 %v878, %v869
  %v1419 = vpack.c.b16 %v879, %v870
  %v1420 = vpack.c.b16 %v880, %v871
  %v1421 = vpack.c.b16 %v890, %v881
  %v1422 = vpack.c.b16 %v891, %v882
  %v1423 = vpack.c.b16 %v892, %v883
  %v1424 = vpack.c.b16 %v893, %v884
  %v1425 = vpack.c.b16 %v894, %v885
  %v1426 = vpack.c.b16 %v895, %v886
  %v1427 = vpack.c.b16 %v896, %v887
  %v1428 = vpack.c.b16 %v897, %v888
  %v1429 = vpack.c.b16 %v898, %v889
  %v1430 = vpack.c.b16 %v908, %v899
  %v1431 = vpack.c.b16 %v909, %v900
  %v1432 = vpack.c.b16 %v910, %v901
  %v1433 = vpack.c.b16 %v911, %v902
  %v1434 = vpack.c.b16 %v912, %v903
  %v1435 = vpack.c.b16 %v913, %v904
  %v1436 = vpack.c.b16 %v914, %v905
  %v1437 = vpack.c.b16 %v915, %v906
  %v1438 = vpack.c.b16 %v916, %v907
  %v1439 = vpack.c.b16 %v926, %v917
  %v1440 = vpack.c.b16 %v927, %v918
  %v1441 = vpack.c.b16 %v928, %v919
  %v1442 = vpack.c.b16 %v929, %v920
  %v1443 = vpack.c.b16 %v930, %v921
  %v1444 = vpack.c.b16 %v931, %v922
  %v1445 = vpack.c.b16 %v932, %v923
  %v1446 = vpack.c.b16 %v933, %v924
  %v1447 = vpack.c.b16 %v934, %v925
  %v1448 = vpack.c.b16 %v944, %v935
  %v1449 = vpack.c.b16 %v945, %v936
  %v1450 = vpack.c.b16 %v946, %v937
  %v1451 = vpack.c.b16 %v947, %v938
  %v1452 = vpack.c.b16 %v948, %v939
  %v1453 = vpack.c.b16 %v949, %v940
  %v1454 = vpack.c.b16 %v950, %v941
  %v1455 = vpack.c.b16 %v951, %v942
  %v1456 = vpack.c.b16 %v952, %v943
  %v1457 = vpack.c.b16 %v962, %v953
  %v1458 = vpack.c.b16 %v963, %v954
  %v1459 = vpack.c.b16 %v964, %v955
  %v1460 = vpack.c.b16 %v965, %v956
  %v1461 = vpack.c.b16 %v966, %v957
  %v1462 = vpack.c.b16 %v967, %v958
  %v1463 = vpack.c.b16 %v968, %v959
  %v1464 = vpack.c.b16 %v969, %v960
  %v1465 = vpack.c.b16 %v970, %v961
  %v1466 = vpack.c.b16 %v980, %v971
  %v1467 = vpack.c.b16 %v981, %v972
  %v1468 = vpack.c.b16 %v982, %v973
  %v1469 = vpack.c.b16 %v983, %v974
  %v1470 = vpack.c.b16 %v984, %v975
  %v1471 = vpack.c.b16 %v985, %v976
  %v1472 = vpack.c.b16 %v986, %v977
  %v1473 = vpack.c.b16 %v987, %v978
  %v1474 = vpack.c.b16 %v988, %v979
  %v1475 = vpack.c.b16 %v998, %v989
  %v1476 = vpack.c.b16 %v999, %v990
  %v1477 = vpack.c.b16 %v1000, %v991
  %v1478 = vpack.c.b16 %v1001, %v992
  %v1479 = vpack.c.b16 %v1002, %v993
  %v1480 = vpack.c.b16 %v1003, %v994
  %v1481 = vpack.c.b16 %v1004, %v995
  %v1482 = vpack.c.b16 %v1005, %v996
  %v1483 = vpack.c.b16 %v1006, %v997
  %v1484 = vpack.c.b16 %v1016, %v1007
  %v1485 = vpack.c.b16 %v1017, %v1008
  %v1486 = vpack.c.b16 %v1018, %v1009
  %v1487 = vpack.c.b16 %v1019, %v1010
  %v1488 = vpack.c.b16 %v1020, %v1011
  %v1489 = vpack.c.b16 %v1021, %v1012
  %v1490 = vpack.c.b16 %v1022, %v1013
  %v1491 = vpack.c.b16 %v1023, %v1014
  %v1492 = vpack.c.b16 %v1024, %v1015
  %v1493 = vpack.c.b16 %v1034, %v1025
  %v1494 = vpack.c.b16 %v1035, %v1026
  %v1495 = vpack.c.b16 %v1036, %v1027
  %v1496 = vpack.c.b16 %v1037, %v1028
  %v1497 = vpack.c.b16 %v1038, %v1029
  %v1498 = vpack.c.b16 %v1039, %v1030
  %v1499 = vpack.c.b16 %v1040, %v1031
  %v1500 = vpack.c.b16 %v1041, %v1032
  %v1501 = vpack.c.b16 %v1042, %v1033
  %v1502 = vpack.c.b16 %v1052, %v1043
  %v1503 = vpack.c.b16 %v1053, %v1044
  %v1504 = vpack.c.b16 %v1054, %v1045
  %v1505 = vpack.c.b16 %v1055, %v1046
  %v1506 = vpack.c.b16 %v1056, %v1047
  %v1507 = vpack.c.b16 %v1057, %v1048
  %v1508 = vpack.c.b16 %v1058, %v1049
  %v1509 = vpack.c.b16 %v1059, %v1050
  %v1510 = vpack.c.b16 %v1060, %v1051
  %v1511 = vpack.c.b16 %v1070, %v1061
  %v1512 = vpack.c.b16 %v1071, %v1062
  %v1513 = vpack.c.b16 %v1072, %v1063
  %v1514 = vpack.c.b16 %v1073, %v1064
  %v1515 = vpack.c.b16 %v1074, %v1065
  %v1516 = vpack.c.b16 %v1075, %v1066
  %v1517 = vpack.c.b16 %v1076, %v1067
  %v1518 = vpack.c.b16 %v1077, %v1068
  %v1519 = vpack.c.b16 %v1078, %v1069
  %v1520 = vpack.c.b16 %v1088, %v1079
  %v1521 = vpack.c.b16 %v1089, %v1080
  %v1522 = vpack.c.b16 %v1090, %v1081
  %v1523 = vpack.c.b16 %v1091, %v1082
  %v1524 = vpack.c.b16 %v1092, %v1083
  %v1525 = vpack.c.b16 %v1093, %v1084
  %v1526 = vpack.c.b16 %v1094, %v1085
  %v1527 = vpack.c.b16 %v1095, %v1086
  %v1528 = vpack.c.b16 %v1096, %v1087
  %v1529 = vpack.c.b16 %v1106, %v1097
  %v1530 = vpack.c.b16 %v1107, %v1098
  %v1531 = vpack.c.b16 %v1108, %v1099
  %v1532 = vpack.c.b16 %v1109, %v1100
  %v1533 = vpack.c.b16 %v1110, %v1101
  %v1534 = vpack.c.b16 %v1111, %v1102
  %v1535 = vpack.c.b16 %v1112, %v1103
  %v1536 = vpack.c.b16 %v1113, %v1104
  %v1537 = vpack.c.b16 %v1114, %v1105
  %v1538 = vpack.c.b16 %v1124, %v1115
  %v1539 = vpack.c.b16 %v1125, %v1116
  %v1540 = vpack.c.b16 %v1126, %v1117
  %v1541 = vpack.c.b16 %v1127, %v1118
  %v1542 = vpack.c.b16 %v1128, %v1119
  %v1543 = vpack.c.b16 %v1129, %v1120
  %v1544 = vpack.c.b16 %v1130, %v1121
  %v1545 = vpack.c.b16 %v1131, %v1122
  %v1546 = vpack.c.b16 %v1132, %v1123
  %v1547 = vpack.c.b16 %v1142, %v1133
  %v1548 = vpack.c.b16 %v1143, %v1134
  %v1549 = vpack.c.b16 %v1144, %v1135
  %v1550 = vpack.c.b16 %v1145, %v1136
  %v1551 = vpack.c.b16 %v1146, %v1137
  %v1552 = vpack.c.b16 %v1147, %v1138
  %v1553 = vpack.c.b16 %v1148, %v1139
  %v1554 = vpack.c.b16 %v1149, %v1140
  %v1555 = vpack.c.b16 %v1150, %v1141
  %v1556 = vpack.c.b16 %v1160, %v1151
  %v1557 = vpack.c.b16 %v1161, %v1152
  %v1558 = vpack.c.b16 %v1162, %v1153
  %v1559 = vpack.c.b16 %v1163, %v1154
  %v1560 = vpack.c.b16 %v1164, %v1155
  %v1561 = vpack.c.b16 %v1165, %v1156
  %v1562 = vpack.c.b16 %v1166, %v1157
  %v1563 = vpack.c.b16 %v1167, %v1158
  %v1564 = vpack.c.b16 %v1168, %v1159
  %v1565 = vpack.c.b16 %v1178, %v1169
  %v1566 = vpack.c.b16 %v1179, %v1170
  %v1567 = vpack.c.b16 %v1180, %v1171
  %v1568 = vpack.c.b16 %v1181, %v1172
  %v1569 = vpack.c.b16 %v1182, %v1173
  %v1570 = vpack.c.b16 %v1183, %v1174
  %v1571 = vpack.c.b16 %v1184, %v1175
  %v1572 = vpack.c.b16 %v1185, %v1176
  %v1573 = vpack.c.b16 %v1186, %v1177
  %v1574 = vpack.c.b16 %v1196, %v1187
  %v1575 = vpack.c.b16 %v1197, %v1188
  %v1576 = vpack.c.b16 %v1198, %v1189
  %v1577 = vpack.c.b16 %v1199, %v1190
  %v1578 = vpack.c.b16 %v1200, %v1191
  %v1579 = vpack.c.b16 %v1201, %v1192
  %v1580 = vpack.c.b16 %v1202, %v1193
  %v1581 = vpack.c.b16 %v1203, %v1194
  %v1582 = vpack.c.b16 %v1204, %v1195
  %v1583 = vpack.c.b16 %v1214, %v1205
  %v1584 = vpack.c.b16 %v1215, %v1206
  %v1585 = vpack.c.b16 %v1216, %v1207
  %v1586 = vpack.c.b16 %v1217, %v1208
  %v1587 = vpack.c.b16 %v1218, %v1209
  %v1588 = vpack.c.b16 %v1219, %v1210
  %v1589 = vpack.c.b16 %v1220, %v1211
  %v1590 = vpack.c.b16 %v1221, %v1212
  %v1591 = vpack.c.b16 %v1222, %v1213
  %v1592 = vpack.c.b16 %v1232, %v1223
  %v1593 = vpack.c.b16 %v1233, %v1224
  %v1594 = vpack.c.b16 %v1234, %v1225
  %v1595 = vpack.c.b16 %v1235, %v1226
  %v1596 = vpack.c.b16 %v1236, %v1227
  %v1597 = vpack.c.b16 %v1237, %v1228
  %v1598 = vpack.c.b16 %v1238, %v1229
  %v1599 = vpack.c.b16 %v1239, %v1230
  %v1600 = vpack.c.b16 %v1240, %v1231
  %v1601 = vpack.c.b16 %v1250, %v1241
  %v1602 = vpack.c.b16 %v1251, %v1242
  %v1603 = vpack.c.b16 %v1252, %v1243
  %v1604 = vpack.c.b16 %v1253, %v1244
  %v1605 = vpack.c.b16 %v1254, %v1245
  %v1606 = vpack.c.b16 %v1255, %v1246
  %v1607 = vpack.c.b16 %v1256, %v1247
  %v1608 = vpack.c.b16 %v1257, %v1248
  %v1609 = vpack.c.b16 %v1258, %v1249
  %v1610 = vpack.c.b16 %v1268, %v1259
  %v1611 = vpack.c.b16 %v1269, %v1260
  %v1612 = vpack.c.b16 %v1270, %v1261
  %v1613 = vpack.c.b16 %v1271, %v1262
  %v1614 = vpack.c.b16 %v1272, %v1263
  %v1615 = vpack.c.b16 %v1273, %v1264
  %v1616 = vpack.c.b16 %v1274, %v1265
  %v1617 = vpack.c.b16 %v1275, %v1266
  %v1618 = vpack.c.b16 %v1276, %v1267
  %v1619 = vpack.c.b16 %v1286, %v1277
  %v1620 = vpack.c.b16 %v1287, %v1278
  %v1621 = vpack.c.b16 %v1288, %v1279
  %v1622 = vpack.c.b16 %v1289, %v1280
  %v1623 = vpack.c.b16 %v1290, %v1281
  %v1624 = vpack.c.b16 %v1291, %v1282
  %v1625 = vpack.c.b16 %v1292, %v1283
  %v1626 = vpack.c.b16 %v1293, %v1284
  %v1627 = vpack.c.b16 %v1294, %v1285
  %v1628 = vpack.c.b16 %v1304, %v1295
  %v1629 = vpack.c.b16 %v1305, %v1296
  %v1630 = vpack.c.b16 %v1306, %v1297
  %v1631 = vpack.c.b16 %v1307, %v1298
  %v1632 = vpack.c.b16 %v1308, %v1299
  %v1633 = vpack.c.b16 %v1309, %v1300
  %v1634 = vpack.c.b16 %v1310, %v1301
  %v1635 = vpack.c.b16 %v1311, %v1302
  %v1636 = vpack.c.b16 %v1312, %v1303
  %v1637 = vpack.c.b16 %v1322, %v1313
  %v1638 = vpack.c.b16 %v1323, %v1314
  %v1639 = vpack.c.b16 %v1324, %v1315
  %v1640 = vpack.c.b16 %v1325, %v1316
  %v1641 = vpack.c.b16 %v1326, %v1317
  %v1642 = vpack.c.b16 %v1327, %v1318
  %v1643 = vpack.c.b16 %v1328, %v1319
  %v1644 = vpack.c.b16 %v1329, %v1320
  %v1645 = vpack.c.b16 %v1330, %v1321
  %v1646 = vpack.c.b16 %v1340, %v1331
  %v1647 = vpack.c.b16 %v1341, %v1332
  %v1648 = vpack.c.b16 %v1342, %v1333
  %v1649 = vpack.c.b16 %v1343, %v1334
  %v1650 = vpack.c.b16 %v1344, %v1335
  %v1651 = vpack.c.b16 %v1345, %v1336
  %v1652 = vpack.c.b16 %v1346, %v1337
  %v1653 = vpack.c.b16 %v1347, %v1338
  %v1654 = vpack.c.b16 %v1348, %v1339
  %v1655 = vpack.c.b16 %v1358, %v1349
  %v1656 = vpack.c.b16 %v1359, %v1350
  %v1657 = vpack.c.b16 %v1360, %v1351
  %v1658 = vpack.c.b16 %v1361, %v1352
  %v1659 = vpack.c.b16 %v1362, %v1353
  %v1660 = vpack.c.b16 %v1363, %v1354
  %v1661 = vpack.c.b16 %v1364, %v1355
  %v1662 = vpack.c.b16 %v1365, %v1356
  %v1663 = vpack.c.b16 %v1366, %v1357
  %v1664 = vpack.c.b16 %v1376, %v1367
  %v1665 = vpack.c.b16 %v1377, %v1368
  %v1666 = vpack.c.b16 %v1378, %v1369
  %v1667 = vpack.c.b16 %v1379, %v1370
  %v1668 = vpack.c.b16 %v1380, %v1371
  %v1669 = vpack.c.b16 %v1381, %v1372
  %v1670 = vpack.c.b16 %v1382, %v1373
  %v1671 = vpack.c.b16 %v1383, %v1374
  %v1672 = vpack.c.b16 %v1384, %v1375
  %v2105 = vunpack.c.l.b16 %v338
  %v2106 = vunpack.c.l.b16 %v339
  %v2107 = vunpack.c.l.b16 %v340
  %v2108 = vunpack.c.l.b16 %v341
  %v2109 = vunpack.c.l.b16 %v342
  %v2110 = vunpack.c.l.b16 %v343
  %v2111 = vunpack.c.l.b16 %v344
  %v2112 = vunpack.c.l.b16 %v345
  %v2113 = vunpack.c.l.b16 %v346
  %v2114 = vunpack.c.l.b16 %v347
  %v2115 = vunpack.c.l.b16 %v348
  %v2116 = vunpack.c.l.b16 %v349
  %v2117 = vunpack.c.l.b16 %v350
  %v2118 = vunpack.c.l.b16 %v351
  %v2119 = vunpack.c.l.b16 %v352
  %v2120 = vunpack.c.l.b16 %v353
  %v2121 = vunpack.c.l.b16 %v354
  %v2122 = vunpack.c.l.b16 %v355
  %v2123 = vunpack.c.l.b16 %v356
  %v2124 = vunpack.c.l.b16 %v357
  %v2125 = vunpack.c.l.b16 %v358
  %v2126 = vunpack.c.l.b16 %v359
  %v2127 = vunpack.c.l.b16 %v360
  %v2128 = vunpack.c.l.b16 %v361
  %v2129 = vunpack.c.l.b16 %v362
  %v2130 = vunpack.c.l.b16 %v363
  %v2131 = vunpack.c.l.b16 %v364
  %v2132 = vunpack.c.l.b16 %v365
  %v2133 = vunpack.c.l.b16 %v366
  %v2134 = vunpack.c.l.b16 %v367
  %v2135 = vunpack.c.l.b16 %v368
  %v2136 = vunpack.c.l.b16 %v369
  %v2137 = vunpack.c.l.b16 %v370
  %v2138 = vunpack.c.l.b16 %v371
  %v2139 = vunpack.c.l.b16 %v372
  %v2140 = vunpack.c.l.b16 %v373
  %v2141 = vunpack.c.l.b16 %v374
  %v2142 = vunpack.c.l.b16 %v375
  %v2143 = vunpack.c.l.b16 %v376
  %v2144 = vunpack.c.l.b16 %v377
  %v2145 = vunpack.c.l.b16 %v378
  %v2146 = vunpack.c.l.b16 %v379
  %v2147 = vunpack.c.l.b16 %v380
  %v2148 = vunpack.c.l.b16 %v381
  %v2149 = vunpack.c.l.b16 %v382
  %v2150 = vunpack.c.l.b16 %v383
  %v2151 = vunpack.c.l.b16 %v384
  %v2152 = vunpack.c.l.b16 %v385
  %v2153 = vunpack.c.l.b16 %v386
  %v2154 = vunpack.c.l.b16 %v387
  %v2155 = vunpack.c.l.b16 %v388
  %v2156 = vunpack.c.l.b16 %v389
  %v2157 = vunpack.c.l.b16 %v390
  %v2158 = vunpack.c.l.b16 %v391
  %v2159 = vunpack.c.l.b16 %v392
  %v2160 = vunpack.c.l.b16 %v393
  %v2161 = vunpack.c.l.b16 %v394
  %v2162 = vunpack.c.l.b16 %v395
  %v2163 = vunpack.c.l.b16 %v396
  %v2164 = vunpack.c.l.b16 %v397
  %v2165 = vunpack.c.l.b16 %v398
  %v2166 = vunpack.c.l.b16 %v399
  %v2167 = vunpack.c.l.b16 %v400
  %v2168 = vunpack.c.l.b16 %v401
  %v2169 = vunpack.c.l.b16 %v402
  %v2170 = vunpack.c.l.b16 %v403
  %v2171 = vunpack.c.l.b16 %v404
  %v2172 = vunpack.c.l.b16 %v405
  %v2173 = vunpack.c.l.b16 %v406
  %v2174 = vunpack.c.l.b16 %v407
  %v2175 = vunpack.c.l.b16 %v408
  %v2176 = vunpack.c.l.b16 %v409
  %v2177 = vunpack.c.l.b16 %v410
  %v2178 = vunpack.c.l.b16 %v411
  %v2179 = vunpack.c.l.b16 %v412
  %v2180 = vunpack.c.l.b16 %v413
  %v2181 = vunpack.c.l.b16 %v414
  %v2182 = vunpack.c.l.b16 %v415
  %v2183 = vunpack.c.l.b16 %v416
  %v2184 = vunpack.c.l.b16 %v417
  %v2185 = vunpack.c.l.b16 %v418
  %v2186 = vunpack.c.l.b16 %v419
  %v2187 = vunpack.c.l.b16 %v420
  %v2188 = vunpack.c.l.b16 %v421
  %v2189 = vunpack.c.l.b16 %v422
  %v2190 = vunpack.c.l.b16 %v423
  %v2191 = vunpack.c.l.b16 %v424
  %v2192 = vunpack.c.l.b16 %v425
  %v2193 = vunpack.c.l.b16 %v426
  %v2194 = vunpack.c.l.b16 %v427
  %v2195 = vunpack.c.l.b16 %v428
  %v2196 = vunpack.c.l.b16 %v429
  %v2197 = vunpack.c.l.b16 %v430
  %v2198 = vunpack.c.l.b16 %v431
  %v2199 = vunpack.c.l.b16 %v432
  %v2200 = vunpack.c.l.b16 %v433
  %v2201 = vunpack.c.l.b16 %v434
  %v2202 = vunpack.c.l.b16 %v435
  %v2203 = vunpack.c.l.b16 %v436
  %v2204 = vunpack.c.l.b16 %v437
  %v2205 = vunpack.c.l.b16 %v438
  %v2206 = vunpack.c.l.b16 %v439
  %v2207 = vunpack.c.l.b16 %v440
  %v2208 = vunpack.c.l.b16 %v441
  %v2209 = vunpack.c.l.b16 %v442
  %v2210 = vunpack.c.l.b16 %v443
  %v2211 = vunpack.c.l.b16 %v444
  %v2212 = vunpack.c.l.b16 %v445
  %v2213 = vunpack.c.l.b16 %v446
  %v2214 = vunpack.c.l.b16 %v447
  %v2215 = vunpack.c.l.b16 %v448
  %v2216 = vunpack.c.l.b16 %v449
  %v2217 = vunpack.c.l.b16 %v450
  %v2218 = vunpack.c.l.b16 %v451
  %v2219 = vunpack.c.l.b16 %v452
  %v2220 = vunpack.c.l.b16 %v453
  %v2221 = vunpack.c.l.b16 %v454
  %v2222 = vunpack.c.l.b16 %v455
  %v2223 = vunpack.c.l.b16 %v456
  %v2224 = vunpack.c.l.b16 %v457
  %v2225 = vunpack.c.l.b16 %v458
  %v2226 = vunpack.c.l.b16 %v459
  %v2227 = vunpack.c.l.b16 %v460
  %v2228 = vunpack.c.l.b16 %v461
  %v2229 = vunpack.c.l.b16 %v462
  %v2230 = vunpack.c.l.b16 %v463
  %v2231 = vunpack.c.l.b16 %v464
  %v2232 = vunpack.c.l.b16 %v465
  %v2233 = vunpack.c.l.b16 %v466
  %v2234 = vunpack.c.l.b16 %v467
  %v2235 = vunpack.c.l.b16 %v468
  %v2236 = vunpack.c.l.b16 %v469
  %v2237 = vunpack.c.l.b16 %v470
  %v2238 = vunpack.c.l.b16 %v471
  %v2239 = vunpack.c.l.b16 %v472
  %v2240 = vunpack.c.l.b16 %v473
  %v2241 = vunpack.c.l.b16 %v474
  %v2242 = vunpack.c.l.b16 %v475
  %v2243 = vunpack.c.l.b16 %v476
  %v2244 = vunpack.c.l.b16 %v477
  %v2245 = vunpack.c.l.b16 %v478
  %v2246 = vunpack.c.l.b16 %v479
  %v2247 = vunpack.c.l.b16 %v480
  %v2248 = vunpack.c.l.b16 %v481
  %v2249 = vpack.c.b16 %v2106, %v2105
  %v2250 = vpack.c.b16 %v2108, %v2107
  %v2251 = vpack.c.b16 %v2110, %v2109
  %v2252 = vpack.c.b16 %v2112, %v2111
  %v2253 = vpack.c.b16 %v2114, %v2113
  %v2254 = vpack.c.b16 %v2116, %v2115
  %v2255 = vpack.c.b16 %v2118, %v2117
  %v2256 = vpack.c.b16 %v2120, %v2119
  %v2257 = vpack.c.b16 %v2122, %v2121
  %v2258 = vpack.c.b16 %v2124, %v2123
  %v2259 = vpack.c.b16 %v2126, %v2125
  %v2260 = vpack.c.b16 %v2128, %v2127
  %v2261 = vpack.c.b16 %v2130, %v2129
  %v2262 = vpack.c.b16 %v2132, %v2131
  %v2263 = vpack.c.b16 %v2134, %v2133
  %v2264 = vpack.c.b16 %v2136, %v2135
  %v2265 = vpack.c.b16 %v2138, %v2137
  %v2266 = vpack.c.b16 %v2140, %v2139
  %v2267 = vpack.c.b16 %v2142, %v2141
  %v2268 = vpack.c.b16 %v2144, %v2143
  %v2269 = vpack.c.b16 %v2146, %v2145
  %v2270 = vpack.c.b16 %v2148, %v2147
  %v2271 = vpack.c.b16 %v2150, %v2149
  %v2272 = vpack.c.b16 %v2152, %v2151
  %v2273 = vpack.c.b16 %v2154, %v2153
  %v2274 = vpack.c.b16 %v2156, %v2155
  %v2275 = vpack.c.b16 %v2158, %v2157
  %v2276 = vpack.c.b16 %v2160, %v2159
  %v2277 = vpack.c.b16 %v2162, %v2161
  %v2278 = vpack.c.b16 %v2164, %v2163
  %v2279 = vpack.c.b16 %v2166, %v2165
  %v2280 = vpack.c.b16 %v2168, %v2167
  %v2281 = vpack.c.b16 %v2170, %v2169
  %v2282 = vpack.c.b16 %v2172, %v2171
  %v2283 = vpack.c.b16 %v2174, %v2173
  %v2284 = vpack.c.b16 %v2176, %v2175
  %v2285 = vpack.c.b16 %v2178, %v2177
  %v2286 = vpack.c.b16 %v2180, %v2179
  %v2287 = vpack.c.b16 %v2182, %v2181
  %v2288 = vpack.c.b16 %v2184, %v2183
  %v2289 = vpack.c.b16 %v2186, %v2185
  %v2290 = vpack.c.b16 %v2188, %v2187
  %v2291 = vpack.c.b16 %v2190, %v2189
  %v2292 = vpack.c.b16 %v2192, %v2191
  %v2293 = vpack.c.b16 %v2194, %v2193
  %v2294 = vpack.c.b16 %v2196, %v2195
  %v2295 = vpack.c.b16 %v2198, %v2197
  %v2296 = vpack.c.b16 %v2200, %v2199
  %v2297 = vpack.c.b16 %v2202, %v2201
  %v2298 = vpack.c.b16 %v2204, %v2203
  %v2299 = vpack.c.b16 %v2206, %v2205
  %v2300 = vpack.c.b16 %v2208, %v2207
  %v2301 = vpack.c.b16 %v2210, %v2209
  %v2302 = vpack.c.b16 %v2212, %v2211
  %v2303 = vpack.c.b16 %v2214, %v2213
  %v2304 = vpack.c.b16 %v2216, %v2215
  %v2305 = vpack.c.b16 %v2218, %v2217
  %v2306 = vpack.c.b16 %v2220, %v2219
  %v2307 = vpack.c.b16 %v2222, %v2221
  %v2308 = vpack.c.b16 %v2224, %v2223
  %v2309 = vpack.c.b16 %v2226, %v2225
  %v2310 = vpack.c.b16 %v2228, %v2227
  %v2311 = vpack.c.b16 %v2230, %v2229
  %v2312 = vpack.c.b16 %v2232, %v2231
  %v2313 = vpack.c.b16 %v2234, %v2233
  %v2314 = vpack.c.b16 %v2236, %v2235
  %v2315 = vpack.c.b16 %v2238, %v2237
  %v2316 = vpack.c.b16 %v2240, %v2239
  %v2317 = vpack.c.b16 %v2242, %v2241
  %v2318 = vpack.c.b16 %v2244, %v2243
  %v2319 = vpack.c.b16 %v2246, %v2245
  %v2320 = vpack.c.b16 %v2248, %v2247
  %2393 = vmatprep.subr.bf16.mxu0 0
  %2394 = vmatpush1.bf16.msra.mxu0 %v2256
  %2395 = vmatprep.subr.bf16.mxu0 0
  %2396 = vmatpush1.bf16.msra.mxu0 %v2255
  %2397 = vmatprep.subr.bf16.mxu0 0
  %2398 = vmatpush1.bf16.msra.mxu0 %v2254
  %2399 = vmatprep.subr.bf16.mxu0 0
  %2400 = vmatpush1.bf16.msra.mxu0 %v2253
  %2401 = vmatprep.subr.bf16.mxu0 0
  %2402 = vmatpush1.bf16.msra.mxu0 %v2252
  %2403 = vmatprep.subr.bf16.mxu0 0
  %2404 = vmatpush1.bf16.msra.mxu0 %v2251
  %2405 = vmatprep.subr.bf16.mxu0 0
  %2406 = vmatpush1.bf16.msra.mxu0 %v2250
  %2407 = vmatprep.subr.bf16.mxu0 0
  %2408 = vmatpush1.bf16.msra.mxu0 %v2249
  %2409 = vmatprep.subr.bf16.mxu0 0
  %2410 = vmatpush2.bf16.msra.mxu0 %v2264
  %2411 = vmatprep.subr.bf16.mxu0 0
  %2412 = vmatpush2.bf16.msra.mxu0 %v2263
  %2413 = vmatprep.subr.bf16.mxu0 0
  %2414 = vmatpush2.bf16.msra.mxu0 %v2262
  %2415 = vmatprep.subr.bf16.mxu0 0
  %2416 = vmatpush2.bf16.msra.mxu0 %v2261
  %2417 = vmatprep.subr.bf16.mxu0 0
  %2418 = vmatpush2.bf16.msra.mxu0 %v2260
  %2419 = vmatprep.subr.bf16.mxu0 0
  %2420 = vmatpush2.bf16.msra.mxu0 %v2259
  %2421 = vmatprep.subr.bf16.mxu0 0
  %2422 = vmatpush2.bf16.msra.mxu0 %v2258
  %2423 = vmatprep.subr.bf16.mxu0 0
  %2424 = vmatpush2.bf16.msra.mxu0 %v2257
  %2425 = vmatprep.mubr.bf16.mxu0 %v1386
  %2426 = vmatmul.mubr.bf16.gmra.mxu0 %v1385
  %v2427 = vpop.f32.mrf.mxu0
  %v2428 = vadd.f32 %v487, %v2427
  %v2429 = vpop.f32.mrf.mxu0
  %v2430 = vpop.f32.mrf.mxu0
  %v2431 = vadd.f32 %v487, %v2430
  %v2432 = vpop.f32.mrf.mxu0
  %2433 = vmatprep.mubr.bf16.mxu0 %v1395
  %2434 = vmatmul.mubr.bf16.gmra.mxu0 %v1394
  %v2435 = vpop.f32.mrf.mxu0
  %v2436 = vadd.f32 %v487, %v2435
  %v2437 = vpop.f32.mrf.mxu0
  %v2438 = vpop.f32.mrf.mxu0
  %v2439 = vadd.f32 %v487, %v2438
  %v2440 = vpop.f32.mrf.mxu0
  %2441 = vmatprep.mubr.bf16.mxu0 %v1404
  %2442 = vmatmul.mubr.bf16.gmra.mxu0 %v1403
  %v2443 = vpop.f32.mrf.mxu0
  %v2444 = vadd.f32 %v487, %v2443
  %v2445 = vpop.f32.mrf.mxu0
  %v2446 = vpop.f32.mrf.mxu0
  %v2447 = vadd.f32 %v487, %v2446
  %v2448 = vpop.f32.mrf.mxu0
  %2449 = vmatprep.mubr.bf16.mxu0 %v1413
  %2450 = vmatmul.mubr.bf16.gmra.mxu0 %v1412
  %v2451 = vpop.f32.mrf.mxu0
  %v2452 = vadd.f32 %v487, %v2451
  %v2453 = vpop.f32.mrf.mxu0
  %v2454 = vpop.f32.mrf.mxu0
  %v2455 = vadd.f32 %v487, %v2454
  %v2456 = vpop.f32.mrf.mxu0
  %2457 = vmatprep.mubr.bf16.mxu0 %v1422
  %2458 = vmatmul.mubr.bf16.gmra.mxu0 %v1421
  %v2459 = vpop.f32.mrf.mxu0
  %v2460 = vadd.f32 %v487, %v2459
  %v2461 = vpop.f32.mrf.mxu0
  %v2462 = vpop.f32.mrf.mxu0
  %v2463 = vadd.f32 %v487, %v2462
  %v2464 = vpop.f32.mrf.mxu0
  %2465 = vmatprep.mubr.bf16.mxu0 %v1431
  %2466 = vmatmul.mubr.bf16.gmra.mxu0 %v1430
  %v2467 = vpop.f32.mrf.mxu0
  %v2468 = vadd.f32 %v487, %v2467
  %v2469 = vpop.f32.mrf.mxu0
  %v2470 = vpop.f32.mrf.mxu0
  %v2471 = vadd.f32 %v487, %v2470
  %v2472 = vpop.f32.mrf.mxu0
  %2473 = vmatprep.mubr.bf16.mxu0 %v1440
  %2474 = vmatmul.mubr.bf16.gmra.mxu0 %v1439
  %v2475 = vpop.f32.mrf.mxu0
  %v2476 = vadd.f32 %v487, %v2475
  %v2477 = vpop.f32.mrf.mxu0
  %v2478 = vpop.f32.mrf.mxu0
  %v2479 = vadd.f32 %v487, %v2478
  %v2480 = vpop.f32.mrf.mxu0
  %2481 = vmatprep.mubr.bf16.mxu0 %v1449
  %2482 = vmatmul.mubr.bf16.gmra.mxu0 %v1448
  %v2483 = vpop.f32.mrf.mxu0
  %v2484 = vadd.f32 %v487, %v2483
  %v2485 = vpop.f32.mrf.mxu0
  %v2486 = vpop.f32.mrf.mxu0
  %v2487 = vadd.f32 %v487, %v2486
  %v2488 = vpop.f32.mrf.mxu0
  %2489 = vmatprep.mubr.bf16.mxu0 %v1458
  %2490 = vmatmul.mubr.bf16.gmra.mxu0 %v1457
  %v2491 = vpop.f32.mrf.mxu0
  %v2492 = vadd.f32 %v487, %v2491
  %v2493 = vpop.f32.mrf.mxu0
  %v2494 = vpop.f32.mrf.mxu0
  %v2495 = vadd.f32 %v487, %v2494
  %v2496 = vpop.f32.mrf.mxu0
  %2497 = vmatprep.mubr.bf16.mxu0 %v1467
  %2498 = vmatmul.mubr.bf16.gmra.mxu0 %v1466
  %v2499 = vpop.f32.mrf.mxu0
  %v2500 = vadd.f32 %v487, %v2499
  %v2501 = vpop.f32.mrf.mxu0
  %v2502 = vpop.f32.mrf.mxu0
  %v2503 = vadd.f32 %v487, %v2502
  %v2504 = vpop.f32.mrf.mxu0
  %2505 = vmatprep.mubr.bf16.mxu0 %v1476
  %2506 = vmatmul.mubr.bf16.gmra.mxu0 %v1475
  %v2507 = vpop.f32.mrf.mxu0
  %v2508 = vadd.f32 %v487, %v2507
  %v2509 = vpop.f32.mrf.mxu0
  %v2510 = vpop.f32.mrf.mxu0
  %v2511 = vadd.f32 %v487, %v2510
  %v2512 = vpop.f32.mrf.mxu0
  %2513 = vmatprep.mubr.bf16.mxu0 %v1485
  %2514 = vmatmul.mubr.bf16.gmra.mxu0 %v1484
  %v2515 = vpop.f32.mrf.mxu0
  %v2516 = vadd.f32 %v487, %v2515
  %v2517 = vpop.f32.mrf.mxu0
  %v2518 = vpop.f32.mrf.mxu0
  %v2519 = vadd.f32 %v487, %v2518
  %v2520 = vpop.f32.mrf.mxu0
  %2521 = vmatprep.mubr.bf16.mxu0 %v1494
  %2522 = vmatmul.mubr.bf16.gmra.mxu0 %v1493
  %v2523 = vpop.f32.mrf.mxu0
  %v2524 = vadd.f32 %v487, %v2523
  %v2525 = vpop.f32.mrf.mxu0
  %v2526 = vpop.f32.mrf.mxu0
  %v2527 = vadd.f32 %v487, %v2526
  %v2528 = vpop.f32.mrf.mxu0
  %2529 = vmatprep.mubr.bf16.mxu0 %v1503
  %2530 = vmatmul.mubr.bf16.gmra.mxu0 %v1502
  %v2531 = vpop.f32.mrf.mxu0
  %v2532 = vadd.f32 %v487, %v2531
  %v2533 = vpop.f32.mrf.mxu0
  %v2534 = vpop.f32.mrf.mxu0
  %v2535 = vadd.f32 %v487, %v2534
  %v2536 = vpop.f32.mrf.mxu0
  %2537 = vmatprep.mubr.bf16.mxu0 %v1512
  %2538 = vmatmul.mubr.bf16.gmra.mxu0 %v1511
  %v2539 = vpop.f32.mrf.mxu0
  %v2540 = vadd.f32 %v487, %v2539
  %v2541 = vpop.f32.mrf.mxu0
  %v2542 = vpop.f32.mrf.mxu0
  %v2543 = vadd.f32 %v487, %v2542
  %v2544 = vpop.f32.mrf.mxu0
  %2545 = vmatprep.mubr.bf16.mxu0 %v1521
  %2546 = vmatmul.mubr.bf16.gmra.mxu0 %v1520
  %v2547 = vpop.f32.mrf.mxu0
  %v2548 = vadd.f32 %v487, %v2547
  %v2549 = vpop.f32.mrf.mxu0
  %v2550 = vpop.f32.mrf.mxu0
  %v2551 = vadd.f32 %v487, %v2550
  %v2552 = vpop.f32.mrf.mxu0
  %2553 = vmatprep.mubr.bf16.mxu0 %v1530
  %2554 = vmatmul.mubr.bf16.gmra.mxu0 %v1529
  %v2555 = vpop.f32.mrf.mxu0
  %v2556 = vadd.f32 %v487, %v2555
  %v2557 = vpop.f32.mrf.mxu0
  %v2558 = vpop.f32.mrf.mxu0
  %v2559 = vadd.f32 %v487, %v2558
  %v2560 = vpop.f32.mrf.mxu0
  %2561 = vmatprep.mubr.bf16.mxu0 %v1539
  %2562 = vmatmul.mubr.bf16.gmra.mxu0 %v1538
  %v2563 = vpop.f32.mrf.mxu0
  %v2564 = vadd.f32 %v487, %v2563
  %v2565 = vpop.f32.mrf.mxu0
  %v2566 = vpop.f32.mrf.mxu0
  %v2567 = vadd.f32 %v487, %v2566
  %v2568 = vpop.f32.mrf.mxu0
  %2569 = vmatprep.mubr.bf16.mxu0 %v1548
  %2570 = vmatmul.mubr.bf16.gmra.mxu0 %v1547
  %v2571 = vpop.f32.mrf.mxu0
  %v2572 = vadd.f32 %v487, %v2571
  %v2573 = vpop.f32.mrf.mxu0
  %v2574 = vpop.f32.mrf.mxu0
  %v2575 = vadd.f32 %v487, %v2574
  %v2576 = vpop.f32.mrf.mxu0
  %2577 = vmatprep.mubr.bf16.mxu0 %v1557
  %2578 = vmatmul.mubr.bf16.gmra.mxu0 %v1556
  %v2579 = vpop.f32.mrf.mxu0
  %v2580 = vadd.f32 %v487, %v2579
  %v2581 = vpop.f32.mrf.mxu0
  %v2582 = vpop.f32.mrf.mxu0
  %v2583 = vadd.f32 %v487, %v2582
  %v2584 = vpop.f32.mrf.mxu0
  %2585 = vmatprep.mubr.bf16.mxu0 %v1566
  %2586 = vmatmul.mubr.bf16.gmra.mxu0 %v1565
  %v2587 = vpop.f32.mrf.mxu0
  %v2588 = vadd.f32 %v487, %v2587
  %v2589 = vpop.f32.mrf.mxu0
  %v2590 = vpop.f32.mrf.mxu0
  %v2591 = vadd.f32 %v487, %v2590
  %v2592 = vpop.f32.mrf.mxu0
  %2593 = vmatprep.mubr.bf16.mxu0 %v1575
  %2594 = vmatmul.mubr.bf16.gmra.mxu0 %v1574
  %v2595 = vpop.f32.mrf.mxu0
  %v2596 = vadd.f32 %v487, %v2595
  %v2597 = vpop.f32.mrf.mxu0
  %v2598 = vpop.f32.mrf.mxu0
  %v2599 = vadd.f32 %v487, %v2598
  %v2600 = vpop.f32.mrf.mxu0
  %2601 = vmatprep.mubr.bf16.mxu0 %v1584
  %2602 = vmatmul.mubr.bf16.gmra.mxu0 %v1583
  %v2603 = vpop.f32.mrf.mxu0
  %v2604 = vadd.f32 %v487, %v2603
  %v2605 = vpop.f32.mrf.mxu0
  %v2606 = vpop.f32.mrf.mxu0
  %v2607 = vadd.f32 %v487, %v2606
  %v2608 = vpop.f32.mrf.mxu0
  %2609 = vmatprep.mubr.bf16.mxu0 %v1593
  %2610 = vmatmul.mubr.bf16.gmra.mxu0 %v1592
  %v2611 = vpop.f32.mrf.mxu0
  %v2612 = vadd.f32 %v487, %v2611
  %v2613 = vpop.f32.mrf.mxu0
  %v2614 = vpop.f32.mrf.mxu0
  %v2615 = vadd.f32 %v487, %v2614
  %v2616 = vpop.f32.mrf.mxu0
  %2617 = vmatprep.mubr.bf16.mxu0 %v1602
  %2618 = vmatmul.mubr.bf16.gmra.mxu0 %v1601
  %v2619 = vpop.f32.mrf.mxu0
  %v2620 = vadd.f32 %v487, %v2619
  %v2621 = vpop.f32.mrf.mxu0
  %v2622 = vpop.f32.mrf.mxu0
  %v2623 = vadd.f32 %v487, %v2622
  %v2624 = vpop.f32.mrf.mxu0
  %2625 = vmatprep.mubr.bf16.mxu0 %v1611
  %2626 = vmatmul.mubr.bf16.gmra.mxu0 %v1610
  %v2627 = vpop.f32.mrf.mxu0
  %v2628 = vadd.f32 %v487, %v2627
  %v2629 = vpop.f32.mrf.mxu0
  %v2630 = vpop.f32.mrf.mxu0
  %v2631 = vadd.f32 %v487, %v2630
  %v2632 = vpop.f32.mrf.mxu0
  %2633 = vmatprep.mubr.bf16.mxu0 %v1620
  %2634 = vmatmul.mubr.bf16.gmra.mxu0 %v1619
  %v2635 = vpop.f32.mrf.mxu0
  %v2636 = vadd.f32 %v487, %v2635
  %v2637 = vpop.f32.mrf.mxu0
  %v2638 = vpop.f32.mrf.mxu0
  %v2639 = vadd.f32 %v487, %v2638
  %v2640 = vpop.f32.mrf.mxu0
  %2641 = vmatprep.mubr.bf16.mxu0 %v1629
  %2642 = vmatmul.mubr.bf16.gmra.mxu0 %v1628
  %v2643 = vpop.f32.mrf.mxu0
  %v2644 = vadd.f32 %v487, %v2643
  %v2645 = vpop.f32.mrf.mxu0
  %v2646 = vpop.f32.mrf.mxu0
  %v2647 = vadd.f32 %v487, %v2646
  %v2648 = vpop.f32.mrf.mxu0
  %2649 = vmatprep.mubr.bf16.mxu0 %v1638
  %2650 = vmatmul.mubr.bf16.gmra.mxu0 %v1637
  %v2651 = vpop.f32.mrf.mxu0
  %v2652 = vadd.f32 %v487, %v2651
  %v2653 = vpop.f32.mrf.mxu0
  %v2654 = vpop.f32.mrf.mxu0
  %v2655 = vadd.f32 %v487, %v2654
  %v2656 = vpop.f32.mrf.mxu0
  %2657 = vmatprep.mubr.bf16.mxu0 %v1647
  %2658 = vmatmul.mubr.bf16.gmra.mxu0 %v1646
  %v2659 = vpop.f32.mrf.mxu0
  %v2660 = vadd.f32 %v487, %v2659
  %v2661 = vpop.f32.mrf.mxu0
  %v2662 = vpop.f32.mrf.mxu0
  %v2663 = vadd.f32 %v487, %v2662
  %v2664 = vpop.f32.mrf.mxu0
  %2665 = vmatprep.mubr.bf16.mxu0 %v1656
  %2666 = vmatmul.mubr.bf16.gmra.mxu0 %v1655
  %v2667 = vpop.f32.mrf.mxu0
  %v2668 = vadd.f32 %v487, %v2667
  %v2669 = vpop.f32.mrf.mxu0
  %v2670 = vpop.f32.mrf.mxu0
  %v2671 = vadd.f32 %v487, %v2670
  %v2672 = vpop.f32.mrf.mxu0
  %2673 = vmatprep.mubr.bf16.mxu0 %v1665
  %2674 = vmatmul.mubr.bf16.gmra.mxu0 %v1664
  %v2675 = vpop.f32.mrf.mxu0
  %v2676 = vadd.f32 %v487, %v2675
  %v2677 = vpop.f32.mrf.mxu0
  %v2678 = vpop.f32.mrf.mxu0
  %v2679 = vadd.f32 %v487, %v2678
  %v2680 = vpop.f32.mrf.mxu0
  %2681 = vdwg.mxu0
  %2682 = vmatprep.subr.bf16.mxu0 0
  %2683 = vmatpush1.bf16.msra.mxu0 %v2272
  %2684 = vmatprep.subr.bf16.mxu0 0
  %2685 = vmatpush1.bf16.msra.mxu0 %v2271
  %2686 = vmatprep.subr.bf16.mxu0 0
  %2687 = vmatpush1.bf16.msra.mxu0 %v2270
  %2688 = vmatprep.subr.bf16.mxu0 0
  %2689 = vmatpush1.bf16.msra.mxu0 %v2269
  %2690 = vmatprep.subr.bf16.mxu0 0
  %2691 = vmatpush1.bf16.msra.mxu0 %v2268
  %2692 = vmatprep.subr.bf16.mxu0 0
  %2693 = vmatpush1.bf16.msra.mxu0 %v2267
  %2694 = vmatprep.subr.bf16.mxu0 0
  %2695 = vmatpush1.bf16.msra.mxu0 %v2266
  %2696 = vmatprep.subr.bf16.mxu0 0
  %2697 = vmatpush1.bf16.msra.mxu0 %v2265
  %2698 = vmatprep.subr.bf16.mxu0 0
  %2699 = vmatpush2.bf16.msra.mxu0 %v2280
  %2700 = vmatprep.subr.bf16.mxu0 0
  %2701 = vmatpush2.bf16.msra.mxu0 %v2279
  %2702 = vmatprep.subr.bf16.mxu0 0
  %2703 = vmatpush2.bf16.msra.mxu0 %v2278
  %2704 = vmatprep.subr.bf16.mxu0 0
  %2705 = vmatpush2.bf16.msra.mxu0 %v2277
  %2706 = vmatprep.subr.bf16.mxu0 0
  %2707 = vmatpush2.bf16.msra.mxu0 %v2276
  %2708 = vmatprep.subr.bf16.mxu0 0
  %2709 = vmatpush2.bf16.msra.mxu0 %v2275
  %2710 = vmatprep.subr.bf16.mxu0 0
  %2711 = vmatpush2.bf16.msra.mxu0 %v2274
  %2712 = vmatprep.subr.bf16.mxu0 0
  %2713 = vmatpush2.bf16.msra.mxu0 %v2273
  %2714 = vmatprep.mubr.bf16.mxu0 %v1388
  %2715 = vmatmul.mubr.bf16.gmra.mxu0 %v1387
  %v2716 = vpop.f32.mrf.mxu0
  %v2717 = vadd.f32 %v2428, %v2716
  %v2718 = vpop.f32.mrf.mxu0
  %v2719 = vpop.f32.mrf.mxu0
  %v2720 = vadd.f32 %v2431, %v2719
  %v2721 = vpop.f32.mrf.mxu0
  %2722 = vmatprep.mubr.bf16.mxu0 %v1397
  %2723 = vmatmul.mubr.bf16.gmra.mxu0 %v1396
  %v2724 = vpop.f32.mrf.mxu0
  %v2725 = vadd.f32 %v2436, %v2724
  %v2726 = vpop.f32.mrf.mxu0
  %v2727 = vpop.f32.mrf.mxu0
  %v2728 = vadd.f32 %v2439, %v2727
  %v2729 = vpop.f32.mrf.mxu0
  %2730 = vmatprep.mubr.bf16.mxu0 %v1406
  %2731 = vmatmul.mubr.bf16.gmra.mxu0 %v1405
  %v2732 = vpop.f32.mrf.mxu0
  %v2733 = vadd.f32 %v2444, %v2732
  %v2734 = vpop.f32.mrf.mxu0
  %v2735 = vpop.f32.mrf.mxu0
  %v2736 = vadd.f32 %v2447, %v2735
  %v2737 = vpop.f32.mrf.mxu0
  %2738 = vmatprep.mubr.bf16.mxu0 %v1415
  %2739 = vmatmul.mubr.bf16.gmra.mxu0 %v1414
  %v2740 = vpop.f32.mrf.mxu0
  %v2741 = vadd.f32 %v2452, %v2740
  %v2742 = vpop.f32.mrf.mxu0
  %v2743 = vpop.f32.mrf.mxu0
  %v2744 = vadd.f32 %v2455, %v2743
  %v2745 = vpop.f32.mrf.mxu0
  %2746 = vmatprep.mubr.bf16.mxu0 %v1424
  %2747 = vmatmul.mubr.bf16.gmra.mxu0 %v1423
  %v2748 = vpop.f32.mrf.mxu0
  %v2749 = vadd.f32 %v2460, %v2748
  %v2750 = vpop.f32.mrf.mxu0
  %v2751 = vpop.f32.mrf.mxu0
  %v2752 = vadd.f32 %v2463, %v2751
  %v2753 = vpop.f32.mrf.mxu0
  %2754 = vmatprep.mubr.bf16.mxu0 %v1433
  %2755 = vmatmul.mubr.bf16.gmra.mxu0 %v1432
  %v2756 = vpop.f32.mrf.mxu0
  %v2757 = vadd.f32 %v2468, %v2756
  %v2758 = vpop.f32.mrf.mxu0
  %v2759 = vpop.f32.mrf.mxu0
  %v2760 = vadd.f32 %v2471, %v2759
  %v2761 = vpop.f32.mrf.mxu0
  %2762 = vmatprep.mubr.bf16.mxu0 %v1442
  %2763 = vmatmul.mubr.bf16.gmra.mxu0 %v1441
  %v2764 = vpop.f32.mrf.mxu0
  %v2765 = vadd.f32 %v2476, %v2764
  %v2766 = vpop.f32.mrf.mxu0
  %v2767 = vpop.f32.mrf.mxu0
  %v2768 = vadd.f32 %v2479, %v2767
  %v2769 = vpop.f32.mrf.mxu0
  %2770 = vmatprep.mubr.bf16.mxu0 %v1451
  %2771 = vmatmul.mubr.bf16.gmra.mxu0 %v1450
  %v2772 = vpop.f32.mrf.mxu0
  %v2773 = vadd.f32 %v2484, %v2772
  %v2774 = vpop.f32.mrf.mxu0
  %v2775 = vpop.f32.mrf.mxu0
  %v2776 = vadd.f32 %v2487, %v2775
  %v2777 = vpop.f32.mrf.mxu0
  %2778 = vmatprep.mubr.bf16.mxu0 %v1460
  %2779 = vmatmul.mubr.bf16.gmra.mxu0 %v1459
  %v2780 = vpop.f32.mrf.mxu0
  %v2781 = vadd.f32 %v2492, %v2780
  %v2782 = vpop.f32.mrf.mxu0
  %v2783 = vpop.f32.mrf.mxu0
  %v2784 = vadd.f32 %v2495, %v2783
  %v2785 = vpop.f32.mrf.mxu0
  %2786 = vmatprep.mubr.bf16.mxu0 %v1469
  %2787 = vmatmul.mubr.bf16.gmra.mxu0 %v1468
  %v2788 = vpop.f32.mrf.mxu0
  %v2789 = vadd.f32 %v2500, %v2788
  %v2790 = vpop.f32.mrf.mxu0
  %v2791 = vpop.f32.mrf.mxu0
  %v2792 = vadd.f32 %v2503, %v2791
  %v2793 = vpop.f32.mrf.mxu0
  %2794 = vmatprep.mubr.bf16.mxu0 %v1478
  %2795 = vmatmul.mubr.bf16.gmra.mxu0 %v1477
  %v2796 = vpop.f32.mrf.mxu0
  %v2797 = vadd.f32 %v2508, %v2796
  %v2798 = vpop.f32.mrf.mxu0
  %v2799 = vpop.f32.mrf.mxu0
  %v2800 = vadd.f32 %v2511, %v2799
  %v2801 = vpop.f32.mrf.mxu0
  %2802 = vmatprep.mubr.bf16.mxu0 %v1487
  %2803 = vmatmul.mubr.bf16.gmra.mxu0 %v1486
  %v2804 = vpop.f32.mrf.mxu0
  %v2805 = vadd.f32 %v2516, %v2804
  %v2806 = vpop.f32.mrf.mxu0
  %v2807 = vpop.f32.mrf.mxu0
  %v2808 = vadd.f32 %v2519, %v2807
  %v2809 = vpop.f32.mrf.mxu0
  %2810 = vmatprep.mubr.bf16.mxu0 %v1496
  %2811 = vmatmul.mubr.bf16.gmra.mxu0 %v1495
  %v2812 = vpop.f32.mrf.mxu0
  %v2813 = vadd.f32 %v2524, %v2812
  %v2814 = vpop.f32.mrf.mxu0
  %v2815 = vpop.f32.mrf.mxu0
  %v2816 = vadd.f32 %v2527, %v2815
  %v2817 = vpop.f32.mrf.mxu0
  %2818 = vmatprep.mubr.bf16.mxu0 %v1505
  %2819 = vmatmul.mubr.bf16.gmra.mxu0 %v1504
  %v2820 = vpop.f32.mrf.mxu0
  %v2821 = vadd.f32 %v2532, %v2820
  %v2822 = vpop.f32.mrf.mxu0
  %v2823 = vpop.f32.mrf.mxu0
  %v2824 = vadd.f32 %v2535, %v2823
  %v2825 = vpop.f32.mrf.mxu0
  %2826 = vmatprep.mubr.bf16.mxu0 %v1514
  %2827 = vmatmul.mubr.bf16.gmra.mxu0 %v1513
  %v2828 = vpop.f32.mrf.mxu0
  %v2829 = vadd.f32 %v2540, %v2828
  %v2830 = vpop.f32.mrf.mxu0
  %v2831 = vpop.f32.mrf.mxu0
  %v2832 = vadd.f32 %v2543, %v2831
  %v2833 = vpop.f32.mrf.mxu0
  %2834 = vmatprep.mubr.bf16.mxu0 %v1523
  %2835 = vmatmul.mubr.bf16.gmra.mxu0 %v1522
  %v2836 = vpop.f32.mrf.mxu0
  %v2837 = vadd.f32 %v2548, %v2836
  %v2838 = vpop.f32.mrf.mxu0
  %v2839 = vpop.f32.mrf.mxu0
  %v2840 = vadd.f32 %v2551, %v2839
  %v2841 = vpop.f32.mrf.mxu0
  %2842 = vmatprep.mubr.bf16.mxu0 %v1532
  %2843 = vmatmul.mubr.bf16.gmra.mxu0 %v1531
  %v2844 = vpop.f32.mrf.mxu0
  %v2845 = vadd.f32 %v2556, %v2844
  %v2846 = vpop.f32.mrf.mxu0
  %v2847 = vpop.f32.mrf.mxu0
  %v2848 = vadd.f32 %v2559, %v2847
  %v2849 = vpop.f32.mrf.mxu0
  %2850 = vmatprep.mubr.bf16.mxu0 %v1541
  %2851 = vmatmul.mubr.bf16.gmra.mxu0 %v1540
  %v2852 = vpop.f32.mrf.mxu0
  %v2853 = vadd.f32 %v2564, %v2852
  %v2854 = vpop.f32.mrf.mxu0
  %v2855 = vpop.f32.mrf.mxu0
  %v2856 = vadd.f32 %v2567, %v2855
  %v2857 = vpop.f32.mrf.mxu0
  %2858 = vmatprep.mubr.bf16.mxu0 %v1550
  %2859 = vmatmul.mubr.bf16.gmra.mxu0 %v1549
  %v2860 = vpop.f32.mrf.mxu0
  %v2861 = vadd.f32 %v2572, %v2860
  %v2862 = vpop.f32.mrf.mxu0
  %v2863 = vpop.f32.mrf.mxu0
  %v2864 = vadd.f32 %v2575, %v2863
  %v2865 = vpop.f32.mrf.mxu0
  %2866 = vmatprep.mubr.bf16.mxu0 %v1559
  %2867 = vmatmul.mubr.bf16.gmra.mxu0 %v1558
  %v2868 = vpop.f32.mrf.mxu0
  %v2869 = vadd.f32 %v2580, %v2868
  %v2870 = vpop.f32.mrf.mxu0
  %v2871 = vpop.f32.mrf.mxu0
  %v2872 = vadd.f32 %v2583, %v2871
  %v2873 = vpop.f32.mrf.mxu0
  %2874 = vmatprep.mubr.bf16.mxu0 %v1568
  %2875 = vmatmul.mubr.bf16.gmra.mxu0 %v1567
  %v2876 = vpop.f32.mrf.mxu0
  %v2877 = vadd.f32 %v2588, %v2876
  %v2878 = vpop.f32.mrf.mxu0
  %v2879 = vpop.f32.mrf.mxu0
  %v2880 = vadd.f32 %v2591, %v2879
  %v2881 = vpop.f32.mrf.mxu0
  %2882 = vmatprep.mubr.bf16.mxu0 %v1577
  %2883 = vmatmul.mubr.bf16.gmra.mxu0 %v1576
  %v2884 = vpop.f32.mrf.mxu0
  %v2885 = vadd.f32 %v2596, %v2884
  %v2886 = vpop.f32.mrf.mxu0
  %v2887 = vpop.f32.mrf.mxu0
  %v2888 = vadd.f32 %v2599, %v2887
  %v2889 = vpop.f32.mrf.mxu0
  %2890 = vmatprep.mubr.bf16.mxu0 %v1586
  %2891 = vmatmul.mubr.bf16.gmra.mxu0 %v1585
  %v2892 = vpop.f32.mrf.mxu0
  %v2893 = vadd.f32 %v2604, %v2892
  %v2894 = vpop.f32.mrf.mxu0
  %v2895 = vpop.f32.mrf.mxu0
  %v2896 = vadd.f32 %v2607, %v2895
  %v2897 = vpop.f32.mrf.mxu0
  %2898 = vmatprep.mubr.bf16.mxu0 %v1595
  %2899 = vmatmul.mubr.bf16.gmra.mxu0 %v1594
  %v2900 = vpop.f32.mrf.mxu0
  %v2901 = vadd.f32 %v2612, %v2900
  %v2902 = vpop.f32.mrf.mxu0
  %v2903 = vpop.f32.mrf.mxu0
  %v2904 = vadd.f32 %v2615, %v2903
  %v2905 = vpop.f32.mrf.mxu0
  %2906 = vmatprep.mubr.bf16.mxu0 %v1604
  %2907 = vmatmul.mubr.bf16.gmra.mxu0 %v1603
  %v2908 = vpop.f32.mrf.mxu0
  %v2909 = vadd.f32 %v2620, %v2908
  %v2910 = vpop.f32.mrf.mxu0
  %v2911 = vpop.f32.mrf.mxu0
  %v2912 = vadd.f32 %v2623, %v2911
  %v2913 = vpop.f32.mrf.mxu0
  %2914 = vmatprep.mubr.bf16.mxu0 %v1613
  %2915 = vmatmul.mubr.bf16.gmra.mxu0 %v1612
  %v2916 = vpop.f32.mrf.mxu0
  %v2917 = vadd.f32 %v2628, %v2916
  %v2918 = vpop.f32.mrf.mxu0
  %v2919 = vpop.f32.mrf.mxu0
  %v2920 = vadd.f32 %v2631, %v2919
  %v2921 = vpop.f32.mrf.mxu0
  %2922 = vmatprep.mubr.bf16.mxu0 %v1622
  %2923 = vmatmul.mubr.bf16.gmra.mxu0 %v1621
  %v2924 = vpop.f32.mrf.mxu0
  %v2925 = vadd.f32 %v2636, %v2924
  %v2926 = vpop.f32.mrf.mxu0
  %v2927 = vpop.f32.mrf.mxu0
  %v2928 = vadd.f32 %v2639, %v2927
  %v2929 = vpop.f32.mrf.mxu0
  %2930 = vmatprep.mubr.bf16.mxu0 %v1631
  %2931 = vmatmul.mubr.bf16.gmra.mxu0 %v1630
  %v2932 = vpop.f32.mrf.mxu0
  %v2933 = vadd.f32 %v2644, %v2932
  %v2934 = vpop.f32.mrf.mxu0
  %v2935 = vpop.f32.mrf.mxu0
  %v2936 = vadd.f32 %v2647, %v2935
  %v2937 = vpop.f32.mrf.mxu0
  %2938 = vmatprep.mubr.bf16.mxu0 %v1640
  %2939 = vmatmul.mubr.bf16.gmra.mxu0 %v1639
  %v2940 = vpop.f32.mrf.mxu0
  %v2941 = vadd.f32 %v2652, %v2940
  %v2942 = vpop.f32.mrf.mxu0
  %v2943 = vpop.f32.mrf.mxu0
  %v2944 = vadd.f32 %v2655, %v2943
  %v2945 = vpop.f32.mrf.mxu0
  %2946 = vmatprep.mubr.bf16.mxu0 %v1649
  %2947 = vmatmul.mubr.bf16.gmra.mxu0 %v1648
  %v2948 = vpop.f32.mrf.mxu0
  %v2949 = vadd.f32 %v2660, %v2948
  %v2950 = vpop.f32.mrf.mxu0
  %v2951 = vpop.f32.mrf.mxu0
  %v2952 = vadd.f32 %v2663, %v2951
  %v2953 = vpop.f32.mrf.mxu0
  %2954 = vmatprep.mubr.bf16.mxu0 %v1658
  %2955 = vmatmul.mubr.bf16.gmra.mxu0 %v1657
  %v2956 = vpop.f32.mrf.mxu0
  %v2957 = vadd.f32 %v2668, %v2956
  %v2958 = vpop.f32.mrf.mxu0
  %v2959 = vpop.f32.mrf.mxu0
  %v2960 = vadd.f32 %v2671, %v2959
  %v2961 = vpop.f32.mrf.mxu0
  %2962 = vmatprep.mubr.bf16.mxu0 %v1667
  %2963 = vmatmul.mubr.bf16.gmra.mxu0 %v1666
  %v2964 = vpop.f32.mrf.mxu0
  %v2965 = vadd.f32 %v2676, %v2964
  %v2966 = vpop.f32.mrf.mxu0
  %v2967 = vpop.f32.mrf.mxu0
  %v2968 = vadd.f32 %v2679, %v2967
  %v2969 = vpop.f32.mrf.mxu0
  %2970 = vdwg.mxu0
  %2971 = vmatprep.subr.bf16.mxu0 0
  %2972 = vmatpush1.bf16.msra.mxu0 %v2288
  %2973 = vmatprep.subr.bf16.mxu0 0
  %2974 = vmatpush1.bf16.msra.mxu0 %v2287
  %2975 = vmatprep.subr.bf16.mxu0 0
  %2976 = vmatpush1.bf16.msra.mxu0 %v2286
  %2977 = vmatprep.subr.bf16.mxu0 0
  %2978 = vmatpush1.bf16.msra.mxu0 %v2285
  %2979 = vmatprep.subr.bf16.mxu0 0
  %2980 = vmatpush1.bf16.msra.mxu0 %v2284
  %2981 = vmatprep.subr.bf16.mxu0 0
  %2982 = vmatpush1.bf16.msra.mxu0 %v2283
  %2983 = vmatprep.subr.bf16.mxu0 0
  %2984 = vmatpush1.bf16.msra.mxu0 %v2282
  %2985 = vmatprep.subr.bf16.mxu0 0
  %2986 = vmatpush1.bf16.msra.mxu0 %v2281
  %2987 = vmatprep.subr.bf16.mxu0 0
  %2988 = vmatpush2.bf16.msra.mxu0 %v2296
  %2989 = vmatprep.subr.bf16.mxu0 0
  %2990 = vmatpush2.bf16.msra.mxu0 %v2295
  %2991 = vmatprep.subr.bf16.mxu0 0
  %2992 = vmatpush2.bf16.msra.mxu0 %v2294
  %2993 = vmatprep.subr.bf16.mxu0 0
  %2994 = vmatpush2.bf16.msra.mxu0 %v2293
  %2995 = vmatprep.subr.bf16.mxu0 0
  %2996 = vmatpush2.bf16.msra.mxu0 %v2292
  %2997 = vmatprep.subr.bf16.mxu0 0
  %2998 = vmatpush2.bf16.msra.mxu0 %v2291
  %2999 = vmatprep.subr.bf16.mxu0 0
  %3000 = vmatpush2.bf16.msra.mxu0 %v2290
  %3001 = vmatprep.subr.bf16.mxu0 0
  %3002 = vmatpush2.bf16.msra.mxu0 %v2289
  %3003 = vmatprep.mubr.bf16.mxu0 %v1390
  %3004 = vmatmul.mubr.bf16.gmra.mxu0 %v1389
  %v3005 = vpop.f32.mrf.mxu0
  %v3006 = vadd.f32 %v2717, %v3005
  %v3007 = vpop.f32.mrf.mxu0
  %v3008 = vpop.f32.mrf.mxu0
  %v3009 = vadd.f32 %v2720, %v3008
  %v3010 = vpop.f32.mrf.mxu0
  %3011 = vmatprep.mubr.bf16.mxu0 %v1399
  %3012 = vmatmul.mubr.bf16.gmra.mxu0 %v1398
  %v3013 = vpop.f32.mrf.mxu0
  %v3014 = vadd.f32 %v2725, %v3013
  %v3015 = vpop.f32.mrf.mxu0
  %v3016 = vpop.f32.mrf.mxu0
  %v3017 = vadd.f32 %v2728, %v3016
  %v3018 = vpop.f32.mrf.mxu0
  %3019 = vmatprep.mubr.bf16.mxu0 %v1408
  %3020 = vmatmul.mubr.bf16.gmra.mxu0 %v1407
  %v3021 = vpop.f32.mrf.mxu0
  %v3022 = vadd.f32 %v2733, %v3021
  %v3023 = vpop.f32.mrf.mxu0
  %v3024 = vpop.f32.mrf.mxu0
  %v3025 = vadd.f32 %v2736, %v3024
  %v3026 = vpop.f32.mrf.mxu0
  %3027 = vmatprep.mubr.bf16.mxu0 %v1417
  %3028 = vmatmul.mubr.bf16.gmra.mxu0 %v1416
  %v3029 = vpop.f32.mrf.mxu0
  %v3030 = vadd.f32 %v2741, %v3029
  %v3031 = vpop.f32.mrf.mxu0
  %v3032 = vpop.f32.mrf.mxu0
  %v3033 = vadd.f32 %v2744, %v3032
  %v3034 = vpop.f32.mrf.mxu0
  %3035 = vmatprep.mubr.bf16.mxu0 %v1426
  %3036 = vmatmul.mubr.bf16.gmra.mxu0 %v1425
  %v3037 = vpop.f32.mrf.mxu0
  %v3038 = vadd.f32 %v2749, %v3037
  %v3039 = vpop.f32.mrf.mxu0
  %v3040 = vpop.f32.mrf.mxu0
  %v3041 = vadd.f32 %v2752, %v3040
  %v3042 = vpop.f32.mrf.mxu0
  %3043 = vmatprep.mubr.bf16.mxu0 %v1435
  %3044 = vmatmul.mubr.bf16.gmra.mxu0 %v1434
  %v3045 = vpop.f32.mrf.mxu0
  %v3046 = vadd.f32 %v2757, %v3045
  %v3047 = vpop.f32.mrf.mxu0
  %v3048 = vpop.f32.mrf.mxu0
  %v3049 = vadd.f32 %v2760, %v3048
  %v3050 = vpop.f32.mrf.mxu0
  %3051 = vmatprep.mubr.bf16.mxu0 %v1444
  %3052 = vmatmul.mubr.bf16.gmra.mxu0 %v1443
  %v3053 = vpop.f32.mrf.mxu0
  %v3054 = vadd.f32 %v2765, %v3053
  %v3055 = vpop.f32.mrf.mxu0
  %v3056 = vpop.f32.mrf.mxu0
  %v3057 = vadd.f32 %v2768, %v3056
  %v3058 = vpop.f32.mrf.mxu0
  %3059 = vmatprep.mubr.bf16.mxu0 %v1453
  %3060 = vmatmul.mubr.bf16.gmra.mxu0 %v1452
  %v3061 = vpop.f32.mrf.mxu0
  %v3062 = vadd.f32 %v2773, %v3061
  %v3063 = vpop.f32.mrf.mxu0
  %v3064 = vpop.f32.mrf.mxu0
  %v3065 = vadd.f32 %v2776, %v3064
  %v3066 = vpop.f32.mrf.mxu0
  %3067 = vmatprep.mubr.bf16.mxu0 %v1462
  %3068 = vmatmul.mubr.bf16.gmra.mxu0 %v1461
  %v3069 = vpop.f32.mrf.mxu0
  %v3070 = vadd.f32 %v2781, %v3069
  %v3071 = vpop.f32.mrf.mxu0
  %v3072 = vpop.f32.mrf.mxu0
  %v3073 = vadd.f32 %v2784, %v3072
  %v3074 = vpop.f32.mrf.mxu0
  %3075 = vmatprep.mubr.bf16.mxu0 %v1471
  %3076 = vmatmul.mubr.bf16.gmra.mxu0 %v1470
  %v3077 = vpop.f32.mrf.mxu0
  %v3078 = vadd.f32 %v2789, %v3077
  %v3079 = vpop.f32.mrf.mxu0
  %v3080 = vpop.f32.mrf.mxu0
  %v3081 = vadd.f32 %v2792, %v3080
  %v3082 = vpop.f32.mrf.mxu0
  %3083 = vmatprep.mubr.bf16.mxu0 %v1480
  %3084 = vmatmul.mubr.bf16.gmra.mxu0 %v1479
  %v3085 = vpop.f32.mrf.mxu0
  %v3086 = vadd.f32 %v2797, %v3085
  %v3087 = vpop.f32.mrf.mxu0
  %v3088 = vpop.f32.mrf.mxu0
  %v3089 = vadd.f32 %v2800, %v3088
  %v3090 = vpop.f32.mrf.mxu0
  %3091 = vmatprep.mubr.bf16.mxu0 %v1489
  %3092 = vmatmul.mubr.bf16.gmra.mxu0 %v1488
  %v3093 = vpop.f32.mrf.mxu0
  %v3094 = vadd.f32 %v2805, %v3093
  %v3095 = vpop.f32.mrf.mxu0
  %v3096 = vpop.f32.mrf.mxu0
  %v3097 = vadd.f32 %v2808, %v3096
  %v3098 = vpop.f32.mrf.mxu0
  %3099 = vmatprep.mubr.bf16.mxu0 %v1498
  %3100 = vmatmul.mubr.bf16.gmra.mxu0 %v1497
  %v3101 = vpop.f32.mrf.mxu0
  %v3102 = vadd.f32 %v2813, %v3101
  %v3103 = vpop.f32.mrf.mxu0
  %v3104 = vpop.f32.mrf.mxu0
  %v3105 = vadd.f32 %v2816, %v3104
  %v3106 = vpop.f32.mrf.mxu0
  %3107 = vmatprep.mubr.bf16.mxu0 %v1507
  %3108 = vmatmul.mubr.bf16.gmra.mxu0 %v1506
  %v3109 = vpop.f32.mrf.mxu0
  %v3110 = vadd.f32 %v2821, %v3109
  %v3111 = vpop.f32.mrf.mxu0
  %v3112 = vpop.f32.mrf.mxu0
  %v3113 = vadd.f32 %v2824, %v3112
  %v3114 = vpop.f32.mrf.mxu0
  %3115 = vmatprep.mubr.bf16.mxu0 %v1516
  %3116 = vmatmul.mubr.bf16.gmra.mxu0 %v1515
  %v3117 = vpop.f32.mrf.mxu0
  %v3118 = vadd.f32 %v2829, %v3117
  %v3119 = vpop.f32.mrf.mxu0
  %v3120 = vpop.f32.mrf.mxu0
  %v3121 = vadd.f32 %v2832, %v3120
  %v3122 = vpop.f32.mrf.mxu0
  %3123 = vmatprep.mubr.bf16.mxu0 %v1525
  %3124 = vmatmul.mubr.bf16.gmra.mxu0 %v1524
  %v3125 = vpop.f32.mrf.mxu0
  %v3126 = vadd.f32 %v2837, %v3125
  %v3127 = vpop.f32.mrf.mxu0
  %v3128 = vpop.f32.mrf.mxu0
  %v3129 = vadd.f32 %v2840, %v3128
  %v3130 = vpop.f32.mrf.mxu0
  %3131 = vmatprep.mubr.bf16.mxu0 %v1534
  %3132 = vmatmul.mubr.bf16.gmra.mxu0 %v1533
  %v3133 = vpop.f32.mrf.mxu0
  %v3134 = vadd.f32 %v2845, %v3133
  %v3135 = vpop.f32.mrf.mxu0
  %v3136 = vpop.f32.mrf.mxu0
  %v3137 = vadd.f32 %v2848, %v3136
  %v3138 = vpop.f32.mrf.mxu0
  %3139 = vmatprep.mubr.bf16.mxu0 %v1543
  %3140 = vmatmul.mubr.bf16.gmra.mxu0 %v1542
  %v3141 = vpop.f32.mrf.mxu0
  %v3142 = vadd.f32 %v2853, %v3141
  %v3143 = vpop.f32.mrf.mxu0
  %v3144 = vpop.f32.mrf.mxu0
  %v3145 = vadd.f32 %v2856, %v3144
  %v3146 = vpop.f32.mrf.mxu0
  %3147 = vmatprep.mubr.bf16.mxu0 %v1552
  %3148 = vmatmul.mubr.bf16.gmra.mxu0 %v1551
  %v3149 = vpop.f32.mrf.mxu0
  %v3150 = vadd.f32 %v2861, %v3149
  %v3151 = vpop.f32.mrf.mxu0
  %v3152 = vpop.f32.mrf.mxu0
  %v3153 = vadd.f32 %v2864, %v3152
  %v3154 = vpop.f32.mrf.mxu0
  %3155 = vmatprep.mubr.bf16.mxu0 %v1561
  %3156 = vmatmul.mubr.bf16.gmra.mxu0 %v1560
  %v3157 = vpop.f32.mrf.mxu0
  %v3158 = vadd.f32 %v2869, %v3157
  %v3159 = vpop.f32.mrf.mxu0
  %v3160 = vpop.f32.mrf.mxu0
  %v3161 = vadd.f32 %v2872, %v3160
  %v3162 = vpop.f32.mrf.mxu0
  %3163 = vmatprep.mubr.bf16.mxu0 %v1570
  %3164 = vmatmul.mubr.bf16.gmra.mxu0 %v1569
  %v3165 = vpop.f32.mrf.mxu0
  %v3166 = vadd.f32 %v2877, %v3165
  %v3167 = vpop.f32.mrf.mxu0
  %v3168 = vpop.f32.mrf.mxu0
  %v3169 = vadd.f32 %v2880, %v3168
  %v3170 = vpop.f32.mrf.mxu0
  %3171 = vmatprep.mubr.bf16.mxu0 %v1579
  %3172 = vmatmul.mubr.bf16.gmra.mxu0 %v1578
  %v3173 = vpop.f32.mrf.mxu0
  %v3174 = vadd.f32 %v2885, %v3173
  %v3175 = vpop.f32.mrf.mxu0
  %v3176 = vpop.f32.mrf.mxu0
  %v3177 = vadd.f32 %v2888, %v3176
  %v3178 = vpop.f32.mrf.mxu0
  %3179 = vmatprep.mubr.bf16.mxu0 %v1588
  %3180 = vmatmul.mubr.bf16.gmra.mxu0 %v1587
  %v3181 = vpop.f32.mrf.mxu0
  %v3182 = vadd.f32 %v2893, %v3181
  %v3183 = vpop.f32.mrf.mxu0
  %v3184 = vpop.f32.mrf.mxu0
  %v3185 = vadd.f32 %v2896, %v3184
  %v3186 = vpop.f32.mrf.mxu0
  %3187 = vmatprep.mubr.bf16.mxu0 %v1597
  %3188 = vmatmul.mubr.bf16.gmra.mxu0 %v1596
  %v3189 = vpop.f32.mrf.mxu0
  %v3190 = vadd.f32 %v2901, %v3189
  %v3191 = vpop.f32.mrf.mxu0
  %v3192 = vpop.f32.mrf.mxu0
  %v3193 = vadd.f32 %v2904, %v3192
  %v3194 = vpop.f32.mrf.mxu0
  %3195 = vmatprep.mubr.bf16.mxu0 %v1606
  %3196 = vmatmul.mubr.bf16.gmra.mxu0 %v1605
  %v3197 = vpop.f32.mrf.mxu0
  %v3198 = vadd.f32 %v2909, %v3197
  %v3199 = vpop.f32.mrf.mxu0
  %v3200 = vpop.f32.mrf.mxu0
  %v3201 = vadd.f32 %v2912, %v3200
  %v3202 = vpop.f32.mrf.mxu0
  %3203 = vmatprep.mubr.bf16.mxu0 %v1615
  %3204 = vmatmul.mubr.bf16.gmra.mxu0 %v1614
  %v3205 = vpop.f32.mrf.mxu0
  %v3206 = vadd.f32 %v2917, %v3205
  %v3207 = vpop.f32.mrf.mxu0
  %v3208 = vpop.f32.mrf.mxu0
  %v3209 = vadd.f32 %v2920, %v3208
  %v3210 = vpop.f32.mrf.mxu0
  %3211 = vmatprep.mubr.bf16.mxu0 %v1624
  %3212 = vmatmul.mubr.bf16.gmra.mxu0 %v1623
  %v3213 = vpop.f32.mrf.mxu0
  %v3214 = vadd.f32 %v2925, %v3213
  %v3215 = vpop.f32.mrf.mxu0
  %v3216 = vpop.f32.mrf.mxu0
  %v3217 = vadd.f32 %v2928, %v3216
  %v3218 = vpop.f32.mrf.mxu0
  %3219 = vmatprep.mubr.bf16.mxu0 %v1633
  %3220 = vmatmul.mubr.bf16.gmra.mxu0 %v1632
  %v3221 = vpop.f32.mrf.mxu0
  %v3222 = vadd.f32 %v2933, %v3221
  %v3223 = vpop.f32.mrf.mxu0
  %v3224 = vpop.f32.mrf.mxu0
  %v3225 = vadd.f32 %v2936, %v3224
  %v3226 = vpop.f32.mrf.mxu0
  %3227 = vmatprep.mubr.bf16.mxu0 %v1642
  %3228 = vmatmul.mubr.bf16.gmra.mxu0 %v1641
  %v3229 = vpop.f32.mrf.mxu0
  %v3230 = vadd.f32 %v2941, %v3229
  %v3231 = vpop.f32.mrf.mxu0
  %v3232 = vpop.f32.mrf.mxu0
  %v3233 = vadd.f32 %v2944, %v3232
  %v3234 = vpop.f32.mrf.mxu0
  %3235 = vmatprep.mubr.bf16.mxu0 %v1651
  %3236 = vmatmul.mubr.bf16.gmra.mxu0 %v1650
  %v3237 = vpop.f32.mrf.mxu0
  %v3238 = vadd.f32 %v2949, %v3237
  %v3239 = vpop.f32.mrf.mxu0
  %v3240 = vpop.f32.mrf.mxu0
  %v3241 = vadd.f32 %v2952, %v3240
  %v3242 = vpop.f32.mrf.mxu0
  %3243 = vmatprep.mubr.bf16.mxu0 %v1660
  %3244 = vmatmul.mubr.bf16.gmra.mxu0 %v1659
  %v3245 = vpop.f32.mrf.mxu0
  %v3246 = vadd.f32 %v2957, %v3245
  %v3247 = vpop.f32.mrf.mxu0
  %v3248 = vpop.f32.mrf.mxu0
  %v3249 = vadd.f32 %v2960, %v3248
  %v3250 = vpop.f32.mrf.mxu0
  %3251 = vmatprep.mubr.bf16.mxu0 %v1669
  %3252 = vmatmul.mubr.bf16.gmra.mxu0 %v1668
  %v3253 = vpop.f32.mrf.mxu0
  %v3254 = vadd.f32 %v2965, %v3253
  %v3255 = vpop.f32.mrf.mxu0
  %v3256 = vpop.f32.mrf.mxu0
  %v3257 = vadd.f32 %v2968, %v3256
  %v3258 = vpop.f32.mrf.mxu0
  %3259 = vdwg.mxu0
  %3260 = vmatprep.subr.bf16.mxu0 0
  %3261 = vmatpush1.bf16.msra.mxu0 %v2304
  %3262 = vmatprep.subr.bf16.mxu0 0
  %3263 = vmatpush1.bf16.msra.mxu0 %v2303
  %3264 = vmatprep.subr.bf16.mxu0 0
  %3265 = vmatpush1.bf16.msra.mxu0 %v2302
  %3266 = vmatprep.subr.bf16.mxu0 0
  %3267 = vmatpush1.bf16.msra.mxu0 %v2301
  %3268 = vmatprep.subr.bf16.mxu0 0
  %3269 = vmatpush1.bf16.msra.mxu0 %v2300
  %3270 = vmatprep.subr.bf16.mxu0 0
  %3271 = vmatpush1.bf16.msra.mxu0 %v2299
  %3272 = vmatprep.subr.bf16.mxu0 0
  %3273 = vmatpush1.bf16.msra.mxu0 %v2298
  %3274 = vmatprep.subr.bf16.mxu0 0
  %3275 = vmatpush1.bf16.msra.mxu0 %v2297
  %3276 = vmatprep.subr.bf16.mxu0 0
  %3277 = vmatpush2.bf16.msra.mxu0 %v2312
  %3278 = vmatprep.subr.bf16.mxu0 0
  %3279 = vmatpush2.bf16.msra.mxu0 %v2311
  %3280 = vmatprep.subr.bf16.mxu0 0
  %3281 = vmatpush2.bf16.msra.mxu0 %v2310
  %3282 = vmatprep.subr.bf16.mxu0 0
  %3283 = vmatpush2.bf16.msra.mxu0 %v2309
  %3284 = vmatprep.subr.bf16.mxu0 0
  %3285 = vmatpush2.bf16.msra.mxu0 %v2308
  %3286 = vmatprep.subr.bf16.mxu0 0
  %3287 = vmatpush2.bf16.msra.mxu0 %v2307
  %3288 = vmatprep.subr.bf16.mxu0 0
  %3289 = vmatpush2.bf16.msra.mxu0 %v2306
  %3290 = vmatprep.subr.bf16.mxu0 0
  %3291 = vmatpush2.bf16.msra.mxu0 %v2305
  %3292 = vmatprep.mubr.bf16.mxu0 %v1392
  %3293 = vmatmul.mubr.bf16.gmra.mxu0 %v1391
  %v3294 = vpop.f32.mrf.mxu0
  %v3295 = vadd.f32 %v3006, %v3294
  %v3296 = vpop.f32.mrf.mxu0
  %v3297 = vpop.f32.mrf.mxu0
  %v3298 = vadd.f32 %v3009, %v3297
  %v3299 = vpop.f32.mrf.mxu0
  %3300 = vmatprep.mubr.bf16.mxu0 %v1401
  %3301 = vmatmul.mubr.bf16.gmra.mxu0 %v1400
  %v3302 = vpop.f32.mrf.mxu0
  %v3303 = vadd.f32 %v3014, %v3302
  %v3304 = vpop.f32.mrf.mxu0
  %v3305 = vpop.f32.mrf.mxu0
  %v3306 = vadd.f32 %v3017, %v3305
  %v3307 = vpop.f32.mrf.mxu0
  %3308 = vmatprep.mubr.bf16.mxu0 %v1410
  %3309 = vmatmul.mubr.bf16.gmra.mxu0 %v1409
  %v3310 = vpop.f32.mrf.mxu0
  %v3311 = vadd.f32 %v3022, %v3310
  %v3312 = vpop.f32.mrf.mxu0
  %v3313 = vpop.f32.mrf.mxu0
  %v3314 = vadd.f32 %v3025, %v3313
  %v3315 = vpop.f32.mrf.mxu0
  %3316 = vmatprep.mubr.bf16.mxu0 %v1419
  %3317 = vmatmul.mubr.bf16.gmra.mxu0 %v1418
  %v3318 = vpop.f32.mrf.mxu0
  %v3319 = vadd.f32 %v3030, %v3318
  %v3320 = vpop.f32.mrf.mxu0
  %v3321 = vpop.f32.mrf.mxu0
  %v3322 = vadd.f32 %v3033, %v3321
  %v3323 = vpop.f32.mrf.mxu0
  %3324 = vmatprep.mubr.bf16.mxu0 %v1428
  %3325 = vmatmul.mubr.bf16.gmra.mxu0 %v1427
  %v3326 = vpop.f32.mrf.mxu0
  %v3327 = vadd.f32 %v3038, %v3326
  %v3328 = vpop.f32.mrf.mxu0
  %v3329 = vpop.f32.mrf.mxu0
  %v3330 = vadd.f32 %v3041, %v3329
  %v3331 = vpop.f32.mrf.mxu0
  %3332 = vmatprep.mubr.bf16.mxu0 %v1437
  %3333 = vmatmul.mubr.bf16.gmra.mxu0 %v1436
  %v3334 = vpop.f32.mrf.mxu0
  %v3335 = vadd.f32 %v3046, %v3334
  %v3336 = vpop.f32.mrf.mxu0
  %v3337 = vpop.f32.mrf.mxu0
  %v3338 = vadd.f32 %v3049, %v3337
  %v3339 = vpop.f32.mrf.mxu0
  %3340 = vmatprep.mubr.bf16.mxu0 %v1446
  %3341 = vmatmul.mubr.bf16.gmra.mxu0 %v1445
  %v3342 = vpop.f32.mrf.mxu0
  %v3343 = vadd.f32 %v3054, %v3342
  %v3344 = vpop.f32.mrf.mxu0
  %v3345 = vpop.f32.mrf.mxu0
  %v3346 = vadd.f32 %v3057, %v3345
  %v3347 = vpop.f32.mrf.mxu0
  %3348 = vmatprep.mubr.bf16.mxu0 %v1455
  %3349 = vmatmul.mubr.bf16.gmra.mxu0 %v1454
  %v3350 = vpop.f32.mrf.mxu0
  %v3351 = vadd.f32 %v3062, %v3350
  %v3352 = vpop.f32.mrf.mxu0
  %v3353 = vpop.f32.mrf.mxu0
  %v3354 = vadd.f32 %v3065, %v3353
  %v3355 = vpop.f32.mrf.mxu0
  %3356 = vmatprep.mubr.bf16.mxu0 %v1464
  %3357 = vmatmul.mubr.bf16.gmra.mxu0 %v1463
  %v3358 = vpop.f32.mrf.mxu0
  %v3359 = vadd.f32 %v3070, %v3358
  %v3360 = vpop.f32.mrf.mxu0
  %v3361 = vpop.f32.mrf.mxu0
  %v3362 = vadd.f32 %v3073, %v3361
  %v3363 = vpop.f32.mrf.mxu0
  %3364 = vmatprep.mubr.bf16.mxu0 %v1473
  %3365 = vmatmul.mubr.bf16.gmra.mxu0 %v1472
  %v3366 = vpop.f32.mrf.mxu0
  %v3367 = vadd.f32 %v3078, %v3366
  %v3368 = vpop.f32.mrf.mxu0
  %v3369 = vpop.f32.mrf.mxu0
  %v3370 = vadd.f32 %v3081, %v3369
  %v3371 = vpop.f32.mrf.mxu0
  %3372 = vmatprep.mubr.bf16.mxu0 %v1482
  %3373 = vmatmul.mubr.bf16.gmra.mxu0 %v1481
  %v3374 = vpop.f32.mrf.mxu0
  %v3375 = vadd.f32 %v3086, %v3374
  %v3376 = vpop.f32.mrf.mxu0
  %v3377 = vpop.f32.mrf.mxu0
  %v3378 = vadd.f32 %v3089, %v3377
  %v3379 = vpop.f32.mrf.mxu0
  %3380 = vmatprep.mubr.bf16.mxu0 %v1491
  %3381 = vmatmul.mubr.bf16.gmra.mxu0 %v1490
  %v3382 = vpop.f32.mrf.mxu0
  %v3383 = vadd.f32 %v3094, %v3382
  %v3384 = vpop.f32.mrf.mxu0
  %v3385 = vpop.f32.mrf.mxu0
  %v3386 = vadd.f32 %v3097, %v3385
  %v3387 = vpop.f32.mrf.mxu0
  %3388 = vmatprep.mubr.bf16.mxu0 %v1500
  %3389 = vmatmul.mubr.bf16.gmra.mxu0 %v1499
  %v3390 = vpop.f32.mrf.mxu0
  %v3391 = vadd.f32 %v3102, %v3390
  %v3392 = vpop.f32.mrf.mxu0
  %v3393 = vpop.f32.mrf.mxu0
  %v3394 = vadd.f32 %v3105, %v3393
  %v3395 = vpop.f32.mrf.mxu0
  %3396 = vmatprep.mubr.bf16.mxu0 %v1509
  %3397 = vmatmul.mubr.bf16.gmra.mxu0 %v1508
  %v3398 = vpop.f32.mrf.mxu0
  %v3399 = vadd.f32 %v3110, %v3398
  %v3400 = vpop.f32.mrf.mxu0
  %v3401 = vpop.f32.mrf.mxu0
  %v3402 = vadd.f32 %v3113, %v3401
  %v3403 = vpop.f32.mrf.mxu0
  %3404 = vmatprep.mubr.bf16.mxu0 %v1518
  %3405 = vmatmul.mubr.bf16.gmra.mxu0 %v1517
  %v3406 = vpop.f32.mrf.mxu0
  %v3407 = vadd.f32 %v3118, %v3406
  %v3408 = vpop.f32.mrf.mxu0
  %v3409 = vpop.f32.mrf.mxu0
  %v3410 = vadd.f32 %v3121, %v3409
  %v3411 = vpop.f32.mrf.mxu0
  %3412 = vmatprep.mubr.bf16.mxu0 %v1527
  %3413 = vmatmul.mubr.bf16.gmra.mxu0 %v1526
  %v3414 = vpop.f32.mrf.mxu0
  %v3415 = vadd.f32 %v3126, %v3414
  %v3416 = vpop.f32.mrf.mxu0
  %v3417 = vpop.f32.mrf.mxu0
  %v3418 = vadd.f32 %v3129, %v3417
  %v3419 = vpop.f32.mrf.mxu0
  %3420 = vmatprep.mubr.bf16.mxu0 %v1536
  %3421 = vmatmul.mubr.bf16.gmra.mxu0 %v1535
  %v3422 = vpop.f32.mrf.mxu0
  %v3423 = vadd.f32 %v3134, %v3422
  %v3424 = vpop.f32.mrf.mxu0
  %v3425 = vpop.f32.mrf.mxu0
  %v3426 = vadd.f32 %v3137, %v3425
  %v3427 = vpop.f32.mrf.mxu0
  %3428 = vmatprep.mubr.bf16.mxu0 %v1545
  %3429 = vmatmul.mubr.bf16.gmra.mxu0 %v1544
  %v3430 = vpop.f32.mrf.mxu0
  %v3431 = vadd.f32 %v3142, %v3430
  %v3432 = vpop.f32.mrf.mxu0
  %v3433 = vpop.f32.mrf.mxu0
  %v3434 = vadd.f32 %v3145, %v3433
  %v3435 = vpop.f32.mrf.mxu0
  %3436 = vmatprep.mubr.bf16.mxu0 %v1554
  %3437 = vmatmul.mubr.bf16.gmra.mxu0 %v1553
  %v3438 = vpop.f32.mrf.mxu0
  %v3439 = vadd.f32 %v3150, %v3438
  %v3440 = vpop.f32.mrf.mxu0
  %v3441 = vpop.f32.mrf.mxu0
  %v3442 = vadd.f32 %v3153, %v3441
  %v3443 = vpop.f32.mrf.mxu0
  %3444 = vmatprep.mubr.bf16.mxu0 %v1563
  %3445 = vmatmul.mubr.bf16.gmra.mxu0 %v1562
  %v3446 = vpop.f32.mrf.mxu0
  %v3447 = vadd.f32 %v3158, %v3446
  %v3448 = vpop.f32.mrf.mxu0
  %v3449 = vpop.f32.mrf.mxu0
  %v3450 = vadd.f32 %v3161, %v3449
  %v3451 = vpop.f32.mrf.mxu0
  %3452 = vmatprep.mubr.bf16.mxu0 %v1572
  %3453 = vmatmul.mubr.bf16.gmra.mxu0 %v1571
  %v3454 = vpop.f32.mrf.mxu0
  %v3455 = vadd.f32 %v3166, %v3454
  %v3456 = vpop.f32.mrf.mxu0
  %v3457 = vpop.f32.mrf.mxu0
  %v3458 = vadd.f32 %v3169, %v3457
  %v3459 = vpop.f32.mrf.mxu0
  %3460 = vmatprep.mubr.bf16.mxu0 %v1581
  %3461 = vmatmul.mubr.bf16.gmra.mxu0 %v1580
  %v3462 = vpop.f32.mrf.mxu0
  %v3463 = vadd.f32 %v3174, %v3462
  %v3464 = vpop.f32.mrf.mxu0
  %v3465 = vpop.f32.mrf.mxu0
  %v3466 = vadd.f32 %v3177, %v3465
  %v3467 = vpop.f32.mrf.mxu0
  %3468 = vmatprep.mubr.bf16.mxu0 %v1590
  %3469 = vmatmul.mubr.bf16.gmra.mxu0 %v1589
  %v3470 = vpop.f32.mrf.mxu0
  %v3471 = vadd.f32 %v3182, %v3470
  %v3472 = vpop.f32.mrf.mxu0
  %v3473 = vpop.f32.mrf.mxu0
  %v3474 = vadd.f32 %v3185, %v3473
  %v3475 = vpop.f32.mrf.mxu0
  %3476 = vmatprep.mubr.bf16.mxu0 %v1599
  %3477 = vmatmul.mubr.bf16.gmra.mxu0 %v1598
  %v3478 = vpop.f32.mrf.mxu0
  %v3479 = vadd.f32 %v3190, %v3478
  %v3480 = vpop.f32.mrf.mxu0
  %v3481 = vpop.f32.mrf.mxu0
  %v3482 = vadd.f32 %v3193, %v3481
  %v3483 = vpop.f32.mrf.mxu0
  %3484 = vmatprep.mubr.bf16.mxu0 %v1608
  %3485 = vmatmul.mubr.bf16.gmra.mxu0 %v1607
  %v3486 = vpop.f32.mrf.mxu0
  %v3487 = vadd.f32 %v3198, %v3486
  %v3488 = vpop.f32.mrf.mxu0
  %v3489 = vpop.f32.mrf.mxu0
  %v3490 = vadd.f32 %v3201, %v3489
  %v3491 = vpop.f32.mrf.mxu0
  %3492 = vmatprep.mubr.bf16.mxu0 %v1617
  %3493 = vmatmul.mubr.bf16.gmra.mxu0 %v1616
  %v3494 = vpop.f32.mrf.mxu0
  %v3495 = vadd.f32 %v3206, %v3494
  %v3496 = vpop.f32.mrf.mxu0
  %v3497 = vpop.f32.mrf.mxu0
  %v3498 = vadd.f32 %v3209, %v3497
  %v3499 = vpop.f32.mrf.mxu0
  %3500 = vmatprep.mubr.bf16.mxu0 %v1626
  %3501 = vmatmul.mubr.bf16.gmra.mxu0 %v1625
  %v3502 = vpop.f32.mrf.mxu0
  %v3503 = vadd.f32 %v3214, %v3502
  %v3504 = vpop.f32.mrf.mxu0
  %v3505 = vpop.f32.mrf.mxu0
  %v3506 = vadd.f32 %v3217, %v3505
  %v3507 = vpop.f32.mrf.mxu0
  %3508 = vmatprep.mubr.bf16.mxu0 %v1635
  %3509 = vmatmul.mubr.bf16.gmra.mxu0 %v1634
  %v3510 = vpop.f32.mrf.mxu0
  %v3511 = vadd.f32 %v3222, %v3510
  %v3512 = vpop.f32.mrf.mxu0
  %v3513 = vpop.f32.mrf.mxu0
  %v3514 = vadd.f32 %v3225, %v3513
  %v3515 = vpop.f32.mrf.mxu0
  %3516 = vmatprep.mubr.bf16.mxu0 %v1644
  %3517 = vmatmul.mubr.bf16.gmra.mxu0 %v1643
  %v3518 = vpop.f32.mrf.mxu0
  %v3519 = vadd.f32 %v3230, %v3518
  %v3520 = vpop.f32.mrf.mxu0
  %v3521 = vpop.f32.mrf.mxu0
  %v3522 = vadd.f32 %v3233, %v3521
  %v3523 = vpop.f32.mrf.mxu0
  %3524 = vmatprep.mubr.bf16.mxu0 %v1653
  %3525 = vmatmul.mubr.bf16.gmra.mxu0 %v1652
  %v3526 = vpop.f32.mrf.mxu0
  %v3527 = vadd.f32 %v3238, %v3526
  %v3528 = vpop.f32.mrf.mxu0
  %v3529 = vpop.f32.mrf.mxu0
  %v3530 = vadd.f32 %v3241, %v3529
  %v3531 = vpop.f32.mrf.mxu0
  %3532 = vmatprep.mubr.bf16.mxu0 %v1662
  %3533 = vmatmul.mubr.bf16.gmra.mxu0 %v1661
  %v3534 = vpop.f32.mrf.mxu0
  %v3535 = vadd.f32 %v3246, %v3534
  %v3536 = vpop.f32.mrf.mxu0
  %v3537 = vpop.f32.mrf.mxu0
  %v3538 = vadd.f32 %v3249, %v3537
  %v3539 = vpop.f32.mrf.mxu0
  %3540 = vmatprep.mubr.bf16.mxu0 %v1671
  %3541 = vmatmul.mubr.bf16.gmra.mxu0 %v1670
  %v3542 = vpop.f32.mrf.mxu0
  %v3543 = vadd.f32 %v3254, %v3542
  %v3544 = vpop.f32.mrf.mxu0
  %v3545 = vpop.f32.mrf.mxu0
  %v3546 = vadd.f32 %v3257, %v3545
  %v3547 = vpop.f32.mrf.mxu0
  %3548 = vdwg.mxu0
  %3549 = vmatprep.subr.bf16.mxu0 0
  %3550 = vmatpush1.bf16.msra.mxu0 %v2320
  %3551 = vmatprep.subr.bf16.mxu0 0
  %3552 = vmatpush1.bf16.msra.mxu0 %v2319
  %3553 = vmatprep.subr.bf16.mxu0 0
  %3554 = vmatpush1.bf16.msra.mxu0 %v2318
  %3555 = vmatprep.subr.bf16.mxu0 0
  %3556 = vmatpush1.bf16.msra.mxu0 %v2317
  %3557 = vmatprep.subr.bf16.mxu0 0
  %3558 = vmatpush1.bf16.msra.mxu0 %v2316
  %3559 = vmatprep.subr.bf16.mxu0 0
  %3560 = vmatpush1.bf16.msra.mxu0 %v2315
  %3561 = vmatprep.subr.bf16.mxu0 0
  %3562 = vmatpush1.bf16.msra.mxu0 %v2314
  %3563 = vmatprep.subr.bf16.mxu0 0
  %3564 = vmatpush1.bf16.msra.mxu0 %v2313
  %3565 = vmatprep.subr.bf16.mxu0 0
  %3566 = vmatpush2.bf16.msra.mxu0 0
  %3567 = vmatprep.subr.bf16.mxu0 0
  %3568 = vmatpush2.bf16.msra.mxu0 0
  %3569 = vmatprep.subr.bf16.mxu0 0
  %3570 = vmatpush2.bf16.msra.mxu0 0
  %3571 = vmatprep.subr.bf16.mxu0 0
  %3572 = vmatpush2.bf16.msra.mxu0 0
  %3573 = vmatprep.subr.bf16.mxu0 0
  %3574 = vmatpush2.bf16.msra.mxu0 0
  %3575 = vmatprep.subr.bf16.mxu0 0
  %3576 = vmatpush2.bf16.msra.mxu0 0
  %3577 = vmatprep.subr.bf16.mxu0 0
  %3578 = vmatpush2.bf16.msra.mxu0 0
  %3579 = vmatprep.subr.bf16.mxu0 0
  %3580 = vmatpush2.bf16.msra.mxu0 0
  %3581 = vmatprep.mubr.bf16.mxu0 0
  %3582 = vmatmul.mubr.bf16.gmra.mxu0 %v1393
  %v3583 = vpop.f32.mrf.mxu0
  %v3584 = vadd.f32 %v3295, %v3583
  %v3585 = vpop.f32.mrf.mxu0
  %v3586 = vpop.f32.mrf.mxu0
  %v3587 = vadd.f32 %v3298, %v3586
  %v3588 = vpop.f32.mrf.mxu0
  %3589 = vmatprep.mubr.bf16.mxu0 0
  %3590 = vmatmul.mubr.bf16.gmra.mxu0 %v1402
  %v3591 = vpop.f32.mrf.mxu0
  %v3592 = vadd.f32 %v3303, %v3591
  %v3593 = vpop.f32.mrf.mxu0
  %v3594 = vpop.f32.mrf.mxu0
  %v3595 = vadd.f32 %v3306, %v3594
  %v3596 = vpop.f32.mrf.mxu0
  %3597 = vmatprep.mubr.bf16.mxu0 0
  %3598 = vmatmul.mubr.bf16.gmra.mxu0 %v1411
  %v3599 = vpop.f32.mrf.mxu0
  %v3600 = vadd.f32 %v3311, %v3599
  %v3601 = vpop.f32.mrf.mxu0
  %v3602 = vpop.f32.mrf.mxu0
  %v3603 = vadd.f32 %v3314, %v3602
  %v3604 = vpop.f32.mrf.mxu0
  %3605 = vmatprep.mubr.bf16.mxu0 0
  %3606 = vmatmul.mubr.bf16.gmra.mxu0 %v1420
  %v3607 = vpop.f32.mrf.mxu0
  %v3608 = vadd.f32 %v3319, %v3607
  %v3609 = vpop.f32.mrf.mxu0
  %v3610 = vpop.f32.mrf.mxu0
  %v3611 = vadd.f32 %v3322, %v3610
  %v3612 = vpop.f32.mrf.mxu0
  %3613 = vmatprep.mubr.bf16.mxu0 0
  %3614 = vmatmul.mubr.bf16.gmra.mxu0 %v1429
  %v3615 = vpop.f32.mrf.mxu0
  %v3616 = vadd.f32 %v3327, %v3615
  %v3617 = vpop.f32.mrf.mxu0
  %v3618 = vpop.f32.mrf.mxu0
  %v3619 = vadd.f32 %v3330, %v3618
  %v3620 = vpop.f32.mrf.mxu0
  %3621 = vmatprep.mubr.bf16.mxu0 0
  %3622 = vmatmul.mubr.bf16.gmra.mxu0 %v1438
  %v3623 = vpop.f32.mrf.mxu0
  %v3624 = vadd.f32 %v3335, %v3623
  %v3625 = vpop.f32.mrf.mxu0
  %v3626 = vpop.f32.mrf.mxu0
  %v3627 = vadd.f32 %v3338, %v3626
  %v3628 = vpop.f32.mrf.mxu0
  %3629 = vmatprep.mubr.bf16.mxu0 0
  %3630 = vmatmul.mubr.bf16.gmra.mxu0 %v1447
  %v3631 = vpop.f32.mrf.mxu0
  %v3632 = vadd.f32 %v3343, %v3631
  %v3633 = vpop.f32.mrf.mxu0
  %v3634 = vpop.f32.mrf.mxu0
  %v3635 = vadd.f32 %v3346, %v3634
  %v3636 = vpop.f32.mrf.mxu0
  %3637 = vmatprep.mubr.bf16.mxu0 0
  %3638 = vmatmul.mubr.bf16.gmra.mxu0 %v1456
  %v3639 = vpop.f32.mrf.mxu0
  %v3640 = vadd.f32 %v3351, %v3639
  %v3641 = vpop.f32.mrf.mxu0
  %v3642 = vpop.f32.mrf.mxu0
  %v3643 = vadd.f32 %v3354, %v3642
  %v3644 = vpop.f32.mrf.mxu0
  %3645 = vmatprep.mubr.bf16.mxu0 0
  %3646 = vmatmul.mubr.bf16.gmra.mxu0 %v1465
  %v3647 = vpop.f32.mrf.mxu0
  %v3648 = vadd.f32 %v3359, %v3647
  %v3649 = vpop.f32.mrf.mxu0
  %v3650 = vpop.f32.mrf.mxu0
  %v3651 = vadd.f32 %v3362, %v3650
  %v3652 = vpop.f32.mrf.mxu0
  %3653 = vmatprep.mubr.bf16.mxu0 0
  %3654 = vmatmul.mubr.bf16.gmra.mxu0 %v1474
  %v3655 = vpop.f32.mrf.mxu0
  %v3656 = vadd.f32 %v3367, %v3655
  %v3657 = vpop.f32.mrf.mxu0
  %v3658 = vpop.f32.mrf.mxu0
  %v3659 = vadd.f32 %v3370, %v3658
  %v3660 = vpop.f32.mrf.mxu0
  %3661 = vmatprep.mubr.bf16.mxu0 0
  %3662 = vmatmul.mubr.bf16.gmra.mxu0 %v1483
  %v3663 = vpop.f32.mrf.mxu0
  %v3664 = vadd.f32 %v3375, %v3663
  %v3665 = vpop.f32.mrf.mxu0
  %v3666 = vpop.f32.mrf.mxu0
  %v3667 = vadd.f32 %v3378, %v3666
  %v3668 = vpop.f32.mrf.mxu0
  %3669 = vmatprep.mubr.bf16.mxu0 0
  %3670 = vmatmul.mubr.bf16.gmra.mxu0 %v1492
  %v3671 = vpop.f32.mrf.mxu0
  %v3672 = vadd.f32 %v3383, %v3671
  %v3673 = vpop.f32.mrf.mxu0
  %v3674 = vpop.f32.mrf.mxu0
  %v3675 = vadd.f32 %v3386, %v3674
  %v3676 = vpop.f32.mrf.mxu0
  %3677 = vmatprep.mubr.bf16.mxu0 0
  %3678 = vmatmul.mubr.bf16.gmra.mxu0 %v1501
  %v3679 = vpop.f32.mrf.mxu0
  %v3680 = vadd.f32 %v3391, %v3679
  %v3681 = vpop.f32.mrf.mxu0
  %v3682 = vpop.f32.mrf.mxu0
  %v3683 = vadd.f32 %v3394, %v3682
  %v3684 = vpop.f32.mrf.mxu0
  %3685 = vmatprep.mubr.bf16.mxu0 0
  %3686 = vmatmul.mubr.bf16.gmra.mxu0 %v1510
  %v3687 = vpop.f32.mrf.mxu0
  %v3688 = vadd.f32 %v3399, %v3687
  %v3689 = vpop.f32.mrf.mxu0
  %v3690 = vpop.f32.mrf.mxu0
  %v3691 = vadd.f32 %v3402, %v3690
  %v3692 = vpop.f32.mrf.mxu0
  %3693 = vmatprep.mubr.bf16.mxu0 0
  %3694 = vmatmul.mubr.bf16.gmra.mxu0 %v1519
  %v3695 = vpop.f32.mrf.mxu0
  %v3696 = vadd.f32 %v3407, %v3695
  %v3697 = vpop.f32.mrf.mxu0
  %v3698 = vpop.f32.mrf.mxu0
  %v3699 = vadd.f32 %v3410, %v3698
  %v3700 = vpop.f32.mrf.mxu0
  %3701 = vmatprep.mubr.bf16.mxu0 0
  %3702 = vmatmul.mubr.bf16.gmra.mxu0 %v1528
  %v3703 = vpop.f32.mrf.mxu0
  %v3704 = vadd.f32 %v3415, %v3703
  %v3705 = vpop.f32.mrf.mxu0
  %v3706 = vpop.f32.mrf.mxu0
  %v3707 = vadd.f32 %v3418, %v3706
  %v3708 = vpop.f32.mrf.mxu0
  %3709 = vmatprep.mubr.bf16.mxu0 0
  %3710 = vmatmul.mubr.bf16.gmra.mxu0 %v1537
  %v3711 = vpop.f32.mrf.mxu0
  %v3712 = vadd.f32 %v3423, %v3711
  %v3713 = vpop.f32.mrf.mxu0
  %v3714 = vpop.f32.mrf.mxu0
  %v3715 = vadd.f32 %v3426, %v3714
  %v3716 = vpop.f32.mrf.mxu0
  %3717 = vmatprep.mubr.bf16.mxu0 0
  %3718 = vmatmul.mubr.bf16.gmra.mxu0 %v1546
  %v3719 = vpop.f32.mrf.mxu0
  %v3720 = vadd.f32 %v3431, %v3719
  %v3721 = vpop.f32.mrf.mxu0
  %v3722 = vpop.f32.mrf.mxu0
  %v3723 = vadd.f32 %v3434, %v3722
  %v3724 = vpop.f32.mrf.mxu0
  %3725 = vmatprep.mubr.bf16.mxu0 0
  %3726 = vmatmul.mubr.bf16.gmra.mxu0 %v1555
  %v3727 = vpop.f32.mrf.mxu0
  %v3728 = vadd.f32 %v3439, %v3727
  %v3729 = vpop.f32.mrf.mxu0
  %v3730 = vpop.f32.mrf.mxu0
  %v3731 = vadd.f32 %v3442, %v3730
  %v3732 = vpop.f32.mrf.mxu0
  %3733 = vmatprep.mubr.bf16.mxu0 0
  %3734 = vmatmul.mubr.bf16.gmra.mxu0 %v1564
  %v3735 = vpop.f32.mrf.mxu0
  %v3736 = vadd.f32 %v3447, %v3735
  %v3737 = vpop.f32.mrf.mxu0
  %v3738 = vpop.f32.mrf.mxu0
  %v3739 = vadd.f32 %v3450, %v3738
  %v3740 = vpop.f32.mrf.mxu0
  %3741 = vmatprep.mubr.bf16.mxu0 0
  %3742 = vmatmul.mubr.bf16.gmra.mxu0 %v1573
  %v3743 = vpop.f32.mrf.mxu0
  %v3744 = vadd.f32 %v3455, %v3743
  %v3745 = vpop.f32.mrf.mxu0
  %v3746 = vpop.f32.mrf.mxu0
  %v3747 = vadd.f32 %v3458, %v3746
  %v3748 = vpop.f32.mrf.mxu0
  %3749 = vmatprep.mubr.bf16.mxu0 0
  %3750 = vmatmul.mubr.bf16.gmra.mxu0 %v1582
  %v3751 = vpop.f32.mrf.mxu0
  %v3752 = vadd.f32 %v3463, %v3751
  %v3753 = vpop.f32.mrf.mxu0
  %v3754 = vpop.f32.mrf.mxu0
  %v3755 = vadd.f32 %v3466, %v3754
  %v3756 = vpop.f32.mrf.mxu0
  %3757 = vmatprep.mubr.bf16.mxu0 0
  %3758 = vmatmul.mubr.bf16.gmra.mxu0 %v1591
  %v3759 = vpop.f32.mrf.mxu0
  %v3760 = vadd.f32 %v3471, %v3759
  %v3761 = vpop.f32.mrf.mxu0
  %v3762 = vpop.f32.mrf.mxu0
  %v3763 = vadd.f32 %v3474, %v3762
  %v3764 = vpop.f32.mrf.mxu0
  %3765 = vmatprep.mubr.bf16.mxu0 0
  %3766 = vmatmul.mubr.bf16.gmra.mxu0 %v1600
  %v3767 = vpop.f32.mrf.mxu0
  %v3768 = vadd.f32 %v3479, %v3767
  %v3769 = vpop.f32.mrf.mxu0
  %v3770 = vpop.f32.mrf.mxu0
  %v3771 = vadd.f32 %v3482, %v3770
  %v3772 = vpop.f32.mrf.mxu0
  %3773 = vmatprep.mubr.bf16.mxu0 0
  %3774 = vmatmul.mubr.bf16.gmra.mxu0 %v1609
  %v3775 = vpop.f32.mrf.mxu0
  %v3776 = vadd.f32 %v3487, %v3775
  %v3777 = vpop.f32.mrf.mxu0
  %v3778 = vpop.f32.mrf.mxu0
  %v3779 = vadd.f32 %v3490, %v3778
  %v3780 = vpop.f32.mrf.mxu0
  %3781 = vmatprep.mubr.bf16.mxu0 0
  %3782 = vmatmul.mubr.bf16.gmra.mxu0 %v1618
  %v3783 = vpop.f32.mrf.mxu0
  %v3784 = vadd.f32 %v3495, %v3783
  %v3785 = vpop.f32.mrf.mxu0
  %v3786 = vpop.f32.mrf.mxu0
  %v3787 = vadd.f32 %v3498, %v3786
  %v3788 = vpop.f32.mrf.mxu0
  %3789 = vmatprep.mubr.bf16.mxu0 0
  %3790 = vmatmul.mubr.bf16.gmra.mxu0 %v1627
  %v3791 = vpop.f32.mrf.mxu0
  %v3792 = vadd.f32 %v3503, %v3791
  %v3793 = vpop.f32.mrf.mxu0
  %v3794 = vpop.f32.mrf.mxu0
  %v3795 = vadd.f32 %v3506, %v3794
  %v3796 = vpop.f32.mrf.mxu0
  %3797 = vmatprep.mubr.bf16.mxu0 0
  %3798 = vmatmul.mubr.bf16.gmra.mxu0 %v1636
  %v3799 = vpop.f32.mrf.mxu0
  %v3800 = vadd.f32 %v3511, %v3799
  %v3801 = vpop.f32.mrf.mxu0
  %v3802 = vpop.f32.mrf.mxu0
  %v3803 = vadd.f32 %v3514, %v3802
  %v3804 = vpop.f32.mrf.mxu0
  %3805 = vmatprep.mubr.bf16.mxu0 0
  %3806 = vmatmul.mubr.bf16.gmra.mxu0 %v1645
  %v3807 = vpop.f32.mrf.mxu0
  %v3808 = vadd.f32 %v3519, %v3807
  %v3809 = vpop.f32.mrf.mxu0
  %v3810 = vpop.f32.mrf.mxu0
  %v3811 = vadd.f32 %v3522, %v3810
  %v3812 = vpop.f32.mrf.mxu0
  %3813 = vmatprep.mubr.bf16.mxu0 0
  %3814 = vmatmul.mubr.bf16.gmra.mxu0 %v1654
  %v3815 = vpop.f32.mrf.mxu0
  %v3816 = vadd.f32 %v3527, %v3815
  %v3817 = vpop.f32.mrf.mxu0
  %v3818 = vpop.f32.mrf.mxu0
  %v3819 = vadd.f32 %v3530, %v3818
  %v3820 = vpop.f32.mrf.mxu0
  %3821 = vmatprep.mubr.bf16.mxu0 0
  %3822 = vmatmul.mubr.bf16.gmra.mxu0 %v1663
  %v3823 = vpop.f32.mrf.mxu0
  %v3824 = vadd.f32 %v3535, %v3823
  %v3825 = vpop.f32.mrf.mxu0
  %v3826 = vpop.f32.mrf.mxu0
  %v3827 = vadd.f32 %v3538, %v3826
  %v3828 = vpop.f32.mrf.mxu0
  %3829 = vmatprep.mubr.bf16.mxu0 0
  %3830 = vmatmul.mubr.bf16.gmra.mxu0 %v1672
  %v3831 = vpop.f32.mrf.mxu0
  %v3832 = vadd.f32 %v3543, %v3831
  %v3833 = vpop.f32.mrf.mxu0
  %v3834 = vpop.f32.mrf.mxu0
  %v3835 = vadd.f32 %v3546, %v3834
  %v3836 = vpop.f32.mrf.mxu0
  %3837 = vdwg.mxu0
  %v3838 = vsub.f32 0.0, %v3584
  %v3839 = vsub.f32 0.0, %v3587
  %v3840 = vsub.f32 0.0, %v3592
  %v3841 = vsub.f32 0.0, %v3595
  %v3842 = vsub.f32 0.0, %v3600
  %v3843 = vsub.f32 0.0, %v3603
  %v3844 = vsub.f32 0.0, %v3608
  %v3845 = vsub.f32 0.0, %v3611
  %v3846 = vsub.f32 0.0, %v3616
  %v3847 = vsub.f32 0.0, %v3619
  %v3848 = vsub.f32 0.0, %v3624
  %v3849 = vsub.f32 0.0, %v3627
  %v3850 = vsub.f32 0.0, %v3632
  %v3851 = vsub.f32 0.0, %v3635
  %v3852 = vsub.f32 0.0, %v3640
  %v3853 = vsub.f32 0.0, %v3643
  %v3854 = vsub.f32 0.0, %v3648
  %v3855 = vsub.f32 0.0, %v3651
  %v3856 = vsub.f32 0.0, %v3656
  %v3857 = vsub.f32 0.0, %v3659
  %v3858 = vsub.f32 0.0, %v3664
  %v3859 = vsub.f32 0.0, %v3667
  %v3860 = vsub.f32 0.0, %v3672
  %v3861 = vsub.f32 0.0, %v3675
  %v3862 = vsub.f32 0.0, %v3680
  %v3863 = vsub.f32 0.0, %v3683
  %v3864 = vsub.f32 0.0, %v3688
  %v3865 = vsub.f32 0.0, %v3691
  %v3866 = vsub.f32 0.0, %v3696
  %v3867 = vsub.f32 0.0, %v3699
  %v3868 = vsub.f32 0.0, %v3704
  %v3869 = vsub.f32 0.0, %v3707
  %v3870 = vsub.f32 0.0, %v3712
  %v3871 = vsub.f32 0.0, %v3715
  %v3872 = vsub.f32 0.0, %v3720
  %v3873 = vsub.f32 0.0, %v3723
  %v3874 = vsub.f32 0.0, %v3728
  %v3875 = vsub.f32 0.0, %v3731
  %v3876 = vsub.f32 0.0, %v3736
  %v3877 = vsub.f32 0.0, %v3739
  %v3878 = vsub.f32 0.0, %v3744
  %v3879 = vsub.f32 0.0, %v3747
  %v3880 = vsub.f32 0.0, %v3752
  %v3881 = vsub.f32 0.0, %v3755
  %v3882 = vsub.f32 0.0, %v3760
  %v3883 = vsub.f32 0.0, %v3763
  %v3884 = vsub.f32 0.0, %v3768
  %v3885 = vsub.f32 0.0, %v3771
  %v3886 = vsub.f32 0.0, %v3776
  %v3887 = vsub.f32 0.0, %v3779
  %v3888 = vsub.f32 0.0, %v3784
  %v3889 = vsub.f32 0.0, %v3787
  %v3890 = vsub.f32 0.0, %v3792
  %v3891 = vsub.f32 0.0, %v3795
  %v3892 = vsub.f32 0.0, %v3800
  %v3893 = vsub.f32 0.0, %v3803
  %v3894 = vsub.f32 0.0, %v3808
  %v3895 = vsub.f32 0.0, %v3811
  %v3896 = vsub.f32 0.0, %v3816
  %v3897 = vsub.f32 0.0, %v3819
  %v3898 = vsub.f32 0.0, %v3824
  %v3899 = vsub.f32 0.0, %v3827
  %v3900 = vsub.f32 0.0, %v3832
  %v3901 = vsub.f32 0.0, %v3835
  %v3902 = vmul.f32 %v3838, 1.442695
  %v3903 = vpow.pop %v3902
  %v3904 = vmul.f32 %v3839, 1.442695
  %v3905 = vpow.pop %v3904
  %v3906 = vmul.f32 %v3840, 1.442695
  %v3907 = vpow.pop %v3906
  %v3908 = vmul.f32 %v3841, 1.442695
  %v3909 = vpow.pop %v3908
  %v3910 = vmul.f32 %v3842, 1.442695
  %v3911 = vpow.pop %v3910
  %v3912 = vmul.f32 %v3843, 1.442695
  %v3913 = vpow.pop %v3912
  %v3914 = vmul.f32 %v3844, 1.442695
  %v3915 = vpow.pop %v3914
  %v3916 = vmul.f32 %v3845, 1.442695
  %v3917 = vpow.pop %v3916
  %v3918 = vmul.f32 %v3846, 1.442695
  %v3919 = vpow.pop %v3918
  %v3920 = vmul.f32 %v3847, 1.442695
  %v3921 = vpow.pop %v3920
  %v3922 = vmul.f32 %v3848, 1.442695
  %v3923 = vpow.pop %v3922
  %v3924 = vmul.f32 %v3849, 1.442695
  %v3925 = vpow.pop %v3924
  %v3926 = vmul.f32 %v3850, 1.442695
  %v3927 = vpow.pop %v3926
  %v3928 = vmul.f32 %v3851, 1.442695
  %v3929 = vpow.pop %v3928
  %v3930 = vmul.f32 %v3852, 1.442695
  %v3931 = vpow.pop %v3930
  %v3932 = vmul.f32 %v3853, 1.442695
  %v3933 = vpow.pop %v3932
  %v3934 = vmul.f32 %v3854, 1.442695
  %v3935 = vpow.pop %v3934
  %v3936 = vmul.f32 %v3855, 1.442695
  %v3937 = vpow.pop %v3936
  %v3938 = vmul.f32 %v3856, 1.442695
  %v3939 = vpow.pop %v3938
  %v3940 = vmul.f32 %v3857, 1.442695
  %v3941 = vpow.pop %v3940
  %v3942 = vmul.f32 %v3858, 1.442695
  %v3943 = vpow.pop %v3942
  %v3944 = vmul.f32 %v3859, 1.442695
  %v3945 = vpow.pop %v3944
  %v3946 = vmul.f32 %v3860, 1.442695
  %v3947 = vpow.pop %v3946
  %v3948 = vmul.f32 %v3861, 1.442695
  %v3949 = vpow.pop %v3948
  %v3950 = vmul.f32 %v3862, 1.442695
  %v3951 = vpow.pop %v3950
  %v3952 = vmul.f32 %v3863, 1.442695
  %v3953 = vpow.pop %v3952
  %v3954 = vmul.f32 %v3864, 1.442695
  %v3955 = vpow.pop %v3954
  %v3956 = vmul.f32 %v3865, 1.442695
  %v3957 = vpow.pop %v3956
  %v3958 = vmul.f32 %v3866, 1.442695
  %v3959 = vpow.pop %v3958
  %v3960 = vmul.f32 %v3867, 1.442695
  %v3961 = vpow.pop %v3960
  %v3962 = vmul.f32 %v3868, 1.442695
  %v3963 = vpow.pop %v3962
  %v3964 = vmul.f32 %v3869, 1.442695
  %v3965 = vpow.pop %v3964
  %v3966 = vmul.f32 %v3870, 1.442695
  %v3967 = vpow.pop %v3966
  %v3968 = vmul.f32 %v3871, 1.442695
  %v3969 = vpow.pop %v3968
  %v3970 = vmul.f32 %v3872, 1.442695
  %v3971 = vpow.pop %v3970
  %v3972 = vmul.f32 %v3873, 1.442695
  %v3973 = vpow.pop %v3972
  %v3974 = vmul.f32 %v3874, 1.442695
  %v3975 = vpow.pop %v3974
  %v3976 = vmul.f32 %v3875, 1.442695
  %v3977 = vpow.pop %v3976
  %v3978 = vmul.f32 %v3876, 1.442695
  %v3979 = vpow.pop %v3978
  %v3980 = vmul.f32 %v3877, 1.442695
  %v3981 = vpow.pop %v3980
  %v3982 = vmul.f32 %v3878, 1.442695
  %v3983 = vpow.pop %v3982
  %v3984 = vmul.f32 %v3879, 1.442695
  %v3985 = vpow.pop %v3984
  %v3986 = vmul.f32 %v3880, 1.442695
  %v3987 = vpow.pop %v3986
  %v3988 = vmul.f32 %v3881, 1.442695
  %v3989 = vpow.pop %v3988
  %v3990 = vmul.f32 %v3882, 1.442695
  %v3991 = vpow.pop %v3990
  %v3992 = vmul.f32 %v3883, 1.442695
  %v3993 = vpow.pop %v3992
  %v3994 = vmul.f32 %v3884, 1.442695
  %v3995 = vpow.pop %v3994
  %v3996 = vmul.f32 %v3885, 1.442695
  %v3997 = vpow.pop %v3996
  %v3998 = vmul.f32 %v3886, 1.442695
  %v3999 = vpow.pop %v3998
  %v4000 = vmul.f32 %v3887, 1.442695
  %v4001 = vpow.pop %v4000
  %v4002 = vmul.f32 %v3888, 1.442695
  %v4003 = vpow.pop %v4002
  %v4004 = vmul.f32 %v3889, 1.442695
  %v4005 = vpow.pop %v4004
  %v4006 = vmul.f32 %v3890, 1.442695
  %v4007 = vpow.pop %v4006
  %v4008 = vmul.f32 %v3891, 1.442695
  %v4009 = vpow.pop %v4008
  %v4010 = vmul.f32 %v3892, 1.442695
  %v4011 = vpow.pop %v4010
  %v4012 = vmul.f32 %v3893, 1.442695
  %v4013 = vpow.pop %v4012
  %v4014 = vmul.f32 %v3894, 1.442695
  %v4015 = vpow.pop %v4014
  %v4016 = vmul.f32 %v3895, 1.442695
  %v4017 = vpow.pop %v4016
  %v4018 = vmul.f32 %v3896, 1.442695
  %v4019 = vpow.pop %v4018
  %v4020 = vmul.f32 %v3897, 1.442695
  %v4021 = vpow.pop %v4020
  %v4022 = vmul.f32 %v3898, 1.442695
  %v4023 = vpow.pop %v4022
  %v4024 = vmul.f32 %v3899, 1.442695
  %v4025 = vpow.pop %v4024
  %v4026 = vmul.f32 %v3900, 1.442695
  %v4027 = vpow.pop %v4026
  %v4028 = vmul.f32 %v3901, 1.442695
  %v4029 = vpow.pop %v4028
  %v4030 = vadd.f32 %v3903, 1.0
  %v4031 = vadd.f32 %v3905, 1.0
  %v4032 = vadd.f32 %v3907, 1.0
  %v4033 = vadd.f32 %v3909, 1.0
  %v4034 = vadd.f32 %v3911, 1.0
  %v4035 = vadd.f32 %v3913, 1.0
  %v4036 = vadd.f32 %v3915, 1.0
  %v4037 = vadd.f32 %v3917, 1.0
  %v4038 = vadd.f32 %v3919, 1.0
  %v4039 = vadd.f32 %v3921, 1.0
  %v4040 = vadd.f32 %v3923, 1.0
  %v4041 = vadd.f32 %v3925, 1.0
  %v4042 = vadd.f32 %v3927, 1.0
  %v4043 = vadd.f32 %v3929, 1.0
  %v4044 = vadd.f32 %v3931, 1.0
  %v4045 = vadd.f32 %v3933, 1.0
  %v4046 = vadd.f32 %v3935, 1.0
  %v4047 = vadd.f32 %v3937, 1.0
  %v4048 = vadd.f32 %v3939, 1.0
  %v4049 = vadd.f32 %v3941, 1.0
  %v4050 = vadd.f32 %v3943, 1.0
  %v4051 = vadd.f32 %v3945, 1.0
  %v4052 = vadd.f32 %v3947, 1.0
  %v4053 = vadd.f32 %v3949, 1.0
  %v4054 = vadd.f32 %v3951, 1.0
  %v4055 = vadd.f32 %v3953, 1.0
  %v4056 = vadd.f32 %v3955, 1.0
  %v4057 = vadd.f32 %v3957, 1.0
  %v4058 = vadd.f32 %v3959, 1.0
  %v4059 = vadd.f32 %v3961, 1.0
  %v4060 = vadd.f32 %v3963, 1.0
  %v4061 = vadd.f32 %v3965, 1.0
  %v4062 = vadd.f32 %v3967, 1.0
  %v4063 = vadd.f32 %v3969, 1.0
  %v4064 = vadd.f32 %v3971, 1.0
  %v4065 = vadd.f32 %v3973, 1.0
  %v4066 = vadd.f32 %v3975, 1.0
  %v4067 = vadd.f32 %v3977, 1.0
  %v4068 = vadd.f32 %v3979, 1.0
  %v4069 = vadd.f32 %v3981, 1.0
  %v4070 = vadd.f32 %v3983, 1.0
  %v4071 = vadd.f32 %v3985, 1.0
  %v4072 = vadd.f32 %v3987, 1.0
  %v4073 = vadd.f32 %v3989, 1.0
  %v4074 = vadd.f32 %v3991, 1.0
  %v4075 = vadd.f32 %v3993, 1.0
  %v4076 = vadd.f32 %v3995, 1.0
  %v4077 = vadd.f32 %v3997, 1.0
  %v4078 = vadd.f32 %v3999, 1.0
  %v4079 = vadd.f32 %v4001, 1.0
  %v4080 = vadd.f32 %v4003, 1.0
  %v4081 = vadd.f32 %v4005, 1.0
  %v4082 = vadd.f32 %v4007, 1.0
  %v4083 = vadd.f32 %v4009, 1.0
  %v4084 = vadd.f32 %v4011, 1.0
  %v4085 = vadd.f32 %v4013, 1.0
  %v4086 = vadd.f32 %v4015, 1.0
  %v4087 = vadd.f32 %v4017, 1.0
  %v4088 = vadd.f32 %v4019, 1.0
  %v4089 = vadd.f32 %v4021, 1.0
  %v4090 = vadd.f32 %v4023, 1.0
  %v4091 = vadd.f32 %v4025, 1.0
  %v4092 = vadd.f32 %v4027, 1.0
  %v4093 = vadd.f32 %v4029, 1.0
  %v4094 = vrcp.pop %v4030
  %v4095 = vrcp.pop %v4031
  %v4096 = vrcp.pop %v4032
  %v4097 = vrcp.pop %v4033
  %v4098 = vrcp.pop %v4034
  %v4099 = vrcp.pop %v4035
  %v4100 = vrcp.pop %v4036
  %v4101 = vrcp.pop %v4037
  %v4102 = vrcp.pop %v4038
  %v4103 = vrcp.pop %v4039
  %v4104 = vrcp.pop %v4040
  %v4105 = vrcp.pop %v4041
  %v4106 = vrcp.pop %v4042
  %v4107 = vrcp.pop %v4043
  %v4108 = vrcp.pop %v4044
  %v4109 = vrcp.pop %v4045
  %v4110 = vrcp.pop %v4046
  %v4111 = vrcp.pop %v4047
  %v4112 = vrcp.pop %v4048
  %v4113 = vrcp.pop %v4049
  %v4114 = vrcp.pop %v4050
  %v4115 = vrcp.pop %v4051
  %v4116 = vrcp.pop %v4052
  %v4117 = vrcp.pop %v4053
  %v4118 = vrcp.pop %v4054
  %v4119 = vrcp.pop %v4055
  %v4120 = vrcp.pop %v4056
  %v4121 = vrcp.pop %v4057
  %v4122 = vrcp.pop %v4058
  %v4123 = vrcp.pop %v4059
  %v4124 = vrcp.pop %v4060
  %v4125 = vrcp.pop %v4061
  %v4126 = vrcp.pop %v4062
  %v4127 = vrcp.pop %v4063
  %v4128 = vrcp.pop %v4064
  %v4129 = vrcp.pop %v4065
  %v4130 = vrcp.pop %v4066
  %v4131 = vrcp.pop %v4067
  %v4132 = vrcp.pop %v4068
  %v4133 = vrcp.pop %v4069
  %v4134 = vrcp.pop %v4070
  %v4135 = vrcp.pop %v4071
  %v4136 = vrcp.pop %v4072
  %v4137 = vrcp.pop %v4073
  %v4138 = vrcp.pop %v4074
  %v4139 = vrcp.pop %v4075
  %v4140 = vrcp.pop %v4076
  %v4141 = vrcp.pop %v4077
  %v4142 = vrcp.pop %v4078
  %v4143 = vrcp.pop %v4079
  %v4144 = vrcp.pop %v4080
  %v4145 = vrcp.pop %v4081
  %v4146 = vrcp.pop %v4082
  %v4147 = vrcp.pop %v4083
  %v4148 = vrcp.pop %v4084
  %v4149 = vrcp.pop %v4085
  %v4150 = vrcp.pop %v4086
  %v4151 = vrcp.pop %v4087
  %v4152 = vrcp.pop %v4088
  %v4153 = vrcp.pop %v4089
  %v4154 = vrcp.pop %v4090
  %v4155 = vrcp.pop %v4091
  %v4156 = vrcp.pop %v4092
  %v4157 = vrcp.pop %v4093
  %v4158 = vmul.f32 %v3584, %v4094
  %v4159 = vmul.f32 %v3587, %v4095
  %v4160 = vmul.f32 %v3592, %v4096
  %v4161 = vmul.f32 %v3595, %v4097
  %v4162 = vmul.f32 %v3600, %v4098
  %v4163 = vmul.f32 %v3603, %v4099
  %v4164 = vmul.f32 %v3608, %v4100
  %v4165 = vmul.f32 %v3611, %v4101
  %v4166 = vmul.f32 %v3616, %v4102
  %v4167 = vmul.f32 %v3619, %v4103
  %v4168 = vmul.f32 %v3624, %v4104
  %v4169 = vmul.f32 %v3627, %v4105
  %v4170 = vmul.f32 %v3632, %v4106
  %v4171 = vmul.f32 %v3635, %v4107
  %v4172 = vmul.f32 %v3640, %v4108
  %v4173 = vmul.f32 %v3643, %v4109
  %v4174 = vmul.f32 %v3648, %v4110
  %v4175 = vmul.f32 %v3651, %v4111
  %v4176 = vmul.f32 %v3656, %v4112
  %v4177 = vmul.f32 %v3659, %v4113
  %v4178 = vmul.f32 %v3664, %v4114
  %v4179 = vmul.f32 %v3667, %v4115
  %v4180 = vmul.f32 %v3672, %v4116
  %v4181 = vmul.f32 %v3675, %v4117
  %v4182 = vmul.f32 %v3680, %v4118
  %v4183 = vmul.f32 %v3683, %v4119
  %v4184 = vmul.f32 %v3688, %v4120
  %v4185 = vmul.f32 %v3691, %v4121
  %v4186 = vmul.f32 %v3696, %v4122
  %v4187 = vmul.f32 %v3699, %v4123
  %v4188 = vmul.f32 %v3704, %v4124
  %v4189 = vmul.f32 %v3707, %v4125
  %v4190 = vmul.f32 %v3712, %v4126
  %v4191 = vmul.f32 %v3715, %v4127
  %v4192 = vmul.f32 %v3720, %v4128
  %v4193 = vmul.f32 %v3723, %v4129
  %v4194 = vmul.f32 %v3728, %v4130
  %v4195 = vmul.f32 %v3731, %v4131
  %v4196 = vmul.f32 %v3736, %v4132
  %v4197 = vmul.f32 %v3739, %v4133
  %v4198 = vmul.f32 %v3744, %v4134
  %v4199 = vmul.f32 %v3747, %v4135
  %v4200 = vmul.f32 %v3752, %v4136
  %v4201 = vmul.f32 %v3755, %v4137
  %v4202 = vmul.f32 %v3760, %v4138
  %v4203 = vmul.f32 %v3763, %v4139
  %v4204 = vmul.f32 %v3768, %v4140
  %v4205 = vmul.f32 %v3771, %v4141
  %v4206 = vmul.f32 %v3776, %v4142
  %v4207 = vmul.f32 %v3779, %v4143
  %v4208 = vmul.f32 %v3784, %v4144
  %v4209 = vmul.f32 %v3787, %v4145
  %v4210 = vmul.f32 %v3792, %v4146
  %v4211 = vmul.f32 %v3795, %v4147
  %v4212 = vmul.f32 %v3800, %v4148
  %v4213 = vmul.f32 %v3803, %v4149
  %v4214 = vmul.f32 %v3808, %v4150
  %v4215 = vmul.f32 %v3811, %v4151
  %v4216 = vmul.f32 %v3816, %v4152
  %v4217 = vmul.f32 %v3819, %v4153
  %v4218 = vmul.f32 %v3824, %v4154
  %v4219 = vmul.f32 %v3827, %v4155
  %v4220 = vmul.f32 %v3832, %v4156
  %v4221 = vmul.f32 %v3835, %v4157
  %v4222 = vld [vmem:[%s3] sm:$0xf]
  %v4223 = vld [vmem:[%s3 + $0x4] sm:$0xf]
  %v4224 = vld [vmem:[%s3 + $0x8] sm:$0xf]
  %v4225 = vld [vmem:[%s3 + $0xc] sm:$0xf]
  %v4226 = vld [vmem:[%s3 + $0x10] sm:$0xf]
  %v4227 = vld [vmem:[%s3 + $0x14] sm:$0xf]
  %v4228 = vld [vmem:[%s3 + $0x18] sm:$0xf]
  %v4229 = vld [vmem:[%s3 + $0x1c] sm:$0xf]
  %v4230 = vld [vmem:[%s3 + $0x20] sm:$0xf]
  %v4231 = vld [vmem:[%s3 + $0x24] sm:$0xf]
  %v4232 = vld [vmem:[%s3 + $0x28] sm:$0xf]
  %v4233 = vld [vmem:[%s3 + $0x2c] sm:$0xf]
  %v4234 = vld [vmem:[%s3 + $0x30] sm:$0xf]
  %v4235 = vld [vmem:[%s3 + $0x34] sm:$0xf]
  %v4236 = vld [vmem:[%s3 + $0x38] sm:$0xf]
  %v4237 = vld [vmem:[%s3 + $0x3c] sm:$0xf]
  %v4238 = vld [vmem:[%s3 + $0x40] sm:$0xf]
  %v4239 = vld [vmem:[%s3 + $0x44] sm:$0xf]
  %v4240 = vld [vmem:[%s3 + $0x48] sm:$0xf]
  %v4241 = vld [vmem:[%s3 + $0x4c] sm:$0xf]
  %v4242 = vld [vmem:[%s3 + $0x50] sm:$0xf]
  %v4243 = vld [vmem:[%s3 + $0x54] sm:$0xf]
  %v4244 = vld [vmem:[%s3 + $0x58] sm:$0xf]
  %v4245 = vld [vmem:[%s3 + $0x5c] sm:$0xf]
  %v4246 = vld [vmem:[%s3 + $0x60] sm:$0xf]
  %v4247 = vld [vmem:[%s3 + $0x64] sm:$0xf]
  %v4248 = vld [vmem:[%s3 + $0x68] sm:$0xf]
  %v4249 = vld [vmem:[%s3 + $0x6c] sm:$0xf]
  %v4250 = vld [vmem:[%s3 + $0x70] sm:$0xf]
  %v4251 = vld [vmem:[%s3 + $0x74] sm:$0xf]
  %v4252 = vld [vmem:[%s3 + $0x78] sm:$0xf]
  %v4253 = vld [vmem:[%s3 + $0x7c] sm:$0xf]
  %v4254 = vld [vmem:[%s3 + $0x80] sm:$0xf]
  %v4255 = vld [vmem:[%s3 + $0x84] sm:$0xf]
  %v4256 = vld [vmem:[%s3 + $0x88] sm:$0xf]
  %v4257 = vld [vmem:[%s3 + $0x8c] sm:$0xf]
  %v4258 = vld [vmem:[%s3 + $0x90] sm:$0xf]
  %v4259 = vld [vmem:[%s3 + $0x94] sm:$0xf]
  %v4260 = vld [vmem:[%s3 + $0x98] sm:$0xf]
  %v4261 = vld [vmem:[%s3 + $0x9c] sm:$0xf]
  %v4262 = vld [vmem:[%s3 + $0xa0] sm:$0xf]
  %v4263 = vld [vmem:[%s3 + $0xa4] sm:$0xf]
  %v4264 = vld [vmem:[%s3 + $0xa8] sm:$0xf]
  %v4265 = vld [vmem:[%s3 + $0xac] sm:$0xf]
  %v4266 = vld [vmem:[%s3 + $0xb0] sm:$0xf]
  %v4267 = vld [vmem:[%s3 + $0xb4] sm:$0xf]
  %v4268 = vld [vmem:[%s3 + $0xb8] sm:$0xf]
  %v4269 = vld [vmem:[%s3 + $0xbc] sm:$0xf]
  %v4270 = vld [vmem:[%s3 + $0xc0] sm:$0xf]
  %v4271 = vld [vmem:[%s3 + $0xc4] sm:$0xf]
  %v4272 = vld [vmem:[%s3 + $0xc8] sm:$0xf]
  %v4273 = vld [vmem:[%s3 + $0xcc] sm:$0xf]
  %v4274 = vld [vmem:[%s3 + $0xd0] sm:$0xf]
  %v4275 = vld [vmem:[%s3 + $0xd4] sm:$0xf]
  %v4276 = vld [vmem:[%s3 + $0xd8] sm:$0xf]
  %v4277 = vld [vmem:[%s3 + $0xdc] sm:$0xf]
  %v4278 = vld [vmem:[%s3 + $0xe0] sm:$0xf]
  %v4279 = vld [vmem:[%s3 + $0xe4] sm:$0xf]
  %v4280 = vld [vmem:[%s3 + $0xe8] sm:$0xf]
  %v4281 = vld [vmem:[%s3 + $0xec] sm:$0xf]
  %v4282 = vld [vmem:[%s3 + $0xf0] sm:$0xf]
  %v4283 = vld [vmem:[%s3 + $0xf4] sm:$0xf]
  %v4284 = vld [vmem:[%s3 + $0xf8] sm:$0xf]
  %v4285 = vld [vmem:[%s3 + $0xfc] sm:$0xf]
  %v4286 = vunpack.c.l.bf16 %v4222
  %v4287 = vunpack.c.l.bf16 %v4223
  %v4288 = vunpack.c.l.bf16 %v4224
  %v4289 = vunpack.c.l.bf16 %v4225
  %v4290 = vunpack.c.l.bf16 %v4226
  %v4291 = vunpack.c.l.bf16 %v4227
  %v4292 = vunpack.c.l.bf16 %v4228
  %v4293 = vunpack.c.l.bf16 %v4229
  %v4294 = vunpack.c.l.bf16 %v4230
  %v4295 = vunpack.c.l.bf16 %v4231
  %v4296 = vunpack.c.l.bf16 %v4232
  %v4297 = vunpack.c.l.bf16 %v4233
  %v4298 = vunpack.c.l.bf16 %v4234
  %v4299 = vunpack.c.l.bf16 %v4235
  %v4300 = vunpack.c.l.bf16 %v4236
  %v4301 = vunpack.c.l.bf16 %v4237
  %v4302 = vunpack.c.l.bf16 %v4238
  %v4303 = vunpack.c.l.bf16 %v4239
  %v4304 = vunpack.c.l.bf16 %v4240
  %v4305 = vunpack.c.l.bf16 %v4241
  %v4306 = vunpack.c.l.bf16 %v4242
  %v4307 = vunpack.c.l.bf16 %v4243
  %v4308 = vunpack.c.l.bf16 %v4244
  %v4309 = vunpack.c.l.bf16 %v4245
  %v4310 = vunpack.c.l.bf16 %v4246
  %v4311 = vunpack.c.l.bf16 %v4247
  %v4312 = vunpack.c.l.bf16 %v4248
  %v4313 = vunpack.c.l.bf16 %v4249
  %v4314 = vunpack.c.l.bf16 %v4250
  %v4315 = vunpack.c.l.bf16 %v4251
  %v4316 = vunpack.c.l.bf16 %v4252
  %v4317 = vunpack.c.l.bf16 %v4253
  %v4318 = vunpack.c.l.bf16 %v4254
  %v4319 = vunpack.c.l.bf16 %v4255
  %v4320 = vunpack.c.l.bf16 %v4256
  %v4321 = vunpack.c.l.bf16 %v4257
  %v4322 = vunpack.c.l.bf16 %v4258
  %v4323 = vunpack.c.l.bf16 %v4259
  %v4324 = vunpack.c.l.bf16 %v4260
  %v4325 = vunpack.c.l.bf16 %v4261
  %v4326 = vunpack.c.l.bf16 %v4262
  %v4327 = vunpack.c.l.bf16 %v4263
  %v4328 = vunpack.c.l.bf16 %v4264
  %v4329 = vunpack.c.l.bf16 %v4265
  %v4330 = vunpack.c.l.bf16 %v4266
  %v4331 = vunpack.c.l.bf16 %v4267
  %v4332 = vunpack.c.l.bf16 %v4268
  %v4333 = vunpack.c.l.bf16 %v4269
  %v4334 = vunpack.c.l.bf16 %v4270
  %v4335 = vunpack.c.l.bf16 %v4271
  %v4336 = vunpack.c.l.bf16 %v4272
  %v4337 = vunpack.c.l.bf16 %v4273
  %v4338 = vunpack.c.l.bf16 %v4274
  %v4339 = vunpack.c.l.bf16 %v4275
  %v4340 = vunpack.c.l.bf16 %v4276
  %v4341 = vunpack.c.l.bf16 %v4277
  %v4342 = vunpack.c.l.bf16 %v4278
  %v4343 = vunpack.c.l.bf16 %v4279
  %v4344 = vunpack.c.l.bf16 %v4280
  %v4345 = vunpack.c.l.bf16 %v4281
  %v4346 = vunpack.c.l.bf16 %v4282
  %v4347 = vunpack.c.l.bf16 %v4283
  %v4348 = vunpack.c.l.bf16 %v4284
  %v4349 = vunpack.c.l.bf16 %v4285
  %v4350 = vadd.f32 %v4158, %v4286
  %v4351 = vadd.f32 %v4159, %v4287
  %v4352 = vadd.f32 %v4160, %v4288
  %v4353 = vadd.f32 %v4161, %v4289
  %v4354 = vadd.f32 %v4162, %v4290
  %v4355 = vadd.f32 %v4163, %v4291
  %v4356 = vadd.f32 %v4164, %v4292
  %v4357 = vadd.f32 %v4165, %v4293
  %v4358 = vadd.f32 %v4166, %v4294
  %v4359 = vadd.f32 %v4167, %v4295
  %v4360 = vadd.f32 %v4168, %v4296
  %v4361 = vadd.f32 %v4169, %v4297
  %v4362 = vadd.f32 %v4170, %v4298
  %v4363 = vadd.f32 %v4171, %v4299
  %v4364 = vadd.f32 %v4172, %v4300
  %v4365 = vadd.f32 %v4173, %v4301
  %v4366 = vadd.f32 %v4174, %v4302
  %v4367 = vadd.f32 %v4175, %v4303
  %v4368 = vadd.f32 %v4176, %v4304
  %v4369 = vadd.f32 %v4177, %v4305
  %v4370 = vadd.f32 %v4178, %v4306
  %v4371 = vadd.f32 %v4179, %v4307
  %v4372 = vadd.f32 %v4180, %v4308
  %v4373 = vadd.f32 %v4181, %v4309
  %v4374 = vadd.f32 %v4182, %v4310
  %v4375 = vadd.f32 %v4183, %v4311
  %v4376 = vadd.f32 %v4184, %v4312
  %v4377 = vadd.f32 %v4185, %v4313
  %v4378 = vadd.f32 %v4186, %v4314
  %v4379 = vadd.f32 %v4187, %v4315
  %v4380 = vadd.f32 %v4188, %v4316
  %v4381 = vadd.f32 %v4189, %v4317
  %v4382 = vadd.f32 %v4190, %v4318
  %v4383 = vadd.f32 %v4191, %v4319
  %v4384 = vadd.f32 %v4192, %v4320
  %v4385 = vadd.f32 %v4193, %v4321
  %v4386 = vadd.f32 %v4194, %v4322
  %v4387 = vadd.f32 %v4195, %v4323
  %v4388 = vadd.f32 %v4196, %v4324
  %v4389 = vadd.f32 %v4197, %v4325
  %v4390 = vadd.f32 %v4198, %v4326
  %v4391 = vadd.f32 %v4199, %v4327
  %v4392 = vadd.f32 %v4200, %v4328
  %v4393 = vadd.f32 %v4201, %v4329
  %v4394 = vadd.f32 %v4202, %v4330
  %v4395 = vadd.f32 %v4203, %v4331
  %v4396 = vadd.f32 %v4204, %v4332
  %v4397 = vadd.f32 %v4205, %v4333
  %v4398 = vadd.f32 %v4206, %v4334
  %v4399 = vadd.f32 %v4207, %v4335
  %v4400 = vadd.f32 %v4208, %v4336
  %v4401 = vadd.f32 %v4209, %v4337
  %v4402 = vadd.f32 %v4210, %v4338
  %v4403 = vadd.f32 %v4211, %v4339
  %v4404 = vadd.f32 %v4212, %v4340
  %v4405 = vadd.f32 %v4213, %v4341
  %v4406 = vadd.f32 %v4214, %v4342
  %v4407 = vadd.f32 %v4215, %v4343
  %v4408 = vadd.f32 %v4216, %v4344
  %v4409 = vadd.f32 %v4217, %v4345
  %v4410 = vadd.f32 %v4218, %v4346
  %v4411 = vadd.f32 %v4219, %v4347
  %v4412 = vadd.f32 %v4220, %v4348
  %v4413 = vadd.f32 %v4221, %v4349
  %v4414 = vpack.c.bf16 %v4351, %v4350
  %v4415 = vpack.c.bf16 %v4353, %v4352
  %v4416 = vpack.c.bf16 %v4355, %v4354
  %v4417 = vpack.c.bf16 %v4357, %v4356
  %v4418 = vpack.c.bf16 %v4359, %v4358
  %v4419 = vpack.c.bf16 %v4361, %v4360
  %v4420 = vpack.c.bf16 %v4363, %v4362
  %v4421 = vpack.c.bf16 %v4365, %v4364
  %v4422 = vpack.c.bf16 %v4367, %v4366
  %v4423 = vpack.c.bf16 %v4369, %v4368
  %v4424 = vpack.c.bf16 %v4371, %v4370
  %v4425 = vpack.c.bf16 %v4373, %v4372
  %v4426 = vpack.c.bf16 %v4375, %v4374
  %v4427 = vpack.c.bf16 %v4377, %v4376
  %v4428 = vpack.c.bf16 %v4379, %v4378
  %v4429 = vpack.c.bf16 %v4381, %v4380
  %v4430 = vpack.c.bf16 %v4383, %v4382
  %v4431 = vpack.c.bf16 %v4385, %v4384
  %v4432 = vpack.c.bf16 %v4387, %v4386
  %v4433 = vpack.c.bf16 %v4389, %v4388
  %v4434 = vpack.c.bf16 %v4391, %v4390
  %v4435 = vpack.c.bf16 %v4393, %v4392
  %v4436 = vpack.c.bf16 %v4395, %v4394
  %v4437 = vpack.c.bf16 %v4397, %v4396
  %v4438 = vpack.c.bf16 %v4399, %v4398
  %v4439 = vpack.c.bf16 %v4401, %v4400
  %v4440 = vpack.c.bf16 %v4403, %v4402
  %v4441 = vpack.c.bf16 %v4405, %v4404
  %v4442 = vpack.c.bf16 %v4407, %v4406
  %v4443 = vpack.c.bf16 %v4409, %v4408
  %v4444 = vpack.c.bf16 %v4411, %v4410
  %v4445 = vpack.c.bf16 %v4413, %v4412
  %v4478 = vunpack.c.l.b16 %v4414
  %v4479 = vunpack.c.h.b16 %v4414
  %v4480 = vunpack.c.l.b16 %v4415
  %v4481 = vunpack.c.h.b16 %v4415
  %v4482 = vunpack.c.l.b16 %v4416
  %v4483 = vunpack.c.h.b16 %v4416
  %v4484 = vunpack.c.l.b16 %v4417
  %v4485 = vunpack.c.h.b16 %v4417
  %v4486 = vunpack.c.l.b16 %v4418
  %v4487 = vunpack.c.h.b16 %v4418
  %v4488 = vunpack.c.l.b16 %v4419
  %v4489 = vunpack.c.h.b16 %v4419
  %v4490 = vunpack.c.l.b16 %v4420
  %v4491 = vunpack.c.h.b16 %v4420
  %v4492 = vunpack.c.l.b16 %v4421
  %v4493 = vunpack.c.h.b16 %v4421
  %v4494 = vunpack.c.l.b16 %v4422
  %v4495 = vunpack.c.h.b16 %v4422
  %v4496 = vunpack.c.l.b16 %v4423
  %v4497 = vunpack.c.h.b16 %v4423
  %v4498 = vunpack.c.l.b16 %v4424
  %v4499 = vunpack.c.h.b16 %v4424
  %v4500 = vunpack.c.l.b16 %v4425
  %v4501 = vunpack.c.h.b16 %v4425
  %v4502 = vunpack.c.l.b16 %v4426
  %v4503 = vunpack.c.h.b16 %v4426
  %v4504 = vunpack.c.l.b16 %v4427
  %v4505 = vunpack.c.h.b16 %v4427
  %v4506 = vunpack.c.l.b16 %v4428
  %v4507 = vunpack.c.h.b16 %v4428
  %v4508 = vunpack.c.l.b16 %v4429
  %v4509 = vunpack.c.h.b16 %v4429
  %v4510 = vunpack.c.l.b16 %v4430
  %v4511 = vunpack.c.h.b16 %v4430
  %v4512 = vunpack.c.l.b16 %v4431
  %v4513 = vunpack.c.h.b16 %v4431
  %v4514 = vunpack.c.l.b16 %v4432
  %v4515 = vunpack.c.h.b16 %v4432
  %v4516 = vunpack.c.l.b16 %v4433
  %v4517 = vunpack.c.h.b16 %v4433
  %v4518 = vunpack.c.l.b16 %v4434
  %v4519 = vunpack.c.h.b16 %v4434
  %v4520 = vunpack.c.l.b16 %v4435
  %v4521 = vunpack.c.h.b16 %v4435
  %v4522 = vunpack.c.l.b16 %v4436
  %v4523 = vunpack.c.h.b16 %v4436
  %v4524 = vunpack.c.l.b16 %v4437
  %v4525 = vunpack.c.h.b16 %v4437
  %v4526 = vunpack.c.l.b16 %v4438
  %v4527 = vunpack.c.h.b16 %v4438
  %v4528 = vunpack.c.l.b16 %v4439
  %v4529 = vunpack.c.h.b16 %v4439
  %v4530 = vunpack.c.l.b16 %v4440
  %v4531 = vunpack.c.h.b16 %v4440
  %v4532 = vunpack.c.l.b16 %v4441
  %v4533 = vunpack.c.h.b16 %v4441
  %v4534 = vunpack.c.l.b16 %v4442
  %v4535 = vunpack.c.h.b16 %v4442
  %v4536 = vunpack.c.l.b16 %v4443
  %v4537 = vunpack.c.h.b16 %v4443
  %v4538 = vunpack.c.l.b16 %v4444
  %v4539 = vunpack.c.h.b16 %v4444
  %v4540 = vunpack.c.l.b16 %v4445
  %v4541 = vunpack.c.h.b16 %v4445
  %v4542 = vpack.c.b16 %v4478, %v4478
  %v4543 = vpack.c.b16 %v4479, %v4479
  %v4544 = vpack.c.b16 %v4480, %v4480
  %v4545 = vpack.c.b16 %v4481, %v4481
  %v4546 = vpack.c.b16 %v4482, %v4482
  %v4547 = vpack.c.b16 %v4483, %v4483
  %v4548 = vpack.c.b16 %v4484, %v4484
  %v4549 = vpack.c.b16 %v4485, %v4485
  %v4550 = vpack.c.b16 %v4486, %v4486
  %v4551 = vpack.c.b16 %v4487, %v4487
  %v4552 = vpack.c.b16 %v4488, %v4488
  %v4553 = vpack.c.b16 %v4489, %v4489
  %v4554 = vpack.c.b16 %v4490, %v4490
  %v4555 = vpack.c.b16 %v4491, %v4491
  %v4556 = vpack.c.b16 %v4492, %v4492
  %v4557 = vpack.c.b16 %v4493, %v4493
  %v4558 = vpack.c.b16 %v4494, %v4494
  %v4559 = vpack.c.b16 %v4495, %v4495
  %v4560 = vpack.c.b16 %v4496, %v4496
  %v4561 = vpack.c.b16 %v4497, %v4497
  %v4562 = vpack.c.b16 %v4498, %v4498
  %v4563 = vpack.c.b16 %v4499, %v4499
  %v4564 = vpack.c.b16 %v4500, %v4500
  %v4565 = vpack.c.b16 %v4501, %v4501
  %v4566 = vpack.c.b16 %v4502, %v4502
  %v4567 = vpack.c.b16 %v4503, %v4503
  %v4568 = vpack.c.b16 %v4504, %v4504
  %v4569 = vpack.c.b16 %v4505, %v4505
  %v4570 = vpack.c.b16 %v4506, %v4506
  %v4571 = vpack.c.b16 %v4507, %v4507
  %v4572 = vpack.c.b16 %v4508, %v4508
  %v4573 = vpack.c.b16 %v4509, %v4509
  %v4574 = vpack.c.b16 %v4510, %v4510
  %v4575 = vpack.c.b16 %v4511, %v4511
  %v4576 = vpack.c.b16 %v4512, %v4512
  %v4577 = vpack.c.b16 %v4513, %v4513
  %v4578 = vpack.c.b16 %v4514, %v4514
  %v4579 = vpack.c.b16 %v4515, %v4515
  %v4580 = vpack.c.b16 %v4516, %v4516
  %v4581 = vpack.c.b16 %v4517, %v4517
  %v4582 = vpack.c.b16 %v4518, %v4518
  %v4583 = vpack.c.b16 %v4519, %v4519
  %v4584 = vpack.c.b16 %v4520, %v4520
  %v4585 = vpack.c.b16 %v4521, %v4521
  %v4586 = vpack.c.b16 %v4522, %v4522
  %v4587 = vpack.c.b16 %v4523, %v4523
  %v4588 = vpack.c.b16 %v4524, %v4524
  %v4589 = vpack.c.b16 %v4525, %v4525
  %v4590 = vpack.c.b16 %v4526, %v4526
  %v4591 = vpack.c.b16 %v4527, %v4527
  %v4592 = vpack.c.b16 %v4528, %v4528
  %v4593 = vpack.c.b16 %v4529, %v4529
  %v4594 = vpack.c.b16 %v4530, %v4530
  %v4595 = vpack.c.b16 %v4531, %v4531
  %v4596 = vpack.c.b16 %v4532, %v4532
  %v4597 = vpack.c.b16 %v4533, %v4533
  %v4598 = vpack.c.b16 %v4534, %v4534
  %v4599 = vpack.c.b16 %v4535, %v4535
  %v4600 = vpack.c.b16 %v4536, %v4536
  %v4601 = vpack.c.b16 %v4537, %v4537
  %v4602 = vpack.c.b16 %v4538, %v4538
  %v4603 = vpack.c.b16 %v4539, %v4539
  %v4604 = vpack.c.b16 %v4540, %v4540
  %v4605 = vpack.c.b16 %v4541, %v4541
  %4670 = vst [vmem:[%s4] sm:$0xf] %v4542
  %4671 = vst [vmem:[%s4 + $0x4] sm:$0xf] %v4543
  %4672 = vst [vmem:[%s4 + $0x8] sm:$0xf] %v4544
  %4673 = vst [vmem:[%s4 + $0xc] sm:$0xf] %v4545
  %4674 = vst [vmem:[%s4 + $0x10] sm:$0xf] %v4546
  %4675 = vst [vmem:[%s4 + $0x14] sm:$0xf] %v4547
  %4676 = vst [vmem:[%s4 + $0x18] sm:$0xf] %v4548
  %4677 = vst [vmem:[%s4 + $0x1c] sm:$0xf] %v4549
  %4678 = vst [vmem:[%s4 + $0x20] sm:$0xf] %v4550
  %4679 = vst [vmem:[%s4 + $0x24] sm:$0xf] %v4551
  %4680 = vst [vmem:[%s4 + $0x28] sm:$0xf] %v4552
  %4681 = vst [vmem:[%s4 + $0x2c] sm:$0xf] %v4553
  %4682 = vst [vmem:[%s4 + $0x30] sm:$0xf] %v4554
  %4683 = vst [vmem:[%s4 + $0x34] sm:$0xf] %v4555
  %4684 = vst [vmem:[%s4 + $0x38] sm:$0xf] %v4556
  %4685 = vst [vmem:[%s4 + $0x3c] sm:$0xf] %v4557
  %4686 = vst [vmem:[%s4 + $0x40] sm:$0xf] %v4558
  %4687 = vst [vmem:[%s4 + $0x44] sm:$0xf] %v4559
  %4688 = vst [vmem:[%s4 + $0x48] sm:$0xf] %v4560
  %4689 = vst [vmem:[%s4 + $0x4c] sm:$0xf] %v4561
  %4690 = vst [vmem:[%s4 + $0x50] sm:$0xf] %v4562
  %4691 = vst [vmem:[%s4 + $0x54] sm:$0xf] %v4563
  %4692 = vst [vmem:[%s4 + $0x58] sm:$0xf] %v4564
  %4693 = vst [vmem:[%s4 + $0x5c] sm:$0xf] %v4565
  %4694 = vst [vmem:[%s4 + $0x60] sm:$0xf] %v4566
  %4695 = vst [vmem:[%s4 + $0x64] sm:$0xf] %v4567
  %4696 = vst [vmem:[%s4 + $0x68] sm:$0xf] %v4568
  %4697 = vst [vmem:[%s4 + $0x6c] sm:$0xf] %v4569
  %4698 = vst [vmem:[%s4 + $0x70] sm:$0xf] %v4570
  %4699 = vst [vmem:[%s4 + $0x74] sm:$0xf] %v4571
  %4700 = vst [vmem:[%s4 + $0x78] sm:$0xf] %v4572
  %4701 = vst [vmem:[%s4 + $0x7c] sm:$0xf] %v4573
  %4702 = vst [vmem:[%s4 + $0x80] sm:$0xf] %v4574
  %4703 = vst [vmem:[%s4 + $0x84] sm:$0xf] %v4575
  %4704 = vst [vmem:[%s4 + $0x88] sm:$0xf] %v4576
  %4705 = vst [vmem:[%s4 + $0x8c] sm:$0xf] %v4577
  %4706 = vst [vmem:[%s4 + $0x90] sm:$0xf] %v4578
  %4707 = vst [vmem:[%s4 + $0x94] sm:$0xf] %v4579
  %4708 = vst [vmem:[%s4 + $0x98] sm:$0xf] %v4580
  %4709 = vst [vmem:[%s4 + $0x9c] sm:$0xf] %v4581
  %4710 = vst [vmem:[%s4 + $0xa0] sm:$0xf] %v4582
  %4711 = vst [vmem:[%s4 + $0xa4] sm:$0xf] %v4583
  %4712 = vst [vmem:[%s4 + $0xa8] sm:$0xf] %v4584
  %4713 = vst [vmem:[%s4 + $0xac] sm:$0xf] %v4585
  %4714 = vst [vmem:[%s4 + $0xb0] sm:$0xf] %v4586
  %4715 = vst [vmem:[%s4 + $0xb4] sm:$0xf] %v4587
  %4716 = vst [vmem:[%s4 + $0xb8] sm:$0xf] %v4588
  %4717 = vst [vmem:[%s4 + $0xbc] sm:$0xf] %v4589
  %4718 = vst [vmem:[%s4 + $0xc0] sm:$0xf] %v4590
  %4719 = vst [vmem:[%s4 + $0xc4] sm:$0xf] %v4591
  %4720 = vst [vmem:[%s4 + $0xc8] sm:$0xf] %v4592
  %4721 = vst [vmem:[%s4 + $0xcc] sm:$0xf] %v4593
  %4722 = vst [vmem:[%s4 + $0xd0] sm:$0xf] %v4594
  %4723 = vst [vmem:[%s4 + $0xd4] sm:$0xf] %v4595
  %4724 = vst [vmem:[%s4 + $0xd8] sm:$0xf] %v4596
  %4725 = vst [vmem:[%s4 + $0xdc] sm:$0xf] %v4597
  %4726 = vst [vmem:[%s4 + $0xe0] sm:$0xf] %v4598
  %4727 = vst [vmem:[%s4 + $0xe4] sm:$0xf] %v4599
  %4728 = vst [vmem:[%s4 + $0xe8] sm:$0xf] %v4600
  %4729 = vst [vmem:[%s4 + $0xec] sm:$0xf] %v4601
  %4730 = vst [vmem:[%s4 + $0xf0] sm:$0xf] %v4602
  %4731 = vst [vmem:[%s4 + $0xf4] sm:$0xf] %v4603
  %4732 = vst [vmem:[%s4 + $0xf8] sm:$0xf] %v4604
  %4733 = vst [vmem:[%s4 + $0xfc] sm:$0xf] %v4605
  // Predicated region
  $region18: #{double_conv_up_c3_forward.9} parent=0 // pred_check
    _
  $region19: #{double_conv_up_c3_forward.9} parent=0 // pred_check_branch
    %4735 = sbr.rel (0) target = $region21
  $region20: #{double_conv_up_c3_forward.9} parent=0 // pred_region
    _
  $region21: #{double_conv_up_c3_forward.9} parent=0 // pred_fallthru
    _
  // Predicated region
  $region22: #{double_conv_up_c3_forward.9} parent=0 // pred_check
    _
  $region23: #{double_conv_up_c3_forward.9} parent=0 // pred_check_branch
    %4737 = sbr.rel (0) target = $region25
  $region24: #{double_conv_up_c3_forward.9} parent=0 // pred_region
    _
  $region25: #{double_conv_up_c3_forward.9} parent=0 // pred_fallthru
    _

// kernel: double_conv_up_c3_forward.11
$region0: #{double_conv_up_c3_forward.11}
  #allocation0 [shape = 'u32[]', space=smem, size = 0x4, offset = 0x4, fixed_abs, tag = 'smem constant byte address 0x4 - core index']
  #allocation1 [shape = 'u32[144,128]{1,0:T(1,128)}', space=vmem, size = 0x12000, scoped, tag = 'internal scratch']
  %s0 = inlined_call_operand.vmem [shape: bf16[4,512,512], index: 0, kind: input, shape index: {}]
  %s1 = inlined_call_operand.vmem [shape: bf16[4,512,128], index: 1, kind: input, shape index: {}]
  %s2 = inlined_call_operand.vmem [shape: f32[1,128], index: 2, kind: input, shape index: {}]
  %s3 = inlined_call_operand.vmem [shape: f32[4,512,128], index: 3, kind: output, shape index: {}]
  %s4 = sld [smem:[#allocation0]]
  $region45: #{double_conv_up_c3_forward.11} parent=0
    _
  %s6 = ssub.s32 1, %s4
  %s7 = scalar_select 0, %s6, %s4
  loop: start=0, step=1, limit=6
  $region2: #{double_conv_up_c3_forward.11} parent=0 // loop_pre_header
    _
  $region3: #{double_conv_up_c3_forward.11} parent=0 // loop_header
    %s9 = sphi 0, %s13
    %p10 = scmp.ge.s32.totalorder %s9, 6
    %s16 = sphi 0, %s28
    %s17 = sphi 0, %s24
    %s18 = sphi 0, %s16
    %s19 = sphi 0, %s17
    %s20 = sphi 0, %s18
    %s21 = sphi 0, %s19
    %s33 = sphi 0, %s35
    %s36 = sphi 0, %s33
    %s37 = sphi 0, %s36
    %s53 = sphi 0, %s37
    %s59 = sphi 0, %s61
    %s62 = sphi 0, %s59
    %s63 = sphi 0, %s62
    %s79 = sphi 0, %s63
    %s83 = sphi 0, %s83
    %s85 = sphi 0, %s83
    %s86 = sphi 0, %s85
    %s100 = sphi 0, %s86
    %s108 = sphi 0, %s110
    %s111 = sphi 0, %s108
    %s112 = sphi 0, %s111
    %s128 = sphi 0, %s112
  $region4: #{double_conv_up_c3_forward.11} parent=0 // loop_header_branch
    %12 = sbr.rel (%p10) target = $region8
  $region5: #{double_conv_up_c3_forward.11} parent=0 // loop_body
    %s14 = ssub.s32 %s9, 1
    %s15 = ssub.s32 %s9, 2
    %s22 = sadd.s32 1, %s17
    %p23 = scmp.ge.s32.totalorder %s22, 1
    %s24 = scalar_select %p23, 0, %s22
    %s25 = sadd.s32 1, %s16
    %s26 = scalar_select %p23, %s25, %s16
    %p27 = scmp.ge.s32.totalorder %s26, 4
    %s28 = scalar_select %p27, 0, %s26
    %s29 = ssub.s32 %s16, %s28
    %s30 = ssub.s32 %s17, %s24
    %s31 = sor.u32 %s29, %s30
    %p32 = scmp.eq.s32.totalorder %s31, 0
    %s34 = sadd.s32 %s33, 1
    %s35 = scalar_select %p32, %s33, %s34
    %p38 = pneg %p32
    %p39 = scmp.eq.s32.totalorder %s9, 3
    %p40 = por %p38, %p39
    %p41 = scmp.ne.s32.totalorder %s33, %s36
    %p42 = scmp.eq.s32.totalorder %s9, 0
    %p43 = por %p41, %p42
    %p44 = scmp.ne.s32.totalorder %s33, %s36
    %p45 = scmp.eq.s32.totalorder %s14, 3
    %p46 = por %p44, %p45
    %p47 = scmp.ne.s32.totalorder %s36, %s37
    %p48 = scmp.eq.s32.totalorder %s14, 0
    %p49 = por %p47, %p48
    %p50 = scmp.ne.s32.totalorder %s36, %s37
    %p51 = scmp.eq.s32.totalorder %s15, 3
    %p52 = por %p50, %p51
    %p54 = scmp.ne.s32.totalorder %s37, %s53
    %p55 = scmp.eq.s32.totalorder %s15, 0
    %p56 = por %p54, %p55
    %s57 = ssub.s32 %s16, %s28
    %p58 = scmp.eq.s32.totalorder %s57, 0
    %s60 = sadd.s32 %s59, 1
    %s61 = scalar_select %p58, %s59, %s60
    %p64 = pneg %p58
    %p65 = scmp.eq.s32.totalorder %s9, 3
    %p66 = por %p64, %p65
    %p67 = scmp.ne.s32.totalorder %s59, %s62
    %p68 = scmp.eq.s32.totalorder %s9, 0
    %p69 = por %p67, %p68
    %p70 = scmp.ne.s32.totalorder %s59, %s62
    %p71 = scmp.eq.s32.totalorder %s14, 3
    %p72 = por %p70, %p71
    %p73 = scmp.ne.s32.totalorder %s62, %s63
    %p74 = scmp.eq.s32.totalorder %s14, 0
    %p75 = por %p73, %p74
    %p76 = scmp.ne.s32.totalorder %s62, %s63
    %p77 = scmp.eq.s32.totalorder %s15, 3
    %p78 = por %p76, %p77
    %p80 = scmp.ne.s32.totalorder %s63, %s79
    %p81 = scmp.eq.s32.totalorder %s15, 0
    %p82 = por %p80, %p81
    %s84 = sadd.s32 %s83, 1
    %p87 = scmp.eq.s32.totalorder %s9, 3
    %p88 = scmp.ne.s32.totalorder %s83, %s85
    %p89 = scmp.eq.s32.totalorder %s9, 0
    %p90 = por %p88, %p89
    %p91 = scmp.ne.s32.totalorder %s83, %s85
    %p92 = scmp.eq.s32.totalorder %s14, 3
    %p93 = por %p91, %p92
    %p94 = scmp.ne.s32.totalorder %s85, %s86
    %p95 = scmp.eq.s32.totalorder %s14, 0
    %p96 = por %p94, %p95
    %p97 = scmp.ne.s32.totalorder %s85, %s86
    %p98 = scmp.eq.s32.totalorder %s15, 3
    %p99 = por %p97, %p98
    %p101 = scmp.ne.s32.totalorder %s86, %s100
    %p102 = scmp.eq.s32.totalorder %s15, 0
    %p103 = por %p101, %p102
    %s104 = ssub.s32 %s16, %s28
    %s105 = ssub.s32 %s17, %s24
    %s106 = sor.u32 %s104, %s105
    %p107 = scmp.eq.s32.totalorder %s106, 0
    %s109 = sadd.s32 %s108, 1
    %s110 = scalar_select %p107, %s108, %s109
    %p113 = pneg %p107
    %p114 = scmp.eq.s32.totalorder %s9, 3
    %p115 = por %p113, %p114
    %p116 = scmp.ne.s32.totalorder %s108, %s111
    %p117 = scmp.eq.s32.totalorder %s9, 0
    %p118 = por %p116, %p117
    %p119 = scmp.ne.s32.totalorder %s108, %s111
    %p120 = scmp.eq.s32.totalorder %s14, 3
    %p121 = por %p119, %p120
    %p122 = scmp.ne.s32.totalorder %s111, %s112
    %p123 = scmp.eq.s32.totalorder %s14, 0
    %p124 = por %p122, %p123
    %p125 = scmp.ne.s32.totalorder %s111, %s112
    %p126 = scmp.eq.s32.totalorder %s15, 3
    %p127 = por %p125, %p126
    %p129 = scmp.ne.s32.totalorder %s112, %s128
    %p130 = scmp.eq.s32.totalorder %s15, 0
    %p131 = por %p129, %p130
    %p132 = scmp.le.s32.totalorder 1, %s9
    %p133 = scmp.lt.s32.totalorder %s9, 5
    %p134 = pnand %p132, %p133
    %p135 = pneg %p134
    // Predicated region
    $region9: #{double_conv_up_c3_forward.11} parent=5 // pred_check
      _
    $region10: #{double_conv_up_c3_forward.11} parent=5 // pred_check_branch
      %137 = sbr.rel (%p134) target = $region12
    $region11: #{double_conv_up_c3_forward.11} parent=5 // pred_region
      %s138 = ssub.s32 %s9, 1
      // Predicated region
      $region13: #{double_conv_up_c3_forward.11} parent=11 // pred_check
        %p139 = pneg %p96
      $region14: #{double_conv_up_c3_forward.11} parent=11 // pred_check_branch
        %141 = sbr.rel (%p139) target = $region16
      $region15: #{double_conv_up_c3_forward.11} parent=11 // pred_region
        _
      $region16: #{double_conv_up_c3_forward.11} parent=11 // pred_fallthru
        _
    $region12: #{double_conv_up_c3_forward.11} parent=5 // pred_fallthru
      _
    %p142 = scmp.lt.s32.totalorder %s9, 4
    // Predicated region
    $region17: #{double_conv_up_c3_forward.11} parent=5 // pred_check
      %p143 = pneg %p142
    $region18: #{double_conv_up_c3_forward.11} parent=5 // pred_check_branch
      %145 = sbr.rel (%p143) target = $region20
    $region19: #{double_conv_up_c3_forward.11} parent=5 // pred_region
      // Predicated region
      $region21: #{double_conv_up_c3_forward.11} parent=19 // pred_check
        %p146 = pneg %p43
      $region22: #{double_conv_up_c3_forward.11} parent=19 // pred_check_branch
        %148 = sbr.rel (%p146) target = $region24
      $region23: #{double_conv_up_c3_forward.11} parent=19 // pred_region
        %s149 = smul.u32 64, %s17
        %p150 = scmp.lt.s32.totalorder %s16, 3
        %s151 = scalar_select %p150, %s16, 3
        %p152 = scmp.lt.s32.totalorder %s149, 63
        %s153 = scalar_select %p152, %s149, 63
        %s154 = smul.addr %s153, 4
        %s155 = smul.addr %s151, 256
        %s156 = sadd.s32 %s154, %s155
        %s157 = smul.addr %s156, 4
        %s158 = scalar_lea.vmem %s0, %s157
        %s159 = smul.u32 64, %s17
      $region24: #{double_conv_up_c3_forward.11} parent=19 // pred_fallthru
        _
      // Predicated region
      $region25: #{double_conv_up_c3_forward.11} parent=19 // pred_check
        %p160 = pneg %p69
      $region26: #{double_conv_up_c3_forward.11} parent=19 // pred_check_branch
        %162 = sbr.rel (%p160) target = $region28
      $region27: #{double_conv_up_c3_forward.11} parent=19 // pred_region
        %p163 = scmp.lt.s32.totalorder %s16, 3
        %s164 = scalar_select %p163, %s16, 3
        %s165 = smul.addr %s164, 64
        %s166 = smul.addr %s165, 4
        %s167 = scalar_lea.vmem %s1, %s166
      $region28: #{double_conv_up_c3_forward.11} parent=19 // pred_fallthru
        _
    $region20: #{double_conv_up_c3_forward.11} parent=5 // pred_fallthru
      _
    %p168 = scmp.le.s32.totalorder 1, %s9
    %p169 = scmp.lt.s32.totalorder %s9, 5
    %p170 = pnand %p168, %p169
    %p171 = pneg %p170
    // Predicated region
    $region29: #{double_conv_up_c3_forward.11} parent=5 // pred_check
      _
    $region30: #{double_conv_up_c3_forward.11} parent=5 // pred_check_branch
      %173 = sbr.rel (%p170) target = $region32
    $region31: #{double_conv_up_c3_forward.11} parent=5 // pred_region
      %s174 = ssub.s32 %s9, 1
      %s175 = smul.u32 64, %s19
      %p176 = scmp.lt.s32.totalorder %s18, 3
      %s177 = scalar_select %p176, %s18, 3
      %p178 = scmp.lt.s32.totalorder %s175, 63
      %s179 = scalar_select %p178, %s175, 63
      %s180 = smul.addr %s179, 4
      %s181 = smul.addr %s177, 256
      %s182 = sadd.s32 %s180, %s181
      %s183 = smul.addr %s182, 4
      %s184 = scalar_lea.vmem %s0, %s183
      %p185 = pneg %p49
      %p186 = pneg %p46
      %p187 = scmp.lt.s32.totalorder %s18, 3
      %s188 = scalar_select %p187, %s18, 3
      %s189 = smul.addr %s188, 64
      %s190 = smul.addr %s189, 4
      %s191 = scalar_lea.vmem %s1, %s190
      %p192 = pneg %p75
      %p193 = pneg %p72
      %p194 = pneg %p96
      %p195 = pneg %p93
      %p196 = pneg %p124
      %p197 = pneg %p121
      %s198 = smul.u32 64, %s19
      %p199 = scmp.lt.s32.totalorder %s18, 3
      %s200 = scalar_select %p199, %s18, 3
      %p201 = scmp.lt.s32.totalorder %s198, 63
      %s202 = scalar_select %p201, %s198, 63
      %s203 = smul.addr %s200, 64
      %s204 = sadd.s32 %s202, %s203
      %s205 = smul.addr %s204, 8
      %s206 = scalar_lea.vmem %s3, %s205
      %s207 = smul.u32 64, %s19
      %p208 = scmp.lt.s32.totalorder %s18, 3
      %s209 = scalar_select %p208, %s18, 3
      %p210 = scmp.lt.s32.totalorder %s207, 63
      %s211 = scalar_select %p210, %s207, 63
      %s212 = smul.addr %s211, 4
      %s213 = smul.addr %s209, 256
      %s214 = sadd.s32 %s212, %s213
      %s215 = smul.addr %s214, 4
      %s216 = scalar_lea.vmem %s0, %s215
      %s217 = smul.u32 64, %s19
      %p218 = scmp.lt.s32.totalorder %s18, 3
      %s219 = scalar_select %p218, %s18, 3
      %s220 = smul.addr %s219, 64
      %s221 = smul.addr %s220, 4
      %s222 = scalar_lea.vmem %s1, %s221
      %s223 = smul.u32 64, %s19
      %p224 = scmp.lt.s32.totalorder %s18, 3
      %s225 = scalar_select %p224, %s18, 3
      %p226 = scmp.lt.s32.totalorder %s223, 63
      %s227 = scalar_select %p226, %s223, 63
      %s228 = smul.addr %s225, 64
      %s229 = sadd.s32 %s227, %s228
      %s230 = smul.addr %s229, 8
      %s231 = scalar_lea.vmem %s3, %s230
      %s232 = smul.u32 64, %s19
      %v234 = vld [vmem:[%s216] sm:$0xff]
      %v235 = vld [vmem:[%s216 + $0x8] sm:$0xff]
      %v236 = vld [vmem:[%s216 + $0x10] sm:$0xff]
      %v237 = vld [vmem:[%s216 + $0x18] sm:$0xff]
      %v238 = vld [vmem:[%s216 + $0x20] sm:$0xff]
      %v239 = vld [vmem:[%s216 + $0x28] sm:$0xff]
      %v240 = vld [vmem:[%s216 + $0x30] sm:$0xff]
      %v241 = vld [vmem:[%s216 + $0x38] sm:$0xff]
      %v242 = vld [vmem:[%s216 + $0x40] sm:$0xff]
      %v243 = vld [vmem:[%s216 + $0x48] sm:$0xff]
      %v244 = vld [vmem:[%s216 + $0x50] sm:$0xff]
      %v245 = vld [vmem:[%s216 + $0x58] sm:$0xff]
      %v246 = vld [vmem:[%s216 + $0x60] sm:$0xff]
      %v247 = vld [vmem:[%s216 + $0x68] sm:$0xff]
      %v248 = vld [vmem:[%s216 + $0x70] sm:$0xff]
      %v249 = vld [vmem:[%s216 + $0x78] sm:$0xff]
      %v250 = vld [vmem:[%s216 + $0x80] sm:$0xff]
      %v251 = vld [vmem:[%s216 + $0x88] sm:$0xff]
      %v252 = vld [vmem:[%s216 + $0x90] sm:$0xff]
      %v253 = vld [vmem:[%s216 + $0x98] sm:$0xff]
      %v254 = vld [vmem:[%s216 + $0xa0] sm:$0xff]
      %v255 = vld [vmem:[%s216 + $0xa8] sm:$0xff]
      %v256 = vld [vmem:[%s216 + $0xb0] sm:$0xff]
      %v257 = vld [vmem:[%s216 + $0xb8] sm:$0xff]
      %v258 = vld [vmem:[%s216 + $0xc0] sm:$0xff]
      %v259 = vld [vmem:[%s216 + $0xc8] sm:$0xff]
      %v260 = vld [vmem:[%s216 + $0xd0] sm:$0xff]
      %v261 = vld [vmem:[%s216 + $0xd8] sm:$0xff]
      %v262 = vld [vmem:[%s216 + $0xe0] sm:$0xff]
      %v263 = vld [vmem:[%s216 + $0xe8] sm:$0xff]
      %v264 = vld [vmem:[%s216 + $0xf0] sm:$0xff]
      %v265 = vld [vmem:[%s216 + $0xf8] sm:$0xff]
      %v266 = vld [vmem:[%s216 + $0x100] sm:$0xff]
      %v267 = vld [vmem:[%s216 + $0x108] sm:$0xff]
      %v268 = vld [vmem:[%s216 + $0x110] sm:$0xff]
      %v269 = vld [vmem:[%s216 + $0x118] sm:$0xff]
      %v270 = vld [vmem:[%s216 + $0x120] sm:$0xff]
      %v271 = vld [vmem:[%s216 + $0x128] sm:$0xff]
      %v272 = vld [vmem:[%s216 + $0x130] sm:$0xff]
      %v273 = vld [vmem:[%s216 + $0x138] sm:$0xff]
      %v274 = vld [vmem:[%s216 + $0x140] sm:$0xff]
      %v275 = vld [vmem:[%s216 + $0x148] sm:$0xff]
      %v276 = vld [vmem:[%s216 + $0x150] sm:$0xff]
      %v277 = vld [vmem:[%s216 + $0x158] sm:$0xff]
      %v278 = vld [vmem:[%s216 + $0x160] sm:$0xff]
      %v279 = vld [vmem:[%s216 + $0x168] sm:$0xff]
      %v280 = vld [vmem:[%s216 + $0x170] sm:$0xff]
      %v281 = vld [vmem:[%s216 + $0x178] sm:$0xff]
      %v282 = vld [vmem:[%s216 + $0x180] sm:$0xff]
      %v283 = vld [vmem:[%s216 + $0x188] sm:$0xff]
      %v284 = vld [vmem:[%s216 + $0x190] sm:$0xff]
      %v285 = vld [vmem:[%s216 + $0x198] sm:$0xff]
      %v286 = vld [vmem:[%s216 + $0x1a0] sm:$0xff]
      %v287 = vld [vmem:[%s216 + $0x1a8] sm:$0xff]
      %v288 = vld [vmem:[%s216 + $0x1b0] sm:$0xff]
      %v289 = vld [vmem:[%s216 + $0x1b8] sm:$0xff]
      %v290 = vld [vmem:[%s216 + $0x1c0] sm:$0xff]
      %v291 = vld [vmem:[%s216 + $0x1c8] sm:$0xff]
      %v292 = vld [vmem:[%s216 + $0x1d0] sm:$0xff]
      %v293 = vld [vmem:[%s216 + $0x1d8] sm:$0xff]
      %v294 = vld [vmem:[%s216 + $0x1e0] sm:$0xff]
      %v295 = vld [vmem:[%s216 + $0x1e8] sm:$0xff]
      %v296 = vld [vmem:[%s216 + $0x1f0] sm:$0xff]
      %v297 = vld [vmem:[%s216 + $0x1f8] sm:$0xff]
      %v298 = vld [vmem:[%s216 + $0x200] sm:$0xff]
      %v299 = vld [vmem:[%s216 + $0x208] sm:$0xff]
      %v300 = vld [vmem:[%s216 + $0x210] sm:$0xff]
      %v301 = vld [vmem:[%s216 + $0x218] sm:$0xff]
      %v302 = vld [vmem:[%s216 + $0x220] sm:$0xff]
      %v303 = vld [vmem:[%s216 + $0x228] sm:$0xff]
      %v304 = vld [vmem:[%s216 + $0x230] sm:$0xff]
      %v305 = vld [vmem:[%s216 + $0x238] sm:$0xff]
      %v306 = vld [vmem:[%s216 + $0x240] sm:$0xff]
      %v307 = vld [vmem:[%s216 + $0x248] sm:$0xff]
      %v308 = vld [vmem:[%s216 + $0x250] sm:$0xff]
      %v309 = vld [vmem:[%s216 + $0x258] sm:$0xff]
      %v310 = vld [vmem:[%s216 + $0x260] sm:$0xff]
      %v311 = vld [vmem:[%s216 + $0x268] sm:$0xff]
      %v312 = vld [vmem:[%s216 + $0x270] sm:$0xff]
      %v313 = vld [vmem:[%s216 + $0x278] sm:$0xff]
      %v314 = vld [vmem:[%s216 + $0x280] sm:$0xff]
      %v315 = vld [vmem:[%s216 + $0x288] sm:$0xff]
      %v316 = vld [vmem:[%s216 + $0x290] sm:$0xff]
      %v317 = vld [vmem:[%s216 + $0x298] sm:$0xff]
      %v318 = vld [vmem:[%s216 + $0x2a0] sm:$0xff]
      %v319 = vld [vmem:[%s216 + $0x2a8] sm:$0xff]
      %v320 = vld [vmem:[%s216 + $0x2b0] sm:$0xff]
      %v321 = vld [vmem:[%s216 + $0x2b8] sm:$0xff]
      %v322 = vld [vmem:[%s216 + $0x2c0] sm:$0xff]
      %v323 = vld [vmem:[%s216 + $0x2c8] sm:$0xff]
      %v324 = vld [vmem:[%s216 + $0x2d0] sm:$0xff]
      %v325 = vld [vmem:[%s216 + $0x2d8] sm:$0xff]
      %v326 = vld [vmem:[%s216 + $0x2e0] sm:$0xff]
      %v327 = vld [vmem:[%s216 + $0x2e8] sm:$0xff]
      %v328 = vld [vmem:[%s216 + $0x2f0] sm:$0xff]
      %v329 = vld [vmem:[%s216 + $0x2f8] sm:$0xff]
      %v330 = vld [vmem:[%s216 + $0x300] sm:$0xff]
      %v331 = vld [vmem:[%s216 + $0x308] sm:$0xff]
      %v332 = vld [vmem:[%s216 + $0x310] sm:$0xff]
      %v333 = vld [vmem:[%s216 + $0x318] sm:$0xff]
      %v334 = vld [vmem:[%s216 + $0x320] sm:$0xff]
      %v335 = vld [vmem:[%s216 + $0x328] sm:$0xff]
      %v336 = vld [vmem:[%s216 + $0x330] sm:$0xff]
      %v337 = vld [vmem:[%s216 + $0x338] sm:$0xff]
      %v338 = vld [vmem:[%s216 + $0x340] sm:$0xff]
      %v339 = vld [vmem:[%s216 + $0x348] sm:$0xff]
      %v340 = vld [vmem:[%s216 + $0x350] sm:$0xff]
      %v341 = vld [vmem:[%s216 + $0x358] sm:$0xff]
      %v342 = vld [vmem:[%s216 + $0x360] sm:$0xff]
      %v343 = vld [vmem:[%s216 + $0x368] sm:$0xff]
      %v344 = vld [vmem:[%s216 + $0x370] sm:$0xff]
      %v345 = vld [vmem:[%s216 + $0x378] sm:$0xff]
      %v346 = vld [vmem:[%s216 + $0x380] sm:$0xff]
      %v347 = vld [vmem:[%s216 + $0x388] sm:$0xff]
      %v348 = vld [vmem:[%s216 + $0x390] sm:$0xff]
      %v349 = vld [vmem:[%s216 + $0x398] sm:$0xff]
      %v350 = vld [vmem:[%s216 + $0x3a0] sm:$0xff]
      %v351 = vld [vmem:[%s216 + $0x3a8] sm:$0xff]
      %v352 = vld [vmem:[%s216 + $0x3b0] sm:$0xff]
      %v353 = vld [vmem:[%s216 + $0x3b8] sm:$0xff]
      %v354 = vld [vmem:[%s216 + $0x3c0] sm:$0xff]
      %v355 = vld [vmem:[%s216 + $0x3c8] sm:$0xff]
      %v356 = vld [vmem:[%s216 + $0x3d0] sm:$0xff]
      %v357 = vld [vmem:[%s216 + $0x3d8] sm:$0xff]
      %v358 = vld [vmem:[%s216 + $0x3e0] sm:$0xff]
      %v359 = vld [vmem:[%s216 + $0x3e8] sm:$0xff]
      %v360 = vld [vmem:[%s216 + $0x3f0] sm:$0xff]
      %v361 = vld [vmem:[%s216 + $0x3f8] sm:$0xff]
      %v362 = vld [vmem:[%s222] sm:$0xf]
      %v363 = vld [vmem:[%s222 + $0x4] sm:$0xf]
      %v364 = vld [vmem:[%s222 + $0x8] sm:$0xf]
      %v365 = vld [vmem:[%s222 + $0xc] sm:$0xf]
      %v366 = vld [vmem:[%s222 + $0x10] sm:$0xf]
      %v367 = vld [vmem:[%s222 + $0x14] sm:$0xf]
      %v368 = vld [vmem:[%s222 + $0x18] sm:$0xf]
      %v369 = vld [vmem:[%s222 + $0x1c] sm:$0xf]
      %v370 = vld [vmem:[%s222 + $0x20] sm:$0xf]
      %v371 = vld [vmem:[%s222 + $0x24] sm:$0xf]
      %v372 = vld [vmem:[%s222 + $0x28] sm:$0xf]
      %v373 = vld [vmem:[%s222 + $0x2c] sm:$0xf]
      %v374 = vld [vmem:[%s222 + $0x30] sm:$0xf]
      %v375 = vld [vmem:[%s222 + $0x34] sm:$0xf]
      %v376 = vld [vmem:[%s222 + $0x38] sm:$0xf]
      %v377 = vld [vmem:[%s222 + $0x3c] sm:$0xf]
      %v378 = vld [vmem:[%s222 + $0x40] sm:$0xf]
      %v379 = vld [vmem:[%s222 + $0x44] sm:$0xf]
      %v380 = vld [vmem:[%s222 + $0x48] sm:$0xf]
      %v381 = vld [vmem:[%s222 + $0x4c] sm:$0xf]
      %v382 = vld [vmem:[%s222 + $0x50] sm:$0xf]
      %v383 = vld [vmem:[%s222 + $0x54] sm:$0xf]
      %v384 = vld [vmem:[%s222 + $0x58] sm:$0xf]
      %v385 = vld [vmem:[%s222 + $0x5c] sm:$0xf]
      %v386 = vld [vmem:[%s222 + $0x60] sm:$0xf]
      %v387 = vld [vmem:[%s222 + $0x64] sm:$0xf]
      %v388 = vld [vmem:[%s222 + $0x68] sm:$0xf]
      %v389 = vld [vmem:[%s222 + $0x6c] sm:$0xf]
      %v390 = vld [vmem:[%s222 + $0x70] sm:$0xf]
      %v391 = vld [vmem:[%s222 + $0x74] sm:$0xf]
      %v392 = vld [vmem:[%s222 + $0x78] sm:$0xf]
      %v393 = vld [vmem:[%s222 + $0x7c] sm:$0xf]
      %v394 = vld [vmem:[%s222 + $0x80] sm:$0xf]
      %v395 = vld [vmem:[%s222 + $0x84] sm:$0xf]
      %v396 = vld [vmem:[%s222 + $0x88] sm:$0xf]
      %v397 = vld [vmem:[%s222 + $0x8c] sm:$0xf]
      %v398 = vld [vmem:[%s222 + $0x90] sm:$0xf]
      %v399 = vld [vmem:[%s222 + $0x94] sm:$0xf]
      %v400 = vld [vmem:[%s222 + $0x98] sm:$0xf]
      %v401 = vld [vmem:[%s222 + $0x9c] sm:$0xf]
      %v402 = vld [vmem:[%s222 + $0xa0] sm:$0xf]
      %v403 = vld [vmem:[%s222 + $0xa4] sm:$0xf]
      %v404 = vld [vmem:[%s222 + $0xa8] sm:$0xf]
      %v405 = vld [vmem:[%s222 + $0xac] sm:$0xf]
      %v406 = vld [vmem:[%s222 + $0xb0] sm:$0xf]
      %v407 = vld [vmem:[%s222 + $0xb4] sm:$0xf]
      %v408 = vld [vmem:[%s222 + $0xb8] sm:$0xf]
      %v409 = vld [vmem:[%s222 + $0xbc] sm:$0xf]
      %v410 = vld [vmem:[%s222 + $0xc0] sm:$0xf]
      %v411 = vld [vmem:[%s222 + $0xc4] sm:$0xf]
      %v412 = vld [vmem:[%s222 + $0xc8] sm:$0xf]
      %v413 = vld [vmem:[%s222 + $0xcc] sm:$0xf]
      %v414 = vld [vmem:[%s222 + $0xd0] sm:$0xf]
      %v415 = vld [vmem:[%s222 + $0xd4] sm:$0xf]
      %v416 = vld [vmem:[%s222 + $0xd8] sm:$0xf]
      %v417 = vld [vmem:[%s222 + $0xdc] sm:$0xf]
      %v418 = vld [vmem:[%s222 + $0xe0] sm:$0xf]
      %v419 = vld [vmem:[%s222 + $0xe4] sm:$0xf]
      %v420 = vld [vmem:[%s222 + $0xe8] sm:$0xf]
      %v421 = vld [vmem:[%s222 + $0xec] sm:$0xf]
      %v422 = vld [vmem:[%s222 + $0xf0] sm:$0xf]
      %v423 = vld [vmem:[%s222 + $0xf4] sm:$0xf]
      %v424 = vld [vmem:[%s222 + $0xf8] sm:$0xf]
      %v425 = vld [vmem:[%s222 + $0xfc] sm:$0xf]
      %v426 = vld [vmem:[%s2] sm:$0x1]
      %v428 = vlaneseq
      %v429 = vshrl.u32 %v428, 7
      %v430 = vsub.s32 0, %v429
      %v431 = vrot.slane %v426, %v430
      %v561 = vunpack.c.l.b16 %v234
      %v562 = vunpack.c.h.b16 %v234
      %v563 = vunpack.c.l.b16 %v235
      %v564 = vunpack.c.h.b16 %v235
      %v565 = vunpack.c.l.b16 %v236
      %v566 = vunpack.c.h.b16 %v236
      %v567 = vunpack.c.l.b16 %v237
      %v568 = vunpack.c.h.b16 %v237
      %v569 = vunpack.c.l.b16 %v238
      %v570 = vunpack.c.h.b16 %v238
      %v571 = vunpack.c.l.b16 %v239
      %v572 = vunpack.c.h.b16 %v239
      %v573 = vunpack.c.l.b16 %v240
      %v574 = vunpack.c.h.b16 %v240
      %v575 = vunpack.c.l.b16 %v241
      %v576 = vunpack.c.h.b16 %v241
      %v577 = vunpack.c.l.b16 %v242
      %v578 = vunpack.c.h.b16 %v242
      %v579 = vunpack.c.l.b16 %v243
      %v580 = vunpack.c.h.b16 %v243
      %v581 = vunpack.c.l.b16 %v244
      %v582 = vunpack.c.h.b16 %v244
      %v583 = vunpack.c.l.b16 %v245
      %v584 = vunpack.c.h.b16 %v245
      %v585 = vunpack.c.l.b16 %v246
      %v586 = vunpack.c.h.b16 %v246
      %v587 = vunpack.c.l.b16 %v247
      %v588 = vunpack.c.h.b16 %v247
      %v589 = vunpack.c.l.b16 %v248
      %v590 = vunpack.c.h.b16 %v248
      %v591 = vunpack.c.l.b16 %v249
      %v592 = vunpack.c.h.b16 %v249
      %v593 = vunpack.c.l.b16 %v250
      %v594 = vunpack.c.h.b16 %v250
      %v595 = vunpack.c.l.b16 %v251
      %v596 = vunpack.c.h.b16 %v251
      %v597 = vunpack.c.l.b16 %v252
      %v598 = vunpack.c.h.b16 %v252
      %v599 = vunpack.c.l.b16 %v253
      %v600 = vunpack.c.h.b16 %v253
      %v601 = vunpack.c.l.b16 %v254
      %v602 = vunpack.c.h.b16 %v254
      %v603 = vunpack.c.l.b16 %v255
      %v604 = vunpack.c.h.b16 %v255
      %v605 = vunpack.c.l.b16 %v256
      %v606 = vunpack.c.h.b16 %v256
      %v607 = vunpack.c.l.b16 %v257
      %v608 = vunpack.c.h.b16 %v257
      %v609 = vunpack.c.l.b16 %v258
      %v610 = vunpack.c.h.b16 %v258
      %v611 = vunpack.c.l.b16 %v259
      %v612 = vunpack.c.h.b16 %v259
      %v613 = vunpack.c.l.b16 %v260
      %v614 = vunpack.c.h.b16 %v260
      %v615 = vunpack.c.l.b16 %v261
      %v616 = vunpack.c.h.b16 %v261
      %v617 = vunpack.c.l.b16 %v262
      %v618 = vunpack.c.h.b16 %v262
      %v619 = vunpack.c.l.b16 %v263
      %v620 = vunpack.c.h.b16 %v263
      %v621 = vunpack.c.l.b16 %v264
      %v622 = vunpack.c.h.b16 %v264
      %v623 = vunpack.c.l.b16 %v265
      %v624 = vunpack.c.h.b16 %v265
      %v625 = vunpack.c.l.b16 %v266
      %v626 = vunpack.c.h.b16 %v266
      %v627 = vunpack.c.l.b16 %v267
      %v628 = vunpack.c.h.b16 %v267
      %v629 = vunpack.c.l.b16 %v268
      %v630 = vunpack.c.h.b16 %v268
      %v631 = vunpack.c.l.b16 %v269
      %v632 = vunpack.c.h.b16 %v269
      %v633 = vunpack.c.l.b16 %v270
      %v634 = vunpack.c.h.b16 %v270
      %v635 = vunpack.c.l.b16 %v271
      %v636 = vunpack.c.h.b16 %v271
      %v637 = vunpack.c.l.b16 %v272
      %v638 = vunpack.c.h.b16 %v272
      %v639 = vunpack.c.l.b16 %v273
      %v640 = vunpack.c.h.b16 %v273
      %v641 = vunpack.c.l.b16 %v274
      %v642 = vunpack.c.h.b16 %v274
      %v643 = vunpack.c.l.b16 %v275
      %v644 = vunpack.c.h.b16 %v275
      %v645 = vunpack.c.l.b16 %v276
      %v646 = vunpack.c.h.b16 %v276
      %v647 = vunpack.c.l.b16 %v277
      %v648 = vunpack.c.h.b16 %v277
      %v649 = vunpack.c.l.b16 %v278
      %v650 = vunpack.c.h.b16 %v278
      %v651 = vunpack.c.l.b16 %v279
      %v652 = vunpack.c.h.b16 %v279
      %v653 = vunpack.c.l.b16 %v280
      %v654 = vunpack.c.h.b16 %v280
      %v655 = vunpack.c.l.b16 %v281
      %v656 = vunpack.c.h.b16 %v281
      %v657 = vunpack.c.l.b16 %v282
      %v658 = vunpack.c.h.b16 %v282
      %v659 = vunpack.c.l.b16 %v283
      %v660 = vunpack.c.h.b16 %v283
      %v661 = vunpack.c.l.b16 %v284
      %v662 = vunpack.c.h.b16 %v284
      %v663 = vunpack.c.l.b16 %v285
      %v664 = vunpack.c.h.b16 %v285
      %v665 = vunpack.c.l.b16 %v286
      %v666 = vunpack.c.h.b16 %v286
      %v667 = vunpack.c.l.b16 %v287
      %v668 = vunpack.c.h.b16 %v287
      %v669 = vunpack.c.l.b16 %v288
      %v670 = vunpack.c.h.b16 %v288
      %v671 = vunpack.c.l.b16 %v289
      %v672 = vunpack.c.h.b16 %v289
      %v673 = vunpack.c.l.b16 %v290
      %v674 = vunpack.c.h.b16 %v290
      %v675 = vunpack.c.l.b16 %v291
      %v676 = vunpack.c.h.b16 %v291
      %v677 = vunpack.c.l.b16 %v292
      %v678 = vunpack.c.h.b16 %v292
      %v679 = vunpack.c.l.b16 %v293
      %v680 = vunpack.c.h.b16 %v293
      %v681 = vunpack.c.l.b16 %v294
      %v682 = vunpack.c.h.b16 %v294
      %v683 = vunpack.c.l.b16 %v295
      %v684 = vunpack.c.h.b16 %v295
      %v685 = vunpack.c.l.b16 %v296
      %v686 = vunpack.c.h.b16 %v296
      %v687 = vunpack.c.l.b16 %v297
      %v688 = vunpack.c.h.b16 %v297
      %v689 = vunpack.c.l.b16 %v298
      %v690 = vunpack.c.h.b16 %v298
      %v691 = vunpack.c.l.b16 %v299
      %v692 = vunpack.c.h.b16 %v299
      %v693 = vunpack.c.l.b16 %v300
      %v694 = vunpack.c.h.b16 %v300
      %v695 = vunpack.c.l.b16 %v301
      %v696 = vunpack.c.h.b16 %v301
      %v697 = vunpack.c.l.b16 %v302
      %v698 = vunpack.c.h.b16 %v302
      %v699 = vunpack.c.l.b16 %v303
      %v700 = vunpack.c.h.b16 %v303
      %v701 = vunpack.c.l.b16 %v304
      %v702 = vunpack.c.h.b16 %v304
      %v703 = vunpack.c.l.b16 %v305
      %v704 = vunpack.c.h.b16 %v305
      %v705 = vunpack.c.l.b16 %v306
      %v706 = vunpack.c.h.b16 %v306
      %v707 = vunpack.c.l.b16 %v307
      %v708 = vunpack.c.h.b16 %v307
      %v709 = vunpack.c.l.b16 %v308
      %v710 = vunpack.c.h.b16 %v308
      %v711 = vunpack.c.l.b16 %v309
      %v712 = vunpack.c.h.b16 %v309
      %v713 = vunpack.c.l.b16 %v310
      %v714 = vunpack.c.h.b16 %v310
      %v715 = vunpack.c.l.b16 %v311
      %v716 = vunpack.c.h.b16 %v311
      %v717 = vunpack.c.l.b16 %v312
      %v718 = vunpack.c.h.b16 %v312
      %v719 = vunpack.c.l.b16 %v313
      %v720 = vunpack.c.h.b16 %v313
      %v721 = vunpack.c.l.b16 %v314
      %v722 = vunpack.c.h.b16 %v314
      %v723 = vunpack.c.l.b16 %v315
      %v724 = vunpack.c.h.b16 %v315
      %v725 = vunpack.c.l.b16 %v316
      %v726 = vunpack.c.h.b16 %v316
      %v727 = vunpack.c.l.b16 %v317
      %v728 = vunpack.c.h.b16 %v317
      %v729 = vunpack.c.l.b16 %v318
      %v730 = vunpack.c.h.b16 %v318
      %v731 = vunpack.c.l.b16 %v319
      %v732 = vunpack.c.h.b16 %v319
      %v733 = vunpack.c.l.b16 %v320
      %v734 = vunpack.c.h.b16 %v320
      %v735 = vunpack.c.l.b16 %v321
      %v736 = vunpack.c.h.b16 %v321
      %v737 = vunpack.c.l.b16 %v322
      %v738 = vunpack.c.h.b16 %v322
      %v739 = vunpack.c.l.b16 %v323
      %v740 = vunpack.c.h.b16 %v323
      %v741 = vunpack.c.l.b16 %v324
      %v742 = vunpack.c.h.b16 %v324
      %v743 = vunpack.c.l.b16 %v325
      %v744 = vunpack.c.h.b16 %v325
      %v745 = vunpack.c.l.b16 %v326
      %v746 = vunpack.c.h.b16 %v326
      %v747 = vunpack.c.l.b16 %v327
      %v748 = vunpack.c.h.b16 %v327
      %v749 = vunpack.c.l.b16 %v328
      %v750 = vunpack.c.h.b16 %v328
      %v751 = vunpack.c.l.b16 %v329
      %v752 = vunpack.c.h.b16 %v329
      %v753 = vunpack.c.l.b16 %v330
      %v754 = vunpack.c.h.b16 %v330
      %v755 = vunpack.c.l.b16 %v331
      %v756 = vunpack.c.h.b16 %v331
      %v757 = vunpack.c.l.b16 %v332
      %v758 = vunpack.c.h.b16 %v332
      %v759 = vunpack.c.l.b16 %v333
      %v760 = vunpack.c.h.b16 %v333
      %v761 = vunpack.c.l.b16 %v334
      %v762 = vunpack.c.h.b16 %v334
      %v763 = vunpack.c.l.b16 %v335
      %v764 = vunpack.c.h.b16 %v335
      %v765 = vunpack.c.l.b16 %v336
      %v766 = vunpack.c.h.b16 %v336
      %v767 = vunpack.c.l.b16 %v337
      %v768 = vunpack.c.h.b16 %v337
      %v769 = vunpack.c.l.b16 %v338
      %v770 = vunpack.c.h.b16 %v338
      %v771 = vunpack.c.l.b16 %v339
      %v772 = vunpack.c.h.b16 %v339
      %v773 = vunpack.c.l.b16 %v340
      %v774 = vunpack.c.h.b16 %v340
      %v775 = vunpack.c.l.b16 %v341
      %v776 = vunpack.c.h.b16 %v341
      %v777 = vunpack.c.l.b16 %v342
      %v778 = vunpack.c.h.b16 %v342
      %v779 = vunpack.c.l.b16 %v343
      %v780 = vunpack.c.h.b16 %v343
      %v781 = vunpack.c.l.b16 %v344
      %v782 = vunpack.c.h.b16 %v344
      %v783 = vunpack.c.l.b16 %v345
      %v784 = vunpack.c.h.b16 %v345
      %v785 = vunpack.c.l.b16 %v346
      %v786 = vunpack.c.h.b16 %v346
      %v787 = vunpack.c.l.b16 %v347
      %v788 = vunpack.c.h.b16 %v347
      %v789 = vunpack.c.l.b16 %v348
      %v790 = vunpack.c.h.b16 %v348
      %v791 = vunpack.c.l.b16 %v349
      %v792 = vunpack.c.h.b16 %v349
      %v793 = vunpack.c.l.b16 %v350
      %v794 = vunpack.c.h.b16 %v350
      %v795 = vunpack.c.l.b16 %v351
      %v796 = vunpack.c.h.b16 %v351
      %v797 = vunpack.c.l.b16 %v352
      %v798 = vunpack.c.h.b16 %v352
      %v799 = vunpack.c.l.b16 %v353
      %v800 = vunpack.c.h.b16 %v353
      %v801 = vunpack.c.l.b16 %v354
      %v802 = vunpack.c.h.b16 %v354
      %v803 = vunpack.c.l.b16 %v355
      %v804 = vunpack.c.h.b16 %v355
      %v805 = vunpack.c.l.b16 %v356
      %v806 = vunpack.c.h.b16 %v356
      %v807 = vunpack.c.l.b16 %v357
      %v808 = vunpack.c.h.b16 %v357
      %v809 = vunpack.c.l.b16 %v358
      %v810 = vunpack.c.h.b16 %v358
      %v811 = vunpack.c.l.b16 %v359
      %v812 = vunpack.c.h.b16 %v359
      %v813 = vunpack.c.l.b16 %v360
      %v814 = vunpack.c.h.b16 %v360
      %v815 = vunpack.c.l.b16 %v361
      %v816 = vunpack.c.h.b16 %v361
      %v817 = vpack.c.b16 %v565, %v561
      %v818 = vpack.c.b16 %v566, %v562
      %v819 = vpack.c.b16 %v567, %v563
      %v820 = vpack.c.b16 %v568, %v564
      %v821 = vpack.c.b16 %v573, %v569
      %v822 = vpack.c.b16 %v574, %v570
      %v823 = vpack.c.b16 %v575, %v571
      %v824 = vpack.c.b16 %v576, %v572
      %v825 = vpack.c.b16 %v581, %v577
      %v826 = vpack.c.b16 %v582, %v578
      %v827 = vpack.c.b16 %v583, %v579
      %v828 = vpack.c.b16 %v584, %v580
      %v829 = vpack.c.b16 %v589, %v585
      %v830 = vpack.c.b16 %v590, %v586
      %v831 = vpack.c.b16 %v591, %v587
      %v832 = vpack.c.b16 %v592, %v588
      %v833 = vpack.c.b16 %v597, %v593
      %v834 = vpack.c.b16 %v598, %v594
      %v835 = vpack.c.b16 %v599, %v595
      %v836 = vpack.c.b16 %v600, %v596
      %v837 = vpack.c.b16 %v605, %v601
      %v838 = vpack.c.b16 %v606, %v602
      %v839 = vpack.c.b16 %v607, %v603
      %v840 = vpack.c.b16 %v608, %v604
      %v841 = vpack.c.b16 %v613, %v609
      %v842 = vpack.c.b16 %v614, %v610
      %v843 = vpack.c.b16 %v615, %v611
      %v844 = vpack.c.b16 %v616, %v612
      %v845 = vpack.c.b16 %v621, %v617
      %v846 = vpack.c.b16 %v622, %v618
      %v847 = vpack.c.b16 %v623, %v619
      %v848 = vpack.c.b16 %v624, %v620
      %v849 = vpack.c.b16 %v629, %v625
      %v850 = vpack.c.b16 %v630, %v626
      %v851 = vpack.c.b16 %v631, %v627
      %v852 = vpack.c.b16 %v632, %v628
      %v853 = vpack.c.b16 %v637, %v633
      %v854 = vpack.c.b16 %v638, %v634
      %v855 = vpack.c.b16 %v639, %v635
      %v856 = vpack.c.b16 %v640, %v636
      %v857 = vpack.c.b16 %v645, %v641
      %v858 = vpack.c.b16 %v646, %v642
      %v859 = vpack.c.b16 %v647, %v643
      %v860 = vpack.c.b16 %v648, %v644
      %v861 = vpack.c.b16 %v653, %v649
      %v862 = vpack.c.b16 %v654, %v650
      %v863 = vpack.c.b16 %v655, %v651
      %v864 = vpack.c.b16 %v656, %v652
      %v865 = vpack.c.b16 %v661, %v657
      %v866 = vpack.c.b16 %v662, %v658
      %v867 = vpack.c.b16 %v663, %v659
      %v868 = vpack.c.b16 %v664, %v660
      %v869 = vpack.c.b16 %v669, %v665
      %v870 = vpack.c.b16 %v670, %v666
      %v871 = vpack.c.b16 %v671, %v667
      %v872 = vpack.c.b16 %v672, %v668
      %v873 = vpack.c.b16 %v677, %v673
      %v874 = vpack.c.b16 %v678, %v674
      %v875 = vpack.c.b16 %v679, %v675
      %v876 = vpack.c.b16 %v680, %v676
      %v877 = vpack.c.b16 %v685, %v681
      %v878 = vpack.c.b16 %v686, %v682
      %v879 = vpack.c.b16 %v687, %v683
      %v880 = vpack.c.b16 %v688, %v684
      %v881 = vpack.c.b16 %v693, %v689
      %v882 = vpack.c.b16 %v694, %v690
      %v883 = vpack.c.b16 %v695, %v691
      %v884 = vpack.c.b16 %v696, %v692
      %v885 = vpack.c.b16 %v701, %v697
      %v886 = vpack.c.b16 %v702, %v698
      %v887 = vpack.c.b16 %v703, %v699
      %v888 = vpack.c.b16 %v704, %v700
      %v889 = vpack.c.b16 %v709, %v705
      %v890 = vpack.c.b16 %v710, %v706
      %v891 = vpack.c.b16 %v711, %v707
      %v892 = vpack.c.b16 %v712, %v708
      %v893 = vpack.c.b16 %v717, %v713
      %v894 = vpack.c.b16 %v718, %v714
      %v895 = vpack.c.b16 %v719, %v715
      %v896 = vpack.c.b16 %v720, %v716
      %v897 = vpack.c.b16 %v725, %v721
      %v898 = vpack.c.b16 %v726, %v722
      %v899 = vpack.c.b16 %v727, %v723
      %v900 = vpack.c.b16 %v728, %v724
      %v901 = vpack.c.b16 %v733, %v729
      %v902 = vpack.c.b16 %v734, %v730
      %v903 = vpack.c.b16 %v735, %v731
      %v904 = vpack.c.b16 %v736, %v732
      %v905 = vpack.c.b16 %v741, %v737
      %v906 = vpack.c.b16 %v742, %v738
      %v907 = vpack.c.b16 %v743, %v739
      %v908 = vpack.c.b16 %v744, %v740
      %v909 = vpack.c.b16 %v749, %v745
      %v910 = vpack.c.b16 %v750, %v746
      %v911 = vpack.c.b16 %v751, %v747
      %v912 = vpack.c.b16 %v752, %v748
      %v913 = vpack.c.b16 %v757, %v753
      %v914 = vpack.c.b16 %v758, %v754
      %v915 = vpack.c.b16 %v759, %v755
      %v916 = vpack.c.b16 %v760, %v756
      %v917 = vpack.c.b16 %v765, %v761
      %v918 = vpack.c.b16 %v766, %v762
      %v919 = vpack.c.b16 %v767, %v763
      %v920 = vpack.c.b16 %v768, %v764
      %v921 = vpack.c.b16 %v773, %v769
      %v922 = vpack.c.b16 %v774, %v770
      %v923 = vpack.c.b16 %v775, %v771
      %v924 = vpack.c.b16 %v776, %v772
      %v925 = vpack.c.b16 %v781, %v777
      %v926 = vpack.c.b16 %v782, %v778
      %v927 = vpack.c.b16 %v783, %v779
      %v928 = vpack.c.b16 %v784, %v780
      %v929 = vpack.c.b16 %v789, %v785
      %v930 = vpack.c.b16 %v790, %v786
      %v931 = vpack.c.b16 %v791, %v787
      %v932 = vpack.c.b16 %v792, %v788
      %v933 = vpack.c.b16 %v797, %v793
      %v934 = vpack.c.b16 %v798, %v794
      %v935 = vpack.c.b16 %v799, %v795
      %v936 = vpack.c.b16 %v800, %v796
      %v937 = vpack.c.b16 %v805, %v801
      %v938 = vpack.c.b16 %v806, %v802
      %v939 = vpack.c.b16 %v807, %v803
      %v940 = vpack.c.b16 %v808, %v804
      %v941 = vpack.c.b16 %v813, %v809
      %v942 = vpack.c.b16 %v814, %v810
      %v943 = vpack.c.b16 %v815, %v811
      %v944 = vpack.c.b16 %v816, %v812
      %v1137 = vunpack.c.l.b16 %v362
      %v1138 = vunpack.c.l.b16 %v363
      %v1139 = vunpack.c.l.b16 %v364
      %v1140 = vunpack.c.l.b16 %v365
      %v1141 = vunpack.c.l.b16 %v366
      %v1142 = vunpack.c.l.b16 %v367
      %v1143 = vunpack.c.l.b16 %v368
      %v1144 = vunpack.c.l.b16 %v369
      %v1145 = vunpack.c.l.b16 %v370
      %v1146 = vunpack.c.l.b16 %v371
      %v1147 = vunpack.c.l.b16 %v372
      %v1148 = vunpack.c.l.b16 %v373
      %v1149 = vunpack.c.l.b16 %v374
      %v1150 = vunpack.c.l.b16 %v375
      %v1151 = vunpack.c.l.b16 %v376
      %v1152 = vunpack.c.l.b16 %v377
      %v1153 = vunpack.c.l.b16 %v378
      %v1154 = vunpack.c.l.b16 %v379
      %v1155 = vunpack.c.l.b16 %v380
      %v1156 = vunpack.c.l.b16 %v381
      %v1157 = vunpack.c.l.b16 %v382
      %v1158 = vunpack.c.l.b16 %v383
      %v1159 = vunpack.c.l.b16 %v384
      %v1160 = vunpack.c.l.b16 %v385
      %v1161 = vunpack.c.l.b16 %v386
      %v1162 = vunpack.c.l.b16 %v387
      %v1163 = vunpack.c.l.b16 %v388
      %v1164 = vunpack.c.l.b16 %v389
      %v1165 = vunpack.c.l.b16 %v390
      %v1166 = vunpack.c.l.b16 %v391
      %v1167 = vunpack.c.l.b16 %v392
      %v1168 = vunpack.c.l.b16 %v393
      %v1169 = vunpack.c.l.b16 %v394
      %v1170 = vunpack.c.l.b16 %v395
      %v1171 = vunpack.c.l.b16 %v396
      %v1172 = vunpack.c.l.b16 %v397
      %v1173 = vunpack.c.l.b16 %v398
      %v1174 = vunpack.c.l.b16 %v399
      %v1175 = vunpack.c.l.b16 %v400
      %v1176 = vunpack.c.l.b16 %v401
      %v1177 = vunpack.c.l.b16 %v402
      %v1178 = vunpack.c.l.b16 %v403
      %v1179 = vunpack.c.l.b16 %v404
      %v1180 = vunpack.c.l.b16 %v405
      %v1181 = vunpack.c.l.b16 %v406
      %v1182 = vunpack.c.l.b16 %v407
      %v1183 = vunpack.c.l.b16 %v408
      %v1184 = vunpack.c.l.b16 %v409
      %v1185 = vunpack.c.l.b16 %v410
      %v1186 = vunpack.c.l.b16 %v411
      %v1187 = vunpack.c.l.b16 %v412
      %v1188 = vunpack.c.l.b16 %v413
      %v1189 = vunpack.c.l.b16 %v414
      %v1190 = vunpack.c.l.b16 %v415
      %v1191 = vunpack.c.l.b16 %v416
      %v1192 = vunpack.c.l.b16 %v417
      %v1193 = vunpack.c.l.b16 %v418
      %v1194 = vunpack.c.l.b16 %v419
      %v1195 = vunpack.c.l.b16 %v420
      %v1196 = vunpack.c.l.b16 %v421
      %v1197 = vunpack.c.l.b16 %v422
      %v1198 = vunpack.c.l.b16 %v423
      %v1199 = vunpack.c.l.b16 %v424
      %v1200 = vunpack.c.l.b16 %v425
      %v1201 = vpack.c.b16 %v1138, %v1137
      %v1202 = vpack.c.b16 %v1140, %v1139
      %v1203 = vpack.c.b16 %v1142, %v1141
      %v1204 = vpack.c.b16 %v1144, %v1143
      %v1205 = vpack.c.b16 %v1146, %v1145
      %v1206 = vpack.c.b16 %v1148, %v1147
      %v1207 = vpack.c.b16 %v1150, %v1149
      %v1208 = vpack.c.b16 %v1152, %v1151
      %v1209 = vpack.c.b16 %v1154, %v1153
      %v1210 = vpack.c.b16 %v1156, %v1155
      %v1211 = vpack.c.b16 %v1158, %v1157
      %v1212 = vpack.c.b16 %v1160, %v1159
      %v1213 = vpack.c.b16 %v1162, %v1161
      %v1214 = vpack.c.b16 %v1164, %v1163
      %v1215 = vpack.c.b16 %v1166, %v1165
      %v1216 = vpack.c.b16 %v1168, %v1167
      %v1217 = vpack.c.b16 %v1170, %v1169
      %v1218 = vpack.c.b16 %v1172, %v1171
      %v1219 = vpack.c.b16 %v1174, %v1173
      %v1220 = vpack.c.b16 %v1176, %v1175
      %v1221 = vpack.c.b16 %v1178, %v1177
      %v1222 = vpack.c.b16 %v1180, %v1179
      %v1223 = vpack.c.b16 %v1182, %v1181
      %v1224 = vpack.c.b16 %v1184, %v1183
      %v1225 = vpack.c.b16 %v1186, %v1185
      %v1226 = vpack.c.b16 %v1188, %v1187
      %v1227 = vpack.c.b16 %v1190, %v1189
      %v1228 = vpack.c.b16 %v1192, %v1191
      %v1229 = vpack.c.b16 %v1194, %v1193
      %v1230 = vpack.c.b16 %v1196, %v1195
      %v1231 = vpack.c.b16 %v1198, %v1197
      %v1232 = vpack.c.b16 %v1200, %v1199
      %1265 = vmatprep.subr.bf16.mxu0 0
      %1266 = vmatpush1.bf16.msra.mxu0 %v1208
      %1267 = vmatprep.subr.bf16.mxu0 0
      %1268 = vmatpush1.bf16.msra.mxu0 %v1207
      %1269 = vmatprep.subr.bf16.mxu0 0
      %1270 = vmatpush1.bf16.msra.mxu0 %v1206
      %1271 = vmatprep.subr.bf16.mxu0 0
      %1272 = vmatpush1.bf16.msra.mxu0 %v1205
      %1273 = vmatprep.subr.bf16.mxu0 0
      %1274 = vmatpush1.bf16.msra.mxu0 %v1204
      %1275 = vmatprep.subr.bf16.mxu0 0
      %1276 = vmatpush1.bf16.msra.mxu0 %v1203
      %1277 = vmatprep.subr.bf16.mxu0 0
      %1278 = vmatpush1.bf16.msra.mxu0 %v1202
      %1279 = vmatprep.subr.bf16.mxu0 0
      %1280 = vmatpush1.bf16.msra.mxu0 %v1201
      %1281 = vmatprep.subr.bf16.mxu0 0
      %1282 = vmatpush2.bf16.msra.mxu0 %v1216
      %1283 = vmatprep.subr.bf16.mxu0 0
      %1284 = vmatpush2.bf16.msra.mxu0 %v1215
      %1285 = vmatprep.subr.bf16.mxu0 0
      %1286 = vmatpush2.bf16.msra.mxu0 %v1214
      %1287 = vmatprep.subr.bf16.mxu0 0
      %1288 = vmatpush2.bf16.msra.mxu0 %v1213
      %1289 = vmatprep.subr.bf16.mxu0 0
      %1290 = vmatpush2.bf16.msra.mxu0 %v1212
      %1291 = vmatprep.subr.bf16.mxu0 0
      %1292 = vmatpush2.bf16.msra.mxu0 %v1211
      %1293 = vmatprep.subr.bf16.mxu0 0
      %1294 = vmatpush2.bf16.msra.mxu0 %v1210
      %1295 = vmatprep.subr.bf16.mxu0 0
      %1296 = vmatpush2.bf16.msra.mxu0 %v1209
      %1297 = vmatprep.mubr.bf16.mxu0 %v818
      %1298 = vmatmul.mubr.bf16.gmra.mxu0 %v817
      %v1299 = vpop.f32.mrf.mxu0
      %v1300 = vadd.f32 %v431, %v1299
      %v1301 = vpop.f32.mrf.mxu0
      %v1302 = vpop.f32.mrf.mxu0
      %v1303 = vadd.f32 %v431, %v1302
      %v1304 = vpop.f32.mrf.mxu0
      %1305 = vmatprep.mubr.bf16.mxu0 %v822
      %1306 = vmatmul.mubr.bf16.gmra.mxu0 %v821
      %v1307 = vpop.f32.mrf.mxu0
      %v1308 = vadd.f32 %v431, %v1307
      %v1309 = vpop.f32.mrf.mxu0
      %v1310 = vpop.f32.mrf.mxu0
      %v1311 = vadd.f32 %v431, %v1310
      %v1312 = vpop.f32.mrf.mxu0
      %1313 = vmatprep.mubr.bf16.mxu0 %v826
      %1314 = vmatmul.mubr.bf16.gmra.mxu0 %v825
      %v1315 = vpop.f32.mrf.mxu0
      %v1316 = vadd.f32 %v431, %v1315
      %v1317 = vpop.f32.mrf.mxu0
      %v1318 = vpop.f32.mrf.mxu0
      %v1319 = vadd.f32 %v431, %v1318
      %v1320 = vpop.f32.mrf.mxu0
      %1321 = vmatprep.mubr.bf16.mxu0 %v830
      %1322 = vmatmul.mubr.bf16.gmra.mxu0 %v829
      %v1323 = vpop.f32.mrf.mxu0
      %v1324 = vadd.f32 %v431, %v1323
      %v1325 = vpop.f32.mrf.mxu0
      %v1326 = vpop.f32.mrf.mxu0
      %v1327 = vadd.f32 %v431, %v1326
      %v1328 = vpop.f32.mrf.mxu0
      %1329 = vmatprep.mubr.bf16.mxu0 %v834
      %1330 = vmatmul.mubr.bf16.gmra.mxu0 %v833
      %v1331 = vpop.f32.mrf.mxu0
      %v1332 = vadd.f32 %v431, %v1331
      %v1333 = vpop.f32.mrf.mxu0
      %v1334 = vpop.f32.mrf.mxu0
      %v1335 = vadd.f32 %v431, %v1334
      %v1336 = vpop.f32.mrf.mxu0
      %1337 = vmatprep.mubr.bf16.mxu0 %v838
      %1338 = vmatmul.mubr.bf16.gmra.mxu0 %v837
      %v1339 = vpop.f32.mrf.mxu0
      %v1340 = vadd.f32 %v431, %v1339
      %v1341 = vpop.f32.mrf.mxu0
      %v1342 = vpop.f32.mrf.mxu0
      %v1343 = vadd.f32 %v431, %v1342
      %v1344 = vpop.f32.mrf.mxu0
      %1345 = vmatprep.mubr.bf16.mxu0 %v842
      %1346 = vmatmul.mubr.bf16.gmra.mxu0 %v841
      %v1347 = vpop.f32.mrf.mxu0
      %v1348 = vadd.f32 %v431, %v1347
      %v1349 = vpop.f32.mrf.mxu0
      %v1350 = vpop.f32.mrf.mxu0
      %v1351 = vadd.f32 %v431, %v1350
      %v1352 = vpop.f32.mrf.mxu0
      %1353 = vmatprep.mubr.bf16.mxu0 %v846
      %1354 = vmatmul.mubr.bf16.gmra.mxu0 %v845
      %v1355 = vpop.f32.mrf.mxu0
      %v1356 = vadd.f32 %v431, %v1355
      %v1357 = vpop.f32.mrf.mxu0
      %v1358 = vpop.f32.mrf.mxu0
      %v1359 = vadd.f32 %v431, %v1358
      %v1360 = vpop.f32.mrf.mxu0
      %1361 = vmatprep.mubr.bf16.mxu0 %v850
      %1362 = vmatmul.mubr.bf16.gmra.mxu0 %v849
      %v1363 = vpop.f32.mrf.mxu0
      %v1364 = vadd.f32 %v431, %v1363
      %v1365 = vpop.f32.mrf.mxu0
      %v1366 = vpop.f32.mrf.mxu0
      %v1367 = vadd.f32 %v431, %v1366
      %v1368 = vpop.f32.mrf.mxu0
      %1369 = vmatprep.mubr.bf16.mxu0 %v854
      %1370 = vmatmul.mubr.bf16.gmra.mxu0 %v853
      %v1371 = vpop.f32.mrf.mxu0
      %v1372 = vadd.f32 %v431, %v1371
      %v1373 = vpop.f32.mrf.mxu0
      %v1374 = vpop.f32.mrf.mxu0
      %v1375 = vadd.f32 %v431, %v1374
      %v1376 = vpop.f32.mrf.mxu0
      %1377 = vmatprep.mubr.bf16.mxu0 %v858
      %1378 = vmatmul.mubr.bf16.gmra.mxu0 %v857
      %v1379 = vpop.f32.mrf.mxu0
      %v1380 = vadd.f32 %v431, %v1379
      %v1381 = vpop.f32.mrf.mxu0
      %v1382 = vpop.f32.mrf.mxu0
      %v1383 = vadd.f32 %v431, %v1382
      %v1384 = vpop.f32.mrf.mxu0
      %1385 = vmatprep.mubr.bf16.mxu0 %v862
      %1386 = vmatmul.mubr.bf16.gmra.mxu0 %v861
      %v1387 = vpop.f32.mrf.mxu0
      %v1388 = vadd.f32 %v431, %v1387
      %v1389 = vpop.f32.mrf.mxu0
      %v1390 = vpop.f32.mrf.mxu0
      %v1391 = vadd.f32 %v431, %v1390
      %v1392 = vpop.f32.mrf.mxu0
      %1393 = vmatprep.mubr.bf16.mxu0 %v866
      %1394 = vmatmul.mubr.bf16.gmra.mxu0 %v865
      %v1395 = vpop.f32.mrf.mxu0
      %v1396 = vadd.f32 %v431, %v1395
      %v1397 = vpop.f32.mrf.mxu0
      %v1398 = vpop.f32.mrf.mxu0
      %v1399 = vadd.f32 %v431, %v1398
      %v1400 = vpop.f32.mrf.mxu0
      %1401 = vmatprep.mubr.bf16.mxu0 %v870
      %1402 = vmatmul.mubr.bf16.gmra.mxu0 %v869
      %v1403 = vpop.f32.mrf.mxu0
      %v1404 = vadd.f32 %v431, %v1403
      %v1405 = vpop.f32.mrf.mxu0
      %v1406 = vpop.f32.mrf.mxu0
      %v1407 = vadd.f32 %v431, %v1406
      %v1408 = vpop.f32.mrf.mxu0
      %1409 = vmatprep.mubr.bf16.mxu0 %v874
      %1410 = vmatmul.mubr.bf16.gmra.mxu0 %v873
      %v1411 = vpop.f32.mrf.mxu0
      %v1412 = vadd.f32 %v431, %v1411
      %v1413 = vpop.f32.mrf.mxu0
      %v1414 = vpop.f32.mrf.mxu0
      %v1415 = vadd.f32 %v431, %v1414
      %v1416 = vpop.f32.mrf.mxu0
      %1417 = vmatprep.mubr.bf16.mxu0 %v878
      %1418 = vmatmul.mubr.bf16.gmra.mxu0 %v877
      %v1419 = vpop.f32.mrf.mxu0
      %v1420 = vadd.f32 %v431, %v1419
      %v1421 = vpop.f32.mrf.mxu0
      %v1422 = vpop.f32.mrf.mxu0
      %v1423 = vadd.f32 %v431, %v1422
      %v1424 = vpop.f32.mrf.mxu0
      %1425 = vmatprep.mubr.bf16.mxu0 %v882
      %1426 = vmatmul.mubr.bf16.gmra.mxu0 %v881
      %v1427 = vpop.f32.mrf.mxu0
      %v1428 = vadd.f32 %v431, %v1427
      %v1429 = vpop.f32.mrf.mxu0
      %v1430 = vpop.f32.mrf.mxu0
      %v1431 = vadd.f32 %v431, %v1430
      %v1432 = vpop.f32.mrf.mxu0
      %1433 = vmatprep.mubr.bf16.mxu0 %v886
      %1434 = vmatmul.mubr.bf16.gmra.mxu0 %v885
      %v1435 = vpop.f32.mrf.mxu0
      %v1436 = vadd.f32 %v431, %v1435
      %v1437 = vpop.f32.mrf.mxu0
      %v1438 = vpop.f32.mrf.mxu0
      %v1439 = vadd.f32 %v431, %v1438
      %v1440 = vpop.f32.mrf.mxu0
      %1441 = vmatprep.mubr.bf16.mxu0 %v890
      %1442 = vmatmul.mubr.bf16.gmra.mxu0 %v889
      %v1443 = vpop.f32.mrf.mxu0
      %v1444 = vadd.f32 %v431, %v1443
      %v1445 = vpop.f32.mrf.mxu0
      %v1446 = vpop.f32.mrf.mxu0
      %v1447 = vadd.f32 %v431, %v1446
      %v1448 = vpop.f32.mrf.mxu0
      %1449 = vmatprep.mubr.bf16.mxu0 %v894
      %1450 = vmatmul.mubr.bf16.gmra.mxu0 %v893
      %v1451 = vpop.f32.mrf.mxu0
      %v1452 = vadd.f32 %v431, %v1451
      %v1453 = vpop.f32.mrf.mxu0
      %v1454 = vpop.f32.mrf.mxu0
      %v1455 = vadd.f32 %v431, %v1454
      %v1456 = vpop.f32.mrf.mxu0
      %1457 = vmatprep.mubr.bf16.mxu0 %v898
      %1458 = vmatmul.mubr.bf16.gmra.mxu0 %v897
      %v1459 = vpop.f32.mrf.mxu0
      %v1460 = vadd.f32 %v431, %v1459
      %v1461 = vpop.f32.mrf.mxu0
      %v1462 = vpop.f32.mrf.mxu0
      %v1463 = vadd.f32 %v431, %v1462
      %v1464 = vpop.f32.mrf.mxu0
      %1465 = vmatprep.mubr.bf16.mxu0 %v902
      %1466 = vmatmul.mubr.bf16.gmra.mxu0 %v901
      %v1467 = vpop.f32.mrf.mxu0
      %v1468 = vadd.f32 %v431, %v1467
      %v1469 = vpop.f32.mrf.mxu0
      %v1470 = vpop.f32.mrf.mxu0
      %v1471 = vadd.f32 %v431, %v1470
      %v1472 = vpop.f32.mrf.mxu0
      %1473 = vmatprep.mubr.bf16.mxu0 %v906
      %1474 = vmatmul.mubr.bf16.gmra.mxu0 %v905
      %v1475 = vpop.f32.mrf.mxu0
      %v1476 = vadd.f32 %v431, %v1475
      %v1477 = vpop.f32.mrf.mxu0
      %v1478 = vpop.f32.mrf.mxu0
      %v1479 = vadd.f32 %v431, %v1478
      %v1480 = vpop.f32.mrf.mxu0
      %1481 = vmatprep.mubr.bf16.mxu0 %v910
      %1482 = vmatmul.mubr.bf16.gmra.mxu0 %v909
      %v1483 = vpop.f32.mrf.mxu0
      %v1484 = vadd.f32 %v431, %v1483
      %v1485 = vpop.f32.mrf.mxu0
      %v1486 = vpop.f32.mrf.mxu0
      %v1487 = vadd.f32 %v431, %v1486
      %v1488 = vpop.f32.mrf.mxu0
      %1489 = vmatprep.mubr.bf16.mxu0 %v914
      %1490 = vmatmul.mubr.bf16.gmra.mxu0 %v913
      %v1491 = vpop.f32.mrf.mxu0
      %v1492 = vadd.f32 %v431, %v1491
      %v1493 = vpop.f32.mrf.mxu0
      %v1494 = vpop.f32.mrf.mxu0
      %v1495 = vadd.f32 %v431, %v1494
      %v1496 = vpop.f32.mrf.mxu0
      %1497 = vmatprep.mubr.bf16.mxu0 %v918
      %1498 = vmatmul.mubr.bf16.gmra.mxu0 %v917
      %v1499 = vpop.f32.mrf.mxu0
      %v1500 = vadd.f32 %v431, %v1499
      %v1501 = vpop.f32.mrf.mxu0
      %v1502 = vpop.f32.mrf.mxu0
      %v1503 = vadd.f32 %v431, %v1502
      %v1504 = vpop.f32.mrf.mxu0
      %1505 = vmatprep.mubr.bf16.mxu0 %v922
      %1506 = vmatmul.mubr.bf16.gmra.mxu0 %v921
      %v1507 = vpop.f32.mrf.mxu0
      %v1508 = vadd.f32 %v431, %v1507
      %v1509 = vpop.f32.mrf.mxu0
      %v1510 = vpop.f32.mrf.mxu0
      %v1511 = vadd.f32 %v431, %v1510
      %v1512 = vpop.f32.mrf.mxu0
      %1513 = vmatprep.mubr.bf16.mxu0 %v926
      %1514 = vmatmul.mubr.bf16.gmra.mxu0 %v925
      %v1515 = vpop.f32.mrf.mxu0
      %v1516 = vadd.f32 %v431, %v1515
      %v1517 = vpop.f32.mrf.mxu0
      %v1518 = vpop.f32.mrf.mxu0
      %v1519 = vadd.f32 %v431, %v1518
      %v1520 = vpop.f32.mrf.mxu0
      %1521 = vmatprep.mubr.bf16.mxu0 %v930
      %1522 = vmatmul.mubr.bf16.gmra.mxu0 %v929
      %v1523 = vpop.f32.mrf.mxu0
      %v1524 = vadd.f32 %v431, %v1523
      %v1525 = vpop.f32.mrf.mxu0
      %v1526 = vpop.f32.mrf.mxu0
      %v1527 = vadd.f32 %v431, %v1526
      %v1528 = vpop.f32.mrf.mxu0
      %1529 = vmatprep.mubr.bf16.mxu0 %v934
      %1530 = vmatmul.mubr.bf16.gmra.mxu0 %v933
      %v1531 = vpop.f32.mrf.mxu0
      %v1532 = vadd.f32 %v431, %v1531
      %v1533 = vpop.f32.mrf.mxu0
      %v1534 = vpop.f32.mrf.mxu0
      %v1535 = vadd.f32 %v431, %v1534
      %v1536 = vpop.f32.mrf.mxu0
      %1537 = vmatprep.mubr.bf16.mxu0 %v938
      %1538 = vmatmul.mubr.bf16.gmra.mxu0 %v937
      %v1539 = vpop.f32.mrf.mxu0
      %v1540 = vadd.f32 %v431, %v1539
      %v1541 = vpop.f32.mrf.mxu0
      %v1542 = vpop.f32.mrf.mxu0
      %v1543 = vadd.f32 %v431, %v1542
      %v1544 = vpop.f32.mrf.mxu0
      %1545 = vmatprep.mubr.bf16.mxu0 %v942
      %1546 = vmatmul.mubr.bf16.gmra.mxu0 %v941
      %v1547 = vpop.f32.mrf.mxu0
      %v1548 = vadd.f32 %v431, %v1547
      %v1549 = vpop.f32.mrf.mxu0
      %v1550 = vpop.f32.mrf.mxu0
      %v1551 = vadd.f32 %v431, %v1550
      %v1552 = vpop.f32.mrf.mxu0
      %1553 = vdwg.mxu0
      %1554 = vmatprep.subr.bf16.mxu0 0
      %1555 = vmatpush1.bf16.msra.mxu0 %v1224
      %1556 = vmatprep.subr.bf16.mxu0 0
      %1557 = vmatpush1.bf16.msra.mxu0 %v1223
      %1558 = vmatprep.subr.bf16.mxu0 0
      %1559 = vmatpush1.bf16.msra.mxu0 %v1222
      %1560 = vmatprep.subr.bf16.mxu0 0
      %1561 = vmatpush1.bf16.msra.mxu0 %v1221
      %1562 = vmatprep.subr.bf16.mxu0 0
      %1563 = vmatpush1.bf16.msra.mxu0 %v1220
      %1564 = vmatprep.subr.bf16.mxu0 0
      %1565 = vmatpush1.bf16.msra.mxu0 %v1219
      %1566 = vmatprep.subr.bf16.mxu0 0
      %1567 = vmatpush1.bf16.msra.mxu0 %v1218
      %1568 = vmatprep.subr.bf16.mxu0 0
      %1569 = vmatpush1.bf16.msra.mxu0 %v1217
      %1570 = vmatprep.subr.bf16.mxu0 0
      %1571 = vmatpush2.bf16.msra.mxu0 %v1232
      %1572 = vmatprep.subr.bf16.mxu0 0
      %1573 = vmatpush2.bf16.msra.mxu0 %v1231
      %1574 = vmatprep.subr.bf16.mxu0 0
      %1575 = vmatpush2.bf16.msra.mxu0 %v1230
      %1576 = vmatprep.subr.bf16.mxu0 0
      %1577 = vmatpush2.bf16.msra.mxu0 %v1229
      %1578 = vmatprep.subr.bf16.mxu0 0
      %1579 = vmatpush2.bf16.msra.mxu0 %v1228
      %1580 = vmatprep.subr.bf16.mxu0 0
      %1581 = vmatpush2.bf16.msra.mxu0 %v1227
      %1582 = vmatprep.subr.bf16.mxu0 0
      %1583 = vmatpush2.bf16.msra.mxu0 %v1226
      %1584 = vmatprep.subr.bf16.mxu0 0
      %1585 = vmatpush2.bf16.msra.mxu0 %v1225
      %1586 = vmatprep.mubr.bf16.mxu0 %v820
      %1587 = vmatmul.mubr.bf16.gmra.mxu0 %v819
      %v1588 = vpop.f32.mrf.mxu0
      %v1589 = vadd.f32 %v1300, %v1588
      %v1590 = vpop.f32.mrf.mxu0
      %v1591 = vpop.f32.mrf.mxu0
      %v1592 = vadd.f32 %v1303, %v1591
      %v1593 = vpop.f32.mrf.mxu0
      %1594 = vmatprep.mubr.bf16.mxu0 %v824
      %1595 = vmatmul.mubr.bf16.gmra.mxu0 %v823
      %v1596 = vpop.f32.mrf.mxu0
      %v1597 = vadd.f32 %v1308, %v1596
      %v1598 = vpop.f32.mrf.mxu0
      %v1599 = vpop.f32.mrf.mxu0
      %v1600 = vadd.f32 %v1311, %v1599
      %v1601 = vpop.f32.mrf.mxu0
      %1602 = vmatprep.mubr.bf16.mxu0 %v828
      %1603 = vmatmul.mubr.bf16.gmra.mxu0 %v827
      %v1604 = vpop.f32.mrf.mxu0
      %v1605 = vadd.f32 %v1316, %v1604
      %v1606 = vpop.f32.mrf.mxu0
      %v1607 = vpop.f32.mrf.mxu0
      %v1608 = vadd.f32 %v1319, %v1607
      %v1609 = vpop.f32.mrf.mxu0
      %1610 = vmatprep.mubr.bf16.mxu0 %v832
      %1611 = vmatmul.mubr.bf16.gmra.mxu0 %v831
      %v1612 = vpop.f32.mrf.mxu0
      %v1613 = vadd.f32 %v1324, %v1612
      %v1614 = vpop.f32.mrf.mxu0
      %v1615 = vpop.f32.mrf.mxu0
      %v1616 = vadd.f32 %v1327, %v1615
      %v1617 = vpop.f32.mrf.mxu0
      %1618 = vmatprep.mubr.bf16.mxu0 %v836
      %1619 = vmatmul.mubr.bf16.gmra.mxu0 %v835
      %v1620 = vpop.f32.mrf.mxu0
      %v1621 = vadd.f32 %v1332, %v1620
      %v1622 = vpop.f32.mrf.mxu0
      %v1623 = vpop.f32.mrf.mxu0
      %v1624 = vadd.f32 %v1335, %v1623
      %v1625 = vpop.f32.mrf.mxu0
      %1626 = vmatprep.mubr.bf16.mxu0 %v840
      %1627 = vmatmul.mubr.bf16.gmra.mxu0 %v839
      %v1628 = vpop.f32.mrf.mxu0
      %v1629 = vadd.f32 %v1340, %v1628
      %v1630 = vpop.f32.mrf.mxu0
      %v1631 = vpop.f32.mrf.mxu0
      %v1632 = vadd.f32 %v1343, %v1631
      %v1633 = vpop.f32.mrf.mxu0
      %1634 = vmatprep.mubr.bf16.mxu0 %v844
      %1635 = vmatmul.mubr.bf16.gmra.mxu0 %v843
      %v1636 = vpop.f32.mrf.mxu0
      %v1637 = vadd.f32 %v1348, %v1636
      %v1638 = vpop.f32.mrf.mxu0
      %v1639 = vpop.f32.mrf.mxu0
      %v1640 = vadd.f32 %v1351, %v1639
      %v1641 = vpop.f32.mrf.mxu0
      %1642 = vmatprep.mubr.bf16.mxu0 %v848
      %1643 = vmatmul.mubr.bf16.gmra.mxu0 %v847
      %v1644 = vpop.f32.mrf.mxu0
      %v1645 = vadd.f32 %v1356, %v1644
      %v1646 = vpop.f32.mrf.mxu0
      %v1647 = vpop.f32.mrf.mxu0
      %v1648 = vadd.f32 %v1359, %v1647
      %v1649 = vpop.f32.mrf.mxu0
      %1650 = vmatprep.mubr.bf16.mxu0 %v852
      %1651 = vmatmul.mubr.bf16.gmra.mxu0 %v851
      %v1652 = vpop.f32.mrf.mxu0
      %v1653 = vadd.f32 %v1364, %v1652
      %v1654 = vpop.f32.mrf.mxu0
      %v1655 = vpop.f32.mrf.mxu0
      %v1656 = vadd.f32 %v1367, %v1655
      %v1657 = vpop.f32.mrf.mxu0
      %1658 = vmatprep.mubr.bf16.mxu0 %v856
      %1659 = vmatmul.mubr.bf16.gmra.mxu0 %v855
      %v1660 = vpop.f32.mrf.mxu0
      %v1661 = vadd.f32 %v1372, %v1660
      %v1662 = vpop.f32.mrf.mxu0
      %v1663 = vpop.f32.mrf.mxu0
      %v1664 = vadd.f32 %v1375, %v1663
      %v1665 = vpop.f32.mrf.mxu0
      %1666 = vmatprep.mubr.bf16.mxu0 %v860
      %1667 = vmatmul.mubr.bf16.gmra.mxu0 %v859
      %v1668 = vpop.f32.mrf.mxu0
      %v1669 = vadd.f32 %v1380, %v1668
      %v1670 = vpop.f32.mrf.mxu0
      %v1671 = vpop.f32.mrf.mxu0
      %v1672 = vadd.f32 %v1383, %v1671
      %v1673 = vpop.f32.mrf.mxu0
      %1674 = vmatprep.mubr.bf16.mxu0 %v864
      %1675 = vmatmul.mubr.bf16.gmra.mxu0 %v863
      %v1676 = vpop.f32.mrf.mxu0
      %v1677 = vadd.f32 %v1388, %v1676
      %v1678 = vpop.f32.mrf.mxu0
      %v1679 = vpop.f32.mrf.mxu0
      %v1680 = vadd.f32 %v1391, %v1679
      %v1681 = vpop.f32.mrf.mxu0
      %1682 = vmatprep.mubr.bf16.mxu0 %v868
      %1683 = vmatmul.mubr.bf16.gmra.mxu0 %v867
      %v1684 = vpop.f32.mrf.mxu0
      %v1685 = vadd.f32 %v1396, %v1684
      %v1686 = vpop.f32.mrf.mxu0
      %v1687 = vpop.f32.mrf.mxu0
      %v1688 = vadd.f32 %v1399, %v1687
      %v1689 = vpop.f32.mrf.mxu0
      %1690 = vmatprep.mubr.bf16.mxu0 %v872
      %1691 = vmatmul.mubr.bf16.gmra.mxu0 %v871
      %v1692 = vpop.f32.mrf.mxu0
      %v1693 = vadd.f32 %v1404, %v1692
      %v1694 = vpop.f32.mrf.mxu0
      %v1695 = vpop.f32.mrf.mxu0
      %v1696 = vadd.f32 %v1407, %v1695
      %v1697 = vpop.f32.mrf.mxu0
      %1698 = vmatprep.mubr.bf16.mxu0 %v876
      %1699 = vmatmul.mubr.bf16.gmra.mxu0 %v875
      %v1700 = vpop.f32.mrf.mxu0
      %v1701 = vadd.f32 %v1412, %v1700
      %v1702 = vpop.f32.mrf.mxu0
      %v1703 = vpop.f32.mrf.mxu0
      %v1704 = vadd.f32 %v1415, %v1703
      %v1705 = vpop.f32.mrf.mxu0
      %1706 = vmatprep.mubr.bf16.mxu0 %v880
      %1707 = vmatmul.mubr.bf16.gmra.mxu0 %v879
      %v1708 = vpop.f32.mrf.mxu0
      %v1709 = vadd.f32 %v1420, %v1708
      %v1710 = vpop.f32.mrf.mxu0
      %v1711 = vpop.f32.mrf.mxu0
      %v1712 = vadd.f32 %v1423, %v1711
      %v1713 = vpop.f32.mrf.mxu0
      %1714 = vmatprep.mubr.bf16.mxu0 %v884
      %1715 = vmatmul.mubr.bf16.gmra.mxu0 %v883
      %v1716 = vpop.f32.mrf.mxu0
      %v1717 = vadd.f32 %v1428, %v1716
      %v1718 = vpop.f32.mrf.mxu0
      %v1719 = vpop.f32.mrf.mxu0
      %v1720 = vadd.f32 %v1431, %v1719
      %v1721 = vpop.f32.mrf.mxu0
      %1722 = vmatprep.mubr.bf16.mxu0 %v888
      %1723 = vmatmul.mubr.bf16.gmra.mxu0 %v887
      %v1724 = vpop.f32.mrf.mxu0
      %v1725 = vadd.f32 %v1436, %v1724
      %v1726 = vpop.f32.mrf.mxu0
      %v1727 = vpop.f32.mrf.mxu0
      %v1728 = vadd.f32 %v1439, %v1727
      %v1729 = vpop.f32.mrf.mxu0
      %1730 = vmatprep.mubr.bf16.mxu0 %v892
      %1731 = vmatmul.mubr.bf16.gmra.mxu0 %v891
      %v1732 = vpop.f32.mrf.mxu0
      %v1733 = vadd.f32 %v1444, %v1732
      %v1734 = vpop.f32.mrf.mxu0
      %v1735 = vpop.f32.mrf.mxu0
      %v1736 = vadd.f32 %v1447, %v1735
      %v1737 = vpop.f32.mrf.mxu0
      %1738 = vmatprep.mubr.bf16.mxu0 %v896
      %1739 = vmatmul.mubr.bf16.gmra.mxu0 %v895
      %v1740 = vpop.f32.mrf.mxu0
      %v1741 = vadd.f32 %v1452, %v1740
      %v1742 = vpop.f32.mrf.mxu0
      %v1743 = vpop.f32.mrf.mxu0
      %v1744 = vadd.f32 %v1455, %v1743
      %v1745 = vpop.f32.mrf.mxu0
      %1746 = vmatprep.mubr.bf16.mxu0 %v900
      %1747 = vmatmul.mubr.bf16.gmra.mxu0 %v899
      %v1748 = vpop.f32.mrf.mxu0
      %v1749 = vadd.f32 %v1460, %v1748
      %v1750 = vpop.f32.mrf.mxu0
      %v1751 = vpop.f32.mrf.mxu0
      %v1752 = vadd.f32 %v1463, %v1751
      %v1753 = vpop.f32.mrf.mxu0
      %1754 = vmatprep.mubr.bf16.mxu0 %v904
      %1755 = vmatmul.mubr.bf16.gmra.mxu0 %v903
      %v1756 = vpop.f32.mrf.mxu0
      %v1757 = vadd.f32 %v1468, %v1756
      %v1758 = vpop.f32.mrf.mxu0
      %v1759 = vpop.f32.mrf.mxu0
      %v1760 = vadd.f32 %v1471, %v1759
      %v1761 = vpop.f32.mrf.mxu0
      %1762 = vmatprep.mubr.bf16.mxu0 %v908
      %1763 = vmatmul.mubr.bf16.gmra.mxu0 %v907
      %v1764 = vpop.f32.mrf.mxu0
      %v1765 = vadd.f32 %v1476, %v1764
      %v1766 = vpop.f32.mrf.mxu0
      %v1767 = vpop.f32.mrf.mxu0
      %v1768 = vadd.f32 %v1479, %v1767
      %v1769 = vpop.f32.mrf.mxu0
      %1770 = vmatprep.mubr.bf16.mxu0 %v912
      %1771 = vmatmul.mubr.bf16.gmra.mxu0 %v911
      %v1772 = vpop.f32.mrf.mxu0
      %v1773 = vadd.f32 %v1484, %v1772
      %v1774 = vpop.f32.mrf.mxu0
      %v1775 = vpop.f32.mrf.mxu0
      %v1776 = vadd.f32 %v1487, %v1775
      %v1777 = vpop.f32.mrf.mxu0
      %1778 = vmatprep.mubr.bf16.mxu0 %v916
      %1779 = vmatmul.mubr.bf16.gmra.mxu0 %v915
      %v1780 = vpop.f32.mrf.mxu0
      %v1781 = vadd.f32 %v1492, %v1780
      %v1782 = vpop.f32.mrf.mxu0
      %v1783 = vpop.f32.mrf.mxu0
      %v1784 = vadd.f32 %v1495, %v1783
      %v1785 = vpop.f32.mrf.mxu0
      %1786 = vmatprep.mubr.bf16.mxu0 %v920
      %1787 = vmatmul.mubr.bf16.gmra.mxu0 %v919
      %v1788 = vpop.f32.mrf.mxu0
      %v1789 = vadd.f32 %v1500, %v1788
      %v1790 = vpop.f32.mrf.mxu0
      %v1791 = vpop.f32.mrf.mxu0
      %v1792 = vadd.f32 %v1503, %v1791
      %v1793 = vpop.f32.mrf.mxu0
      %1794 = vmatprep.mubr.bf16.mxu0 %v924
      %1795 = vmatmul.mubr.bf16.gmra.mxu0 %v923
      %v1796 = vpop.f32.mrf.mxu0
      %v1797 = vadd.f32 %v1508, %v1796
      %v1798 = vpop.f32.mrf.mxu0
      %v1799 = vpop.f32.mrf.mxu0
      %v1800 = vadd.f32 %v1511, %v1799
      %v1801 = vpop.f32.mrf.mxu0
      %1802 = vmatprep.mubr.bf16.mxu0 %v928
      %1803 = vmatmul.mubr.bf16.gmra.mxu0 %v927
      %v1804 = vpop.f32.mrf.mxu0
      %v1805 = vadd.f32 %v1516, %v1804
      %v1806 = vpop.f32.mrf.mxu0
      %v1807 = vpop.f32.mrf.mxu0
      %v1808 = vadd.f32 %v1519, %v1807
      %v1809 = vpop.f32.mrf.mxu0
      %1810 = vmatprep.mubr.bf16.mxu0 %v932
      %1811 = vmatmul.mubr.bf16.gmra.mxu0 %v931
      %v1812 = vpop.f32.mrf.mxu0
      %v1813 = vadd.f32 %v1524, %v1812
      %v1814 = vpop.f32.mrf.mxu0
      %v1815 = vpop.f32.mrf.mxu0
      %v1816 = vadd.f32 %v1527, %v1815
      %v1817 = vpop.f32.mrf.mxu0
      %1818 = vmatprep.mubr.bf16.mxu0 %v936
      %1819 = vmatmul.mubr.bf16.gmra.mxu0 %v935
      %v1820 = vpop.f32.mrf.mxu0
      %v1821 = vadd.f32 %v1532, %v1820
      %v1822 = vpop.f32.mrf.mxu0
      %v1823 = vpop.f32.mrf.mxu0
      %v1824 = vadd.f32 %v1535, %v1823
      %v1825 = vpop.f32.mrf.mxu0
      %1826 = vmatprep.mubr.bf16.mxu0 %v940
      %1827 = vmatmul.mubr.bf16.gmra.mxu0 %v939
      %v1828 = vpop.f32.mrf.mxu0
      %v1829 = vadd.f32 %v1540, %v1828
      %v1830 = vpop.f32.mrf.mxu0
      %v1831 = vpop.f32.mrf.mxu0
      %v1832 = vadd.f32 %v1543, %v1831
      %v1833 = vpop.f32.mrf.mxu0
      %1834 = vmatprep.mubr.bf16.mxu0 %v944
      %1835 = vmatmul.mubr.bf16.gmra.mxu0 %v943
      %v1836 = vpop.f32.mrf.mxu0
      %v1837 = vadd.f32 %v1548, %v1836
      %v1838 = vpop.f32.mrf.mxu0
      %v1839 = vpop.f32.mrf.mxu0
      %v1840 = vadd.f32 %v1551, %v1839
      %v1841 = vpop.f32.mrf.mxu0
      %1842 = vdwg.mxu0
      %v1843 = vmax.f32 %v1589, 0.0
      %v1844 = vmax.f32 %v1592, 0.0
      %v1845 = vmax.f32 %v1597, 0.0
      %v1846 = vmax.f32 %v1600, 0.0
      %v1847 = vmax.f32 %v1605, 0.0
      %v1848 = vmax.f32 %v1608, 0.0
      %v1849 = vmax.f32 %v1613, 0.0
      %v1850 = vmax.f32 %v1616, 0.0
      %v1851 = vmax.f32 %v1621, 0.0
      %v1852 = vmax.f32 %v1624, 0.0
      %v1853 = vmax.f32 %v1629, 0.0
      %v1854 = vmax.f32 %v1632, 0.0
      %v1855 = vmax.f32 %v1637, 0.0
      %v1856 = vmax.f32 %v1640, 0.0
      %v1857 = vmax.f32 %v1645, 0.0
      %v1858 = vmax.f32 %v1648, 0.0
      %v1859 = vmax.f32 %v1653, 0.0
      %v1860 = vmax.f32 %v1656, 0.0
      %v1861 = vmax.f32 %v1661, 0.0
      %v1862 = vmax.f32 %v1664, 0.0
      %v1863 = vmax.f32 %v1669, 0.0
      %v1864 = vmax.f32 %v1672, 0.0
      %v1865 = vmax.f32 %v1677, 0.0
      %v1866 = vmax.f32 %v1680, 0.0
      %v1867 = vmax.f32 %v1685, 0.0
      %v1868 = vmax.f32 %v1688, 0.0
      %v1869 = vmax.f32 %v1693, 0.0
      %v1870 = vmax.f32 %v1696, 0.0
      %v1871 = vmax.f32 %v1701, 0.0
      %v1872 = vmax.f32 %v1704, 0.0
      %v1873 = vmax.f32 %v1709, 0.0
      %v1874 = vmax.f32 %v1712, 0.0
      %v1875 = vmax.f32 %v1717, 0.0
      %v1876 = vmax.f32 %v1720, 0.0
      %v1877 = vmax.f32 %v1725, 0.0
      %v1878 = vmax.f32 %v1728, 0.0
      %v1879 = vmax.f32 %v1733, 0.0
      %v1880 = vmax.f32 %v1736, 0.0
      %v1881 = vmax.f32 %v1741, 0.0
      %v1882 = vmax.f32 %v1744, 0.0
      %v1883 = vmax.f32 %v1749, 0.0
      %v1884 = vmax.f32 %v1752, 0.0
      %v1885 = vmax.f32 %v1757, 0.0
      %v1886 = vmax.f32 %v1760, 0.0
      %v1887 = vmax.f32 %v1765, 0.0
      %v1888 = vmax.f32 %v1768, 0.0
      %v1889 = vmax.f32 %v1773, 0.0
      %v1890 = vmax.f32 %v1776, 0.0
      %v1891 = vmax.f32 %v1781, 0.0
      %v1892 = vmax.f32 %v1784, 0.0
      %v1893 = vmax.f32 %v1789, 0.0
      %v1894 = vmax.f32 %v1792, 0.0
      %v1895 = vmax.f32 %v1797, 0.0
      %v1896 = vmax.f32 %v1800, 0.0
      %v1897 = vmax.f32 %v1805, 0.0
      %v1898 = vmax.f32 %v1808, 0.0
      %v1899 = vmax.f32 %v1813, 0.0
      %v1900 = vmax.f32 %v1816, 0.0
      %v1901 = vmax.f32 %v1821, 0.0
      %v1902 = vmax.f32 %v1824, 0.0
      %v1903 = vmax.f32 %v1829, 0.0
      %v1904 = vmax.f32 %v1832, 0.0
      %v1905 = vmax.f32 %v1837, 0.0
      %v1906 = vmax.f32 %v1840, 0.0
      %1907 = vst [vmem:[%s231] sm:$0xff] %v1843
      %1908 = vst [vmem:[%s231 + $0x8] sm:$0xff] %v1844
      %1909 = vst [vmem:[%s231 + $0x10] sm:$0xff] %v1845
      %1910 = vst [vmem:[%s231 + $0x18] sm:$0xff] %v1846
      %1911 = vst [vmem:[%s231 + $0x20] sm:$0xff] %v1847
      %1912 = vst [vmem:[%s231 + $0x28] sm:$0xff] %v1848
      %1913 = vst [vmem:[%s231 + $0x30] sm:$0xff] %v1849
      %1914 = vst [vmem:[%s231 + $0x38] sm:$0xff] %v1850
      %1915 = vst [vmem:[%s231 + $0x40] sm:$0xff] %v1851
      %1916 = vst [vmem:[%s231 + $0x48] sm:$0xff] %v1852
      %1917 = vst [vmem:[%s231 + $0x50] sm:$0xff] %v1853
      %1918 = vst [vmem:[%s231 + $0x58] sm:$0xff] %v1854
      %1919 = vst [vmem:[%s231 + $0x60] sm:$0xff] %v1855
      %1920 = vst [vmem:[%s231 + $0x68] sm:$0xff] %v1856
      %1921 = vst [vmem:[%s231 + $0x70] sm:$0xff] %v1857
      %1922 = vst [vmem:[%s231 + $0x78] sm:$0xff] %v1858
      %1923 = vst [vmem:[%s231 + $0x80] sm:$0xff] %v1859
      %1924 = vst [vmem:[%s231 + $0x88] sm:$0xff] %v1860
      %1925 = vst [vmem:[%s231 + $0x90] sm:$0xff] %v1861
      %1926 = vst [vmem:[%s231 + $0x98] sm:$0xff] %v1862
      %1927 = vst [vmem:[%s231 + $0xa0] sm:$0xff] %v1863
      %1928 = vst [vmem:[%s231 + $0xa8] sm:$0xff] %v1864
      %1929 = vst [vmem:[%s231 + $0xb0] sm:$0xff] %v1865
      %1930 = vst [vmem:[%s231 + $0xb8] sm:$0xff] %v1866
      %1931 = vst [vmem:[%s231 + $0xc0] sm:$0xff] %v1867
      %1932 = vst [vmem:[%s231 + $0xc8] sm:$0xff] %v1868
      %1933 = vst [vmem:[%s231 + $0xd0] sm:$0xff] %v1869
      %1934 = vst [vmem:[%s231 + $0xd8] sm:$0xff] %v1870
      %1935 = vst [vmem:[%s231 + $0xe0] sm:$0xff] %v1871
      %1936 = vst [vmem:[%s231 + $0xe8] sm:$0xff] %v1872
      %1937 = vst [vmem:[%s231 + $0xf0] sm:$0xff] %v1873
      %1938 = vst [vmem:[%s231 + $0xf8] sm:$0xff] %v1874
      %1939 = vst [vmem:[%s231 + $0x100] sm:$0xff] %v1875
      %1940 = vst [vmem:[%s231 + $0x108] sm:$0xff] %v1876
      %1941 = vst [vmem:[%s231 + $0x110] sm:$0xff] %v1877
      %1942 = vst [vmem:[%s231 + $0x118] sm:$0xff] %v1878
      %1943 = vst [vmem:[%s231 + $0x120] sm:$0xff] %v1879
      %1944 = vst [vmem:[%s231 + $0x128] sm:$0xff] %v1880
      %1945 = vst [vmem:[%s231 + $0x130] sm:$0xff] %v1881
      %1946 = vst [vmem:[%s231 + $0x138] sm:$0xff] %v1882
      %1947 = vst [vmem:[%s231 + $0x140] sm:$0xff] %v1883
      %1948 = vst [vmem:[%s231 + $0x148] sm:$0xff] %v1884
      %1949 = vst [vmem:[%s231 + $0x150] sm:$0xff] %v1885
      %1950 = vst [vmem:[%s231 + $0x158] sm:$0xff] %v1886
      %1951 = vst [vmem:[%s231 + $0x160] sm:$0xff] %v1887
      %1952 = vst [vmem:[%s231 + $0x168] sm:$0xff] %v1888
      %1953 = vst [vmem:[%s231 + $0x170] sm:$0xff] %v1889
      %1954 = vst [vmem:[%s231 + $0x178] sm:$0xff] %v1890
      %1955 = vst [vmem:[%s231 + $0x180] sm:$0xff] %v1891
      %1956 = vst [vmem:[%s231 + $0x188] sm:$0xff] %v1892
      %1957 = vst [vmem:[%s231 + $0x190] sm:$0xff] %v1893
      %1958 = vst [vmem:[%s231 + $0x198] sm:$0xff] %v1894
      %1959 = vst [vmem:[%s231 + $0x1a0] sm:$0xff] %v1895
      %1960 = vst [vmem:[%s231 + $0x1a8] sm:$0xff] %v1896
      %1961 = vst [vmem:[%s231 + $0x1b0] sm:$0xff] %v1897
      %1962 = vst [vmem:[%s231 + $0x1b8] sm:$0xff] %v1898
      %1963 = vst [vmem:[%s231 + $0x1c0] sm:$0xff] %v1899
      %1964 = vst [vmem:[%s231 + $0x1c8] sm:$0xff] %v1900
      %1965 = vst [vmem:[%s231 + $0x1d0] sm:$0xff] %v1901
      %1966 = vst [vmem:[%s231 + $0x1d8] sm:$0xff] %v1902
      %1967 = vst [vmem:[%s231 + $0x1e0] sm:$0xff] %v1903
      %1968 = vst [vmem:[%s231 + $0x1e8] sm:$0xff] %v1904
      %1969 = vst [vmem:[%s231 + $0x1f0] sm:$0xff] %v1905
      %1970 = vst [vmem:[%s231 + $0x1f8] sm:$0xff] %v1906
      %s1971 = smul.u32 64, %s19
      %p1972 = scmp.lt.s32.totalorder %s18, 3
      %s1973 = scalar_select %p1972, %s18, 3
      %p1974 = scmp.lt.s32.totalorder %s1971, 63
      %s1975 = scalar_select %p1974, %s1971, 63
      %s1976 = smul.addr %s1973, 64
      %s1977 = sadd.s32 %s1975, %s1976
      %s1978 = smul.addr %s1977, 8
      %s1979 = scalar_lea.vmem %s3, %s1978
      // Predicated region
      $region33: #{double_conv_up_c3_forward.11} parent=31 // pred_check
        %p1980 = pneg %p121
      $region34: #{double_conv_up_c3_forward.11} parent=31 // pred_check_branch
        %1982 = sbr.rel (%p1980) target = $region36
      $region35: #{double_conv_up_c3_forward.11} parent=31 // pred_region
        %s1983 = smul.u32 64, %s19
      $region36: #{double_conv_up_c3_forward.11} parent=31 // pred_fallthru
        _
    $region32: #{double_conv_up_c3_forward.11} parent=5 // pred_fallthru
      _
    %p1984 = scmp.le.s32.totalorder 2, %s9
    // Predicated region
    $region37: #{double_conv_up_c3_forward.11} parent=5 // pred_check
      %p1985 = pneg %p1984
    $region38: #{double_conv_up_c3_forward.11} parent=5 // pred_check_branch
      %1987 = sbr.rel (%p1985) target = $region40
    $region39: #{double_conv_up_c3_forward.11} parent=5 // pred_region
      %s1988 = ssub.s32 %s9, 2
      // Predicated region
      $region41: #{double_conv_up_c3_forward.11} parent=39 // pred_check
        %p1989 = pneg %p127
      $region42: #{double_conv_up_c3_forward.11} parent=39 // pred_check_branch
        %1991 = sbr.rel (%p1989) target = $region44
      $region43: #{double_conv_up_c3_forward.11} parent=39 // pred_region
        %s1992 = smul.u32 64, %s21
        %p1993 = scmp.lt.s32.totalorder %s20, 3
        %s1994 = scalar_select %p1993, %s20, 3
        %p1995 = scmp.lt.s32.totalorder %s1992, 63
        %s1996 = scalar_select %p1995, %s1992, 63
        %s1997 = smul.addr %s1994, 64
        %s1998 = sadd.s32 %s1996, %s1997
        %s1999 = smul.addr %s1998, 8
        %s2000 = scalar_lea.vmem %s3, %s1999
      $region44: #{double_conv_up_c3_forward.11} parent=39 // pred_fallthru
        _
    $region40: #{double_conv_up_c3_forward.11} parent=5 // pred_fallthru
      _
  $region6: #{double_conv_up_c3_forward.11} parent=0 // loop_footer
    %s13 = sadd.s32 1, %s9
  $region7: #{double_conv_up_c3_forward.11} parent=0 // loop_footer_branch
    %8 = sbr.rel target = $region3
  $region8: #{double_conv_up_c3_forward.11} parent=0 // loop_exit
    _

</llo_original>
